<compile_context>
chip_gen: v7x
topology: tpu7x:2x2x1
jax: 0.10.0
libtpu: 0.0.40
codegen_flags: <defaults>
</compile_context>

<pallas_src>
import functools

import numpy as np

import jax
import jax.numpy as jnp
from jax.experimental import pallas as pl
from jax.experimental.pallas import tpu as pltpu

# ----------------------------------------------------------------------------
# Module configuration (matches CRFRNN.__init__ defaults)
# ----------------------------------------------------------------------------
NUM_CLASSES = 4
KERNEL_SIZE = (3, 5)
THETA_GAMMA = 0.9
THETA_ALPHA = 0.9
THETA_BETA = 0.015
W_SMOOTH_INIT = 0.02
W_APP_INIT = 0.1
NUM_ITERS = 3

KH, KW = KERNEL_SIZE
PH, PW = KH // 2, KW // 2
ALL_OFFSETS = [(kh - PH, kw - PW) for kh in range(KH) for kw in range(KW)]
OFF_OFFSETS = [o for o in ALL_OFFSETS if o != (0, 0)]        # 14 off-center taps
K_NB = len(OFF_OFFSETS)
DWS = sorted({dw for _, dw in OFF_OFFSETS if dw != 0})       # [-2, -1, 1, 2]

assert PH == 1, "row_shift below assumes a 3-row neighbourhood (|dh| <= 1)"


# ----------------------------------------------------------------------------
# Pallas kernel: one batch element per grid step
# ----------------------------------------------------------------------------
def crf_rnn_kernel(unary_ref, xyz_ref, mask_ref,
                   kg_ref, ka_ref, ws_ref, wa_ref, itb_ref, lc_ref,
                   out_ref, kb_ref,
                   *, H, W, num_classes, num_iters,
                   same_gamma_alpha, shared_beta, potts):
    N = num_classes
    f32 = jnp.float32

    # -- hoisted constants (JAX does not CSE broadcasts: build them once).
    col = jax.lax.broadcasted_iota(jnp.int32, (H, W), 1)
    vcol = {dw: ((col + dw >= 0) & (col + dw < W)).astype(f32) for dw in DWS}
    zrow = jnp.zeros((1, W), f32)

    def col_shift(x, dw):
        """y[h, w] = x[h, w + dw], zero outside: lane roll (XLU) + boundary mask.

        The roll's wrap-around lanes are exactly the out-of-image lanes, so the
        vcol mask is what turns the roll into a zero-padded shift (never drop it)."""
        if dw == 0:
            return x
        return pltpu.roll(x, (-dw) % W, axis=1) * vcol[dw]

    def row_shift(x, dh):
        """y[h, w] = x[h + dh, w], zero outside the image (|dh| <= 1).

        Sublane concat (no XLU roll) keeps the 2 XLU units on v6e/v7x free for
        the lane rolls.  # TODO(synk): on v5e prefer pltpu.roll(axis=0)+row mask
        (3 XLU units, single vst slot)."""
        if dh == 0:
            return x
        if dh > 0:
            return jnp.concatenate([x[dh:, :], zrow], axis=0)
        return jnp.concatenate([zrow, x[:H + dh, :]], axis=0)

    # -- kernel_beta precompute (Q-independent), shifted mask folded in.
    #    Column shifts are shared across the three row offsets (16 lane rolls
    #    total); per-tap work is a cheap row shift + squared-distance sum.
    X = [xyz_ref[0, a] for a in range(3)]
    M0 = mask_ref[0, 0]
    Xc = {dw: [col_shift(X[a], dw) for a in range(3)] for dw in DWS}
    Mc = {dw: col_shift(M0, dw) for dw in DWS}
    if shared_beta:
        itb0 = itb_ref[0]
    for k, (dh, dw) in enumerate(OFF_OFFSETS):
        xs = X if dw == 0 else Xc[dw]
        ms = M0 if dw == 0 else Mc[dw]
        sm = row_shift(ms, dh)                       # shifted mask (0 where OOB)
        pd = jnp.zeros((H, W), f32)
        for a in range(3):
            d = row_shift(xs[a], dh) - X[a]
            pd = pd + d * d
        if shared_beta:
            kb_ref[k] = (jnp.exp(-pd * itb0) * sm).astype(kb_ref.dtype)
        else:
            for c in range(N):
                kb_ref[k, c] = (jnp.exp(-pd * itb_ref[c]) * sm).astype(kb_ref.dtype)

    # -- mean-field iterations.  Q lives in out_ref (VMEM) between iterations;
    #    unary / mask are re-read from their refs at the point of use.
    for it in range(num_iters):
        q_ref = unary_ref if it == 0 else out_ref

        # softmax statistics over classes: elementwise over N planes.
        # EXACT reciprocal (approx vrcp was the dominant error vs. reference).
        m = q_ref[0, 0]
        for c in range(1, N):
            m = jnp.maximum(m, q_ref[0, c])
        s = jnp.exp(q_ref[0, 0] - m)
        for c in range(1, N):
            s = s + jnp.exp(q_ref[0, c] - m)
        inv = 1.0 / s

        weighted = []
        for c in range(N):                           # class-outer / tap-inner
            # recompute exp(Q_c - m): EUP has slack; keeps only m/inv live
            # instead of N exp-planes.
            qs = jnp.exp(q_ref[0, c] - m) * inv

            # ONE lane roll per (class, dw); every tap reuses these planes.
            qc = {dw: col_shift(qs, dw) for dw in DWS}

            kgam = jnp.zeros((H, W), f32)            # Gaussian(theta_gamma) conv
            kalp = None if same_gamma_alpha else jnp.zeros((H, W), f32)
            eapp = jnp.zeros((H, W), f32)            # appearance message sum
            for k, (dh, dw) in enumerate(OFF_OFFSETS):
                sQ = row_shift(qs if dw == 0 else qc[dw], dh)
                kgam = kgam + kg_ref[k, c] * sQ
                if not same_gamma_alpha:
                    kalp = kalp + ka_ref[k, c] * sQ
                eapp = eapp + (kb_ref[k] if shared_beta else kb_ref[k, c]) * sQ

            Mv = mask_ref[0, 0]                      # re-read, don't keep live
            if same_gamma_alpha:                     # kernel_alpha == kernel_gamma
                w_c = kgam * (ws_ref[c] + wa_ref[c] * (eapp * Mv))
            else:
                w_c = ws_ref[c] * kgam + wa_ref[c] * (eapp * Mv * kalp)
            weighted.append(w_c)

        # label compatibility + unary update; new Q written into out_ref.
        if potts:                                    # lc = 1 - I  ->  sum - self
            S = weighted[0]
            for c in range(1, N):
                S = S + weighted[c]
            for c in range(N):
                out_ref[0, c] = unary_ref[0, c] - (S - weighted[c])
        else:                                        # general 1x1 conv path
            for o in range(N):
                p = lc_ref[o, 0] * weighted[0]
                for c in range(1, N):
                    p = p + lc_ref[o, c] * weighted[c]
                out_ref[0, o] = unary_ref[0, o] - p


# ----------------------------------------------------------------------------
# Parameter construction (mirrors the module's buffers / parameter init)
# ----------------------------------------------------------------------------
def _per_class(v, n):
    if isinstance(v, (list, tuple)):
        assert len(v) == n
        return [float(x) for x in v]
    return [float(v)] * n


def build_params(num_classes=NUM_CLASSES, theta_gamma=THETA_GAMMA,
                 theta_alpha=THETA_ALPHA, theta_beta=THETA_BETA,
                 init_weight_smoothness=W_SMOOTH_INIT,
                 init_weight_appearance=W_APP_INIT):
    N = num_classes
    tg = _per_class(theta_gamma, N)
    ta = _per_class(theta_alpha, N)
    tb = _per_class(theta_beta, N)

    def taps(theta):                                  # off-center Gaussian taps
        a = np.zeros((K_NB, N), np.float32)
        for k, (dh, dw) in enumerate(OFF_OFFSETS):
            pd = float(dh * dh + dw * dw)
            for c in range(N):
                a[k, c] = np.exp(-pd / (2.0 * theta[c] ** 2))
        return a

    kg = taps(tg)
    ka = taps(ta)
    itb = np.array([1.0 / (2.0 * t * t) for t in tb], np.float32)
    ws = np.full((N,), init_weight_smoothness, np.float32)
    wa = np.full((N,), init_weight_appearance, np.float32)
    lc = (1.0 - np.eye(N)).astype(np.float32)         # Potts 1x1 conv init

    return dict(
        kg=jnp.asarray(kg), ka=jnp.asarray(ka),
        ws=jnp.asarray(ws), wa=jnp.asarray(wa),
        itb=jnp.asarray(itb), lc=jnp.asarray(lc),
        # trace-time flags selecting the specialized fast paths
        same_gamma_alpha=bool(np.allclose(kg, ka)),
        shared_beta=bool(np.all(itb == itb[0])),
        potts=bool(np.allclose(lc, 1.0 - np.eye(N))),
    )


# ----------------------------------------------------------------------------
# pallas_call wrapper
# ----------------------------------------------------------------------------
def crf_rnn_forward(unary, xyz, mask, params, num_iters=NUM_ITERS,
                    kb_dtype=jnp.float32):
    B, N, H, W = unary.shape
    same_ga = params["same_gamma_alpha"]
    shared_beta = params["shared_beta"]
    potts = params["potts"]

    unary_f = unary.astype(jnp.float32)
    xyz_f = xyz.astype(jnp.float32)
    mask4 = mask if mask.ndim == 4 else mask[:, None]
    mask_f = mask4.astype(jnp.float32)

    # kb_dtype=jnp.bfloat16 halves the largest scratch and its load bytes
    # (worthwhile on v6e, near-mandatory on v7x at LiDAR W >= 1024); default
    # stays f32 to hold the tight tolerance on the sharp exp(-pd/(2*0.015^2)).
    kb_shape = (K_NB, H, W) if shared_beta else (K_NB, N, H, W)

    kernel = functools.partial(
        crf_rnn_kernel, H=H, W=W, num_classes=N, num_iters=num_iters,
        same_gamma_alpha=same_ga, shared_beta=shared_beta, potts=potts)

    smem = pl.BlockSpec(memory_space=pltpu.MemorySpace.SMEM)

    # Advisory cost / memory hints (review item): ~4 VALU ops per tap per class
    # per element, plus softmax / weighting / Potts, plus the kb precompute.
    flops_per_elem = num_iters * (N * (4 * K_NB + 12) + 10) + 12 * K_NB
    cost = pl.CostEstimate(
        flops=int(B * H * W * flops_per_elem),
        transcendentals=int(B * H * W * (K_NB + num_iters * (2 * N + 1))),
        bytes_accessed=int(B * H * W * 4 * (2 * N + 3 + 1)))
    plane_bytes = H * W * 4
    # double-buffered in/out blocks + kb scratch + compiler-temp headroom
    vmem_limit = int(min(100 * 2 ** 20,
                         max(32 * 2 ** 20,
                             plane_bytes * (2 * (2 * N + 4) + K_NB + 32))))

    # Grid: one batch element per step, "parallel" so megacore (v7x: 2 TCs) can
    # split the batch.
    # TODO(synk): for LiDAR-scale H*W (and B=1), add a row-tiled grid axis with
    # a num_iters*PH = 3-row halo (inputs via manual DMA windows, zero-fill
    # outside the image) to bound VMEM on v7x (64 MiB) and feed both TCs.
    out = pl.pallas_call(
        kernel,
        out_shape=jax.ShapeDtypeStruct((B, N, H, W), jnp.float32),
        grid_spec=pltpu.PrefetchScalarGridSpec(
            num_scalar_prefetch=0,
            grid=(B,),
            in_specs=[
                pl.BlockSpec((1, N, H, W), lambda b: (b, 0, 0, 0)),   # unary
                pl.BlockSpec((1, 3, H, W), lambda b: (b, 0, 0, 0)),   # xyz
                pl.BlockSpec((1, 1, H, W), lambda b: (b, 0, 0, 0)),   # mask
                smem,   # kernel_gamma taps      (K_NB, N)
                smem,   # kernel_alpha taps      (K_NB, N)
                smem,   # weight_smoothness      (N,)
                smem,   # weight_appearance      (N,)
                smem,   # 1 / (2 * theta_beta^2) (N,)
                smem,   # label compatibility    (N, N)
            ],
            out_specs=pl.BlockSpec((1, N, H, W), lambda b: (b, 0, 0, 0)),
            scratch_shapes=[pltpu.VMEM(kb_shape, kb_dtype)],          # kernel_beta
        ),
        compiler_params=pltpu.CompilerParams(
            dimension_semantics=("parallel",),
            vmem_limit_bytes=vmem_limit),
        cost_estimate=cost,
    )(unary_f, xyz_f, mask_f,
      params["kg"], params["ka"], params["ws"], params["wa"],
      params["itb"], params["lc"])
    return out


# ----------------------------------------------------------------------------
# Pure-JAX reference (direct transcription of the PyTorch forward)
# ----------------------------------------------------------------------------
def crf_rnn_reference(unary, xyz, mask, params, num_iters=NUM_ITERS):
    kg, ka = params["kg"], params["ka"]
    ws, wa = params["ws"], params["wa"]
    itb, lc = params["itb"], params["lc"]
    B, N, H, W = unary.shape
    mask4 = mask if mask.ndim == 4 else mask[:, None]

    def shift2d(x, dh, dw):
        xp = jnp.pad(x, ((0, 0), (0, 0), (PH, PH), (PW, PW)))
        return xp[:, :, PH + dh:PH + dh + H, PW + dw:PW + dw + W]

    kb = []
    for (dh, dw) in OFF_OFFSETS:
        xn = shift2d(xyz, dh, dw)
        pdist = jnp.sum((xn - xyz) ** 2, axis=1, keepdims=True)       # (B,1,H,W)
        kb.append(jnp.exp(-pdist * itb.reshape(1, N, 1, 1)))

    def conv_diag(Q, taps):
        out = jnp.zeros_like(Q)
        for k, (dh, dw) in enumerate(OFF_OFFSETS):
            out = out + taps[k].reshape(1, N, 1, 1) * shift2d(Q, dh, dw)
        return out

    Q = unary
    for _ in range(num_iters):
        Qs = jax.nn.softmax(Q, axis=1)
        k_smooth = conv_diag(Qs, kg)
        mQ = Qs * mask4
        exp_app = jnp.zeros_like(Qs)
        for k, (dh, dw) in enumerate(OFF_OFFSETS):
            exp_app = exp_app + shift2d(mQ, dh, dw) * kb[k]
        k_app = exp_app * mask4 * conv_diag(Qs, ka)
        weighted = (ws.reshape(1, N, 1, 1) * k_smooth
                    + wa.reshape(1, N, 1, 1) * k_app)
        pairwise = jnp.einsum('oc,bchw->bohw', lc, weighted)
        Q = unary - pairwise
    return Q


# ----------------------------------------------------------------------------
if __name__ == "__main__":
    # Small but lane-aligned shapes (W multiple of 128, H multiple of 8), in the
    # spirit of SqueezeSeg's LiDAR range images.
    B, N, H, W = 2, NUM_CLASSES, 16, 128

    key = jax.random.PRNGKey(0)
    k1, k2, k3 = jax.random.split(key, 3)

    unary = jax.random.normal(k1, (B, N, H, W), jnp.float32)

    # Smooth, small-scale xyz so the appearance (bilateral) term is non-trivial
    # relative to theta_beta = 0.015.
    hh, ww = jnp.meshgrid(jnp.arange(H, dtype=jnp.float32),
                          jnp.arange(W, dtype=jnp.float32), indexing="ij")
    base = jnp.stack([hh, ww, hh + ww], axis=0) * 0.005               # (3,H,W)
    xyz = base[None] + 0.002 * jax.random.normal(k2, (B, 3, H, W), jnp.float32)

    mask = (jax.random.uniform(k3, (B, H, W)) > 0.3).astype(jnp.float32)

    params = build_params()

    out = jax.block_until_ready(crf_rnn_forward(unary, xyz, mask, params))
    ref = crf_rnn_reference(unary, xyz, mask, params)

    err = float(jnp.max(jnp.abs(out - ref)))
    # tolerance budget: f32 reassociation only (softmax uses exact reciprocal)
    if not bool(jnp.all(jnp.isfinite(out))) or err > 1e-3:
        raise SystemExit(f"mismatch vs reference: max abs err = {err}")

    print("KERNEL_OK")
</pallas_src>

<mosaic_0001>
module attributes {stable_mosaic.version = 11 : i64} {
  func.func @crf_rnn_kernel(%arg0: i32, %arg1: memref<1x4x16x128xf32, #tpu.memory_space<vmem>>, %arg2: memref<1x3x16x128xf32, #tpu.memory_space<vmem>>, %arg3: memref<1x1x16x128xf32, #tpu.memory_space<vmem>>, %arg4: memref<14x4xf32, #tpu.memory_space<smem>>, %arg5: memref<14x4xf32, #tpu.memory_space<smem>>, %arg6: memref<4xf32, #tpu.memory_space<smem>>, %arg7: memref<4xf32, #tpu.memory_space<smem>>, %arg8: memref<4xf32, #tpu.memory_space<smem>>, %arg9: memref<4x4xf32, #tpu.memory_space<smem>>, %arg10: memref<1x4x16x128xf32, #tpu.memory_space<vmem>>, %arg11: memref<14x16x128xf32, #tpu.memory_space<vmem>>) attributes {dimension_semantics = [#tpu.dimension_semantics<parallel>], iteration_bounds = array<i64: 2>, scalar_prefetch = 0 : i64, scratch_operands = 1 : i64, tpu.core_type = #tpu.core_type<tc>, window_params = [{transform_indices = @transform_0, window_bounds = array<i64: 1, 4, 16, 128>}, {transform_indices = @transform_1, window_bounds = array<i64: 1, 3, 16, 128>}, {transform_indices = @transform_2, window_bounds = array<i64: 1, 1, 16, 128>}, {transform_indices = @transform_3, window_bounds = array<i64: 14, 4>}, {transform_indices = @transform_4, window_bounds = array<i64: 14, 4>}, {transform_indices = @transform_5, window_bounds = array<i64: 4>}, {transform_indices = @transform_6, window_bounds = array<i64: 4>}, {transform_indices = @transform_7, window_bounds = array<i64: 4>}, {transform_indices = @transform_8, window_bounds = array<i64: 4, 4>}, {transform_indices = @transform_9, window_bounds = array<i64: 1, 4, 16, 128>}]} {
    %0 = tpu.iota {dimensions = array<i32: 1>} : vector<16x128xi32>
    %c-2_i32 = arith.constant -2 : i32
    %1 = vector.broadcast %c-2_i32 : i32 to vector<16x128xi32>
    %2 = arith.addi %0, %1 : vector<16x128xi32>
    %c0_i32 = arith.constant 0 : i32
    %3 = vector.broadcast %c0_i32 : i32 to vector<16x128xi32>
    %4 = arith.cmpi sge, %2, %3 : vector<16x128xi32>
    %c-2_i32_0 = arith.constant -2 : i32
    %5 = vector.broadcast %c-2_i32_0 : i32 to vector<16x128xi32>
    %6 = arith.addi %0, %5 : vector<16x128xi32>
    %c128_i32 = arith.constant 128 : i32
    %7 = vector.broadcast %c128_i32 : i32 to vector<16x128xi32>
    %8 = arith.cmpi slt, %6, %7 : vector<16x128xi32>
    %9 = arith.andi %4, %8 : vector<16x128xi1>
    %10 = arith.extui %9 : vector<16x128xi1> to vector<16x128xi32>
    %11 = arith.sitofp %10 : vector<16x128xi32> to vector<16x128xf32>
    %c-1_i32 = arith.constant -1 : i32
    %12 = vector.broadcast %c-1_i32 : i32 to vector<16x128xi32>
    %13 = arith.addi %0, %12 : vector<16x128xi32>
    %c0_i32_1 = arith.constant 0 : i32
    %14 = vector.broadcast %c0_i32_1 : i32 to vector<16x128xi32>
    %15 = arith.cmpi sge, %13, %14 : vector<16x128xi32>
    %c-1_i32_2 = arith.constant -1 : i32
    %16 = vector.broadcast %c-1_i32_2 : i32 to vector<16x128xi32>
    %17 = arith.addi %0, %16 : vector<16x128xi32>
    %c128_i32_3 = arith.constant 128 : i32
    %18 = vector.broadcast %c128_i32_3 : i32 to vector<16x128xi32>
    %19 = arith.cmpi slt, %17, %18 : vector<16x128xi32>
    %20 = arith.andi %15, %19 : vector<16x128xi1>
    %21 = arith.extui %20 : vector<16x128xi1> to vector<16x128xi32>
    %22 = arith.sitofp %21 : vector<16x128xi32> to vector<16x128xf32>
    %c1_i32 = arith.constant 1 : i32
    %23 = vector.broadcast %c1_i32 : i32 to vector<16x128xi32>
    %24 = arith.addi %0, %23 : vector<16x128xi32>
    %c0_i32_4 = arith.constant 0 : i32
    %25 = vector.broadcast %c0_i32_4 : i32 to vector<16x128xi32>
    %26 = arith.cmpi sge, %24, %25 : vector<16x128xi32>
    %c1_i32_5 = arith.constant 1 : i32
    %27 = vector.broadcast %c1_i32_5 : i32 to vector<16x128xi32>
    %28 = arith.addi %0, %27 : vector<16x128xi32>
    %c128_i32_6 = arith.constant 128 : i32
    %29 = vector.broadcast %c128_i32_6 : i32 to vector<16x128xi32>
    %30 = arith.cmpi slt, %28, %29 : vector<16x128xi32>
    %31 = arith.andi %26, %30 : vector<16x128xi1>
    %32 = arith.extui %31 : vector<16x128xi1> to vector<16x128xi32>
    %33 = arith.sitofp %32 : vector<16x128xi32> to vector<16x128xf32>
    %c2_i32 = arith.constant 2 : i32
    %34 = vector.broadcast %c2_i32 : i32 to vector<16x128xi32>
    %35 = arith.addi %0, %34 : vector<16x128xi32>
    %c0_i32_7 = arith.constant 0 : i32
    %36 = vector.broadcast %c0_i32_7 : i32 to vector<16x128xi32>
    %37 = arith.cmpi sge, %35, %36 : vector<16x128xi32>
    %c2_i32_8 = arith.constant 2 : i32
    %38 = vector.broadcast %c2_i32_8 : i32 to vector<16x128xi32>
    %39 = arith.addi %0, %38 : vector<16x128xi32>
    %c128_i32_9 = arith.constant 128 : i32
    %40 = vector.broadcast %c128_i32_9 : i32 to vector<16x128xi32>
    %41 = arith.cmpi slt, %39, %40 : vector<16x128xi32>
    %42 = arith.andi %37, %41 : vector<16x128xi1>
    %43 = arith.extui %42 : vector<16x128xi1> to vector<16x128xi32>
    %44 = arith.sitofp %43 : vector<16x128xi32> to vector<16x128xf32>
    %cst = arith.constant 0.000000e+00 : f32
    %45 = vector.broadcast %cst : f32 to vector<1x128xf32>
    %c0 = arith.constant 0 : index
    %c0_10 = arith.constant 0 : index
    %c0_11 = arith.constant 0 : index
    %c0_12 = arith.constant 0 : index
    %46 = vector.load %arg2[%c0, %c0_10, %c0_11, %c0_12] : memref<1x3x16x128xf32, #tpu.memory_space<vmem>>, vector<1x1x16x128xf32>
    %47 = vector.shape_cast %46 : vector<1x1x16x128xf32> to vector<16x128xf32>
    %c0_13 = arith.constant 0 : index
    %c1 = arith.constant 1 : index
    %c0_14 = arith.constant 0 : index
    %c0_15 = arith.constant 0 : index
    %48 = vector.load %arg2[%c0_13, %c1, %c0_14, %c0_15] : memref<1x3x16x128xf32, #tpu.memory_space<vmem>>, vector<1x1x16x128xf32>
    %49 = vector.shape_cast %48 : vector<1x1x16x128xf32> to vector<16x128xf32>
    %c0_16 = arith.constant 0 : index
    %c2 = arith.constant 2 : index
    %c0_17 = arith.constant 0 : index
    %c0_18 = arith.constant 0 : index
    %50 = vector.load %arg2[%c0_16, %c2, %c0_17, %c0_18] : memref<1x3x16x128xf32, #tpu.memory_space<vmem>>, vector<1x1x16x128xf32>
    %51 = vector.shape_cast %50 : vector<1x1x16x128xf32> to vector<16x128xf32>
    %c0_19 = arith.constant 0 : index
    %c0_20 = arith.constant 0 : index
    %c0_21 = arith.constant 0 : index
    %c0_22 = arith.constant 0 : index
    %52 = vector.load %arg3[%c0_19, %c0_20, %c0_21, %c0_22] : memref<1x1x16x128xf32, #tpu.memory_space<vmem>>, vector<1x1x16x128xf32>
    %53 = vector.shape_cast %52 : vector<1x1x16x128xf32> to vector<16x128xf32>
    %c2_i32_23 = arith.constant 2 : i32
    %54 = tpu.dynamic_rotate %47 by %c2_i32_23 dim 1 : vector<16x128xf32>, i32 -> vector<16x128xf32>
    %55 = arith.mulf %54, %11 : vector<16x128xf32>
    %c2_i32_24 = arith.constant 2 : i32
    %56 = tpu.dynamic_rotate %49 by %c2_i32_24 dim 1 : vector<16x128xf32>, i32 -> vector<16x128xf32>
    %57 = arith.mulf %56, %11 : vector<16x128xf32>
    %c2_i32_25 = arith.constant 2 : i32
    %58 = tpu.dynamic_rotate %51 by %c2_i32_25 dim 1 : vector<16x128xf32>, i32 -> vector<16x128xf32>
    %59 = arith.mulf %58, %11 : vector<16x128xf32>
    %c1_i32_26 = arith.constant 1 : i32
    %60 = tpu.dynamic_rotate %47 by %c1_i32_26 dim 1 : vector<16x128xf32>, i32 -> vector<16x128xf32>
    %61 = arith.mulf %60, %22 : vector<16x128xf32>
    %c1_i32_27 = arith.constant 1 : i32
    %62 = tpu.dynamic_rotate %49 by %c1_i32_27 dim 1 : vector<16x128xf32>, i32 -> vector<16x128xf32>
    %63 = arith.mulf %62, %22 : vector<16x128xf32>
    %c1_i32_28 = arith.constant 1 : i32
    %64 = tpu.dynamic_rotate %51 by %c1_i32_28 dim 1 : vector<16x128xf32>, i32 -> vector<16x128xf32>
    %65 = arith.mulf %64, %22 : vector<16x128xf32>
    %c127_i32 = arith.constant 127 : i32
    %66 = tpu.dynamic_rotate %47 by %c127_i32 dim 1 : vector<16x128xf32>, i32 -> vector<16x128xf32>
    %67 = arith.mulf %66, %33 : vector<16x128xf32>
    %c127_i32_29 = arith.constant 127 : i32
    %68 = tpu.dynamic_rotate %49 by %c127_i32_29 dim 1 : vector<16x128xf32>, i32 -> vector<16x128xf32>
    %69 = arith.mulf %68, %33 : vector<16x128xf32>
    %c127_i32_30 = arith.constant 127 : i32
    %70 = tpu.dynamic_rotate %51 by %c127_i32_30 dim 1 : vector<16x128xf32>, i32 -> vector<16x128xf32>
    %71 = arith.mulf %70, %33 : vector<16x128xf32>
    %c126_i32 = arith.constant 126 : i32
    %72 = tpu.dynamic_rotate %47 by %c126_i32 dim 1 : vector<16x128xf32>, i32 -> vector<16x128xf32>
    %73 = arith.mulf %72, %44 : vector<16x128xf32>
    %c126_i32_31 = arith.constant 126 : i32
    %74 = tpu.dynamic_rotate %49 by %c126_i32_31 dim 1 : vector<16x128xf32>, i32 -> vector<16x128xf32>
    %75 = arith.mulf %74, %44 : vector<16x128xf32>
    %c126_i32_32 = arith.constant 126 : i32
    %76 = tpu.dynamic_rotate %51 by %c126_i32_32 dim 1 : vector<16x128xf32>, i32 -> vector<16x128xf32>
    %77 = arith.mulf %76, %44 : vector<16x128xf32>
    %c2_i32_33 = arith.constant 2 : i32
    %78 = tpu.dynamic_rotate %53 by %c2_i32_33 dim 1 : vector<16x128xf32>, i32 -> vector<16x128xf32>
    %79 = arith.mulf %78, %11 : vector<16x128xf32>
    %c1_i32_34 = arith.constant 1 : i32
    %80 = tpu.dynamic_rotate %53 by %c1_i32_34 dim 1 : vector<16x128xf32>, i32 -> vector<16x128xf32>
    %81 = arith.mulf %80, %22 : vector<16x128xf32>
    %c127_i32_35 = arith.constant 127 : i32
    %82 = tpu.dynamic_rotate %53 by %c127_i32_35 dim 1 : vector<16x128xf32>, i32 -> vector<16x128xf32>
    %83 = arith.mulf %82, %33 : vector<16x128xf32>
    %c126_i32_36 = arith.constant 126 : i32
    %84 = tpu.dynamic_rotate %53 by %c126_i32_36 dim 1 : vector<16x128xf32>, i32 -> vector<16x128xf32>
    %85 = arith.mulf %84, %44 : vector<16x128xf32>
    %c0_37 = arith.constant 0 : index
    %86 = memref.load %arg8[%c0_37] : memref<4xf32, #tpu.memory_space<smem>>
    %87 = vector.extract_strided_slice %79 {offsets = [0, 0], sizes = [15, 128], strides = [1, 1]} : vector<16x128xf32> to vector<15x128xf32>
    %88 = tpu.concatenate %45, %87 in 0 : vector<1x128xf32>, vector<15x128xf32> -> vector<16x128xf32>
    %cst_38 = arith.constant 0.000000e+00 : f32
    %89 = vector.broadcast %cst_38 : f32 to vector<16x128xf32>
    %90 = vector.extract_strided_slice %55 {offsets = [0, 0], sizes = [15, 128], strides = [1, 1]} : vector<16x128xf32> to vector<15x128xf32>
    %91 = tpu.concatenate %45, %90 in 0 : vector<1x128xf32>, vector<15x128xf32> -> vector<16x128xf32>
    %92 = arith.subf %91, %47 : vector<16x128xf32>
    %93 = arith.mulf %92, %92 : vector<16x128xf32>
    %94 = arith.addf %89, %93 : vector<16x128xf32>
    %95 = vector.extract_strided_slice %57 {offsets = [0, 0], sizes = [15, 128], strides = [1, 1]} : vector<16x128xf32> to vector<15x128xf32>
    %96 = tpu.concatenate %45, %95 in 0 : vector<1x128xf32>, vector<15x128xf32> -> vector<16x128xf32>
    %97 = arith.subf %96, %49 : vector<16x128xf32>
    %98 = arith.mulf %97, %97 : vector<16x128xf32>
    %99 = arith.addf %94, %98 : vector<16x128xf32>
    %100 = vector.extract_strided_slice %59 {offsets = [0, 0], sizes = [15, 128], strides = [1, 1]} : vector<16x128xf32> to vector<15x128xf32>
    %101 = tpu.concatenate %45, %100 in 0 : vector<1x128xf32>, vector<15x128xf32> -> vector<16x128xf32>
    %102 = arith.subf %101, %51 : vector<16x128xf32>
    %103 = arith.mulf %102, %102 : vector<16x128xf32>
    %104 = arith.addf %99, %103 : vector<16x128xf32>
    %cst_39 = arith.constant 0.000000e+00 : f32
    %105 = vector.broadcast %cst_39 : f32 to vector<16x128xf32>
    %106 = arith.subf %105, %104 : vector<16x128xf32>
    %107 = vector.broadcast %86 : f32 to vector<16x128xf32>
    %108 = arith.mulf %106, %107 : vector<16x128xf32>
    %109 = math.exp %108 : vector<16x128xf32>
    %110 = arith.mulf %109, %88 : vector<16x128xf32>
    %c0_40 = arith.constant 0 : index
    %c0_41 = arith.constant 0 : index
    %c0_42 = arith.constant 0 : index
    %111 = vector.load %arg11[%c0_40, %c0_41, %c0_42] : memref<14x16x128xf32, #tpu.memory_space<vmem>>, vector<1x16x128xf32>
    %112 = vector.shape_cast %111 : vector<1x16x128xf32> to vector<16x128xf32>
    %113 = vector.shape_cast %110 : vector<16x128xf32> to vector<1x16x128xf32>
    tpu.vector_store %arg11[%c0_40, %c0_41, %c0_42], %113 {strides = array<i32>} : memref<14x16x128xf32, #tpu.memory_space<vmem>>, vector<1x16x128xf32>,
    %114 = vector.extract_strided_slice %81 {offsets = [0, 0], sizes = [15, 128], strides = [1, 1]} : vector<16x128xf32> to vector<15x128xf32>
    %115 = tpu.concatenate %45, %114 in 0 : vector<1x128xf32>, vector<15x128xf32> -> vector<16x128xf32>
    %cst_43 = arith.constant 0.000000e+00 : f32
    %116 = vector.broadcast %cst_43 : f32 to vector<16x128xf32>
    %117 = vector.extract_strided_slice %61 {offsets = [0, 0], sizes = [15, 128], strides = [1, 1]} : vector<16x128xf32> to vector<15x128xf32>
    %118 = tpu.concatenate %45, %117 in 0 : vector<1x128xf32>, vector<15x128xf32> -> vector<16x128xf32>
    %119 = arith.subf %118, %47 : vector<16x128xf32>
    %120 = arith.mulf %119, %119 : vector<16x128xf32>
    %121 = arith.addf %116, %120 : vector<16x128xf32>
    %122 = vector.extract_strided_slice %63 {offsets = [0, 0], sizes = [15, 128], strides = [1, 1]} : vector<16x128xf32> to vector<15x128xf32>
    %123 = tpu.concatenate %45, %122 in 0 : vector<1x128xf32>, vector<15x128xf32> -> vector<16x128xf32>
    %124 = arith.subf %123, %49 : vector<16x128xf32>
    %125 = arith.mulf %124, %124 : vector<16x128xf32>
    %126 = arith.addf %121, %125 : vector<16x128xf32>
    %127 = vector.extract_strided_slice %65 {offsets = [0, 0], sizes = [15, 128], strides = [1, 1]} : vector<16x128xf32> to vector<15x128xf32>
    %128 = tpu.concatenate %45, %127 in 0 : vector<1x128xf32>, vector<15x128xf32> -> vector<16x128xf32>
    %129 = arith.subf %128, %51 : vector<16x128xf32>
    %130 = arith.mulf %129, %129 : vector<16x128xf32>
    %131 = arith.addf %126, %130 : vector<16x128xf32>
    %cst_44 = arith.constant 0.000000e+00 : f32
    %132 = vector.broadcast %cst_44 : f32 to vector<16x128xf32>
    %133 = arith.subf %132, %131 : vector<16x128xf32>
    %134 = vector.broadcast %86 : f32 to vector<16x128xf32>
    %135 = arith.mulf %133, %134 : vector<16x128xf32>
    %136 = math.exp %135 : vector<16x128xf32>
    %137 = arith.mulf %136, %115 : vector<16x128xf32>
    %c1_45 = arith.constant 1 : index
    %c0_46 = arith.constant 0 : index
    %c0_47 = arith.constant 0 : index
    %138 = vector.load %arg11[%c1_45, %c0_46, %c0_47] : memref<14x16x128xf32, #tpu.memory_space<vmem>>, vector<1x16x128xf32>
    %139 = vector.shape_cast %138 : vector<1x16x128xf32> to vector<16x128xf32>
    %140 = vector.shape_cast %137 : vector<16x128xf32> to vector<1x16x128xf32>
    tpu.vector_store %arg11[%c1_45, %c0_46, %c0_47], %140 {strides = array<i32>} : memref<14x16x128xf32, #tpu.memory_space<vmem>>, vector<1x16x128xf32>,
    %141 = vector.extract_strided_slice %53 {offsets = [0, 0], sizes = [15, 128], strides = [1, 1]} : vector<16x128xf32> to vector<15x128xf32>
    %142 = tpu.concatenate %45, %141 in 0 : vector<1x128xf32>, vector<15x128xf32> -> vector<16x128xf32>
    %cst_48 = arith.constant 0.000000e+00 : f32
    %143 = vector.broadcast %cst_48 : f32 to vector<16x128xf32>
    %144 = vector.extract_strided_slice %47 {offsets = [0, 0], sizes = [15, 128], strides = [1, 1]} : vector<16x128xf32> to vector<15x128xf32>
    %145 = tpu.concatenate %45, %144 in 0 : vector<1x128xf32>, vector<15x128xf32> -> vector<16x128xf32>
    %146 = arith.subf %145, %47 : vector<16x128xf32>
    %147 = arith.mulf %146, %146 : vector<16x128xf32>
    %148 = arith.addf %143, %147 : vector<16x128xf32>
    %149 = vector.extract_strided_slice %49 {offsets = [0, 0], sizes = [15, 128], strides = [1, 1]} : vector<16x128xf32> to vector<15x128xf32>
    %150 = tpu.concatenate %45, %149 in 0 : vector<1x128xf32>, vector<15x128xf32> -> vector<16x128xf32>
    %151 = arith.subf %150, %49 : vector<16x128xf32>
    %152 = arith.mulf %151, %151 : vector<16x128xf32>
    %153 = arith.addf %148, %152 : vector<16x128xf32>
    %154 = vector.extract_strided_slice %51 {offsets = [0, 0], sizes = [15, 128], strides = [1, 1]} : vector<16x128xf32> to vector<15x128xf32>
    %155 = tpu.concatenate %45, %154 in 0 : vector<1x128xf32>, vector<15x128xf32> -> vector<16x128xf32>
    %156 = arith.subf %155, %51 : vector<16x128xf32>
    %157 = arith.mulf %156, %156 : vector<16x128xf32>
    %158 = arith.addf %153, %157 : vector<16x128xf32>
    %cst_49 = arith.constant 0.000000e+00 : f32
    %159 = vector.broadcast %cst_49 : f32 to vector<16x128xf32>
    %160 = arith.subf %159, %158 : vector<16x128xf32>
    %161 = vector.broadcast %86 : f32 to vector<16x128xf32>
    %162 = arith.mulf %160, %161 : vector<16x128xf32>
    %163 = math.exp %162 : vector<16x128xf32>
    %164 = arith.mulf %163, %142 : vector<16x128xf32>
    %c2_50 = arith.constant 2 : index
    %c0_51 = arith.constant 0 : index
    %c0_52 = arith.constant 0 : index
    %165 = vector.load %arg11[%c2_50, %c0_51, %c0_52] : memref<14x16x128xf32, #tpu.memory_space<vmem>>, vector<1x16x128xf32>
    %166 = vector.shape_cast %165 : vector<1x16x128xf32> to vector<16x128xf32>
    %167 = vector.shape_cast %164 : vector<16x128xf32> to vector<1x16x128xf32>
    tpu.vector_store %arg11[%c2_50, %c0_51, %c0_52], %167 {strides = array<i32>} : memref<14x16x128xf32, #tpu.memory_space<vmem>>, vector<1x16x128xf32>,
    %168 = vector.extract_strided_slice %83 {offsets = [0, 0], sizes = [15, 128], strides = [1, 1]} : vector<16x128xf32> to vector<15x128xf32>
    %169 = tpu.concatenate %45, %168 in 0 : vector<1x128xf32>, vector<15x128xf32> -> vector<16x128xf32>
    %cst_53 = arith.constant 0.000000e+00 : f32
    %170 = vector.broadcast %cst_53 : f32 to vector<16x128xf32>
    %171 = vector.extract_strided_slice %67 {offsets = [0, 0], sizes = [15, 128], strides = [1, 1]} : vector<16x128xf32> to vector<15x128xf32>
    %172 = tpu.concatenate %45, %171 in 0 : vector<1x128xf32>, vector<15x128xf32> -> vector<16x128xf32>
    %173 = arith.subf %172, %47 : vector<16x128xf32>
    %174 = arith.mulf %173, %173 : vector<16x128xf32>
    %175 = arith.addf %170, %174 : vector<16x128xf32>
    %176 = vector.extract_strided_slice %69 {offsets = [0, 0], sizes = [15, 128], strides = [1, 1]} : vector<16x128xf32> to vector<15x128xf32>
    %177 = tpu.concatenate %45, %176 in 0 : vector<1x128xf32>, vector<15x128xf32> -> vector<16x128xf32>
    %178 = arith.subf %177, %49 : vector<16x128xf32>
    %179 = arith.mulf %178, %178 : vector<16x128xf32>
    %180 = arith.addf %175, %179 : vector<16x128xf32>
    %181 = vector.extract_strided_slice %71 {offsets = [0, 0], sizes = [15, 128], strides = [1, 1]} : vector<16x128xf32> to vector<15x128xf32>
    %182 = tpu.concatenate %45, %181 in 0 : vector<1x128xf32>, vector<15x128xf32> -> vector<16x128xf32>
    %183 = arith.subf %182, %51 : vector<16x128xf32>
    %184 = arith.mulf %183, %183 : vector<16x128xf32>
    %185 = arith.addf %180, %184 : vector<16x128xf32>
    %cst_54 = arith.constant 0.000000e+00 : f32
    %186 = vector.broadcast %cst_54 : f32 to vector<16x128xf32>
    %187 = arith.subf %186, %185 : vector<16x128xf32>
    %188 = vector.broadcast %86 : f32 to vector<16x128xf32>
    %189 = arith.mulf %187, %188 : vector<16x128xf32>
    %190 = math.exp %189 : vector<16x128xf32>
    %191 = arith.mulf %190, %169 : vector<16x128xf32>
    %c3 = arith.constant 3 : index
    %c0_55 = arith.constant 0 : index
    %c0_56 = arith.constant 0 : index
    %192 = vector.load %arg11[%c3, %c0_55, %c0_56] : memref<14x16x128xf32, #tpu.memory_space<vmem>>, vector<1x16x128xf32>
    %193 = vector.shape_cast %192 : vector<1x16x128xf32> to vector<16x128xf32>
    %194 = vector.shape_cast %191 : vector<16x128xf32> to vector<1x16x128xf32>
    tpu.vector_store %arg11[%c3, %c0_55, %c0_56], %194 {strides = array<i32>} : memref<14x16x128xf32, #tpu.memory_space<vmem>>, vector<1x16x128xf32>,
    %195 = vector.extract_strided_slice %85 {offsets = [0, 0], sizes = [15, 128], strides = [1, 1]} : vector<16x128xf32> to vector<15x128xf32>
    %196 = tpu.concatenate %45, %195 in 0 : vector<1x128xf32>, vector<15x128xf32> -> vector<16x128xf32>
    %cst_57 = arith.constant 0.000000e+00 : f32
    %197 = vector.broadcast %cst_57 : f32 to vector<16x128xf32>
    %198 = vector.extract_strided_slice %73 {offsets = [0, 0], sizes = [15, 128], strides = [1, 1]} : vector<16x128xf32> to vector<15x128xf32>
    %199 = tpu.concatenate %45, %198 in 0 : vector<1x128xf32>, vector<15x128xf32> -> vector<16x128xf32>
    %200 = arith.subf %199, %47 : vector<16x128xf32>
    %201 = arith.mulf %200, %200 : vector<16x128xf32>
    %202 = arith.addf %197, %201 : vector<16x128xf32>
    %203 = vector.extract_strided_slice %75 {offsets = [0, 0], sizes = [15, 128], strides = [1, 1]} : vector<16x128xf32> to vector<15x128xf32>
    %204 = tpu.concatenate %45, %203 in 0 : vector<1x128xf32>, vector<15x128xf32> -> vector<16x128xf32>
    %205 = arith.subf %204, %49 : vector<16x128xf32>
    %206 = arith.mulf %205, %205 : vector<16x128xf32>
    %207 = arith.addf %202, %206 : vector<16x128xf32>
    %208 = vector.extract_strided_slice %77 {offsets = [0, 0], sizes = [15, 128], strides = [1, 1]} : vector<16x128xf32> to vector<15x128xf32>
    %209 = tpu.concatenate %45, %208 in 0 : vector<1x128xf32>, vector<15x128xf32> -> vector<16x128xf32>
    %210 = arith.subf %209, %51 : vector<16x128xf32>
    %211 = arith.mulf %210, %210 : vector<16x128xf32>
    %212 = arith.addf %207, %211 : vector<16x128xf32>
    %cst_58 = arith.constant 0.000000e+00 : f32
    %213 = vector.broadcast %cst_58 : f32 to vector<16x128xf32>
    %214 = arith.subf %213, %212 : vector<16x128xf32>
    %215 = vector.broadcast %86 : f32 to vector<16x128xf32>
    %216 = arith.mulf %214, %215 : vector<16x128xf32>
    %217 = math.exp %216 : vector<16x128xf32>
    %218 = arith.mulf %217, %196 : vector<16x128xf32>
    %c4 = arith.constant 4 : index
    %c0_59 = arith.constant 0 : index
    %c0_60 = arith.constant 0 : index
    %219 = vector.load %arg11[%c4, %c0_59, %c0_60] : memref<14x16x128xf32, #tpu.memory_space<vmem>>, vector<1x16x128xf32>
    %220 = vector.shape_cast %219 : vector<1x16x128xf32> to vector<16x128xf32>
    %221 = vector.shape_cast %218 : vector<16x128xf32> to vector<1x16x128xf32>
    tpu.vector_store %arg11[%c4, %c0_59, %c0_60], %221 {strides = array<i32>} : memref<14x16x128xf32, #tpu.memory_space<vmem>>, vector<1x16x128xf32>,
    %cst_61 = arith.constant 0.000000e+00 : f32
    %222 = vector.broadcast %cst_61 : f32 to vector<16x128xf32>
    %223 = arith.subf %55, %47 : vector<16x128xf32>
    %224 = arith.mulf %223, %223 : vector<16x128xf32>
    %225 = arith.addf %222, %224 : vector<16x128xf32>
    %226 = arith.subf %57, %49 : vector<16x128xf32>
    %227 = arith.mulf %226, %226 : vector<16x128xf32>
    %228 = arith.addf %225, %227 : vector<16x128xf32>
    %229 = arith.subf %59, %51 : vector<16x128xf32>
    %230 = arith.mulf %229, %229 : vector<16x128xf32>
    %231 = arith.addf %228, %230 : vector<16x128xf32>
    %cst_62 = arith.constant 0.000000e+00 : f32
    %232 = vector.broadcast %cst_62 : f32 to vector<16x128xf32>
    %233 = arith.subf %232, %231 : vector<16x128xf32>
    %234 = vector.broadcast %86 : f32 to vector<16x128xf32>
    %235 = arith.mulf %233, %234 : vector<16x128xf32>
    %236 = math.exp %235 : vector<16x128xf32>
    %237 = arith.mulf %236, %79 : vector<16x128xf32>
    %c5 = arith.constant 5 : index
    %c0_63 = arith.constant 0 : index
    %c0_64 = arith.constant 0 : index
    %238 = vector.load %arg11[%c5, %c0_63, %c0_64] : memref<14x16x128xf32, #tpu.memory_space<vmem>>, vector<1x16x128xf32>
    %239 = vector.shape_cast %238 : vector<1x16x128xf32> to vector<16x128xf32>
    %240 = vector.shape_cast %237 : vector<16x128xf32> to vector<1x16x128xf32>
    tpu.vector_store %arg11[%c5, %c0_63, %c0_64], %240 {strides = array<i32>} : memref<14x16x128xf32, #tpu.memory_space<vmem>>, vector<1x16x128xf32>,
    %cst_65 = arith.constant 0.000000e+00 : f32
    %241 = vector.broadcast %cst_65 : f32 to vector<16x128xf32>
    %242 = arith.subf %61, %47 : vector<16x128xf32>
    %243 = arith.mulf %242, %242 : vector<16x128xf32>
    %244 = arith.addf %241, %243 : vector<16x128xf32>
    %245 = arith.subf %63, %49 : vector<16x128xf32>
    %246 = arith.mulf %245, %245 : vector<16x128xf32>
    %247 = arith.addf %244, %246 : vector<16x128xf32>
    %248 = arith.subf %65, %51 : vector<16x128xf32>
    %249 = arith.mulf %248, %248 : vector<16x128xf32>
    %250 = arith.addf %247, %249 : vector<16x128xf32>
    %cst_66 = arith.constant 0.000000e+00 : f32
    %251 = vector.broadcast %cst_66 : f32 to vector<16x128xf32>
    %252 = arith.subf %251, %250 : vector<16x128xf32>
    %253 = vector.broadcast %86 : f32 to vector<16x128xf32>
    %254 = arith.mulf %252, %253 : vector<16x128xf32>
    %255 = math.exp %254 : vector<16x128xf32>
    %256 = arith.mulf %255, %81 : vector<16x128xf32>
    %c6 = arith.constant 6 : index
    %c0_67 = arith.constant 0 : index
    %c0_68 = arith.constant 0 : index
    %257 = vector.load %arg11[%c6, %c0_67, %c0_68] : memref<14x16x128xf32, #tpu.memory_space<vmem>>, vector<1x16x128xf32>
    %258 = vector.shape_cast %257 : vector<1x16x128xf32> to vector<16x128xf32>
    %259 = vector.shape_cast %256 : vector<16x128xf32> to vector<1x16x128xf32>
    tpu.vector_store %arg11[%c6, %c0_67, %c0_68], %259 {strides = array<i32>} : memref<14x16x128xf32, #tpu.memory_space<vmem>>, vector<1x16x128xf32>,
    %cst_69 = arith.constant 0.000000e+00 : f32
    %260 = vector.broadcast %cst_69 : f32 to vector<16x128xf32>
    %261 = arith.subf %67, %47 : vector<16x128xf32>
    %262 = arith.mulf %261, %261 : vector<16x128xf32>
    %263 = arith.addf %260, %262 : vector<16x128xf32>
    %264 = arith.subf %69, %49 : vector<16x128xf32>
    %265 = arith.mulf %264, %264 : vector<16x128xf32>
    %266 = arith.addf %263, %265 : vector<16x128xf32>
    %267 = arith.subf %71, %51 : vector<16x128xf32>
    %268 = arith.mulf %267, %267 : vector<16x128xf32>
    %269 = arith.addf %266, %268 : vector<16x128xf32>
    %cst_70 = arith.constant 0.000000e+00 : f32
    %270 = vector.broadcast %cst_70 : f32 to vector<16x128xf32>
    %271 = arith.subf %270, %269 : vector<16x128xf32>
    %272 = vector.broadcast %86 : f32 to vector<16x128xf32>
    %273 = arith.mulf %271, %272 : vector<16x128xf32>
    %274 = math.exp %273 : vector<16x128xf32>
    %275 = arith.mulf %274, %83 : vector<16x128xf32>
    %c7 = arith.constant 7 : index
    %c0_71 = arith.constant 0 : index
    %c0_72 = arith.constant 0 : index
    %276 = vector.load %arg11[%c7, %c0_71, %c0_72] : memref<14x16x128xf32, #tpu.memory_space<vmem>>, vector<1x16x128xf32>
    %277 = vector.shape_cast %276 : vector<1x16x128xf32> to vector<16x128xf32>
    %278 = vector.shape_cast %275 : vector<16x128xf32> to vector<1x16x128xf32>
    tpu.vector_store %arg11[%c7, %c0_71, %c0_72], %278 {strides = array<i32>} : memref<14x16x128xf32, #tpu.memory_space<vmem>>, vector<1x16x128xf32>,
    %cst_73 = arith.constant 0.000000e+00 : f32
    %279 = vector.broadcast %cst_73 : f32 to vector<16x128xf32>
    %280 = arith.subf %73, %47 : vector<16x128xf32>
    %281 = arith.mulf %280, %280 : vector<16x128xf32>
    %282 = arith.addf %279, %281 : vector<16x128xf32>
    %283 = arith.subf %75, %49 : vector<16x128xf32>
    %284 = arith.mulf %283, %283 : vector<16x128xf32>
    %285 = arith.addf %282, %284 : vector<16x128xf32>
    %286 = arith.subf %77, %51 : vector<16x128xf32>
    %287 = arith.mulf %286, %286 : vector<16x128xf32>
    %288 = arith.addf %285, %287 : vector<16x128xf32>
    %cst_74 = arith.constant 0.000000e+00 : f32
    %289 = vector.broadcast %cst_74 : f32 to vector<16x128xf32>
    %290 = arith.subf %289, %288 : vector<16x128xf32>
    %291 = vector.broadcast %86 : f32 to vector<16x128xf32>
    %292 = arith.mulf %290, %291 : vector<16x128xf32>
    %293 = math.exp %292 : vector<16x128xf32>
    %294 = arith.mulf %293, %85 : vector<16x128xf32>
    %c8 = arith.constant 8 : index
    %c0_75 = arith.constant 0 : index
    %c0_76 = arith.constant 0 : index
    %295 = vector.load %arg11[%c8, %c0_75, %c0_76] : memref<14x16x128xf32, #tpu.memory_space<vmem>>, vector<1x16x128xf32>
    %296 = vector.shape_cast %295 : vector<1x16x128xf32> to vector<16x128xf32>
    %297 = vector.shape_cast %294 : vector<16x128xf32> to vector<1x16x128xf32>
    tpu.vector_store %arg11[%c8, %c0_75, %c0_76], %297 {strides = array<i32>} : memref<14x16x128xf32, #tpu.memory_space<vmem>>, vector<1x16x128xf32>,
    %298 = vector.extract_strided_slice %79 {offsets = [1, 0], sizes = [15, 128], strides = [1, 1]} : vector<16x128xf32> to vector<15x128xf32>
    %299 = tpu.concatenate %298, %45 in 0 : vector<15x128xf32>, vector<1x128xf32> -> vector<16x128xf32>
    %cst_77 = arith.constant 0.000000e+00 : f32
    %300 = vector.broadcast %cst_77 : f32 to vector<16x128xf32>
    %301 = vector.extract_strided_slice %55 {offsets = [1, 0], sizes = [15, 128], strides = [1, 1]} : vector<16x128xf32> to vector<15x128xf32>
    %302 = tpu.concatenate %301, %45 in 0 : vector<15x128xf32>, vector<1x128xf32> -> vector<16x128xf32>
    %303 = arith.subf %302, %47 : vector<16x128xf32>
    %304 = arith.mulf %303, %303 : vector<16x128xf32>
    %305 = arith.addf %300, %304 : vector<16x128xf32>
    %306 = vector.extract_strided_slice %57 {offsets = [1, 0], sizes = [15, 128], strides = [1, 1]} : vector<16x128xf32> to vector<15x128xf32>
    %307 = tpu.concatenate %306, %45 in 0 : vector<15x128xf32>, vector<1x128xf32> -> vector<16x128xf32>
    %308 = arith.subf %307, %49 : vector<16x128xf32>
    %309 = arith.mulf %308, %308 : vector<16x128xf32>
    %310 = arith.addf %305, %309 : vector<16x128xf32>
    %311 = vector.extract_strided_slice %59 {offsets = [1, 0], sizes = [15, 128], strides = [1, 1]} : vector<16x128xf32> to vector<15x128xf32>
    %312 = tpu.concatenate %311, %45 in 0 : vector<15x128xf32>, vector<1x128xf32> -> vector<16x128xf32>
    %313 = arith.subf %312, %51 : vector<16x128xf32>
    %314 = arith.mulf %313, %313 : vector<16x128xf32>
    %315 = arith.addf %310, %314 : vector<16x128xf32>
    %cst_78 = arith.constant 0.000000e+00 : f32
    %316 = vector.broadcast %cst_78 : f32 to vector<16x128xf32>
    %317 = arith.subf %316, %315 : vector<16x128xf32>
    %318 = vector.broadcast %86 : f32 to vector<16x128xf32>
    %319 = arith.mulf %317, %318 : vector<16x128xf32>
    %320 = math.exp %319 : vector<16x128xf32>
    %321 = arith.mulf %320, %299 : vector<16x128xf32>
    %c9 = arith.constant 9 : index
    %c0_79 = arith.constant 0 : index
    %c0_80 = arith.constant 0 : index
    %322 = vector.load %arg11[%c9, %c0_79, %c0_80] : memref<14x16x128xf32, #tpu.memory_space<vmem>>, vector<1x16x128xf32>
    %323 = vector.shape_cast %322 : vector<1x16x128xf32> to vector<16x128xf32>
    %324 = vector.shape_cast %321 : vector<16x128xf32> to vector<1x16x128xf32>
    tpu.vector_store %arg11[%c9, %c0_79, %c0_80], %324 {strides = array<i32>} : memref<14x16x128xf32, #tpu.memory_space<vmem>>, vector<1x16x128xf32>,
    %325 = vector.extract_strided_slice %81 {offsets = [1, 0], sizes = [15, 128], strides = [1, 1]} : vector<16x128xf32> to vector<15x128xf32>
    %326 = tpu.concatenate %325, %45 in 0 : vector<15x128xf32>, vector<1x128xf32> -> vector<16x128xf32>
    %cst_81 = arith.constant 0.000000e+00 : f32
    %327 = vector.broadcast %cst_81 : f32 to vector<16x128xf32>
    %328 = vector.extract_strided_slice %61 {offsets = [1, 0], sizes = [15, 128], strides = [1, 1]} : vector<16x128xf32> to vector<15x128xf32>
    %329 = tpu.concatenate %328, %45 in 0 : vector<15x128xf32>, vector<1x128xf32> -> vector<16x128xf32>
    %330 = arith.subf %329, %47 : vector<16x128xf32>
    %331 = arith.mulf %330, %330 : vector<16x128xf32>
    %332 = arith.addf %327, %331 : vector<16x128xf32>
    %333 = vector.extract_strided_slice %63 {offsets = [1, 0], sizes = [15, 128], strides = [1, 1]} : vector<16x128xf32> to vector<15x128xf32>
    %334 = tpu.concatenate %333, %45 in 0 : vector<15x128xf32>, vector<1x128xf32> -> vector<16x128xf32>
    %335 = arith.subf %334, %49 : vector<16x128xf32>
    %336 = arith.mulf %335, %335 : vector<16x128xf32>
    %337 = arith.addf %332, %336 : vector<16x128xf32>
    %338 = vector.extract_strided_slice %65 {offsets = [1, 0], sizes = [15, 128], strides = [1, 1]} : vector<16x128xf32> to vector<15x128xf32>
    %339 = tpu.concatenate %338, %45 in 0 : vector<15x128xf32>, vector<1x128xf32> -> vector<16x128xf32>
    %340 = arith.subf %339, %51 : vector<16x128xf32>
    %341 = arith.mulf %340, %340 : vector<16x128xf32>
    %342 = arith.addf %337, %341 : vector<16x128xf32>
    %cst_82 = arith.constant 0.000000e+00 : f32
    %343 = vector.broadcast %cst_82 : f32 to vector<16x128xf32>
    %344 = arith.subf %343, %342 : vector<16x128xf32>
    %345 = vector.broadcast %86 : f32 to vector<16x128xf32>
    %346 = arith.mulf %344, %345 : vector<16x128xf32>
    %347 = math.exp %346 : vector<16x128xf32>
    %348 = arith.mulf %347, %326 : vector<16x128xf32>
    %c10 = arith.constant 10 : index
    %c0_83 = arith.constant 0 : index
    %c0_84 = arith.constant 0 : index
    %349 = vector.load %arg11[%c10, %c0_83, %c0_84] : memref<14x16x128xf32, #tpu.memory_space<vmem>>, vector<1x16x128xf32>
    %350 = vector.shape_cast %349 : vector<1x16x128xf32> to vector<16x128xf32>
    %351 = vector.shape_cast %348 : vector<16x128xf32> to vector<1x16x128xf32>
    tpu.vector_store %arg11[%c10, %c0_83, %c0_84], %351 {strides = array<i32>} : memref<14x16x128xf32, #tpu.memory_space<vmem>>, vector<1x16x128xf32>,
    %352 = vector.extract_strided_slice %53 {offsets = [1, 0], sizes = [15, 128], strides = [1, 1]} : vector<16x128xf32> to vector<15x128xf32>
    %353 = tpu.concatenate %352, %45 in 0 : vector<15x128xf32>, vector<1x128xf32> -> vector<16x128xf32>
    %cst_85 = arith.constant 0.000000e+00 : f32
    %354 = vector.broadcast %cst_85 : f32 to vector<16x128xf32>
    %355 = vector.extract_strided_slice %47 {offsets = [1, 0], sizes = [15, 128], strides = [1, 1]} : vector<16x128xf32> to vector<15x128xf32>
    %356 = tpu.concatenate %355, %45 in 0 : vector<15x128xf32>, vector<1x128xf32> -> vector<16x128xf32>
    %357 = arith.subf %356, %47 : vector<16x128xf32>
    %358 = arith.mulf %357, %357 : vector<16x128xf32>
    %359 = arith.addf %354, %358 : vector<16x128xf32>
    %360 = vector.extract_strided_slice %49 {offsets = [1, 0], sizes = [15, 128], strides = [1, 1]} : vector<16x128xf32> to vector<15x128xf32>
    %361 = tpu.concatenate %360, %45 in 0 : vector<15x128xf32>, vector<1x128xf32> -> vector<16x128xf32>
    %362 = arith.subf %361, %49 : vector<16x128xf32>
    %363 = arith.mulf %362, %362 : vector<16x128xf32>
    %364 = arith.addf %359, %363 : vector<16x128xf32>
    %365 = vector.extract_strided_slice %51 {offsets = [1, 0], sizes = [15, 128], strides = [1, 1]} : vector<16x128xf32> to vector<15x128xf32>
    %366 = tpu.concatenate %365, %45 in 0 : vector<15x128xf32>, vector<1x128xf32> -> vector<16x128xf32>
    %367 = arith.subf %366, %51 : vector<16x128xf32>
    %368 = arith.mulf %367, %367 : vector<16x128xf32>
    %369 = arith.addf %364, %368 : vector<16x128xf32>
    %cst_86 = arith.constant 0.000000e+00 : f32
    %370 = vector.broadcast %cst_86 : f32 to vector<16x128xf32>
    %371 = arith.subf %370, %369 : vector<16x128xf32>
    %372 = vector.broadcast %86 : f32 to vector<16x128xf32>
    %373 = arith.mulf %371, %372 : vector<16x128xf32>
    %374 = math.exp %373 : vector<16x128xf32>
    %375 = arith.mulf %374, %353 : vector<16x128xf32>
    %c11 = arith.constant 11 : index
    %c0_87 = arith.constant 0 : index
    %c0_88 = arith.constant 0 : index
    %376 = vector.load %arg11[%c11, %c0_87, %c0_88] : memref<14x16x128xf32, #tpu.memory_space<vmem>>, vector<1x16x128xf32>
    %377 = vector.shape_cast %376 : vector<1x16x128xf32> to vector<16x128xf32>
    %378 = vector.shape_cast %375 : vector<16x128xf32> to vector<1x16x128xf32>
    tpu.vector_store %arg11[%c11, %c0_87, %c0_88], %378 {strides = array<i32>} : memref<14x16x128xf32, #tpu.memory_space<vmem>>, vector<1x16x128xf32>,
    %379 = vector.extract_strided_slice %83 {offsets = [1, 0], sizes = [15, 128], strides = [1, 1]} : vector<16x128xf32> to vector<15x128xf32>
    %380 = tpu.concatenate %379, %45 in 0 : vector<15x128xf32>, vector<1x128xf32> -> vector<16x128xf32>
    %cst_89 = arith.constant 0.000000e+00 : f32
    %381 = vector.broadcast %cst_89 : f32 to vector<16x128xf32>
    %382 = vector.extract_strided_slice %67 {offsets = [1, 0], sizes = [15, 128], strides = [1, 1]} : vector<16x128xf32> to vector<15x128xf32>
    %383 = tpu.concatenate %382, %45 in 0 : vector<15x128xf32>, vector<1x128xf32> -> vector<16x128xf32>
    %384 = arith.subf %383, %47 : vector<16x128xf32>
    %385 = arith.mulf %384, %384 : vector<16x128xf32>
    %386 = arith.addf %381, %385 : vector<16x128xf32>
    %387 = vector.extract_strided_slice %69 {offsets = [1, 0], sizes = [15, 128], strides = [1, 1]} : vector<16x128xf32> to vector<15x128xf32>
    %388 = tpu.concatenate %387, %45 in 0 : vector<15x128xf32>, vector<1x128xf32> -> vector<16x128xf32>
    %389 = arith.subf %388, %49 : vector<16x128xf32>
    %390 = arith.mulf %389, %389 : vector<16x128xf32>
    %391 = arith.addf %386, %390 : vector<16x128xf32>
    %392 = vector.extract_strided_slice %71 {offsets = [1, 0], sizes = [15, 128], strides = [1, 1]} : vector<16x128xf32> to vector<15x128xf32>
    %393 = tpu.concatenate %392, %45 in 0 : vector<15x128xf32>, vector<1x128xf32> -> vector<16x128xf32>
    %394 = arith.subf %393, %51 : vector<16x128xf32>
    %395 = arith.mulf %394, %394 : vector<16x128xf32>
    %396 = arith.addf %391, %395 : vector<16x128xf32>
    %cst_90 = arith.constant 0.000000e+00 : f32
    %397 = vector.broadcast %cst_90 : f32 to vector<16x128xf32>
    %398 = arith.subf %397, %396 : vector<16x128xf32>
    %399 = vector.broadcast %86 : f32 to vector<16x128xf32>
    %400 = arith.mulf %398, %399 : vector<16x128xf32>
    %401 = math.exp %400 : vector<16x128xf32>
    %402 = arith.mulf %401, %380 : vector<16x128xf32>
    %c12 = arith.constant 12 : index
    %c0_91 = arith.constant 0 : index
    %c0_92 = arith.constant 0 : index
    %403 = vector.load %arg11[%c12, %c0_91, %c0_92] : memref<14x16x128xf32, #tpu.memory_space<vmem>>, vector<1x16x128xf32>
    %404 = vector.shape_cast %403 : vector<1x16x128xf32> to vector<16x128xf32>
    %405 = vector.shape_cast %402 : vector<16x128xf32> to vector<1x16x128xf32>
    tpu.vector_store %arg11[%c12, %c0_91, %c0_92], %405 {strides = array<i32>} : memref<14x16x128xf32, #tpu.memory_space<vmem>>, vector<1x16x128xf32>,
    %406 = vector.extract_strided_slice %85 {offsets = [1, 0], sizes = [15, 128], strides = [1, 1]} : vector<16x128xf32> to vector<15x128xf32>
    %407 = tpu.concatenate %406, %45 in 0 : vector<15x128xf32>, vector<1x128xf32> -> vector<16x128xf32>
    %cst_93 = arith.constant 0.000000e+00 : f32
    %408 = vector.broadcast %cst_93 : f32 to vector<16x128xf32>
    %409 = vector.extract_strided_slice %73 {offsets = [1, 0], sizes = [15, 128], strides = [1, 1]} : vector<16x128xf32> to vector<15x128xf32>
    %410 = tpu.concatenate %409, %45 in 0 : vector<15x128xf32>, vector<1x128xf32> -> vector<16x128xf32>
    %411 = arith.subf %410, %47 : vector<16x128xf32>
    %412 = arith.mulf %411, %411 : vector<16x128xf32>
    %413 = arith.addf %408, %412 : vector<16x128xf32>
    %414 = vector.extract_strided_slice %75 {offsets = [1, 0], sizes = [15, 128], strides = [1, 1]} : vector<16x128xf32> to vector<15x128xf32>
    %415 = tpu.concatenate %414, %45 in 0 : vector<15x128xf32>, vector<1x128xf32> -> vector<16x128xf32>
    %416 = arith.subf %415, %49 : vector<16x128xf32>
    %417 = arith.mulf %416, %416 : vector<16x128xf32>
    %418 = arith.addf %413, %417 : vector<16x128xf32>
    %419 = vector.extract_strided_slice %77 {offsets = [1, 0], sizes = [15, 128], strides = [1, 1]} : vector<16x128xf32> to vector<15x128xf32>
    %420 = tpu.concatenate %419, %45 in 0 : vector<15x128xf32>, vector<1x128xf32> -> vector<16x128xf32>
    %421 = arith.subf %420, %51 : vector<16x128xf32>
    %422 = arith.mulf %421, %421 : vector<16x128xf32>
    %423 = arith.addf %418, %422 : vector<16x128xf32>
    %cst_94 = arith.constant 0.000000e+00 : f32
    %424 = vector.broadcast %cst_94 : f32 to vector<16x128xf32>
    %425 = arith.subf %424, %423 : vector<16x128xf32>
    %426 = vector.broadcast %86 : f32 to vector<16x128xf32>
    %427 = arith.mulf %425, %426 : vector<16x128xf32>
    %428 = math.exp %427 : vector<16x128xf32>
    %429 = arith.mulf %428, %407 : vector<16x128xf32>
    %c13 = arith.constant 13 : index
    %c0_95 = arith.constant 0 : index
    %c0_96 = arith.constant 0 : index
    %430 = vector.load %arg11[%c13, %c0_95, %c0_96] : memref<14x16x128xf32, #tpu.memory_space<vmem>>, vector<1x16x128xf32>
    %431 = vector.shape_cast %430 : vector<1x16x128xf32> to vector<16x128xf32>
    %432 = vector.shape_cast %429 : vector<16x128xf32> to vector<1x16x128xf32>
    tpu.vector_store %arg11[%c13, %c0_95, %c0_96], %432 {strides = array<i32>} : memref<14x16x128xf32, #tpu.memory_space<vmem>>, vector<1x16x128xf32>,
    %c0_97 = arith.constant 0 : index
    %c0_98 = arith.constant 0 : index
    %c0_99 = arith.constant 0 : index
    %c0_100 = arith.constant 0 : index
    %433 = vector.load %arg1[%c0_97, %c0_98, %c0_99, %c0_100] : memref<1x4x16x128xf32, #tpu.memory_space<vmem>>, vector<1x1x16x128xf32>
    %434 = vector.shape_cast %433 : vector<1x1x16x128xf32> to vector<16x128xf32>
    %c0_101 = arith.constant 0 : index
    %c1_102 = arith.constant 1 : index
    %c0_103 = arith.constant 0 : index
    %c0_104 = arith.constant 0 : index
    %435 = vector.load %arg1[%c0_101, %c1_102, %c0_103, %c0_104] : memref<1x4x16x128xf32, #tpu.memory_space<vmem>>, vector<1x1x16x128xf32>
    %436 = vector.shape_cast %435 : vector<1x1x16x128xf32> to vector<16x128xf32>
    %437 = arith.maximumf %434, %436 : vector<16x128xf32>
    %c0_105 = arith.constant 0 : index
    %c2_106 = arith.constant 2 : index
    %c0_107 = arith.constant 0 : index
    %c0_108 = arith.constant 0 : index
    %438 = vector.load %arg1[%c0_105, %c2_106, %c0_107, %c0_108] : memref<1x4x16x128xf32, #tpu.memory_space<vmem>>, vector<1x1x16x128xf32>
    %439 = vector.shape_cast %438 : vector<1x1x16x128xf32> to vector<16x128xf32>
    %440 = arith.maximumf %437, %439 : vector<16x128xf32>
    %c0_109 = arith.constant 0 : index
    %c3_110 = arith.constant 3 : index
    %c0_111 = arith.constant 0 : index
    %c0_112 = arith.constant 0 : index
    %441 = vector.load %arg1[%c0_109, %c3_110, %c0_111, %c0_112] : memref<1x4x16x128xf32, #tpu.memory_space<vmem>>, vector<1x1x16x128xf32>
    %442 = vector.shape_cast %441 : vector<1x1x16x128xf32> to vector<16x128xf32>
    %443 = arith.maximumf %440, %442 : vector<16x128xf32>
    %c0_113 = arith.constant 0 : index
    %c0_114 = arith.constant 0 : index
    %c0_115 = arith.constant 0 : index
    %c0_116 = arith.constant 0 : index
    %444 = vector.load %arg1[%c0_113, %c0_114, %c0_115, %c0_116] : memref<1x4x16x128xf32, #tpu.memory_space<vmem>>, vector<1x1x16x128xf32>
    %445 = vector.shape_cast %444 : vector<1x1x16x128xf32> to vector<16x128xf32>
    %446 = arith.subf %445, %443 : vector<16x128xf32>
    %447 = math.exp %446 : vector<16x128xf32>
    %c0_117 = arith.constant 0 : index
    %c1_118 = arith.constant 1 : index
    %c0_119 = arith.constant 0 : index
    %c0_120 = arith.constant 0 : index
    %448 = vector.load %arg1[%c0_117, %c1_118, %c0_119, %c0_120] : memref<1x4x16x128xf32, #tpu.memory_space<vmem>>, vector<1x1x16x128xf32>
    %449 = vector.shape_cast %448 : vector<1x1x16x128xf32> to vector<16x128xf32>
    %450 = arith.subf %449, %443 : vector<16x128xf32>
    %451 = math.exp %450 : vector<16x128xf32>
    %452 = arith.addf %447, %451 : vector<16x128xf32>
    %c0_121 = arith.constant 0 : index
    %c2_122 = arith.constant 2 : index
    %c0_123 = arith.constant 0 : index
    %c0_124 = arith.constant 0 : index
    %453 = vector.load %arg1[%c0_121, %c2_122, %c0_123, %c0_124] : memref<1x4x16x128xf32, #tpu.memory_space<vmem>>, vector<1x1x16x128xf32>
    %454 = vector.shape_cast %453 : vector<1x1x16x128xf32> to vector<16x128xf32>
    %455 = arith.subf %454, %443 : vector<16x128xf32>
    %456 = math.exp %455 : vector<16x128xf32>
    %457 = arith.addf %452, %456 : vector<16x128xf32>
    %c0_125 = arith.constant 0 : index
    %c3_126 = arith.constant 3 : index
    %c0_127 = arith.constant 0 : index
    %c0_128 = arith.constant 0 : index
    %458 = vector.load %arg1[%c0_125, %c3_126, %c0_127, %c0_128] : memref<1x4x16x128xf32, #tpu.memory_space<vmem>>, vector<1x1x16x128xf32>
    %459 = vector.shape_cast %458 : vector<1x1x16x128xf32> to vector<16x128xf32>
    %460 = arith.subf %459, %443 : vector<16x128xf32>
    %461 = math.exp %460 : vector<16x128xf32>
    %462 = arith.addf %457, %461 : vector<16x128xf32>
    %cst_129 = arith.constant 1.000000e+00 : f32
    %463 = vector.broadcast %cst_129 : f32 to vector<16x128xf32>
    %464 = arith.divf %463, %462 : vector<16x128xf32>
    %c0_130 = arith.constant 0 : index
    %c0_131 = arith.constant 0 : index
    %c0_132 = arith.constant 0 : index
    %c0_133 = arith.constant 0 : index
    %465 = vector.load %arg1[%c0_130, %c0_131, %c0_132, %c0_133] : memref<1x4x16x128xf32, #tpu.memory_space<vmem>>, vector<1x1x16x128xf32>
    %466 = vector.shape_cast %465 : vector<1x1x16x128xf32> to vector<16x128xf32>
    %467 = arith.subf %466, %443 : vector<16x128xf32>
    %468 = math.exp %467 : vector<16x128xf32>
    %469 = arith.mulf %468, %464 : vector<16x128xf32>
    %c2_i32_134 = arith.constant 2 : i32
    %470 = tpu.dynamic_rotate %469 by %c2_i32_134 dim 1 : vector<16x128xf32>, i32 -> vector<16x128xf32>
    %471 = arith.mulf %470, %11 : vector<16x128xf32>
    %c1_i32_135 = arith.constant 1 : i32
    %472 = tpu.dynamic_rotate %469 by %c1_i32_135 dim 1 : vector<16x128xf32>, i32 -> vector<16x128xf32>
    %473 = arith.mulf %472, %22 : vector<16x128xf32>
    %c127_i32_136 = arith.constant 127 : i32
    %474 = tpu.dynamic_rotate %469 by %c127_i32_136 dim 1 : vector<16x128xf32>, i32 -> vector<16x128xf32>
    %475 = arith.mulf %474, %33 : vector<16x128xf32>
    %c126_i32_137 = arith.constant 126 : i32
    %476 = tpu.dynamic_rotate %469 by %c126_i32_137 dim 1 : vector<16x128xf32>, i32 -> vector<16x128xf32>
    %477 = arith.mulf %476, %44 : vector<16x128xf32>
    %cst_138 = arith.constant 0.000000e+00 : f32
    %478 = vector.broadcast %cst_138 : f32 to vector<16x128xf32>
    %cst_139 = arith.constant 0.000000e+00 : f32
    %479 = vector.broadcast %cst_139 : f32 to vector<16x128xf32>
    %480 = vector.extract_strided_slice %471 {offsets = [0, 0], sizes = [15, 128], strides = [1, 1]} : vector<16x128xf32> to vector<15x128xf32>
    %481 = tpu.concatenate %45, %480 in 0 : vector<1x128xf32>, vector<15x128xf32> -> vector<16x128xf32>
    %c0_140 = arith.constant 0 : index
    %c0_141 = arith.constant 0 : index
    %482 = memref.load %arg4[%c0_140, %c0_141] : memref<14x4xf32, #tpu.memory_space<smem>>
    %483 = vector.broadcast %482 : f32 to vector<16x128xf32>
    %484 = arith.mulf %483, %481 : vector<16x128xf32>
    %485 = arith.addf %478, %484 : vector<16x128xf32>
    %c0_142 = arith.constant 0 : index
    %c0_143 = arith.constant 0 : index
    %c0_144 = arith.constant 0 : index
    %486 = vector.load %arg11[%c0_142, %c0_143, %c0_144] : memref<14x16x128xf32, #tpu.memory_space<vmem>>, vector<1x16x128xf32>
    %487 = vector.shape_cast %486 : vector<1x16x128xf32> to vector<16x128xf32>
    %488 = arith.mulf %487, %481 : vector<16x128xf32>
    %489 = arith.addf %479, %488 : vector<16x128xf32>
    %490 = vector.extract_strided_slice %473 {offsets = [0, 0], sizes = [15, 128], strides = [1, 1]} : vector<16x128xf32> to vector<15x128xf32>
    %491 = tpu.concatenate %45, %490 in 0 : vector<1x128xf32>, vector<15x128xf32> -> vector<16x128xf32>
    %c1_145 = arith.constant 1 : index
    %c0_146 = arith.constant 0 : index
    %492 = memref.load %arg4[%c1_145, %c0_146] : memref<14x4xf32, #tpu.memory_space<smem>>
    %493 = vector.broadcast %492 : f32 to vector<16x128xf32>
    %494 = arith.mulf %493, %491 : vector<16x128xf32>
    %495 = arith.addf %485, %494 : vector<16x128xf32>
    %c1_147 = arith.constant 1 : index
    %c0_148 = arith.constant 0 : index
    %c0_149 = arith.constant 0 : index
    %496 = vector.load %arg11[%c1_147, %c0_148, %c0_149] : memref<14x16x128xf32, #tpu.memory_space<vmem>>, vector<1x16x128xf32>
    %497 = vector.shape_cast %496 : vector<1x16x128xf32> to vector<16x128xf32>
    %498 = arith.mulf %497, %491 : vector<16x128xf32>
    %499 = arith.addf %489, %498 : vector<16x128xf32>
    %500 = vector.extract_strided_slice %469 {offsets = [0, 0], sizes = [15, 128], strides = [1, 1]} : vector<16x128xf32> to vector<15x128xf32>
    %501 = tpu.concatenate %45, %500 in 0 : vector<1x128xf32>, vector<15x128xf32> -> vector<16x128xf32>
    %c2_150 = arith.constant 2 : index
    %c0_151 = arith.constant 0 : index
    %502 = memref.load %arg4[%c2_150, %c0_151] : memref<14x4xf32, #tpu.memory_space<smem>>
    %503 = vector.broadcast %502 : f32 to vector<16x128xf32>
    %504 = arith.mulf %503, %501 : vector<16x128xf32>
    %505 = arith.addf %495, %504 : vector<16x128xf32>
    %c2_152 = arith.constant 2 : index
    %c0_153 = arith.constant 0 : index
    %c0_154 = arith.constant 0 : index
    %506 = vector.load %arg11[%c2_152, %c0_153, %c0_154] : memref<14x16x128xf32, #tpu.memory_space<vmem>>, vector<1x16x128xf32>
    %507 = vector.shape_cast %506 : vector<1x16x128xf32> to vector<16x128xf32>
    %508 = arith.mulf %507, %501 : vector<16x128xf32>
    %509 = arith.addf %499, %508 : vector<16x128xf32>
    %510 = vector.extract_strided_slice %475 {offsets = [0, 0], sizes = [15, 128], strides = [1, 1]} : vector<16x128xf32> to vector<15x128xf32>
    %511 = tpu.concatenate %45, %510 in 0 : vector<1x128xf32>, vector<15x128xf32> -> vector<16x128xf32>
    %c3_155 = arith.constant 3 : index
    %c0_156 = arith.constant 0 : index
    %512 = memref.load %arg4[%c3_155, %c0_156] : memref<14x4xf32, #tpu.memory_space<smem>>
    %513 = vector.broadcast %512 : f32 to vector<16x128xf32>
    %514 = arith.mulf %513, %511 : vector<16x128xf32>
    %515 = arith.addf %505, %514 : vector<16x128xf32>
    %c3_157 = arith.constant 3 : index
    %c0_158 = arith.constant 0 : index
    %c0_159 = arith.constant 0 : index
    %516 = vector.load %arg11[%c3_157, %c0_158, %c0_159] : memref<14x16x128xf32, #tpu.memory_space<vmem>>, vector<1x16x128xf32>
    %517 = vector.shape_cast %516 : vector<1x16x128xf32> to vector<16x128xf32>
    %518 = arith.mulf %517, %511 : vector<16x128xf32>
    %519 = arith.addf %509, %518 : vector<16x128xf32>
    %520 = vector.extract_strided_slice %477 {offsets = [0, 0], sizes = [15, 128], strides = [1, 1]} : vector<16x128xf32> to vector<15x128xf32>
    %521 = tpu.concatenate %45, %520 in 0 : vector<1x128xf32>, vector<15x128xf32> -> vector<16x128xf32>
    %c4_160 = arith.constant 4 : index
    %c0_161 = arith.constant 0 : index
    %522 = memref.load %arg4[%c4_160, %c0_161] : memref<14x4xf32, #tpu.memory_space<smem>>
    %523 = vector.broadcast %522 : f32 to vector<16x128xf32>
    %524 = arith.mulf %523, %521 : vector<16x128xf32>
    %525 = arith.addf %515, %524 : vector<16x128xf32>
    %c4_162 = arith.constant 4 : index
    %c0_163 = arith.constant 0 : index
    %c0_164 = arith.constant 0 : index
    %526 = vector.load %arg11[%c4_162, %c0_163, %c0_164] : memref<14x16x128xf32, #tpu.memory_space<vmem>>, vector<1x16x128xf32>
    %527 = vector.shape_cast %526 : vector<1x16x128xf32> to vector<16x128xf32>
    %528 = arith.mulf %527, %521 : vector<16x128xf32>
    %529 = arith.addf %519, %528 : vector<16x128xf32>
    %c5_165 = arith.constant 5 : index
    %c0_166 = arith.constant 0 : index
    %530 = memref.load %arg4[%c5_165, %c0_166] : memref<14x4xf32, #tpu.memory_space<smem>>
    %531 = vector.broadcast %530 : f32 to vector<16x128xf32>
    %532 = arith.mulf %531, %471 : vector<16x128xf32>
    %533 = arith.addf %525, %532 : vector<16x128xf32>
    %c5_167 = arith.constant 5 : index
    %c0_168 = arith.constant 0 : index
    %c0_169 = arith.constant 0 : index
    %534 = vector.load %arg11[%c5_167, %c0_168, %c0_169] : memref<14x16x128xf32, #tpu.memory_space<vmem>>, vector<1x16x128xf32>
    %535 = vector.shape_cast %534 : vector<1x16x128xf32> to vector<16x128xf32>
    %536 = arith.mulf %535, %471 : vector<16x128xf32>
    %537 = arith.addf %529, %536 : vector<16x128xf32>
    %c6_170 = arith.constant 6 : index
    %c0_171 = arith.constant 0 : index
    %538 = memref.load %arg4[%c6_170, %c0_171] : memref<14x4xf32, #tpu.memory_space<smem>>
    %539 = vector.broadcast %538 : f32 to vector<16x128xf32>
    %540 = arith.mulf %539, %473 : vector<16x128xf32>
    %541 = arith.addf %533, %540 : vector<16x128xf32>
    %c6_172 = arith.constant 6 : index
    %c0_173 = arith.constant 0 : index
    %c0_174 = arith.constant 0 : index
    %542 = vector.load %arg11[%c6_172, %c0_173, %c0_174] : memref<14x16x128xf32, #tpu.memory_space<vmem>>, vector<1x16x128xf32>
    %543 = vector.shape_cast %542 : vector<1x16x128xf32> to vector<16x128xf32>
    %544 = arith.mulf %543, %473 : vector<16x128xf32>
    %545 = arith.addf %537, %544 : vector<16x128xf32>
    %c7_175 = arith.constant 7 : index
    %c0_176 = arith.constant 0 : index
    %546 = memref.load %arg4[%c7_175, %c0_176] : memref<14x4xf32, #tpu.memory_space<smem>>
    %547 = vector.broadcast %546 : f32 to vector<16x128xf32>
    %548 = arith.mulf %547, %475 : vector<16x128xf32>
    %549 = arith.addf %541, %548 : vector<16x128xf32>
    %c7_177 = arith.constant 7 : index
    %c0_178 = arith.constant 0 : index
    %c0_179 = arith.constant 0 : index
    %550 = vector.load %arg11[%c7_177, %c0_178, %c0_179] : memref<14x16x128xf32, #tpu.memory_space<vmem>>, vector<1x16x128xf32>
    %551 = vector.shape_cast %550 : vector<1x16x128xf32> to vector<16x128xf32>
    %552 = arith.mulf %551, %475 : vector<16x128xf32>
    %553 = arith.addf %545, %552 : vector<16x128xf32>
    %c8_180 = arith.constant 8 : index
    %c0_181 = arith.constant 0 : index
    %554 = memref.load %arg4[%c8_180, %c0_181] : memref<14x4xf32, #tpu.memory_space<smem>>
    %555 = vector.broadcast %554 : f32 to vector<16x128xf32>
    %556 = arith.mulf %555, %477 : vector<16x128xf32>
    %557 = arith.addf %549, %556 : vector<16x128xf32>
    %c8_182 = arith.constant 8 : index
    %c0_183 = arith.constant 0 : index
    %c0_184 = arith.constant 0 : index
    %558 = vector.load %arg11[%c8_182, %c0_183, %c0_184] : memref<14x16x128xf32, #tpu.memory_space<vmem>>, vector<1x16x128xf32>
    %559 = vector.shape_cast %558 : vector<1x16x128xf32> to vector<16x128xf32>
    %560 = arith.mulf %559, %477 : vector<16x128xf32>
    %561 = arith.addf %553, %560 : vector<16x128xf32>
    %562 = vector.extract_strided_slice %471 {offsets = [1, 0], sizes = [15, 128], strides = [1, 1]} : vector<16x128xf32> to vector<15x128xf32>
    %563 = tpu.concatenate %562, %45 in 0 : vector<15x128xf32>, vector<1x128xf32> -> vector<16x128xf32>
    %c9_185 = arith.constant 9 : index
    %c0_186 = arith.constant 0 : index
    %564 = memref.load %arg4[%c9_185, %c0_186] : memref<14x4xf32, #tpu.memory_space<smem>>
    %565 = vector.broadcast %564 : f32 to vector<16x128xf32>
    %566 = arith.mulf %565, %563 : vector<16x128xf32>
    %567 = arith.addf %557, %566 : vector<16x128xf32>
    %c9_187 = arith.constant 9 : index
    %c0_188 = arith.constant 0 : index
    %c0_189 = arith.constant 0 : index
    %568 = vector.load %arg11[%c9_187, %c0_188, %c0_189] : memref<14x16x128xf32, #tpu.memory_space<vmem>>, vector<1x16x128xf32>
    %569 = vector.shape_cast %568 : vector<1x16x128xf32> to vector<16x128xf32>
    %570 = arith.mulf %569, %563 : vector<16x128xf32>
    %571 = arith.addf %561, %570 : vector<16x128xf32>
    %572 = vector.extract_strided_slice %473 {offsets = [1, 0], sizes = [15, 128], strides = [1, 1]} : vector<16x128xf32> to vector<15x128xf32>
    %573 = tpu.concatenate %572, %45 in 0 : vector<15x128xf32>, vector<1x128xf32> -> vector<16x128xf32>
    %c10_190 = arith.constant 10 : index
    %c0_191 = arith.constant 0 : index
    %574 = memref.load %arg4[%c10_190, %c0_191] : memref<14x4xf32, #tpu.memory_space<smem>>
    %575 = vector.broadcast %574 : f32 to vector<16x128xf32>
    %576 = arith.mulf %575, %573 : vector<16x128xf32>
    %577 = arith.addf %567, %576 : vector<16x128xf32>
    %c10_192 = arith.constant 10 : index
    %c0_193 = arith.constant 0 : index
    %c0_194 = arith.constant 0 : index
    %578 = vector.load %arg11[%c10_192, %c0_193, %c0_194] : memref<14x16x128xf32, #tpu.memory_space<vmem>>, vector<1x16x128xf32>
    %579 = vector.shape_cast %578 : vector<1x16x128xf32> to vector<16x128xf32>
    %580 = arith.mulf %579, %573 : vector<16x128xf32>
    %581 = arith.addf %571, %580 : vector<16x128xf32>
    %582 = vector.extract_strided_slice %469 {offsets = [1, 0], sizes = [15, 128], strides = [1, 1]} : vector<16x128xf32> to vector<15x128xf32>
    %583 = tpu.concatenate %582, %45 in 0 : vector<15x128xf32>, vector<1x128xf32> -> vector<16x128xf32>
    %c11_195 = arith.constant 11 : index
    %c0_196 = arith.constant 0 : index
    %584 = memref.load %arg4[%c11_195, %c0_196] : memref<14x4xf32, #tpu.memory_space<smem>>
    %585 = vector.broadcast %584 : f32 to vector<16x128xf32>
    %586 = arith.mulf %585, %583 : vector<16x128xf32>
    %587 = arith.addf %577, %586 : vector<16x128xf32>
    %c11_197 = arith.constant 11 : index
    %c0_198 = arith.constant 0 : index
    %c0_199 = arith.constant 0 : index
    %588 = vector.load %arg11[%c11_197, %c0_198, %c0_199] : memref<14x16x128xf32, #tpu.memory_space<vmem>>, vector<1x16x128xf32>
    %589 = vector.shape_cast %588 : vector<1x16x128xf32> to vector<16x128xf32>
    %590 = arith.mulf %589, %583 : vector<16x128xf32>
    %591 = arith.addf %581, %590 : vector<16x128xf32>
    %592 = vector.extract_strided_slice %475 {offsets = [1, 0], sizes = [15, 128], strides = [1, 1]} : vector<16x128xf32> to vector<15x128xf32>
    %593 = tpu.concatenate %592, %45 in 0 : vector<15x128xf32>, vector<1x128xf32> -> vector<16x128xf32>
    %c12_200 = arith.constant 12 : index
    %c0_201 = arith.constant 0 : index
    %594 = memref.load %arg4[%c12_200, %c0_201] : memref<14x4xf32, #tpu.memory_space<smem>>
    %595 = vector.broadcast %594 : f32 to vector<16x128xf32>
    %596 = arith.mulf %595, %593 : vector<16x128xf32>
    %597 = arith.addf %587, %596 : vector<16x128xf32>
    %c12_202 = arith.constant 12 : index
    %c0_203 = arith.constant 0 : index
    %c0_204 = arith.constant 0 : index
    %598 = vector.load %arg11[%c12_202, %c0_203, %c0_204] : memref<14x16x128xf32, #tpu.memory_space<vmem>>, vector<1x16x128xf32>
    %599 = vector.shape_cast %598 : vector<1x16x128xf32> to vector<16x128xf32>
    %600 = arith.mulf %599, %593 : vector<16x128xf32>
    %601 = arith.addf %591, %600 : vector<16x128xf32>
    %602 = vector.extract_strided_slice %477 {offsets = [1, 0], sizes = [15, 128], strides = [1, 1]} : vector<16x128xf32> to vector<15x128xf32>
    %603 = tpu.concatenate %602, %45 in 0 : vector<15x128xf32>, vector<1x128xf32> -> vector<16x128xf32>
    %c13_205 = arith.constant 13 : index
    %c0_206 = arith.constant 0 : index
    %604 = memref.load %arg4[%c13_205, %c0_206] : memref<14x4xf32, #tpu.memory_space<smem>>
    %605 = vector.broadcast %604 : f32 to vector<16x128xf32>
    %606 = arith.mulf %605, %603 : vector<16x128xf32>
    %607 = arith.addf %597, %606 : vector<16x128xf32>
    %c13_207 = arith.constant 13 : index
    %c0_208 = arith.constant 0 : index
    %c0_209 = arith.constant 0 : index
    %608 = vector.load %arg11[%c13_207, %c0_208, %c0_209] : memref<14x16x128xf32, #tpu.memory_space<vmem>>, vector<1x16x128xf32>
    %609 = vector.shape_cast %608 : vector<1x16x128xf32> to vector<16x128xf32>
    %610 = arith.mulf %609, %603 : vector<16x128xf32>
    %611 = arith.addf %601, %610 : vector<16x128xf32>
    %c0_210 = arith.constant 0 : index
    %c0_211 = arith.constant 0 : index
    %c0_212 = arith.constant 0 : index
    %c0_213 = arith.constant 0 : index
    %612 = vector.load %arg3[%c0_210, %c0_211, %c0_212, %c0_213] : memref<1x1x16x128xf32, #tpu.memory_space<vmem>>, vector<1x1x16x128xf32>
    %613 = vector.shape_cast %612 : vector<1x1x16x128xf32> to vector<16x128xf32>
    %c0_214 = arith.constant 0 : index
    %614 = memref.load %arg6[%c0_214] : memref<4xf32, #tpu.memory_space<smem>>
    %c0_215 = arith.constant 0 : index
    %615 = memref.load %arg7[%c0_215] : memref<4xf32, #tpu.memory_space<smem>>
    %616 = arith.mulf %611, %613 : vector<16x128xf32>
    %617 = vector.broadcast %615 : f32 to vector<16x128xf32>
    %618 = arith.mulf %617, %616 : vector<16x128xf32>
    %619 = vector.broadcast %614 : f32 to vector<16x128xf32>
    %620 = arith.addf %619, %618 : vector<16x128xf32>
    %621 = arith.mulf %607, %620 : vector<16x128xf32>
    %c0_216 = arith.constant 0 : index
    %c1_217 = arith.constant 1 : index
    %c0_218 = arith.constant 0 : index
    %c0_219 = arith.constant 0 : index
    %622 = vector.load %arg1[%c0_216, %c1_217, %c0_218, %c0_219] : memref<1x4x16x128xf32, #tpu.memory_space<vmem>>, vector<1x1x16x128xf32>
    %623 = vector.shape_cast %622 : vector<1x1x16x128xf32> to vector<16x128xf32>
    %624 = arith.subf %623, %443 : vector<16x128xf32>
    %625 = math.exp %624 : vector<16x128xf32>
    %626 = arith.mulf %625, %464 : vector<16x128xf32>
    %c2_i32_220 = arith.constant 2 : i32
    %627 = tpu.dynamic_rotate %626 by %c2_i32_220 dim 1 : vector<16x128xf32>, i32 -> vector<16x128xf32>
    %628 = arith.mulf %627, %11 : vector<16x128xf32>
    %c1_i32_221 = arith.constant 1 : i32
    %629 = tpu.dynamic_rotate %626 by %c1_i32_221 dim 1 : vector<16x128xf32>, i32 -> vector<16x128xf32>
    %630 = arith.mulf %629, %22 : vector<16x128xf32>
    %c127_i32_222 = arith.constant 127 : i32
    %631 = tpu.dynamic_rotate %626 by %c127_i32_222 dim 1 : vector<16x128xf32>, i32 -> vector<16x128xf32>
    %632 = arith.mulf %631, %33 : vector<16x128xf32>
    %c126_i32_223 = arith.constant 126 : i32
    %633 = tpu.dynamic_rotate %626 by %c126_i32_223 dim 1 : vector<16x128xf32>, i32 -> vector<16x128xf32>
    %634 = arith.mulf %633, %44 : vector<16x128xf32>
    %cst_224 = arith.constant 0.000000e+00 : f32
    %635 = vector.broadcast %cst_224 : f32 to vector<16x128xf32>
    %cst_225 = arith.constant 0.000000e+00 : f32
    %636 = vector.broadcast %cst_225 : f32 to vector<16x128xf32>
    %637 = vector.extract_strided_slice %628 {offsets = [0, 0], sizes = [15, 128], strides = [1, 1]} : vector<16x128xf32> to vector<15x128xf32>
    %638 = tpu.concatenate %45, %637 in 0 : vector<1x128xf32>, vector<15x128xf32> -> vector<16x128xf32>
    %c0_226 = arith.constant 0 : index
    %c1_227 = arith.constant 1 : index
    %639 = memref.load %arg4[%c0_226, %c1_227] : memref<14x4xf32, #tpu.memory_space<smem>>
    %640 = vector.broadcast %639 : f32 to vector<16x128xf32>
    %641 = arith.mulf %640, %638 : vector<16x128xf32>
    %642 = arith.addf %635, %641 : vector<16x128xf32>
    %c0_228 = arith.constant 0 : index
    %c0_229 = arith.constant 0 : index
    %c0_230 = arith.constant 0 : index
    %643 = vector.load %arg11[%c0_228, %c0_229, %c0_230] : memref<14x16x128xf32, #tpu.memory_space<vmem>>, vector<1x16x128xf32>
    %644 = vector.shape_cast %643 : vector<1x16x128xf32> to vector<16x128xf32>
    %645 = arith.mulf %644, %638 : vector<16x128xf32>
    %646 = arith.addf %636, %645 : vector<16x128xf32>
    %647 = vector.extract_strided_slice %630 {offsets = [0, 0], sizes = [15, 128], strides = [1, 1]} : vector<16x128xf32> to vector<15x128xf32>
    %648 = tpu.concatenate %45, %647 in 0 : vector<1x128xf32>, vector<15x128xf32> -> vector<16x128xf32>
    %c1_231 = arith.constant 1 : index
    %c1_232 = arith.constant 1 : index
    %649 = memref.load %arg4[%c1_231, %c1_232] : memref<14x4xf32, #tpu.memory_space<smem>>
    %650 = vector.broadcast %649 : f32 to vector<16x128xf32>
    %651 = arith.mulf %650, %648 : vector<16x128xf32>
    %652 = arith.addf %642, %651 : vector<16x128xf32>
    %c1_233 = arith.constant 1 : index
    %c0_234 = arith.constant 0 : index
    %c0_235 = arith.constant 0 : index
    %653 = vector.load %arg11[%c1_233, %c0_234, %c0_235] : memref<14x16x128xf32, #tpu.memory_space<vmem>>, vector<1x16x128xf32>
    %654 = vector.shape_cast %653 : vector<1x16x128xf32> to vector<16x128xf32>
    %655 = arith.mulf %654, %648 : vector<16x128xf32>
    %656 = arith.addf %646, %655 : vector<16x128xf32>
    %657 = vector.extract_strided_slice %626 {offsets = [0, 0], sizes = [15, 128], strides = [1, 1]} : vector<16x128xf32> to vector<15x128xf32>
    %658 = tpu.concatenate %45, %657 in 0 : vector<1x128xf32>, vector<15x128xf32> -> vector<16x128xf32>
    %c2_236 = arith.constant 2 : index
    %c1_237 = arith.constant 1 : index
    %659 = memref.load %arg4[%c2_236, %c1_237] : memref<14x4xf32, #tpu.memory_space<smem>>
    %660 = vector.broadcast %659 : f32 to vector<16x128xf32>
    %661 = arith.mulf %660, %658 : vector<16x128xf32>
    %662 = arith.addf %652, %661 : vector<16x128xf32>
    %c2_238 = arith.constant 2 : index
    %c0_239 = arith.constant 0 : index
    %c0_240 = arith.constant 0 : index
    %663 = vector.load %arg11[%c2_238, %c0_239, %c0_240] : memref<14x16x128xf32, #tpu.memory_space<vmem>>, vector<1x16x128xf32>
    %664 = vector.shape_cast %663 : vector<1x16x128xf32> to vector<16x128xf32>
    %665 = arith.mulf %664, %658 : vector<16x128xf32>
    %666 = arith.addf %656, %665 : vector<16x128xf32>
    %667 = vector.extract_strided_slice %632 {offsets = [0, 0], sizes = [15, 128], strides = [1, 1]} : vector<16x128xf32> to vector<15x128xf32>
    %668 = tpu.concatenate %45, %667 in 0 : vector<1x128xf32>, vector<15x128xf32> -> vector<16x128xf32>
    %c3_241 = arith.constant 3 : index
    %c1_242 = arith.constant 1 : index
    %669 = memref.load %arg4[%c3_241, %c1_242] : memref<14x4xf32, #tpu.memory_space<smem>>
    %670 = vector.broadcast %669 : f32 to vector<16x128xf32>
    %671 = arith.mulf %670, %668 : vector<16x128xf32>
    %672 = arith.addf %662, %671 : vector<16x128xf32>
    %c3_243 = arith.constant 3 : index
    %c0_244 = arith.constant 0 : index
    %c0_245 = arith.constant 0 : index
    %673 = vector.load %arg11[%c3_243, %c0_244, %c0_245] : memref<14x16x128xf32, #tpu.memory_space<vmem>>, vector<1x16x128xf32>
    %674 = vector.shape_cast %673 : vector<1x16x128xf32> to vector<16x128xf32>
    %675 = arith.mulf %674, %668 : vector<16x128xf32>
    %676 = arith.addf %666, %675 : vector<16x128xf32>
    %677 = vector.extract_strided_slice %634 {offsets = [0, 0], sizes = [15, 128], strides = [1, 1]} : vector<16x128xf32> to vector<15x128xf32>
    %678 = tpu.concatenate %45, %677 in 0 : vector<1x128xf32>, vector<15x128xf32> -> vector<16x128xf32>
    %c4_246 = arith.constant 4 : index
    %c1_247 = arith.constant 1 : index
    %679 = memref.load %arg4[%c4_246, %c1_247] : memref<14x4xf32, #tpu.memory_space<smem>>
    %680 = vector.broadcast %679 : f32 to vector<16x128xf32>
    %681 = arith.mulf %680, %678 : vector<16x128xf32>
    %682 = arith.addf %672, %681 : vector<16x128xf32>
    %c4_248 = arith.constant 4 : index
    %c0_249 = arith.constant 0 : index
    %c0_250 = arith.constant 0 : index
    %683 = vector.load %arg11[%c4_248, %c0_249, %c0_250] : memref<14x16x128xf32, #tpu.memory_space<vmem>>, vector<1x16x128xf32>
    %684 = vector.shape_cast %683 : vector<1x16x128xf32> to vector<16x128xf32>
    %685 = arith.mulf %684, %678 : vector<16x128xf32>
    %686 = arith.addf %676, %685 : vector<16x128xf32>
    %c5_251 = arith.constant 5 : index
    %c1_252 = arith.constant 1 : index
    %687 = memref.load %arg4[%c5_251, %c1_252] : memref<14x4xf32, #tpu.memory_space<smem>>
    %688 = vector.broadcast %687 : f32 to vector<16x128xf32>
    %689 = arith.mulf %688, %628 : vector<16x128xf32>
    %690 = arith.addf %682, %689 : vector<16x128xf32>
    %c5_253 = arith.constant 5 : index
    %c0_254 = arith.constant 0 : index
    %c0_255 = arith.constant 0 : index
    %691 = vector.load %arg11[%c5_253, %c0_254, %c0_255] : memref<14x16x128xf32, #tpu.memory_space<vmem>>, vector<1x16x128xf32>
    %692 = vector.shape_cast %691 : vector<1x16x128xf32> to vector<16x128xf32>
    %693 = arith.mulf %692, %628 : vector<16x128xf32>
    %694 = arith.addf %686, %693 : vector<16x128xf32>
    %c6_256 = arith.constant 6 : index
    %c1_257 = arith.constant 1 : index
    %695 = memref.load %arg4[%c6_256, %c1_257] : memref<14x4xf32, #tpu.memory_space<smem>>
    %696 = vector.broadcast %695 : f32 to vector<16x128xf32>
    %697 = arith.mulf %696, %630 : vector<16x128xf32>
    %698 = arith.addf %690, %697 : vector<16x128xf32>
    %c6_258 = arith.constant 6 : index
    %c0_259 = arith.constant 0 : index
    %c0_260 = arith.constant 0 : index
    %699 = vector.load %arg11[%c6_258, %c0_259, %c0_260] : memref<14x16x128xf32, #tpu.memory_space<vmem>>, vector<1x16x128xf32>
    %700 = vector.shape_cast %699 : vector<1x16x128xf32> to vector<16x128xf32>
    %701 = arith.mulf %700, %630 : vector<16x128xf32>
    %702 = arith.addf %694, %701 : vector<16x128xf32>
    %c7_261 = arith.constant 7 : index
    %c1_262 = arith.constant 1 : index
    %703 = memref.load %arg4[%c7_261, %c1_262] : memref<14x4xf32, #tpu.memory_space<smem>>
    %704 = vector.broadcast %703 : f32 to vector<16x128xf32>
    %705 = arith.mulf %704, %632 : vector<16x128xf32>
    %706 = arith.addf %698, %705 : vector<16x128xf32>
    %c7_263 = arith.constant 7 : index
    %c0_264 = arith.constant 0 : index
    %c0_265 = arith.constant 0 : index
    %707 = vector.load %arg11[%c7_263, %c0_264, %c0_265] : memref<14x16x128xf32, #tpu.memory_space<vmem>>, vector<1x16x128xf32>
    %708 = vector.shape_cast %707 : vector<1x16x128xf32> to vector<16x128xf32>
    %709 = arith.mulf %708, %632 : vector<16x128xf32>
    %710 = arith.addf %702, %709 : vector<16x128xf32>
    %c8_266 = arith.constant 8 : index
    %c1_267 = arith.constant 1 : index
    %711 = memref.load %arg4[%c8_266, %c1_267] : memref<14x4xf32, #tpu.memory_space<smem>>
    %712 = vector.broadcast %711 : f32 to vector<16x128xf32>
    %713 = arith.mulf %712, %634 : vector<16x128xf32>
    %714 = arith.addf %706, %713 : vector<16x128xf32>
    %c8_268 = arith.constant 8 : index
    %c0_269 = arith.constant 0 : index
    %c0_270 = arith.constant 0 : index
    %715 = vector.load %arg11[%c8_268, %c0_269, %c0_270] : memref<14x16x128xf32, #tpu.memory_space<vmem>>, vector<1x16x128xf32>
    %716 = vector.shape_cast %715 : vector<1x16x128xf32> to vector<16x128xf32>
    %717 = arith.mulf %716, %634 : vector<16x128xf32>
    %718 = arith.addf %710, %717 : vector<16x128xf32>
    %719 = vector.extract_strided_slice %628 {offsets = [1, 0], sizes = [15, 128], strides = [1, 1]} : vector<16x128xf32> to vector<15x128xf32>
    %720 = tpu.concatenate %719, %45 in 0 : vector<15x128xf32>, vector<1x128xf32> -> vector<16x128xf32>
    %c9_271 = arith.constant 9 : index
    %c1_272 = arith.constant 1 : index
    %721 = memref.load %arg4[%c9_271, %c1_272] : memref<14x4xf32, #tpu.memory_space<smem>>
    %722 = vector.broadcast %721 : f32 to vector<16x128xf32>
    %723 = arith.mulf %722, %720 : vector<16x128xf32>
    %724 = arith.addf %714, %723 : vector<16x128xf32>
    %c9_273 = arith.constant 9 : index
    %c0_274 = arith.constant 0 : index
    %c0_275 = arith.constant 0 : index
    %725 = vector.load %arg11[%c9_273, %c0_274, %c0_275] : memref<14x16x128xf32, #tpu.memory_space<vmem>>, vector<1x16x128xf32>
    %726 = vector.shape_cast %725 : vector<1x16x128xf32> to vector<16x128xf32>
    %727 = arith.mulf %726, %720 : vector<16x128xf32>
    %728 = arith.addf %718, %727 : vector<16x128xf32>
    %729 = vector.extract_strided_slice %630 {offsets = [1, 0], sizes = [15, 128], strides = [1, 1]} : vector<16x128xf32> to vector<15x128xf32>
    %730 = tpu.concatenate %729, %45 in 0 : vector<15x128xf32>, vector<1x128xf32> -> vector<16x128xf32>
    %c10_276 = arith.constant 10 : index
    %c1_277 = arith.constant 1 : index
    %731 = memref.load %arg4[%c10_276, %c1_277] : memref<14x4xf32, #tpu.memory_space<smem>>
    %732 = vector.broadcast %731 : f32 to vector<16x128xf32>
    %733 = arith.mulf %732, %730 : vector<16x128xf32>
    %734 = arith.addf %724, %733 : vector<16x128xf32>
    %c10_278 = arith.constant 10 : index
    %c0_279 = arith.constant 0 : index
    %c0_280 = arith.constant 0 : index
    %735 = vector.load %arg11[%c10_278, %c0_279, %c0_280] : memref<14x16x128xf32, #tpu.memory_space<vmem>>, vector<1x16x128xf32>
    %736 = vector.shape_cast %735 : vector<1x16x128xf32> to vector<16x128xf32>
    %737 = arith.mulf %736, %730 : vector<16x128xf32>
    %738 = arith.addf %728, %737 : vector<16x128xf32>
    %739 = vector.extract_strided_slice %626 {offsets = [1, 0], sizes = [15, 128], strides = [1, 1]} : vector<16x128xf32> to vector<15x128xf32>
    %740 = tpu.concatenate %739, %45 in 0 : vector<15x128xf32>, vector<1x128xf32> -> vector<16x128xf32>
    %c11_281 = arith.constant 11 : index
    %c1_282 = arith.constant 1 : index
    %741 = memref.load %arg4[%c11_281, %c1_282] : memref<14x4xf32, #tpu.memory_space<smem>>
    %742 = vector.broadcast %741 : f32 to vector<16x128xf32>
    %743 = arith.mulf %742, %740 : vector<16x128xf32>
    %744 = arith.addf %734, %743 : vector<16x128xf32>
    %c11_283 = arith.constant 11 : index
    %c0_284 = arith.constant 0 : index
    %c0_285 = arith.constant 0 : index
    %745 = vector.load %arg11[%c11_283, %c0_284, %c0_285] : memref<14x16x128xf32, #tpu.memory_space<vmem>>, vector<1x16x128xf32>
    %746 = vector.shape_cast %745 : vector<1x16x128xf32> to vector<16x128xf32>
    %747 = arith.mulf %746, %740 : vector<16x128xf32>
    %748 = arith.addf %738, %747 : vector<16x128xf32>
    %749 = vector.extract_strided_slice %632 {offsets = [1, 0], sizes = [15, 128], strides = [1, 1]} : vector<16x128xf32> to vector<15x128xf32>
    %750 = tpu.concatenate %749, %45 in 0 : vector<15x128xf32>, vector<1x128xf32> -> vector<16x128xf32>
    %c12_286 = arith.constant 12 : index
    %c1_287 = arith.constant 1 : index
    %751 = memref.load %arg4[%c12_286, %c1_287] : memref<14x4xf32, #tpu.memory_space<smem>>
    %752 = vector.broadcast %751 : f32 to vector<16x128xf32>
    %753 = arith.mulf %752, %750 : vector<16x128xf32>
    %754 = arith.addf %744, %753 : vector<16x128xf32>
    %c12_288 = arith.constant 12 : index
    %c0_289 = arith.constant 0 : index
    %c0_290 = arith.constant 0 : index
    %755 = vector.load %arg11[%c12_288, %c0_289, %c0_290] : memref<14x16x128xf32, #tpu.memory_space<vmem>>, vector<1x16x128xf32>
    %756 = vector.shape_cast %755 : vector<1x16x128xf32> to vector<16x128xf32>
    %757 = arith.mulf %756, %750 : vector<16x128xf32>
    %758 = arith.addf %748, %757 : vector<16x128xf32>
    %759 = vector.extract_strided_slice %634 {offsets = [1, 0], sizes = [15, 128], strides = [1, 1]} : vector<16x128xf32> to vector<15x128xf32>
    %760 = tpu.concatenate %759, %45 in 0 : vector<15x128xf32>, vector<1x128xf32> -> vector<16x128xf32>
    %c13_291 = arith.constant 13 : index
    %c1_292 = arith.constant 1 : index
    %761 = memref.load %arg4[%c13_291, %c1_292] : memref<14x4xf32, #tpu.memory_space<smem>>
    %762 = vector.broadcast %761 : f32 to vector<16x128xf32>
    %763 = arith.mulf %762, %760 : vector<16x128xf32>
    %764 = arith.addf %754, %763 : vector<16x128xf32>
    %c13_293 = arith.constant 13 : index
    %c0_294 = arith.constant 0 : index
    %c0_295 = arith.constant 0 : index
    %765 = vector.load %arg11[%c13_293, %c0_294, %c0_295] : memref<14x16x128xf32, #tpu.memory_space<vmem>>, vector<1x16x128xf32>
    %766 = vector.shape_cast %765 : vector<1x16x128xf32> to vector<16x128xf32>
    %767 = arith.mulf %766, %760 : vector<16x128xf32>
    %768 = arith.addf %758, %767 : vector<16x128xf32>
    %c0_296 = arith.constant 0 : index
    %c0_297 = arith.constant 0 : index
    %c0_298 = arith.constant 0 : index
    %c0_299 = arith.constant 0 : index
    %769 = vector.load %arg3[%c0_296, %c0_297, %c0_298, %c0_299] : memref<1x1x16x128xf32, #tpu.memory_space<vmem>>, vector<1x1x16x128xf32>
    %770 = vector.shape_cast %769 : vector<1x1x16x128xf32> to vector<16x128xf32>
    %c1_300 = arith.constant 1 : index
    %771 = memref.load %arg6[%c1_300] : memref<4xf32, #tpu.memory_space<smem>>
    %c1_301 = arith.constant 1 : index
    %772 = memref.load %arg7[%c1_301] : memref<4xf32, #tpu.memory_space<smem>>
    %773 = arith.mulf %768, %770 : vector<16x128xf32>
    %774 = vector.broadcast %772 : f32 to vector<16x128xf32>
    %775 = arith.mulf %774, %773 : vector<16x128xf32>
    %776 = vector.broadcast %771 : f32 to vector<16x128xf32>
    %777 = arith.addf %776, %775 : vector<16x128xf32>
    %778 = arith.mulf %764, %777 : vector<16x128xf32>
    %c0_302 = arith.constant 0 : index
    %c2_303 = arith.constant 2 : index
    %c0_304 = arith.constant 0 : index
    %c0_305 = arith.constant 0 : index
    %779 = vector.load %arg1[%c0_302, %c2_303, %c0_304, %c0_305] : memref<1x4x16x128xf32, #tpu.memory_space<vmem>>, vector<1x1x16x128xf32>
    %780 = vector.shape_cast %779 : vector<1x1x16x128xf32> to vector<16x128xf32>
    %781 = arith.subf %780, %443 : vector<16x128xf32>
    %782 = math.exp %781 : vector<16x128xf32>
    %783 = arith.mulf %782, %464 : vector<16x128xf32>
    %c2_i32_306 = arith.constant 2 : i32
    %784 = tpu.dynamic_rotate %783 by %c2_i32_306 dim 1 : vector<16x128xf32>, i32 -> vector<16x128xf32>
    %785 = arith.mulf %784, %11 : vector<16x128xf32>
    %c1_i32_307 = arith.constant 1 : i32
    %786 = tpu.dynamic_rotate %783 by %c1_i32_307 dim 1 : vector<16x128xf32>, i32 -> vector<16x128xf32>
    %787 = arith.mulf %786, %22 : vector<16x128xf32>
    %c127_i32_308 = arith.constant 127 : i32
    %788 = tpu.dynamic_rotate %783 by %c127_i32_308 dim 1 : vector<16x128xf32>, i32 -> vector<16x128xf32>
    %789 = arith.mulf %788, %33 : vector<16x128xf32>
    %c126_i32_309 = arith.constant 126 : i32
    %790 = tpu.dynamic_rotate %783 by %c126_i32_309 dim 1 : vector<16x128xf32>, i32 -> vector<16x128xf32>
    %791 = arith.mulf %790, %44 : vector<16x128xf32>
    %cst_310 = arith.constant 0.000000e+00 : f32
    %792 = vector.broadcast %cst_310 : f32 to vector<16x128xf32>
    %cst_311 = arith.constant 0.000000e+00 : f32
    %793 = vector.broadcast %cst_311 : f32 to vector<16x128xf32>
    %794 = vector.extract_strided_slice %785 {offsets = [0, 0], sizes = [15, 128], strides = [1, 1]} : vector<16x128xf32> to vector<15x128xf32>
    %795 = tpu.concatenate %45, %794 in 0 : vector<1x128xf32>, vector<15x128xf32> -> vector<16x128xf32>
    %c0_312 = arith.constant 0 : index
    %c2_313 = arith.constant 2 : index
    %796 = memref.load %arg4[%c0_312, %c2_313] : memref<14x4xf32, #tpu.memory_space<smem>>
    %797 = vector.broadcast %796 : f32 to vector<16x128xf32>
    %798 = arith.mulf %797, %795 : vector<16x128xf32>
    %799 = arith.addf %792, %798 : vector<16x128xf32>
    %c0_314 = arith.constant 0 : index
    %c0_315 = arith.constant 0 : index
    %c0_316 = arith.constant 0 : index
    %800 = vector.load %arg11[%c0_314, %c0_315, %c0_316] : memref<14x16x128xf32, #tpu.memory_space<vmem>>, vector<1x16x128xf32>
    %801 = vector.shape_cast %800 : vector<1x16x128xf32> to vector<16x128xf32>
    %802 = arith.mulf %801, %795 : vector<16x128xf32>
    %803 = arith.addf %793, %802 : vector<16x128xf32>
    %804 = vector.extract_strided_slice %787 {offsets = [0, 0], sizes = [15, 128], strides = [1, 1]} : vector<16x128xf32> to vector<15x128xf32>
    %805 = tpu.concatenate %45, %804 in 0 : vector<1x128xf32>, vector<15x128xf32> -> vector<16x128xf32>
    %c1_317 = arith.constant 1 : index
    %c2_318 = arith.constant 2 : index
    %806 = memref.load %arg4[%c1_317, %c2_318] : memref<14x4xf32, #tpu.memory_space<smem>>
    %807 = vector.broadcast %806 : f32 to vector<16x128xf32>
    %808 = arith.mulf %807, %805 : vector<16x128xf32>
    %809 = arith.addf %799, %808 : vector<16x128xf32>
    %c1_319 = arith.constant 1 : index
    %c0_320 = arith.constant 0 : index
    %c0_321 = arith.constant 0 : index
    %810 = vector.load %arg11[%c1_319, %c0_320, %c0_321] : memref<14x16x128xf32, #tpu.memory_space<vmem>>, vector<1x16x128xf32>
    %811 = vector.shape_cast %810 : vector<1x16x128xf32> to vector<16x128xf32>
    %812 = arith.mulf %811, %805 : vector<16x128xf32>
    %813 = arith.addf %803, %812 : vector<16x128xf32>
    %814 = vector.extract_strided_slice %783 {offsets = [0, 0], sizes = [15, 128], strides = [1, 1]} : vector<16x128xf32> to vector<15x128xf32>
    %815 = tpu.concatenate %45, %814 in 0 : vector<1x128xf32>, vector<15x128xf32> -> vector<16x128xf32>
    %c2_322 = arith.constant 2 : index
    %c2_323 = arith.constant 2 : index
    %816 = memref.load %arg4[%c2_322, %c2_323] : memref<14x4xf32, #tpu.memory_space<smem>>
    %817 = vector.broadcast %816 : f32 to vector<16x128xf32>
    %818 = arith.mulf %817, %815 : vector<16x128xf32>
    %819 = arith.addf %809, %818 : vector<16x128xf32>
    %c2_324 = arith.constant 2 : index
    %c0_325 = arith.constant 0 : index
    %c0_326 = arith.constant 0 : index
    %820 = vector.load %arg11[%c2_324, %c0_325, %c0_326] : memref<14x16x128xf32, #tpu.memory_space<vmem>>, vector<1x16x128xf32>
    %821 = vector.shape_cast %820 : vector<1x16x128xf32> to vector<16x128xf32>
    %822 = arith.mulf %821, %815 : vector<16x128xf32>
    %823 = arith.addf %813, %822 : vector<16x128xf32>
    %824 = vector.extract_strided_slice %789 {offsets = [0, 0], sizes = [15, 128], strides = [1, 1]} : vector<16x128xf32> to vector<15x128xf32>
    %825 = tpu.concatenate %45, %824 in 0 : vector<1x128xf32>, vector<15x128xf32> -> vector<16x128xf32>
    %c3_327 = arith.constant 3 : index
    %c2_328 = arith.constant 2 : index
    %826 = memref.load %arg4[%c3_327, %c2_328] : memref<14x4xf32, #tpu.memory_space<smem>>
    %827 = vector.broadcast %826 : f32 to vector<16x128xf32>
    %828 = arith.mulf %827, %825 : vector<16x128xf32>
    %829 = arith.addf %819, %828 : vector<16x128xf32>
    %c3_329 = arith.constant 3 : index
    %c0_330 = arith.constant 0 : index
    %c0_331 = arith.constant 0 : index
    %830 = vector.load %arg11[%c3_329, %c0_330, %c0_331] : memref<14x16x128xf32, #tpu.memory_space<vmem>>, vector<1x16x128xf32>
    %831 = vector.shape_cast %830 : vector<1x16x128xf32> to vector<16x128xf32>
    %832 = arith.mulf %831, %825 : vector<16x128xf32>
    %833 = arith.addf %823, %832 : vector<16x128xf32>
    %834 = vector.extract_strided_slice %791 {offsets = [0, 0], sizes = [15, 128], strides = [1, 1]} : vector<16x128xf32> to vector<15x128xf32>
    %835 = tpu.concatenate %45, %834 in 0 : vector<1x128xf32>, vector<15x128xf32> -> vector<16x128xf32>
    %c4_332 = arith.constant 4 : index
    %c2_333 = arith.constant 2 : index
    %836 = memref.load %arg4[%c4_332, %c2_333] : memref<14x4xf32, #tpu.memory_space<smem>>
    %837 = vector.broadcast %836 : f32 to vector<16x128xf32>
    %838 = arith.mulf %837, %835 : vector<16x128xf32>
    %839 = arith.addf %829, %838 : vector<16x128xf32>
    %c4_334 = arith.constant 4 : index
    %c0_335 = arith.constant 0 : index
    %c0_336 = arith.constant 0 : index
    %840 = vector.load %arg11[%c4_334, %c0_335, %c0_336] : memref<14x16x128xf32, #tpu.memory_space<vmem>>, vector<1x16x128xf32>
    %841 = vector.shape_cast %840 : vector<1x16x128xf32> to vector<16x128xf32>
    %842 = arith.mulf %841, %835 : vector<16x128xf32>
    %843 = arith.addf %833, %842 : vector<16x128xf32>
    %c5_337 = arith.constant 5 : index
    %c2_338 = arith.constant 2 : index
    %844 = memref.load %arg4[%c5_337, %c2_338] : memref<14x4xf32, #tpu.memory_space<smem>>
    %845 = vector.broadcast %844 : f32 to vector<16x128xf32>
    %846 = arith.mulf %845, %785 : vector<16x128xf32>
    %847 = arith.addf %839, %846 : vector<16x128xf32>
    %c5_339 = arith.constant 5 : index
    %c0_340 = arith.constant 0 : index
    %c0_341 = arith.constant 0 : index
    %848 = vector.load %arg11[%c5_339, %c0_340, %c0_341] : memref<14x16x128xf32, #tpu.memory_space<vmem>>, vector<1x16x128xf32>
    %849 = vector.shape_cast %848 : vector<1x16x128xf32> to vector<16x128xf32>
    %850 = arith.mulf %849, %785 : vector<16x128xf32>
    %851 = arith.addf %843, %850 : vector<16x128xf32>
    %c6_342 = arith.constant 6 : index
    %c2_343 = arith.constant 2 : index
    %852 = memref.load %arg4[%c6_342, %c2_343] : memref<14x4xf32, #tpu.memory_space<smem>>
    %853 = vector.broadcast %852 : f32 to vector<16x128xf32>
    %854 = arith.mulf %853, %787 : vector<16x128xf32>
    %855 = arith.addf %847, %854 : vector<16x128xf32>
    %c6_344 = arith.constant 6 : index
    %c0_345 = arith.constant 0 : index
    %c0_346 = arith.constant 0 : index
    %856 = vector.load %arg11[%c6_344, %c0_345, %c0_346] : memref<14x16x128xf32, #tpu.memory_space<vmem>>, vector<1x16x128xf32>
    %857 = vector.shape_cast %856 : vector<1x16x128xf32> to vector<16x128xf32>
    %858 = arith.mulf %857, %787 : vector<16x128xf32>
    %859 = arith.addf %851, %858 : vector<16x128xf32>
    %c7_347 = arith.constant 7 : index
    %c2_348 = arith.constant 2 : index
    %860 = memref.load %arg4[%c7_347, %c2_348] : memref<14x4xf32, #tpu.memory_space<smem>>
    %861 = vector.broadcast %860 : f32 to vector<16x128xf32>
    %862 = arith.mulf %861, %789 : vector<16x128xf32>
    %863 = arith.addf %855, %862 : vector<16x128xf32>
    %c7_349 = arith.constant 7 : index
    %c0_350 = arith.constant 0 : index
    %c0_351 = arith.constant 0 : index
    %864 = vector.load %arg11[%c7_349, %c0_350, %c0_351] : memref<14x16x128xf32, #tpu.memory_space<vmem>>, vector<1x16x128xf32>
    %865 = vector.shape_cast %864 : vector<1x16x128xf32> to vector<16x128xf32>
    %866 = arith.mulf %865, %789 : vector<16x128xf32>
    %867 = arith.addf %859, %866 : vector<16x128xf32>
    %c8_352 = arith.constant 8 : index
    %c2_353 = arith.constant 2 : index
    %868 = memref.load %arg4[%c8_352, %c2_353] : memref<14x4xf32, #tpu.memory_space<smem>>
    %869 = vector.broadcast %868 : f32 to vector<16x128xf32>
    %870 = arith.mulf %869, %791 : vector<16x128xf32>
    %871 = arith.addf %863, %870 : vector<16x128xf32>
    %c8_354 = arith.constant 8 : index
    %c0_355 = arith.constant 0 : index
    %c0_356 = arith.constant 0 : index
    %872 = vector.load %arg11[%c8_354, %c0_355, %c0_356] : memref<14x16x128xf32, #tpu.memory_space<vmem>>, vector<1x16x128xf32>
    %873 = vector.shape_cast %872 : vector<1x16x128xf32> to vector<16x128xf32>
    %874 = arith.mulf %873, %791 : vector<16x128xf32>
    %875 = arith.addf %867, %874 : vector<16x128xf32>
    %876 = vector.extract_strided_slice %785 {offsets = [1, 0], sizes = [15, 128], strides = [1, 1]} : vector<16x128xf32> to vector<15x128xf32>
    %877 = tpu.concatenate %876, %45 in 0 : vector<15x128xf32>, vector<1x128xf32> -> vector<16x128xf32>
    %c9_357 = arith.constant 9 : index
    %c2_358 = arith.constant 2 : index
    %878 = memref.load %arg4[%c9_357, %c2_358] : memref<14x4xf32, #tpu.memory_space<smem>>
    %879 = vector.broadcast %878 : f32 to vector<16x128xf32>
    %880 = arith.mulf %879, %877 : vector<16x128xf32>
    %881 = arith.addf %871, %880 : vector<16x128xf32>
    %c9_359 = arith.constant 9 : index
    %c0_360 = arith.constant 0 : index
    %c0_361 = arith.constant 0 : index
    %882 = vector.load %arg11[%c9_359, %c0_360, %c0_361] : memref<14x16x128xf32, #tpu.memory_space<vmem>>, vector<1x16x128xf32>
    %883 = vector.shape_cast %882 : vector<1x16x128xf32> to vector<16x128xf32>
    %884 = arith.mulf %883, %877 : vector<16x128xf32>
    %885 = arith.addf %875, %884 : vector<16x128xf32>
    %886 = vector.extract_strided_slice %787 {offsets = [1, 0], sizes = [15, 128], strides = [1, 1]} : vector<16x128xf32> to vector<15x128xf32>
    %887 = tpu.concatenate %886, %45 in 0 : vector<15x128xf32>, vector<1x128xf32> -> vector<16x128xf32>
    %c10_362 = arith.constant 10 : index
    %c2_363 = arith.constant 2 : index
    %888 = memref.load %arg4[%c10_362, %c2_363] : memref<14x4xf32, #tpu.memory_space<smem>>
    %889 = vector.broadcast %888 : f32 to vector<16x128xf32>
    %890 = arith.mulf %889, %887 : vector<16x128xf32>
    %891 = arith.addf %881, %890 : vector<16x128xf32>
    %c10_364 = arith.constant 10 : index
    %c0_365 = arith.constant 0 : index
    %c0_366 = arith.constant 0 : index
    %892 = vector.load %arg11[%c10_364, %c0_365, %c0_366] : memref<14x16x128xf32, #tpu.memory_space<vmem>>, vector<1x16x128xf32>
    %893 = vector.shape_cast %892 : vector<1x16x128xf32> to vector<16x128xf32>
    %894 = arith.mulf %893, %887 : vector<16x128xf32>
    %895 = arith.addf %885, %894 : vector<16x128xf32>
    %896 = vector.extract_strided_slice %783 {offsets = [1, 0], sizes = [15, 128], strides = [1, 1]} : vector<16x128xf32> to vector<15x128xf32>
    %897 = tpu.concatenate %896, %45 in 0 : vector<15x128xf32>, vector<1x128xf32> -> vector<16x128xf32>
    %c11_367 = arith.constant 11 : index
    %c2_368 = arith.constant 2 : index
    %898 = memref.load %arg4[%c11_367, %c2_368] : memref<14x4xf32, #tpu.memory_space<smem>>
    %899 = vector.broadcast %898 : f32 to vector<16x128xf32>
    %900 = arith.mulf %899, %897 : vector<16x128xf32>
    %901 = arith.addf %891, %900 : vector<16x128xf32>
    %c11_369 = arith.constant 11 : index
    %c0_370 = arith.constant 0 : index
    %c0_371 = arith.constant 0 : index
    %902 = vector.load %arg11[%c11_369, %c0_370, %c0_371] : memref<14x16x128xf32, #tpu.memory_space<vmem>>, vector<1x16x128xf32>
    %903 = vector.shape_cast %902 : vector<1x16x128xf32> to vector<16x128xf32>
    %904 = arith.mulf %903, %897 : vector<16x128xf32>
    %905 = arith.addf %895, %904 : vector<16x128xf32>
    %906 = vector.extract_strided_slice %789 {offsets = [1, 0], sizes = [15, 128], strides = [1, 1]} : vector<16x128xf32> to vector<15x128xf32>
    %907 = tpu.concatenate %906, %45 in 0 : vector<15x128xf32>, vector<1x128xf32> -> vector<16x128xf32>
    %c12_372 = arith.constant 12 : index
    %c2_373 = arith.constant 2 : index
    %908 = memref.load %arg4[%c12_372, %c2_373] : memref<14x4xf32, #tpu.memory_space<smem>>
    %909 = vector.broadcast %908 : f32 to vector<16x128xf32>
    %910 = arith.mulf %909, %907 : vector<16x128xf32>
    %911 = arith.addf %901, %910 : vector<16x128xf32>
    %c12_374 = arith.constant 12 : index
    %c0_375 = arith.constant 0 : index
    %c0_376 = arith.constant 0 : index
    %912 = vector.load %arg11[%c12_374, %c0_375, %c0_376] : memref<14x16x128xf32, #tpu.memory_space<vmem>>, vector<1x16x128xf32>
    %913 = vector.shape_cast %912 : vector<1x16x128xf32> to vector<16x128xf32>
    %914 = arith.mulf %913, %907 : vector<16x128xf32>
    %915 = arith.addf %905, %914 : vector<16x128xf32>
    %916 = vector.extract_strided_slice %791 {offsets = [1, 0], sizes = [15, 128], strides = [1, 1]} : vector<16x128xf32> to vector<15x128xf32>
    %917 = tpu.concatenate %916, %45 in 0 : vector<15x128xf32>, vector<1x128xf32> -> vector<16x128xf32>
    %c13_377 = arith.constant 13 : index
    %c2_378 = arith.constant 2 : index
    %918 = memref.load %arg4[%c13_377, %c2_378] : memref<14x4xf32, #tpu.memory_space<smem>>
    %919 = vector.broadcast %918 : f32 to vector<16x128xf32>
    %920 = arith.mulf %919, %917 : vector<16x128xf32>
    %921 = arith.addf %911, %920 : vector<16x128xf32>
    %c13_379 = arith.constant 13 : index
    %c0_380 = arith.constant 0 : index
    %c0_381 = arith.constant 0 : index
    %922 = vector.load %arg11[%c13_379, %c0_380, %c0_381] : memref<14x16x128xf32, #tpu.memory_space<vmem>>, vector<1x16x128xf32>
    %923 = vector.shape_cast %922 : vector<1x16x128xf32> to vector<16x128xf32>
    %924 = arith.mulf %923, %917 : vector<16x128xf32>
    %925 = arith.addf %915, %924 : vector<16x128xf32>
    %c0_382 = arith.constant 0 : index
    %c0_383 = arith.constant 0 : index
    %c0_384 = arith.constant 0 : index
    %c0_385 = arith.constant 0 : index
    %926 = vector.load %arg3[%c0_382, %c0_383, %c0_384, %c0_385] : memref<1x1x16x128xf32, #tpu.memory_space<vmem>>, vector<1x1x16x128xf32>
    %927 = vector.shape_cast %926 : vector<1x1x16x128xf32> to vector<16x128xf32>
    %c2_386 = arith.constant 2 : index
    %928 = memref.load %arg6[%c2_386] : memref<4xf32, #tpu.memory_space<smem>>
    %c2_387 = arith.constant 2 : index
    %929 = memref.load %arg7[%c2_387] : memref<4xf32, #tpu.memory_space<smem>>
    %930 = arith.mulf %925, %927 : vector<16x128xf32>
    %931 = vector.broadcast %929 : f32 to vector<16x128xf32>
    %932 = arith.mulf %931, %930 : vector<16x128xf32>
    %933 = vector.broadcast %928 : f32 to vector<16x128xf32>
    %934 = arith.addf %933, %932 : vector<16x128xf32>
    %935 = arith.mulf %921, %934 : vector<16x128xf32>
    %c0_388 = arith.constant 0 : index
    %c3_389 = arith.constant 3 : index
    %c0_390 = arith.constant 0 : index
    %c0_391 = arith.constant 0 : index
    %936 = vector.load %arg1[%c0_388, %c3_389, %c0_390, %c0_391] : memref<1x4x16x128xf32, #tpu.memory_space<vmem>>, vector<1x1x16x128xf32>
    %937 = vector.shape_cast %936 : vector<1x1x16x128xf32> to vector<16x128xf32>
    %938 = arith.subf %937, %443 : vector<16x128xf32>
    %939 = math.exp %938 : vector<16x128xf32>
    %940 = arith.mulf %939, %464 : vector<16x128xf32>
    %c2_i32_392 = arith.constant 2 : i32
    %941 = tpu.dynamic_rotate %940 by %c2_i32_392 dim 1 : vector<16x128xf32>, i32 -> vector<16x128xf32>
    %942 = arith.mulf %941, %11 : vector<16x128xf32>
    %c1_i32_393 = arith.constant 1 : i32
    %943 = tpu.dynamic_rotate %940 by %c1_i32_393 dim 1 : vector<16x128xf32>, i32 -> vector<16x128xf32>
    %944 = arith.mulf %943, %22 : vector<16x128xf32>
    %c127_i32_394 = arith.constant 127 : i32
    %945 = tpu.dynamic_rotate %940 by %c127_i32_394 dim 1 : vector<16x128xf32>, i32 -> vector<16x128xf32>
    %946 = arith.mulf %945, %33 : vector<16x128xf32>
    %c126_i32_395 = arith.constant 126 : i32
    %947 = tpu.dynamic_rotate %940 by %c126_i32_395 dim 1 : vector<16x128xf32>, i32 -> vector<16x128xf32>
    %948 = arith.mulf %947, %44 : vector<16x128xf32>
    %cst_396 = arith.constant 0.000000e+00 : f32
    %949 = vector.broadcast %cst_396 : f32 to vector<16x128xf32>
    %cst_397 = arith.constant 0.000000e+00 : f32
    %950 = vector.broadcast %cst_397 : f32 to vector<16x128xf32>
    %951 = vector.extract_strided_slice %942 {offsets = [0, 0], sizes = [15, 128], strides = [1, 1]} : vector<16x128xf32> to vector<15x128xf32>
    %952 = tpu.concatenate %45, %951 in 0 : vector<1x128xf32>, vector<15x128xf32> -> vector<16x128xf32>
    %c0_398 = arith.constant 0 : index
    %c3_399 = arith.constant 3 : index
    %953 = memref.load %arg4[%c0_398, %c3_399] : memref<14x4xf32, #tpu.memory_space<smem>>
    %954 = vector.broadcast %953 : f32 to vector<16x128xf32>
    %955 = arith.mulf %954, %952 : vector<16x128xf32>
    %956 = arith.addf %949, %955 : vector<16x128xf32>
    %c0_400 = arith.constant 0 : index
    %c0_401 = arith.constant 0 : index
    %c0_402 = arith.constant 0 : index
    %957 = vector.load %arg11[%c0_400, %c0_401, %c0_402] : memref<14x16x128xf32, #tpu.memory_space<vmem>>, vector<1x16x128xf32>
    %958 = vector.shape_cast %957 : vector<1x16x128xf32> to vector<16x128xf32>
    %959 = arith.mulf %958, %952 : vector<16x128xf32>
    %960 = arith.addf %950, %959 : vector<16x128xf32>
    %961 = vector.extract_strided_slice %944 {offsets = [0, 0], sizes = [15, 128], strides = [1, 1]} : vector<16x128xf32> to vector<15x128xf32>
    %962 = tpu.concatenate %45, %961 in 0 : vector<1x128xf32>, vector<15x128xf32> -> vector<16x128xf32>
    %c1_403 = arith.constant 1 : index
    %c3_404 = arith.constant 3 : index
    %963 = memref.load %arg4[%c1_403, %c3_404] : memref<14x4xf32, #tpu.memory_space<smem>>
    %964 = vector.broadcast %963 : f32 to vector<16x128xf32>
    %965 = arith.mulf %964, %962 : vector<16x128xf32>
    %966 = arith.addf %956, %965 : vector<16x128xf32>
    %c1_405 = arith.constant 1 : index
    %c0_406 = arith.constant 0 : index
    %c0_407 = arith.constant 0 : index
    %967 = vector.load %arg11[%c1_405, %c0_406, %c0_407] : memref<14x16x128xf32, #tpu.memory_space<vmem>>, vector<1x16x128xf32>
    %968 = vector.shape_cast %967 : vector<1x16x128xf32> to vector<16x128xf32>
    %969 = arith.mulf %968, %962 : vector<16x128xf32>
    %970 = arith.addf %960, %969 : vector<16x128xf32>
    %971 = vector.extract_strided_slice %940 {offsets = [0, 0], sizes = [15, 128], strides = [1, 1]} : vector<16x128xf32> to vector<15x128xf32>
    %972 = tpu.concatenate %45, %971 in 0 : vector<1x128xf32>, vector<15x128xf32> -> vector<16x128xf32>
    %c2_408 = arith.constant 2 : index
    %c3_409 = arith.constant 3 : index
    %973 = memref.load %arg4[%c2_408, %c3_409] : memref<14x4xf32, #tpu.memory_space<smem>>
    %974 = vector.broadcast %973 : f32 to vector<16x128xf32>
    %975 = arith.mulf %974, %972 : vector<16x128xf32>
    %976 = arith.addf %966, %975 : vector<16x128xf32>
    %c2_410 = arith.constant 2 : index
    %c0_411 = arith.constant 0 : index
    %c0_412 = arith.constant 0 : index
    %977 = vector.load %arg11[%c2_410, %c0_411, %c0_412] : memref<14x16x128xf32, #tpu.memory_space<vmem>>, vector<1x16x128xf32>
    %978 = vector.shape_cast %977 : vector<1x16x128xf32> to vector<16x128xf32>
    %979 = arith.mulf %978, %972 : vector<16x128xf32>
    %980 = arith.addf %970, %979 : vector<16x128xf32>
    %981 = vector.extract_strided_slice %946 {offsets = [0, 0], sizes = [15, 128], strides = [1, 1]} : vector<16x128xf32> to vector<15x128xf32>
    %982 = tpu.concatenate %45, %981 in 0 : vector<1x128xf32>, vector<15x128xf32> -> vector<16x128xf32>
    %c3_413 = arith.constant 3 : index
    %c3_414 = arith.constant 3 : index
    %983 = memref.load %arg4[%c3_413, %c3_414] : memref<14x4xf32, #tpu.memory_space<smem>>
    %984 = vector.broadcast %983 : f32 to vector<16x128xf32>
    %985 = arith.mulf %984, %982 : vector<16x128xf32>
    %986 = arith.addf %976, %985 : vector<16x128xf32>
    %c3_415 = arith.constant 3 : index
    %c0_416 = arith.constant 0 : index
    %c0_417 = arith.constant 0 : index
    %987 = vector.load %arg11[%c3_415, %c0_416, %c0_417] : memref<14x16x128xf32, #tpu.memory_space<vmem>>, vector<1x16x128xf32>
    %988 = vector.shape_cast %987 : vector<1x16x128xf32> to vector<16x128xf32>
    %989 = arith.mulf %988, %982 : vector<16x128xf32>
    %990 = arith.addf %980, %989 : vector<16x128xf32>
    %991 = vector.extract_strided_slice %948 {offsets = [0, 0], sizes = [15, 128], strides = [1, 1]} : vector<16x128xf32> to vector<15x128xf32>
    %992 = tpu.concatenate %45, %991 in 0 : vector<1x128xf32>, vector<15x128xf32> -> vector<16x128xf32>
    %c4_418 = arith.constant 4 : index
    %c3_419 = arith.constant 3 : index
    %993 = memref.load %arg4[%c4_418, %c3_419] : memref<14x4xf32, #tpu.memory_space<smem>>
    %994 = vector.broadcast %993 : f32 to vector<16x128xf32>
    %995 = arith.mulf %994, %992 : vector<16x128xf32>
    %996 = arith.addf %986, %995 : vector<16x128xf32>
    %c4_420 = arith.constant 4 : index
    %c0_421 = arith.constant 0 : index
    %c0_422 = arith.constant 0 : index
    %997 = vector.load %arg11[%c4_420, %c0_421, %c0_422] : memref<14x16x128xf32, #tpu.memory_space<vmem>>, vector<1x16x128xf32>
    %998 = vector.shape_cast %997 : vector<1x16x128xf32> to vector<16x128xf32>
    %999 = arith.mulf %998, %992 : vector<16x128xf32>
    %1000 = arith.addf %990, %999 : vector<16x128xf32>
    %c5_423 = arith.constant 5 : index
    %c3_424 = arith.constant 3 : index
    %1001 = memref.load %arg4[%c5_423, %c3_424] : memref<14x4xf32, #tpu.memory_space<smem>>
    %1002 = vector.broadcast %1001 : f32 to vector<16x128xf32>
    %1003 = arith.mulf %1002, %942 : vector<16x128xf32>
    %1004 = arith.addf %996, %1003 : vector<16x128xf32>
    %c5_425 = arith.constant 5 : index
    %c0_426 = arith.constant 0 : index
    %c0_427 = arith.constant 0 : index
    %1005 = vector.load %arg11[%c5_425, %c0_426, %c0_427] : memref<14x16x128xf32, #tpu.memory_space<vmem>>, vector<1x16x128xf32>
    %1006 = vector.shape_cast %1005 : vector<1x16x128xf32> to vector<16x128xf32>
    %1007 = arith.mulf %1006, %942 : vector<16x128xf32>
    %1008 = arith.addf %1000, %1007 : vector<16x128xf32>
    %c6_428 = arith.constant 6 : index
    %c3_429 = arith.constant 3 : index
    %1009 = memref.load %arg4[%c6_428, %c3_429] : memref<14x4xf32, #tpu.memory_space<smem>>
    %1010 = vector.broadcast %1009 : f32 to vector<16x128xf32>
    %1011 = arith.mulf %1010, %944 : vector<16x128xf32>
    %1012 = arith.addf %1004, %1011 : vector<16x128xf32>
    %c6_430 = arith.constant 6 : index
    %c0_431 = arith.constant 0 : index
    %c0_432 = arith.constant 0 : index
    %1013 = vector.load %arg11[%c6_430, %c0_431, %c0_432] : memref<14x16x128xf32, #tpu.memory_space<vmem>>, vector<1x16x128xf32>
    %1014 = vector.shape_cast %1013 : vector<1x16x128xf32> to vector<16x128xf32>
    %1015 = arith.mulf %1014, %944 : vector<16x128xf32>
    %1016 = arith.addf %1008, %1015 : vector<16x128xf32>
    %c7_433 = arith.constant 7 : index
    %c3_434 = arith.constant 3 : index
    %1017 = memref.load %arg4[%c7_433, %c3_434] : memref<14x4xf32, #tpu.memory_space<smem>>
    %1018 = vector.broadcast %1017 : f32 to vector<16x128xf32>
    %1019 = arith.mulf %1018, %946 : vector<16x128xf32>
    %1020 = arith.addf %1012, %1019 : vector<16x128xf32>
    %c7_435 = arith.constant 7 : index
    %c0_436 = arith.constant 0 : index
    %c0_437 = arith.constant 0 : index
    %1021 = vector.load %arg11[%c7_435, %c0_436, %c0_437] : memref<14x16x128xf32, #tpu.memory_space<vmem>>, vector<1x16x128xf32>
    %1022 = vector.shape_cast %1021 : vector<1x16x128xf32> to vector<16x128xf32>
    %1023 = arith.mulf %1022, %946 : vector<16x128xf32>
    %1024 = arith.addf %1016, %1023 : vector<16x128xf32>
    %c8_438 = arith.constant 8 : index
    %c3_439 = arith.constant 3 : index
    %1025 = memref.load %arg4[%c8_438, %c3_439] : memref<14x4xf32, #tpu.memory_space<smem>>
    %1026 = vector.broadcast %1025 : f32 to vector<16x128xf32>
    %1027 = arith.mulf %1026, %948 : vector<16x128xf32>
    %1028 = arith.addf %1020, %1027 : vector<16x128xf32>
    %c8_440 = arith.constant 8 : index
    %c0_441 = arith.constant 0 : index
    %c0_442 = arith.constant 0 : index
    %1029 = vector.load %arg11[%c8_440, %c0_441, %c0_442] : memref<14x16x128xf32, #tpu.memory_space<vmem>>, vector<1x16x128xf32>
    %1030 = vector.shape_cast %1029 : vector<1x16x128xf32> to vector<16x128xf32>
    %1031 = arith.mulf %1030, %948 : vector<16x128xf32>
    %1032 = arith.addf %1024, %1031 : vector<16x128xf32>
    %1033 = vector.extract_strided_slice %942 {offsets = [1, 0], sizes = [15, 128], strides = [1, 1]} : vector<16x128xf32> to vector<15x128xf32>
    %1034 = tpu.concatenate %1033, %45 in 0 : vector<15x128xf32>, vector<1x128xf32> -> vector<16x128xf32>
    %c9_443 = arith.constant 9 : index
    %c3_444 = arith.constant 3 : index
    %1035 = memref.load %arg4[%c9_443, %c3_444] : memref<14x4xf32, #tpu.memory_space<smem>>
    %1036 = vector.broadcast %1035 : f32 to vector<16x128xf32>
    %1037 = arith.mulf %1036, %1034 : vector<16x128xf32>
    %1038 = arith.addf %1028, %1037 : vector<16x128xf32>
    %c9_445 = arith.constant 9 : index
    %c0_446 = arith.constant 0 : index
    %c0_447 = arith.constant 0 : index
    %1039 = vector.load %arg11[%c9_445, %c0_446, %c0_447] : memref<14x16x128xf32, #tpu.memory_space<vmem>>, vector<1x16x128xf32>
    %1040 = vector.shape_cast %1039 : vector<1x16x128xf32> to vector<16x128xf32>
    %1041 = arith.mulf %1040, %1034 : vector<16x128xf32>
    %1042 = arith.addf %1032, %1041 : vector<16x128xf32>
    %1043 = vector.extract_strided_slice %944 {offsets = [1, 0], sizes = [15, 128], strides = [1, 1]} : vector<16x128xf32> to vector<15x128xf32>
    %1044 = tpu.concatenate %1043, %45 in 0 : vector<15x128xf32>, vector<1x128xf32> -> vector<16x128xf32>
    %c10_448 = arith.constant 10 : index
    %c3_449 = arith.constant 3 : index
    %1045 = memref.load %arg4[%c10_448, %c3_449] : memref<14x4xf32, #tpu.memory_space<smem>>
    %1046 = vector.broadcast %1045 : f32 to vector<16x128xf32>
    %1047 = arith.mulf %1046, %1044 : vector<16x128xf32>
    %1048 = arith.addf %1038, %1047 : vector<16x128xf32>
    %c10_450 = arith.constant 10 : index
    %c0_451 = arith.constant 0 : index
    %c0_452 = arith.constant 0 : index
    %1049 = vector.load %arg11[%c10_450, %c0_451, %c0_452] : memref<14x16x128xf32, #tpu.memory_space<vmem>>, vector<1x16x128xf32>
    %1050 = vector.shape_cast %1049 : vector<1x16x128xf32> to vector<16x128xf32>
    %1051 = arith.mulf %1050, %1044 : vector<16x128xf32>
    %1052 = arith.addf %1042, %1051 : vector<16x128xf32>
    %1053 = vector.extract_strided_slice %940 {offsets = [1, 0], sizes = [15, 128], strides = [1, 1]} : vector<16x128xf32> to vector<15x128xf32>
    %1054 = tpu.concatenate %1053, %45 in 0 : vector<15x128xf32>, vector<1x128xf32> -> vector<16x128xf32>
    %c11_453 = arith.constant 11 : index
    %c3_454 = arith.constant 3 : index
    %1055 = memref.load %arg4[%c11_453, %c3_454] : memref<14x4xf32, #tpu.memory_space<smem>>
    %1056 = vector.broadcast %1055 : f32 to vector<16x128xf32>
    %1057 = arith.mulf %1056, %1054 : vector<16x128xf32>
    %1058 = arith.addf %1048, %1057 : vector<16x128xf32>
    %c11_455 = arith.constant 11 : index
    %c0_456 = arith.constant 0 : index
    %c0_457 = arith.constant 0 : index
    %1059 = vector.load %arg11[%c11_455, %c0_456, %c0_457] : memref<14x16x128xf32, #tpu.memory_space<vmem>>, vector<1x16x128xf32>
    %1060 = vector.shape_cast %1059 : vector<1x16x128xf32> to vector<16x128xf32>
    %1061 = arith.mulf %1060, %1054 : vector<16x128xf32>
    %1062 = arith.addf %1052, %1061 : vector<16x128xf32>
    %1063 = vector.extract_strided_slice %946 {offsets = [1, 0], sizes = [15, 128], strides = [1, 1]} : vector<16x128xf32> to vector<15x128xf32>
    %1064 = tpu.concatenate %1063, %45 in 0 : vector<15x128xf32>, vector<1x128xf32> -> vector<16x128xf32>
    %c12_458 = arith.constant 12 : index
    %c3_459 = arith.constant 3 : index
    %1065 = memref.load %arg4[%c12_458, %c3_459] : memref<14x4xf32, #tpu.memory_space<smem>>
    %1066 = vector.broadcast %1065 : f32 to vector<16x128xf32>
    %1067 = arith.mulf %1066, %1064 : vector<16x128xf32>
    %1068 = arith.addf %1058, %1067 : vector<16x128xf32>
    %c12_460 = arith.constant 12 : index
    %c0_461 = arith.constant 0 : index
    %c0_462 = arith.constant 0 : index
    %1069 = vector.load %arg11[%c12_460, %c0_461, %c0_462] : memref<14x16x128xf32, #tpu.memory_space<vmem>>, vector<1x16x128xf32>
    %1070 = vector.shape_cast %1069 : vector<1x16x128xf32> to vector<16x128xf32>
    %1071 = arith.mulf %1070, %1064 : vector<16x128xf32>
    %1072 = arith.addf %1062, %1071 : vector<16x128xf32>
    %1073 = vector.extract_strided_slice %948 {offsets = [1, 0], sizes = [15, 128], strides = [1, 1]} : vector<16x128xf32> to vector<15x128xf32>
    %1074 = tpu.concatenate %1073, %45 in 0 : vector<15x128xf32>, vector<1x128xf32> -> vector<16x128xf32>
    %c13_463 = arith.constant 13 : index
    %c3_464 = arith.constant 3 : index
    %1075 = memref.load %arg4[%c13_463, %c3_464] : memref<14x4xf32, #tpu.memory_space<smem>>
    %1076 = vector.broadcast %1075 : f32 to vector<16x128xf32>
    %1077 = arith.mulf %1076, %1074 : vector<16x128xf32>
    %1078 = arith.addf %1068, %1077 : vector<16x128xf32>
    %c13_465 = arith.constant 13 : index
    %c0_466 = arith.constant 0 : index
    %c0_467 = arith.constant 0 : index
    %1079 = vector.load %arg11[%c13_465, %c0_466, %c0_467] : memref<14x16x128xf32, #tpu.memory_space<vmem>>, vector<1x16x128xf32>
    %1080 = vector.shape_cast %1079 : vector<1x16x128xf32> to vector<16x128xf32>
    %1081 = arith.mulf %1080, %1074 : vector<16x128xf32>
    %1082 = arith.addf %1072, %1081 : vector<16x128xf32>
    %c0_468 = arith.constant 0 : index
    %c0_469 = arith.constant 0 : index
    %c0_470 = arith.constant 0 : index
    %c0_471 = arith.constant 0 : index
    %1083 = vector.load %arg3[%c0_468, %c0_469, %c0_470, %c0_471] : memref<1x1x16x128xf32, #tpu.memory_space<vmem>>, vector<1x1x16x128xf32>
    %1084 = vector.shape_cast %1083 : vector<1x1x16x128xf32> to vector<16x128xf32>
    %c3_472 = arith.constant 3 : index
    %1085 = memref.load %arg6[%c3_472] : memref<4xf32, #tpu.memory_space<smem>>
    %c3_473 = arith.constant 3 : index
    %1086 = memref.load %arg7[%c3_473] : memref<4xf32, #tpu.memory_space<smem>>
    %1087 = arith.mulf %1082, %1084 : vector<16x128xf32>
    %1088 = vector.broadcast %1086 : f32 to vector<16x128xf32>
    %1089 = arith.mulf %1088, %1087 : vector<16x128xf32>
    %1090 = vector.broadcast %1085 : f32 to vector<16x128xf32>
    %1091 = arith.addf %1090, %1089 : vector<16x128xf32>
    %1092 = arith.mulf %1078, %1091 : vector<16x128xf32>
    %1093 = arith.addf %621, %778 : vector<16x128xf32>
    %1094 = arith.addf %1093, %935 : vector<16x128xf32>
    %1095 = arith.addf %1094, %1092 : vector<16x128xf32>
    %c0_474 = arith.constant 0 : index
    %c0_475 = arith.constant 0 : index
    %c0_476 = arith.constant 0 : index
    %c0_477 = arith.constant 0 : index
    %1096 = vector.load %arg1[%c0_474, %c0_475, %c0_476, %c0_477] : memref<1x4x16x128xf32, #tpu.memory_space<vmem>>, vector<1x1x16x128xf32>
    %1097 = vector.shape_cast %1096 : vector<1x1x16x128xf32> to vector<16x128xf32>
    %1098 = arith.subf %1095, %621 : vector<16x128xf32>
    %1099 = arith.subf %1097, %1098 : vector<16x128xf32>
    %c0_478 = arith.constant 0 : index
    %c0_479 = arith.constant 0 : index
    %c0_480 = arith.constant 0 : index
    %c0_481 = arith.constant 0 : index
    %1100 = vector.load %arg10[%c0_478, %c0_479, %c0_480, %c0_481] : memref<1x4x16x128xf32, #tpu.memory_space<vmem>>, vector<1x1x16x128xf32>
    %1101 = vector.shape_cast %1100 : vector<1x1x16x128xf32> to vector<16x128xf32>
    %1102 = vector.shape_cast %1099 : vector<16x128xf32> to vector<1x1x16x128xf32>
    tpu.vector_store %arg10[%c0_478, %c0_479, %c0_480, %c0_481], %1102 {strides = array<i32>} : memref<1x4x16x128xf32, #tpu.memory_space<vmem>>, vector<1x1x16x128xf32>,
    %c0_482 = arith.constant 0 : index
    %c1_483 = arith.constant 1 : index
    %c0_484 = arith.constant 0 : index
    %c0_485 = arith.constant 0 : index
    %1103 = vector.load %arg1[%c0_482, %c1_483, %c0_484, %c0_485] : memref<1x4x16x128xf32, #tpu.memory_space<vmem>>, vector<1x1x16x128xf32>
    %1104 = vector.shape_cast %1103 : vector<1x1x16x128xf32> to vector<16x128xf32>
    %1105 = arith.subf %1095, %778 : vector<16x128xf32>
    %1106 = arith.subf %1104, %1105 : vector<16x128xf32>
    %c0_486 = arith.constant 0 : index
    %c1_487 = arith.constant 1 : index
    %c0_488 = arith.constant 0 : index
    %c0_489 = arith.constant 0 : index
    %1107 = vector.load %arg10[%c0_486, %c1_487, %c0_488, %c0_489] : memref<1x4x16x128xf32, #tpu.memory_space<vmem>>, vector<1x1x16x128xf32>
    %1108 = vector.shape_cast %1107 : vector<1x1x16x128xf32> to vector<16x128xf32>
    %1109 = vector.shape_cast %1106 : vector<16x128xf32> to vector<1x1x16x128xf32>
    tpu.vector_store %arg10[%c0_486, %c1_487, %c0_488, %c0_489], %1109 {strides = array<i32>} : memref<1x4x16x128xf32, #tpu.memory_space<vmem>>, vector<1x1x16x128xf32>,
    %c0_490 = arith.constant 0 : index
    %c2_491 = arith.constant 2 : index
    %c0_492 = arith.constant 0 : index
    %c0_493 = arith.constant 0 : index
    %1110 = vector.load %arg1[%c0_490, %c2_491, %c0_492, %c0_493] : memref<1x4x16x128xf32, #tpu.memory_space<vmem>>, vector<1x1x16x128xf32>
    %1111 = vector.shape_cast %1110 : vector<1x1x16x128xf32> to vector<16x128xf32>
    %1112 = arith.subf %1095, %935 : vector<16x128xf32>
    %1113 = arith.subf %1111, %1112 : vector<16x128xf32>
    %c0_494 = arith.constant 0 : index
    %c2_495 = arith.constant 2 : index
    %c0_496 = arith.constant 0 : index
    %c0_497 = arith.constant 0 : index
    %1114 = vector.load %arg10[%c0_494, %c2_495, %c0_496, %c0_497] : memref<1x4x16x128xf32, #tpu.memory_space<vmem>>, vector<1x1x16x128xf32>
    %1115 = vector.shape_cast %1114 : vector<1x1x16x128xf32> to vector<16x128xf32>
    %1116 = vector.shape_cast %1113 : vector<16x128xf32> to vector<1x1x16x128xf32>
    tpu.vector_store %arg10[%c0_494, %c2_495, %c0_496, %c0_497], %1116 {strides = array<i32>} : memref<1x4x16x128xf32, #tpu.memory_space<vmem>>, vector<1x1x16x128xf32>,
    %c0_498 = arith.constant 0 : index
    %c3_499 = arith.constant 3 : index
    %c0_500 = arith.constant 0 : index
    %c0_501 = arith.constant 0 : index
    %1117 = vector.load %arg1[%c0_498, %c3_499, %c0_500, %c0_501] : memref<1x4x16x128xf32, #tpu.memory_space<vmem>>, vector<1x1x16x128xf32>
    %1118 = vector.shape_cast %1117 : vector<1x1x16x128xf32> to vector<16x128xf32>
    %1119 = arith.subf %1095, %1092 : vector<16x128xf32>
    %1120 = arith.subf %1118, %1119 : vector<16x128xf32>
    %c0_502 = arith.constant 0 : index
    %c3_503 = arith.constant 3 : index
    %c0_504 = arith.constant 0 : index
    %c0_505 = arith.constant 0 : index
    %1121 = vector.load %arg10[%c0_502, %c3_503, %c0_504, %c0_505] : memref<1x4x16x128xf32, #tpu.memory_space<vmem>>, vector<1x1x16x128xf32>
    %1122 = vector.shape_cast %1121 : vector<1x1x16x128xf32> to vector<16x128xf32>
    %1123 = vector.shape_cast %1120 : vector<16x128xf32> to vector<1x1x16x128xf32>
    tpu.vector_store %arg10[%c0_502, %c3_503, %c0_504, %c0_505], %1123 {strides = array<i32>} : memref<1x4x16x128xf32, #tpu.memory_space<vmem>>, vector<1x1x16x128xf32>,
    %c0_506 = arith.constant 0 : index
    %c0_507 = arith.constant 0 : index
    %c0_508 = arith.constant 0 : index
    %c0_509 = arith.constant 0 : index
    %1124 = vector.load %arg10[%c0_506, %c0_507, %c0_508, %c0_509] : memref<1x4x16x128xf32, #tpu.memory_space<vmem>>, vector<1x1x16x128xf32>
    %1125 = vector.shape_cast %1124 : vector<1x1x16x128xf32> to vector<16x128xf32>
    %c0_510 = arith.constant 0 : index
    %c1_511 = arith.constant 1 : index
    %c0_512 = arith.constant 0 : index
    %c0_513 = arith.constant 0 : index
    %1126 = vector.load %arg10[%c0_510, %c1_511, %c0_512, %c0_513] : memref<1x4x16x128xf32, #tpu.memory_space<vmem>>, vector<1x1x16x128xf32>
    %1127 = vector.shape_cast %1126 : vector<1x1x16x128xf32> to vector<16x128xf32>
    %1128 = arith.maximumf %1125, %1127 : vector<16x128xf32>
    %c0_514 = arith.constant 0 : index
    %c2_515 = arith.constant 2 : index
    %c0_516 = arith.constant 0 : index
    %c0_517 = arith.constant 0 : index
    %1129 = vector.load %arg10[%c0_514, %c2_515, %c0_516, %c0_517] : memref<1x4x16x128xf32, #tpu.memory_space<vmem>>, vector<1x1x16x128xf32>
    %1130 = vector.shape_cast %1129 : vector<1x1x16x128xf32> to vector<16x128xf32>
    %1131 = arith.maximumf %1128, %1130 : vector<16x128xf32>
    %c0_518 = arith.constant 0 : index
    %c3_519 = arith.constant 3 : index
    %c0_520 = arith.constant 0 : index
    %c0_521 = arith.constant 0 : index
    %1132 = vector.load %arg10[%c0_518, %c3_519, %c0_520, %c0_521] : memref<1x4x16x128xf32, #tpu.memory_space<vmem>>, vector<1x1x16x128xf32>
    %1133 = vector.shape_cast %1132 : vector<1x1x16x128xf32> to vector<16x128xf32>
    %1134 = arith.maximumf %1131, %1133 : vector<16x128xf32>
    %c0_522 = arith.constant 0 : index
    %c0_523 = arith.constant 0 : index
    %c0_524 = arith.constant 0 : index
    %c0_525 = arith.constant 0 : index
    %1135 = vector.load %arg10[%c0_522, %c0_523, %c0_524, %c0_525] : memref<1x4x16x128xf32, #tpu.memory_space<vmem>>, vector<1x1x16x128xf32>
    %1136 = vector.shape_cast %1135 : vector<1x1x16x128xf32> to vector<16x128xf32>
    %1137 = arith.subf %1136, %1134 : vector<16x128xf32>
    %1138 = math.exp %1137 : vector<16x128xf32>
    %c0_526 = arith.constant 0 : index
    %c1_527 = arith.constant 1 : index
    %c0_528 = arith.constant 0 : index
    %c0_529 = arith.constant 0 : index
    %1139 = vector.load %arg10[%c0_526, %c1_527, %c0_528, %c0_529] : memref<1x4x16x128xf32, #tpu.memory_space<vmem>>, vector<1x1x16x128xf32>
    %1140 = vector.shape_cast %1139 : vector<1x1x16x128xf32> to vector<16x128xf32>
    %1141 = arith.subf %1140, %1134 : vector<16x128xf32>
    %1142 = math.exp %1141 : vector<16x128xf32>
    %1143 = arith.addf %1138, %1142 : vector<16x128xf32>
    %c0_530 = arith.constant 0 : index
    %c2_531 = arith.constant 2 : index
    %c0_532 = arith.constant 0 : index
    %c0_533 = arith.constant 0 : index
    %1144 = vector.load %arg10[%c0_530, %c2_531, %c0_532, %c0_533] : memref<1x4x16x128xf32, #tpu.memory_space<vmem>>, vector<1x1x16x128xf32>
    %1145 = vector.shape_cast %1144 : vector<1x1x16x128xf32> to vector<16x128xf32>
    %1146 = arith.subf %1145, %1134 : vector<16x128xf32>
    %1147 = math.exp %1146 : vector<16x128xf32>
    %1148 = arith.addf %1143, %1147 : vector<16x128xf32>
    %c0_534 = arith.constant 0 : index
    %c3_535 = arith.constant 3 : index
    %c0_536 = arith.constant 0 : index
    %c0_537 = arith.constant 0 : index
    %1149 = vector.load %arg10[%c0_534, %c3_535, %c0_536, %c0_537] : memref<1x4x16x128xf32, #tpu.memory_space<vmem>>, vector<1x1x16x128xf32>
    %1150 = vector.shape_cast %1149 : vector<1x1x16x128xf32> to vector<16x128xf32>
    %1151 = arith.subf %1150, %1134 : vector<16x128xf32>
    %1152 = math.exp %1151 : vector<16x128xf32>
    %1153 = arith.addf %1148, %1152 : vector<16x128xf32>
    %cst_538 = arith.constant 1.000000e+00 : f32
    %1154 = vector.broadcast %cst_538 : f32 to vector<16x128xf32>
    %1155 = arith.divf %1154, %1153 : vector<16x128xf32>
    %c0_539 = arith.constant 0 : index
    %c0_540 = arith.constant 0 : index
    %c0_541 = arith.constant 0 : index
    %c0_542 = arith.constant 0 : index
    %1156 = vector.load %arg10[%c0_539, %c0_540, %c0_541, %c0_542] : memref<1x4x16x128xf32, #tpu.memory_space<vmem>>, vector<1x1x16x128xf32>
    %1157 = vector.shape_cast %1156 : vector<1x1x16x128xf32> to vector<16x128xf32>
    %1158 = arith.subf %1157, %1134 : vector<16x128xf32>
    %1159 = math.exp %1158 : vector<16x128xf32>
    %1160 = arith.mulf %1159, %1155 : vector<16x128xf32>
    %c2_i32_543 = arith.constant 2 : i32
    %1161 = tpu.dynamic_rotate %1160 by %c2_i32_543 dim 1 : vector<16x128xf32>, i32 -> vector<16x128xf32>
    %1162 = arith.mulf %1161, %11 : vector<16x128xf32>
    %c1_i32_544 = arith.constant 1 : i32
    %1163 = tpu.dynamic_rotate %1160 by %c1_i32_544 dim 1 : vector<16x128xf32>, i32 -> vector<16x128xf32>
    %1164 = arith.mulf %1163, %22 : vector<16x128xf32>
    %c127_i32_545 = arith.constant 127 : i32
    %1165 = tpu.dynamic_rotate %1160 by %c127_i32_545 dim 1 : vector<16x128xf32>, i32 -> vector<16x128xf32>
    %1166 = arith.mulf %1165, %33 : vector<16x128xf32>
    %c126_i32_546 = arith.constant 126 : i32
    %1167 = tpu.dynamic_rotate %1160 by %c126_i32_546 dim 1 : vector<16x128xf32>, i32 -> vector<16x128xf32>
    %1168 = arith.mulf %1167, %44 : vector<16x128xf32>
    %cst_547 = arith.constant 0.000000e+00 : f32
    %1169 = vector.broadcast %cst_547 : f32 to vector<16x128xf32>
    %cst_548 = arith.constant 0.000000e+00 : f32
    %1170 = vector.broadcast %cst_548 : f32 to vector<16x128xf32>
    %1171 = vector.extract_strided_slice %1162 {offsets = [0, 0], sizes = [15, 128], strides = [1, 1]} : vector<16x128xf32> to vector<15x128xf32>
    %1172 = tpu.concatenate %45, %1171 in 0 : vector<1x128xf32>, vector<15x128xf32> -> vector<16x128xf32>
    %c0_549 = arith.constant 0 : index
    %c0_550 = arith.constant 0 : index
    %1173 = memref.load %arg4[%c0_549, %c0_550] : memref<14x4xf32, #tpu.memory_space<smem>>
    %1174 = vector.broadcast %1173 : f32 to vector<16x128xf32>
    %1175 = arith.mulf %1174, %1172 : vector<16x128xf32>
    %1176 = arith.addf %1169, %1175 : vector<16x128xf32>
    %c0_551 = arith.constant 0 : index
    %c0_552 = arith.constant 0 : index
    %c0_553 = arith.constant 0 : index
    %1177 = vector.load %arg11[%c0_551, %c0_552, %c0_553] : memref<14x16x128xf32, #tpu.memory_space<vmem>>, vector<1x16x128xf32>
    %1178 = vector.shape_cast %1177 : vector<1x16x128xf32> to vector<16x128xf32>
    %1179 = arith.mulf %1178, %1172 : vector<16x128xf32>
    %1180 = arith.addf %1170, %1179 : vector<16x128xf32>
    %1181 = vector.extract_strided_slice %1164 {offsets = [0, 0], sizes = [15, 128], strides = [1, 1]} : vector<16x128xf32> to vector<15x128xf32>
    %1182 = tpu.concatenate %45, %1181 in 0 : vector<1x128xf32>, vector<15x128xf32> -> vector<16x128xf32>
    %c1_554 = arith.constant 1 : index
    %c0_555 = arith.constant 0 : index
    %1183 = memref.load %arg4[%c1_554, %c0_555] : memref<14x4xf32, #tpu.memory_space<smem>>
    %1184 = vector.broadcast %1183 : f32 to vector<16x128xf32>
    %1185 = arith.mulf %1184, %1182 : vector<16x128xf32>
    %1186 = arith.addf %1176, %1185 : vector<16x128xf32>
    %c1_556 = arith.constant 1 : index
    %c0_557 = arith.constant 0 : index
    %c0_558 = arith.constant 0 : index
    %1187 = vector.load %arg11[%c1_556, %c0_557, %c0_558] : memref<14x16x128xf32, #tpu.memory_space<vmem>>, vector<1x16x128xf32>
    %1188 = vector.shape_cast %1187 : vector<1x16x128xf32> to vector<16x128xf32>
    %1189 = arith.mulf %1188, %1182 : vector<16x128xf32>
    %1190 = arith.addf %1180, %1189 : vector<16x128xf32>
    %1191 = vector.extract_strided_slice %1160 {offsets = [0, 0], sizes = [15, 128], strides = [1, 1]} : vector<16x128xf32> to vector<15x128xf32>
    %1192 = tpu.concatenate %45, %1191 in 0 : vector<1x128xf32>, vector<15x128xf32> -> vector<16x128xf32>
    %c2_559 = arith.constant 2 : index
    %c0_560 = arith.constant 0 : index
    %1193 = memref.load %arg4[%c2_559, %c0_560] : memref<14x4xf32, #tpu.memory_space<smem>>
    %1194 = vector.broadcast %1193 : f32 to vector<16x128xf32>
    %1195 = arith.mulf %1194, %1192 : vector<16x128xf32>
    %1196 = arith.addf %1186, %1195 : vector<16x128xf32>
    %c2_561 = arith.constant 2 : index
    %c0_562 = arith.constant 0 : index
    %c0_563 = arith.constant 0 : index
    %1197 = vector.load %arg11[%c2_561, %c0_562, %c0_563] : memref<14x16x128xf32, #tpu.memory_space<vmem>>, vector<1x16x128xf32>
    %1198 = vector.shape_cast %1197 : vector<1x16x128xf32> to vector<16x128xf32>
    %1199 = arith.mulf %1198, %1192 : vector<16x128xf32>
    %1200 = arith.addf %1190, %1199 : vector<16x128xf32>
    %1201 = vector.extract_strided_slice %1166 {offsets = [0, 0], sizes = [15, 128], strides = [1, 1]} : vector<16x128xf32> to vector<15x128xf32>
    %1202 = tpu.concatenate %45, %1201 in 0 : vector<1x128xf32>, vector<15x128xf32> -> vector<16x128xf32>
    %c3_564 = arith.constant 3 : index
    %c0_565 = arith.constant 0 : index
    %1203 = memref.load %arg4[%c3_564, %c0_565] : memref<14x4xf32, #tpu.memory_space<smem>>
    %1204 = vector.broadcast %1203 : f32 to vector<16x128xf32>
    %1205 = arith.mulf %1204, %1202 : vector<16x128xf32>
    %1206 = arith.addf %1196, %1205 : vector<16x128xf32>
    %c3_566 = arith.constant 3 : index
    %c0_567 = arith.constant 0 : index
    %c0_568 = arith.constant 0 : index
    %1207 = vector.load %arg11[%c3_566, %c0_567, %c0_568] : memref<14x16x128xf32, #tpu.memory_space<vmem>>, vector<1x16x128xf32>
    %1208 = vector.shape_cast %1207 : vector<1x16x128xf32> to vector<16x128xf32>
    %1209 = arith.mulf %1208, %1202 : vector<16x128xf32>
    %1210 = arith.addf %1200, %1209 : vector<16x128xf32>
    %1211 = vector.extract_strided_slice %1168 {offsets = [0, 0], sizes = [15, 128], strides = [1, 1]} : vector<16x128xf32> to vector<15x128xf32>
    %1212 = tpu.concatenate %45, %1211 in 0 : vector<1x128xf32>, vector<15x128xf32> -> vector<16x128xf32>
    %c4_569 = arith.constant 4 : index
    %c0_570 = arith.constant 0 : index
    %1213 = memref.load %arg4[%c4_569, %c0_570] : memref<14x4xf32, #tpu.memory_space<smem>>
    %1214 = vector.broadcast %1213 : f32 to vector<16x128xf32>
    %1215 = arith.mulf %1214, %1212 : vector<16x128xf32>
    %1216 = arith.addf %1206, %1215 : vector<16x128xf32>
    %c4_571 = arith.constant 4 : index
    %c0_572 = arith.constant 0 : index
    %c0_573 = arith.constant 0 : index
    %1217 = vector.load %arg11[%c4_571, %c0_572, %c0_573] : memref<14x16x128xf32, #tpu.memory_space<vmem>>, vector<1x16x128xf32>
    %1218 = vector.shape_cast %1217 : vector<1x16x128xf32> to vector<16x128xf32>
    %1219 = arith.mulf %1218, %1212 : vector<16x128xf32>
    %1220 = arith.addf %1210, %1219 : vector<16x128xf32>
    %c5_574 = arith.constant 5 : index
    %c0_575 = arith.constant 0 : index
    %1221 = memref.load %arg4[%c5_574, %c0_575] : memref<14x4xf32, #tpu.memory_space<smem>>
    %1222 = vector.broadcast %1221 : f32 to vector<16x128xf32>
    %1223 = arith.mulf %1222, %1162 : vector<16x128xf32>
    %1224 = arith.addf %1216, %1223 : vector<16x128xf32>
    %c5_576 = arith.constant 5 : index
    %c0_577 = arith.constant 0 : index
    %c0_578 = arith.constant 0 : index
    %1225 = vector.load %arg11[%c5_576, %c0_577, %c0_578] : memref<14x16x128xf32, #tpu.memory_space<vmem>>, vector<1x16x128xf32>
    %1226 = vector.shape_cast %1225 : vector<1x16x128xf32> to vector<16x128xf32>
    %1227 = arith.mulf %1226, %1162 : vector<16x128xf32>
    %1228 = arith.addf %1220, %1227 : vector<16x128xf32>
    %c6_579 = arith.constant 6 : index
    %c0_580 = arith.constant 0 : index
    %1229 = memref.load %arg4[%c6_579, %c0_580] : memref<14x4xf32, #tpu.memory_space<smem>>
    %1230 = vector.broadcast %1229 : f32 to vector<16x128xf32>
    %1231 = arith.mulf %1230, %1164 : vector<16x128xf32>
    %1232 = arith.addf %1224, %1231 : vector<16x128xf32>
    %c6_581 = arith.constant 6 : index
    %c0_582 = arith.constant 0 : index
    %c0_583 = arith.constant 0 : index
    %1233 = vector.load %arg11[%c6_581, %c0_582, %c0_583] : memref<14x16x128xf32, #tpu.memory_space<vmem>>, vector<1x16x128xf32>
    %1234 = vector.shape_cast %1233 : vector<1x16x128xf32> to vector<16x128xf32>
    %1235 = arith.mulf %1234, %1164 : vector<16x128xf32>
    %1236 = arith.addf %1228, %1235 : vector<16x128xf32>
    %c7_584 = arith.constant 7 : index
    %c0_585 = arith.constant 0 : index
    %1237 = memref.load %arg4[%c7_584, %c0_585] : memref<14x4xf32, #tpu.memory_space<smem>>
    %1238 = vector.broadcast %1237 : f32 to vector<16x128xf32>
    %1239 = arith.mulf %1238, %1166 : vector<16x128xf32>
    %1240 = arith.addf %1232, %1239 : vector<16x128xf32>
    %c7_586 = arith.constant 7 : index
    %c0_587 = arith.constant 0 : index
    %c0_588 = arith.constant 0 : index
    %1241 = vector.load %arg11[%c7_586, %c0_587, %c0_588] : memref<14x16x128xf32, #tpu.memory_space<vmem>>, vector<1x16x128xf32>
    %1242 = vector.shape_cast %1241 : vector<1x16x128xf32> to vector<16x128xf32>
    %1243 = arith.mulf %1242, %1166 : vector<16x128xf32>
    %1244 = arith.addf %1236, %1243 : vector<16x128xf32>
    %c8_589 = arith.constant 8 : index
    %c0_590 = arith.constant 0 : index
    %1245 = memref.load %arg4[%c8_589, %c0_590] : memref<14x4xf32, #tpu.memory_space<smem>>
    %1246 = vector.broadcast %1245 : f32 to vector<16x128xf32>
    %1247 = arith.mulf %1246, %1168 : vector<16x128xf32>
    %1248 = arith.addf %1240, %1247 : vector<16x128xf32>
    %c8_591 = arith.constant 8 : index
    %c0_592 = arith.constant 0 : index
    %c0_593 = arith.constant 0 : index
    %1249 = vector.load %arg11[%c8_591, %c0_592, %c0_593] : memref<14x16x128xf32, #tpu.memory_space<vmem>>, vector<1x16x128xf32>
    %1250 = vector.shape_cast %1249 : vector<1x16x128xf32> to vector<16x128xf32>
    %1251 = arith.mulf %1250, %1168 : vector<16x128xf32>
    %1252 = arith.addf %1244, %1251 : vector<16x128xf32>
    %1253 = vector.extract_strided_slice %1162 {offsets = [1, 0], sizes = [15, 128], strides = [1, 1]} : vector<16x128xf32> to vector<15x128xf32>
    %1254 = tpu.concatenate %1253, %45 in 0 : vector<15x128xf32>, vector<1x128xf32> -> vector<16x128xf32>
    %c9_594 = arith.constant 9 : index
    %c0_595 = arith.constant 0 : index
    %1255 = memref.load %arg4[%c9_594, %c0_595] : memref<14x4xf32, #tpu.memory_space<smem>>
    %1256 = vector.broadcast %1255 : f32 to vector<16x128xf32>
    %1257 = arith.mulf %1256, %1254 : vector<16x128xf32>
    %1258 = arith.addf %1248, %1257 : vector<16x128xf32>
    %c9_596 = arith.constant 9 : index
    %c0_597 = arith.constant 0 : index
    %c0_598 = arith.constant 0 : index
    %1259 = vector.load %arg11[%c9_596, %c0_597, %c0_598] : memref<14x16x128xf32, #tpu.memory_space<vmem>>, vector<1x16x128xf32>
    %1260 = vector.shape_cast %1259 : vector<1x16x128xf32> to vector<16x128xf32>
    %1261 = arith.mulf %1260, %1254 : vector<16x128xf32>
    %1262 = arith.addf %1252, %1261 : vector<16x128xf32>
    %1263 = vector.extract_strided_slice %1164 {offsets = [1, 0], sizes = [15, 128], strides = [1, 1]} : vector<16x128xf32> to vector<15x128xf32>
    %1264 = tpu.concatenate %1263, %45 in 0 : vector<15x128xf32>, vector<1x128xf32> -> vector<16x128xf32>
    %c10_599 = arith.constant 10 : index
    %c0_600 = arith.constant 0 : index
    %1265 = memref.load %arg4[%c10_599, %c0_600] : memref<14x4xf32, #tpu.memory_space<smem>>
    %1266 = vector.broadcast %1265 : f32 to vector<16x128xf32>
    %1267 = arith.mulf %1266, %1264 : vector<16x128xf32>
    %1268 = arith.addf %1258, %1267 : vector<16x128xf32>
    %c10_601 = arith.constant 10 : index
    %c0_602 = arith.constant 0 : index
    %c0_603 = arith.constant 0 : index
    %1269 = vector.load %arg11[%c10_601, %c0_602, %c0_603] : memref<14x16x128xf32, #tpu.memory_space<vmem>>, vector<1x16x128xf32>
    %1270 = vector.shape_cast %1269 : vector<1x16x128xf32> to vector<16x128xf32>
    %1271 = arith.mulf %1270, %1264 : vector<16x128xf32>
    %1272 = arith.addf %1262, %1271 : vector<16x128xf32>
    %1273 = vector.extract_strided_slice %1160 {offsets = [1, 0], sizes = [15, 128], strides = [1, 1]} : vector<16x128xf32> to vector<15x128xf32>
    %1274 = tpu.concatenate %1273, %45 in 0 : vector<15x128xf32>, vector<1x128xf32> -> vector<16x128xf32>
    %c11_604 = arith.constant 11 : index
    %c0_605 = arith.constant 0 : index
    %1275 = memref.load %arg4[%c11_604, %c0_605] : memref<14x4xf32, #tpu.memory_space<smem>>
    %1276 = vector.broadcast %1275 : f32 to vector<16x128xf32>
    %1277 = arith.mulf %1276, %1274 : vector<16x128xf32>
    %1278 = arith.addf %1268, %1277 : vector<16x128xf32>
    %c11_606 = arith.constant 11 : index
    %c0_607 = arith.constant 0 : index
    %c0_608 = arith.constant 0 : index
    %1279 = vector.load %arg11[%c11_606, %c0_607, %c0_608] : memref<14x16x128xf32, #tpu.memory_space<vmem>>, vector<1x16x128xf32>
    %1280 = vector.shape_cast %1279 : vector<1x16x128xf32> to vector<16x128xf32>
    %1281 = arith.mulf %1280, %1274 : vector<16x128xf32>
    %1282 = arith.addf %1272, %1281 : vector<16x128xf32>
    %1283 = vector.extract_strided_slice %1166 {offsets = [1, 0], sizes = [15, 128], strides = [1, 1]} : vector<16x128xf32> to vector<15x128xf32>
    %1284 = tpu.concatenate %1283, %45 in 0 : vector<15x128xf32>, vector<1x128xf32> -> vector<16x128xf32>
    %c12_609 = arith.constant 12 : index
    %c0_610 = arith.constant 0 : index
    %1285 = memref.load %arg4[%c12_609, %c0_610] : memref<14x4xf32, #tpu.memory_space<smem>>
    %1286 = vector.broadcast %1285 : f32 to vector<16x128xf32>
    %1287 = arith.mulf %1286, %1284 : vector<16x128xf32>
    %1288 = arith.addf %1278, %1287 : vector<16x128xf32>
    %c12_611 = arith.constant 12 : index
    %c0_612 = arith.constant 0 : index
    %c0_613 = arith.constant 0 : index
    %1289 = vector.load %arg11[%c12_611, %c0_612, %c0_613] : memref<14x16x128xf32, #tpu.memory_space<vmem>>, vector<1x16x128xf32>
    %1290 = vector.shape_cast %1289 : vector<1x16x128xf32> to vector<16x128xf32>
    %1291 = arith.mulf %1290, %1284 : vector<16x128xf32>
    %1292 = arith.addf %1282, %1291 : vector<16x128xf32>
    %1293 = vector.extract_strided_slice %1168 {offsets = [1, 0], sizes = [15, 128], strides = [1, 1]} : vector<16x128xf32> to vector<15x128xf32>
    %1294 = tpu.concatenate %1293, %45 in 0 : vector<15x128xf32>, vector<1x128xf32> -> vector<16x128xf32>
    %c13_614 = arith.constant 13 : index
    %c0_615 = arith.constant 0 : index
    %1295 = memref.load %arg4[%c13_614, %c0_615] : memref<14x4xf32, #tpu.memory_space<smem>>
    %1296 = vector.broadcast %1295 : f32 to vector<16x128xf32>
    %1297 = arith.mulf %1296, %1294 : vector<16x128xf32>
    %1298 = arith.addf %1288, %1297 : vector<16x128xf32>
    %c13_616 = arith.constant 13 : index
    %c0_617 = arith.constant 0 : index
    %c0_618 = arith.constant 0 : index
    %1299 = vector.load %arg11[%c13_616, %c0_617, %c0_618] : memref<14x16x128xf32, #tpu.memory_space<vmem>>, vector<1x16x128xf32>
    %1300 = vector.shape_cast %1299 : vector<1x16x128xf32> to vector<16x128xf32>
    %1301 = arith.mulf %1300, %1294 : vector<16x128xf32>
    %1302 = arith.addf %1292, %1301 : vector<16x128xf32>
    %c0_619 = arith.constant 0 : index
    %c0_620 = arith.constant 0 : index
    %c0_621 = arith.constant 0 : index
    %c0_622 = arith.constant 0 : index
    %1303 = vector.load %arg3[%c0_619, %c0_620, %c0_621, %c0_622] : memref<1x1x16x128xf32, #tpu.memory_space<vmem>>, vector<1x1x16x128xf32>
    %1304 = vector.shape_cast %1303 : vector<1x1x16x128xf32> to vector<16x128xf32>
    %c0_623 = arith.constant 0 : index
    %1305 = memref.load %arg6[%c0_623] : memref<4xf32, #tpu.memory_space<smem>>
    %c0_624 = arith.constant 0 : index
    %1306 = memref.load %arg7[%c0_624] : memref<4xf32, #tpu.memory_space<smem>>
    %1307 = arith.mulf %1302, %1304 : vector<16x128xf32>
    %1308 = vector.broadcast %1306 : f32 to vector<16x128xf32>
    %1309 = arith.mulf %1308, %1307 : vector<16x128xf32>
    %1310 = vector.broadcast %1305 : f32 to vector<16x128xf32>
    %1311 = arith.addf %1310, %1309 : vector<16x128xf32>
    %1312 = arith.mulf %1298, %1311 : vector<16x128xf32>
    %c0_625 = arith.constant 0 : index
    %c1_626 = arith.constant 1 : index
    %c0_627 = arith.constant 0 : index
    %c0_628 = arith.constant 0 : index
    %1313 = vector.load %arg10[%c0_625, %c1_626, %c0_627, %c0_628] : memref<1x4x16x128xf32, #tpu.memory_space<vmem>>, vector<1x1x16x128xf32>
    %1314 = vector.shape_cast %1313 : vector<1x1x16x128xf32> to vector<16x128xf32>
    %1315 = arith.subf %1314, %1134 : vector<16x128xf32>
    %1316 = math.exp %1315 : vector<16x128xf32>
    %1317 = arith.mulf %1316, %1155 : vector<16x128xf32>
    %c2_i32_629 = arith.constant 2 : i32
    %1318 = tpu.dynamic_rotate %1317 by %c2_i32_629 dim 1 : vector<16x128xf32>, i32 -> vector<16x128xf32>
    %1319 = arith.mulf %1318, %11 : vector<16x128xf32>
    %c1_i32_630 = arith.constant 1 : i32
    %1320 = tpu.dynamic_rotate %1317 by %c1_i32_630 dim 1 : vector<16x128xf32>, i32 -> vector<16x128xf32>
    %1321 = arith.mulf %1320, %22 : vector<16x128xf32>
    %c127_i32_631 = arith.constant 127 : i32
    %1322 = tpu.dynamic_rotate %1317 by %c127_i32_631 dim 1 : vector<16x128xf32>, i32 -> vector<16x128xf32>
    %1323 = arith.mulf %1322, %33 : vector<16x128xf32>
    %c126_i32_632 = arith.constant 126 : i32
    %1324 = tpu.dynamic_rotate %1317 by %c126_i32_632 dim 1 : vector<16x128xf32>, i32 -> vector<16x128xf32>
    %1325 = arith.mulf %1324, %44 : vector<16x128xf32>
    %cst_633 = arith.constant 0.000000e+00 : f32
    %1326 = vector.broadcast %cst_633 : f32 to vector<16x128xf32>
    %cst_634 = arith.constant 0.000000e+00 : f32
    %1327 = vector.broadcast %cst_634 : f32 to vector<16x128xf32>
    %1328 = vector.extract_strided_slice %1319 {offsets = [0, 0], sizes = [15, 128], strides = [1, 1]} : vector<16x128xf32> to vector<15x128xf32>
    %1329 = tpu.concatenate %45, %1328 in 0 : vector<1x128xf32>, vector<15x128xf32> -> vector<16x128xf32>
    %c0_635 = arith.constant 0 : index
    %c1_636 = arith.constant 1 : index
    %1330 = memref.load %arg4[%c0_635, %c1_636] : memref<14x4xf32, #tpu.memory_space<smem>>
    %1331 = vector.broadcast %1330 : f32 to vector<16x128xf32>
    %1332 = arith.mulf %1331, %1329 : vector<16x128xf32>
    %1333 = arith.addf %1326, %1332 : vector<16x128xf32>
    %c0_637 = arith.constant 0 : index
    %c0_638 = arith.constant 0 : index
    %c0_639 = arith.constant 0 : index
    %1334 = vector.load %arg11[%c0_637, %c0_638, %c0_639] : memref<14x16x128xf32, #tpu.memory_space<vmem>>, vector<1x16x128xf32>
    %1335 = vector.shape_cast %1334 : vector<1x16x128xf32> to vector<16x128xf32>
    %1336 = arith.mulf %1335, %1329 : vector<16x128xf32>
    %1337 = arith.addf %1327, %1336 : vector<16x128xf32>
    %1338 = vector.extract_strided_slice %1321 {offsets = [0, 0], sizes = [15, 128], strides = [1, 1]} : vector<16x128xf32> to vector<15x128xf32>
    %1339 = tpu.concatenate %45, %1338 in 0 : vector<1x128xf32>, vector<15x128xf32> -> vector<16x128xf32>
    %c1_640 = arith.constant 1 : index
    %c1_641 = arith.constant 1 : index
    %1340 = memref.load %arg4[%c1_640, %c1_641] : memref<14x4xf32, #tpu.memory_space<smem>>
    %1341 = vector.broadcast %1340 : f32 to vector<16x128xf32>
    %1342 = arith.mulf %1341, %1339 : vector<16x128xf32>
    %1343 = arith.addf %1333, %1342 : vector<16x128xf32>
    %c1_642 = arith.constant 1 : index
    %c0_643 = arith.constant 0 : index
    %c0_644 = arith.constant 0 : index
    %1344 = vector.load %arg11[%c1_642, %c0_643, %c0_644] : memref<14x16x128xf32, #tpu.memory_space<vmem>>, vector<1x16x128xf32>
    %1345 = vector.shape_cast %1344 : vector<1x16x128xf32> to vector<16x128xf32>
    %1346 = arith.mulf %1345, %1339 : vector<16x128xf32>
    %1347 = arith.addf %1337, %1346 : vector<16x128xf32>
    %1348 = vector.extract_strided_slice %1317 {offsets = [0, 0], sizes = [15, 128], strides = [1, 1]} : vector<16x128xf32> to vector<15x128xf32>
    %1349 = tpu.concatenate %45, %1348 in 0 : vector<1x128xf32>, vector<15x128xf32> -> vector<16x128xf32>
    %c2_645 = arith.constant 2 : index
    %c1_646 = arith.constant 1 : index
    %1350 = memref.load %arg4[%c2_645, %c1_646] : memref<14x4xf32, #tpu.memory_space<smem>>
    %1351 = vector.broadcast %1350 : f32 to vector<16x128xf32>
    %1352 = arith.mulf %1351, %1349 : vector<16x128xf32>
    %1353 = arith.addf %1343, %1352 : vector<16x128xf32>
    %c2_647 = arith.constant 2 : index
    %c0_648 = arith.constant 0 : index
    %c0_649 = arith.constant 0 : index
    %1354 = vector.load %arg11[%c2_647, %c0_648, %c0_649] : memref<14x16x128xf32, #tpu.memory_space<vmem>>, vector<1x16x128xf32>
    %1355 = vector.shape_cast %1354 : vector<1x16x128xf32> to vector<16x128xf32>
    %1356 = arith.mulf %1355, %1349 : vector<16x128xf32>
    %1357 = arith.addf %1347, %1356 : vector<16x128xf32>
    %1358 = vector.extract_strided_slice %1323 {offsets = [0, 0], sizes = [15, 128], strides = [1, 1]} : vector<16x128xf32> to vector<15x128xf32>
    %1359 = tpu.concatenate %45, %1358 in 0 : vector<1x128xf32>, vector<15x128xf32> -> vector<16x128xf32>
    %c3_650 = arith.constant 3 : index
    %c1_651 = arith.constant 1 : index
    %1360 = memref.load %arg4[%c3_650, %c1_651] : memref<14x4xf32, #tpu.memory_space<smem>>
    %1361 = vector.broadcast %1360 : f32 to vector<16x128xf32>
    %1362 = arith.mulf %1361, %1359 : vector<16x128xf32>
    %1363 = arith.addf %1353, %1362 : vector<16x128xf32>
    %c3_652 = arith.constant 3 : index
    %c0_653 = arith.constant 0 : index
    %c0_654 = arith.constant 0 : index
    %1364 = vector.load %arg11[%c3_652, %c0_653, %c0_654] : memref<14x16x128xf32, #tpu.memory_space<vmem>>, vector<1x16x128xf32>
    %1365 = vector.shape_cast %1364 : vector<1x16x128xf32> to vector<16x128xf32>
    %1366 = arith.mulf %1365, %1359 : vector<16x128xf32>
    %1367 = arith.addf %1357, %1366 : vector<16x128xf32>
    %1368 = vector.extract_strided_slice %1325 {offsets = [0, 0], sizes = [15, 128], strides = [1, 1]} : vector<16x128xf32> to vector<15x128xf32>
    %1369 = tpu.concatenate %45, %1368 in 0 : vector<1x128xf32>, vector<15x128xf32> -> vector<16x128xf32>
    %c4_655 = arith.constant 4 : index
    %c1_656 = arith.constant 1 : index
    %1370 = memref.load %arg4[%c4_655, %c1_656] : memref<14x4xf32, #tpu.memory_space<smem>>
    %1371 = vector.broadcast %1370 : f32 to vector<16x128xf32>
    %1372 = arith.mulf %1371, %1369 : vector<16x128xf32>
    %1373 = arith.addf %1363, %1372 : vector<16x128xf32>
    %c4_657 = arith.constant 4 : index
    %c0_658 = arith.constant 0 : index
    %c0_659 = arith.constant 0 : index
    %1374 = vector.load %arg11[%c4_657, %c0_658, %c0_659] : memref<14x16x128xf32, #tpu.memory_space<vmem>>, vector<1x16x128xf32>
    %1375 = vector.shape_cast %1374 : vector<1x16x128xf32> to vector<16x128xf32>
    %1376 = arith.mulf %1375, %1369 : vector<16x128xf32>
    %1377 = arith.addf %1367, %1376 : vector<16x128xf32>
    %c5_660 = arith.constant 5 : index
    %c1_661 = arith.constant 1 : index
    %1378 = memref.load %arg4[%c5_660, %c1_661] : memref<14x4xf32, #tpu.memory_space<smem>>
    %1379 = vector.broadcast %1378 : f32 to vector<16x128xf32>
    %1380 = arith.mulf %1379, %1319 : vector<16x128xf32>
    %1381 = arith.addf %1373, %1380 : vector<16x128xf32>
    %c5_662 = arith.constant 5 : index
    %c0_663 = arith.constant 0 : index
    %c0_664 = arith.constant 0 : index
    %1382 = vector.load %arg11[%c5_662, %c0_663, %c0_664] : memref<14x16x128xf32, #tpu.memory_space<vmem>>, vector<1x16x128xf32>
    %1383 = vector.shape_cast %1382 : vector<1x16x128xf32> to vector<16x128xf32>
    %1384 = arith.mulf %1383, %1319 : vector<16x128xf32>
    %1385 = arith.addf %1377, %1384 : vector<16x128xf32>
    %c6_665 = arith.constant 6 : index
    %c1_666 = arith.constant 1 : index
    %1386 = memref.load %arg4[%c6_665, %c1_666] : memref<14x4xf32, #tpu.memory_space<smem>>
    %1387 = vector.broadcast %1386 : f32 to vector<16x128xf32>
    %1388 = arith.mulf %1387, %1321 : vector<16x128xf32>
    %1389 = arith.addf %1381, %1388 : vector<16x128xf32>
    %c6_667 = arith.constant 6 : index
    %c0_668 = arith.constant 0 : index
    %c0_669 = arith.constant 0 : index
    %1390 = vector.load %arg11[%c6_667, %c0_668, %c0_669] : memref<14x16x128xf32, #tpu.memory_space<vmem>>, vector<1x16x128xf32>
    %1391 = vector.shape_cast %1390 : vector<1x16x128xf32> to vector<16x128xf32>
    %1392 = arith.mulf %1391, %1321 : vector<16x128xf32>
    %1393 = arith.addf %1385, %1392 : vector<16x128xf32>
    %c7_670 = arith.constant 7 : index
    %c1_671 = arith.constant 1 : index
    %1394 = memref.load %arg4[%c7_670, %c1_671] : memref<14x4xf32, #tpu.memory_space<smem>>
    %1395 = vector.broadcast %1394 : f32 to vector<16x128xf32>
    %1396 = arith.mulf %1395, %1323 : vector<16x128xf32>
    %1397 = arith.addf %1389, %1396 : vector<16x128xf32>
    %c7_672 = arith.constant 7 : index
    %c0_673 = arith.constant 0 : index
    %c0_674 = arith.constant 0 : index
    %1398 = vector.load %arg11[%c7_672, %c0_673, %c0_674] : memref<14x16x128xf32, #tpu.memory_space<vmem>>, vector<1x16x128xf32>
    %1399 = vector.shape_cast %1398 : vector<1x16x128xf32> to vector<16x128xf32>
    %1400 = arith.mulf %1399, %1323 : vector<16x128xf32>
    %1401 = arith.addf %1393, %1400 : vector<16x128xf32>
    %c8_675 = arith.constant 8 : index
    %c1_676 = arith.constant 1 : index
    %1402 = memref.load %arg4[%c8_675, %c1_676] : memref<14x4xf32, #tpu.memory_space<smem>>
    %1403 = vector.broadcast %1402 : f32 to vector<16x128xf32>
    %1404 = arith.mulf %1403, %1325 : vector<16x128xf32>
    %1405 = arith.addf %1397, %1404 : vector<16x128xf32>
    %c8_677 = arith.constant 8 : index
    %c0_678 = arith.constant 0 : index
    %c0_679 = arith.constant 0 : index
    %1406 = vector.load %arg11[%c8_677, %c0_678, %c0_679] : memref<14x16x128xf32, #tpu.memory_space<vmem>>, vector<1x16x128xf32>
    %1407 = vector.shape_cast %1406 : vector<1x16x128xf32> to vector<16x128xf32>
    %1408 = arith.mulf %1407, %1325 : vector<16x128xf32>
    %1409 = arith.addf %1401, %1408 : vector<16x128xf32>
    %1410 = vector.extract_strided_slice %1319 {offsets = [1, 0], sizes = [15, 128], strides = [1, 1]} : vector<16x128xf32> to vector<15x128xf32>
    %1411 = tpu.concatenate %1410, %45 in 0 : vector<15x128xf32>, vector<1x128xf32> -> vector<16x128xf32>
    %c9_680 = arith.constant 9 : index
    %c1_681 = arith.constant 1 : index
    %1412 = memref.load %arg4[%c9_680, %c1_681] : memref<14x4xf32, #tpu.memory_space<smem>>
    %1413 = vector.broadcast %1412 : f32 to vector<16x128xf32>
    %1414 = arith.mulf %1413, %1411 : vector<16x128xf32>
    %1415 = arith.addf %1405, %1414 : vector<16x128xf32>
    %c9_682 = arith.constant 9 : index
    %c0_683 = arith.constant 0 : index
    %c0_684 = arith.constant 0 : index
    %1416 = vector.load %arg11[%c9_682, %c0_683, %c0_684] : memref<14x16x128xf32, #tpu.memory_space<vmem>>, vector<1x16x128xf32>
    %1417 = vector.shape_cast %1416 : vector<1x16x128xf32> to vector<16x128xf32>
    %1418 = arith.mulf %1417, %1411 : vector<16x128xf32>
    %1419 = arith.addf %1409, %1418 : vector<16x128xf32>
    %1420 = vector.extract_strided_slice %1321 {offsets = [1, 0], sizes = [15, 128], strides = [1, 1]} : vector<16x128xf32> to vector<15x128xf32>
    %1421 = tpu.concatenate %1420, %45 in 0 : vector<15x128xf32>, vector<1x128xf32> -> vector<16x128xf32>
    %c10_685 = arith.constant 10 : index
    %c1_686 = arith.constant 1 : index
    %1422 = memref.load %arg4[%c10_685, %c1_686] : memref<14x4xf32, #tpu.memory_space<smem>>
    %1423 = vector.broadcast %1422 : f32 to vector<16x128xf32>
    %1424 = arith.mulf %1423, %1421 : vector<16x128xf32>
    %1425 = arith.addf %1415, %1424 : vector<16x128xf32>
    %c10_687 = arith.constant 10 : index
    %c0_688 = arith.constant 0 : index
    %c0_689 = arith.constant 0 : index
    %1426 = vector.load %arg11[%c10_687, %c0_688, %c0_689] : memref<14x16x128xf32, #tpu.memory_space<vmem>>, vector<1x16x128xf32>
    %1427 = vector.shape_cast %1426 : vector<1x16x128xf32> to vector<16x128xf32>
    %1428 = arith.mulf %1427, %1421 : vector<16x128xf32>
    %1429 = arith.addf %1419, %1428 : vector<16x128xf32>
    %1430 = vector.extract_strided_slice %1317 {offsets = [1, 0], sizes = [15, 128], strides = [1, 1]} : vector<16x128xf32> to vector<15x128xf32>
    %1431 = tpu.concatenate %1430, %45 in 0 : vector<15x128xf32>, vector<1x128xf32> -> vector<16x128xf32>
    %c11_690 = arith.constant 11 : index
    %c1_691 = arith.constant 1 : index
    %1432 = memref.load %arg4[%c11_690, %c1_691] : memref<14x4xf32, #tpu.memory_space<smem>>
    %1433 = vector.broadcast %1432 : f32 to vector<16x128xf32>
    %1434 = arith.mulf %1433, %1431 : vector<16x128xf32>
    %1435 = arith.addf %1425, %1434 : vector<16x128xf32>
    %c11_692 = arith.constant 11 : index
    %c0_693 = arith.constant 0 : index
    %c0_694 = arith.constant 0 : index
    %1436 = vector.load %arg11[%c11_692, %c0_693, %c0_694] : memref<14x16x128xf32, #tpu.memory_space<vmem>>, vector<1x16x128xf32>
    %1437 = vector.shape_cast %1436 : vector<1x16x128xf32> to vector<16x128xf32>
    %1438 = arith.mulf %1437, %1431 : vector<16x128xf32>
    %1439 = arith.addf %1429, %1438 : vector<16x128xf32>
    %1440 = vector.extract_strided_slice %1323 {offsets = [1, 0], sizes = [15, 128], strides = [1, 1]} : vector<16x128xf32> to vector<15x128xf32>
    %1441 = tpu.concatenate %1440, %45 in 0 : vector<15x128xf32>, vector<1x128xf32> -> vector<16x128xf32>
    %c12_695 = arith.constant 12 : index
    %c1_696 = arith.constant 1 : index
    %1442 = memref.load %arg4[%c12_695, %c1_696] : memref<14x4xf32, #tpu.memory_space<smem>>
    %1443 = vector.broadcast %1442 : f32 to vector<16x128xf32>
    %1444 = arith.mulf %1443, %1441 : vector<16x128xf32>
    %1445 = arith.addf %1435, %1444 : vector<16x128xf32>
    %c12_697 = arith.constant 12 : index
    %c0_698 = arith.constant 0 : index
    %c0_699 = arith.constant 0 : index
    %1446 = vector.load %arg11[%c12_697, %c0_698, %c0_699] : memref<14x16x128xf32, #tpu.memory_space<vmem>>, vector<1x16x128xf32>
    %1447 = vector.shape_cast %1446 : vector<1x16x128xf32> to vector<16x128xf32>
    %1448 = arith.mulf %1447, %1441 : vector<16x128xf32>
    %1449 = arith.addf %1439, %1448 : vector<16x128xf32>
    %1450 = vector.extract_strided_slice %1325 {offsets = [1, 0], sizes = [15, 128], strides = [1, 1]} : vector<16x128xf32> to vector<15x128xf32>
    %1451 = tpu.concatenate %1450, %45 in 0 : vector<15x128xf32>, vector<1x128xf32> -> vector<16x128xf32>
    %c13_700 = arith.constant 13 : index
    %c1_701 = arith.constant 1 : index
    %1452 = memref.load %arg4[%c13_700, %c1_701] : memref<14x4xf32, #tpu.memory_space<smem>>
    %1453 = vector.broadcast %1452 : f32 to vector<16x128xf32>
    %1454 = arith.mulf %1453, %1451 : vector<16x128xf32>
    %1455 = arith.addf %1445, %1454 : vector<16x128xf32>
    %c13_702 = arith.constant 13 : index
    %c0_703 = arith.constant 0 : index
    %c0_704 = arith.constant 0 : index
    %1456 = vector.load %arg11[%c13_702, %c0_703, %c0_704] : memref<14x16x128xf32, #tpu.memory_space<vmem>>, vector<1x16x128xf32>
    %1457 = vector.shape_cast %1456 : vector<1x16x128xf32> to vector<16x128xf32>
    %1458 = arith.mulf %1457, %1451 : vector<16x128xf32>
    %1459 = arith.addf %1449, %1458 : vector<16x128xf32>
    %c0_705 = arith.constant 0 : index
    %c0_706 = arith.constant 0 : index
    %c0_707 = arith.constant 0 : index
    %c0_708 = arith.constant 0 : index
    %1460 = vector.load %arg3[%c0_705, %c0_706, %c0_707, %c0_708] : memref<1x1x16x128xf32, #tpu.memory_space<vmem>>, vector<1x1x16x128xf32>
    %1461 = vector.shape_cast %1460 : vector<1x1x16x128xf32> to vector<16x128xf32>
    %c1_709 = arith.constant 1 : index
    %1462 = memref.load %arg6[%c1_709] : memref<4xf32, #tpu.memory_space<smem>>
    %c1_710 = arith.constant 1 : index
    %1463 = memref.load %arg7[%c1_710] : memref<4xf32, #tpu.memory_space<smem>>
    %1464 = arith.mulf %1459, %1461 : vector<16x128xf32>
    %1465 = vector.broadcast %1463 : f32 to vector<16x128xf32>
    %1466 = arith.mulf %1465, %1464 : vector<16x128xf32>
    %1467 = vector.broadcast %1462 : f32 to vector<16x128xf32>
    %1468 = arith.addf %1467, %1466 : vector<16x128xf32>
    %1469 = arith.mulf %1455, %1468 : vector<16x128xf32>
    %c0_711 = arith.constant 0 : index
    %c2_712 = arith.constant 2 : index
    %c0_713 = arith.constant 0 : index
    %c0_714 = arith.constant 0 : index
    %1470 = vector.load %arg10[%c0_711, %c2_712, %c0_713, %c0_714] : memref<1x4x16x128xf32, #tpu.memory_space<vmem>>, vector<1x1x16x128xf32>
    %1471 = vector.shape_cast %1470 : vector<1x1x16x128xf32> to vector<16x128xf32>
    %1472 = arith.subf %1471, %1134 : vector<16x128xf32>
    %1473 = math.exp %1472 : vector<16x128xf32>
    %1474 = arith.mulf %1473, %1155 : vector<16x128xf32>
    %c2_i32_715 = arith.constant 2 : i32
    %1475 = tpu.dynamic_rotate %1474 by %c2_i32_715 dim 1 : vector<16x128xf32>, i32 -> vector<16x128xf32>
    %1476 = arith.mulf %1475, %11 : vector<16x128xf32>
    %c1_i32_716 = arith.constant 1 : i32
    %1477 = tpu.dynamic_rotate %1474 by %c1_i32_716 dim 1 : vector<16x128xf32>, i32 -> vector<16x128xf32>
    %1478 = arith.mulf %1477, %22 : vector<16x128xf32>
    %c127_i32_717 = arith.constant 127 : i32
    %1479 = tpu.dynamic_rotate %1474 by %c127_i32_717 dim 1 : vector<16x128xf32>, i32 -> vector<16x128xf32>
    %1480 = arith.mulf %1479, %33 : vector<16x128xf32>
    %c126_i32_718 = arith.constant 126 : i32
    %1481 = tpu.dynamic_rotate %1474 by %c126_i32_718 dim 1 : vector<16x128xf32>, i32 -> vector<16x128xf32>
    %1482 = arith.mulf %1481, %44 : vector<16x128xf32>
    %cst_719 = arith.constant 0.000000e+00 : f32
    %1483 = vector.broadcast %cst_719 : f32 to vector<16x128xf32>
    %cst_720 = arith.constant 0.000000e+00 : f32
    %1484 = vector.broadcast %cst_720 : f32 to vector<16x128xf32>
    %1485 = vector.extract_strided_slice %1476 {offsets = [0, 0], sizes = [15, 128], strides = [1, 1]} : vector<16x128xf32> to vector<15x128xf32>
    %1486 = tpu.concatenate %45, %1485 in 0 : vector<1x128xf32>, vector<15x128xf32> -> vector<16x128xf32>
    %c0_721 = arith.constant 0 : index
    %c2_722 = arith.constant 2 : index
    %1487 = memref.load %arg4[%c0_721, %c2_722] : memref<14x4xf32, #tpu.memory_space<smem>>
    %1488 = vector.broadcast %1487 : f32 to vector<16x128xf32>
    %1489 = arith.mulf %1488, %1486 : vector<16x128xf32>
    %1490 = arith.addf %1483, %1489 : vector<16x128xf32>
    %c0_723 = arith.constant 0 : index
    %c0_724 = arith.constant 0 : index
    %c0_725 = arith.constant 0 : index
    %1491 = vector.load %arg11[%c0_723, %c0_724, %c0_725] : memref<14x16x128xf32, #tpu.memory_space<vmem>>, vector<1x16x128xf32>
    %1492 = vector.shape_cast %1491 : vector<1x16x128xf32> to vector<16x128xf32>
    %1493 = arith.mulf %1492, %1486 : vector<16x128xf32>
    %1494 = arith.addf %1484, %1493 : vector<16x128xf32>
    %1495 = vector.extract_strided_slice %1478 {offsets = [0, 0], sizes = [15, 128], strides = [1, 1]} : vector<16x128xf32> to vector<15x128xf32>
    %1496 = tpu.concatenate %45, %1495 in 0 : vector<1x128xf32>, vector<15x128xf32> -> vector<16x128xf32>
    %c1_726 = arith.constant 1 : index
    %c2_727 = arith.constant 2 : index
    %1497 = memref.load %arg4[%c1_726, %c2_727] : memref<14x4xf32, #tpu.memory_space<smem>>
    %1498 = vector.broadcast %1497 : f32 to vector<16x128xf32>
    %1499 = arith.mulf %1498, %1496 : vector<16x128xf32>
    %1500 = arith.addf %1490, %1499 : vector<16x128xf32>
    %c1_728 = arith.constant 1 : index
    %c0_729 = arith.constant 0 : index
    %c0_730 = arith.constant 0 : index
    %1501 = vector.load %arg11[%c1_728, %c0_729, %c0_730] : memref<14x16x128xf32, #tpu.memory_space<vmem>>, vector<1x16x128xf32>
    %1502 = vector.shape_cast %1501 : vector<1x16x128xf32> to vector<16x128xf32>
    %1503 = arith.mulf %1502, %1496 : vector<16x128xf32>
    %1504 = arith.addf %1494, %1503 : vector<16x128xf32>
    %1505 = vector.extract_strided_slice %1474 {offsets = [0, 0], sizes = [15, 128], strides = [1, 1]} : vector<16x128xf32> to vector<15x128xf32>
    %1506 = tpu.concatenate %45, %1505 in 0 : vector<1x128xf32>, vector<15x128xf32> -> vector<16x128xf32>
    %c2_731 = arith.constant 2 : index
    %c2_732 = arith.constant 2 : index
    %1507 = memref.load %arg4[%c2_731, %c2_732] : memref<14x4xf32, #tpu.memory_space<smem>>
    %1508 = vector.broadcast %1507 : f32 to vector<16x128xf32>
    %1509 = arith.mulf %1508, %1506 : vector<16x128xf32>
    %1510 = arith.addf %1500, %1509 : vector<16x128xf32>
    %c2_733 = arith.constant 2 : index
    %c0_734 = arith.constant 0 : index
    %c0_735 = arith.constant 0 : index
    %1511 = vector.load %arg11[%c2_733, %c0_734, %c0_735] : memref<14x16x128xf32, #tpu.memory_space<vmem>>, vector<1x16x128xf32>
    %1512 = vector.shape_cast %1511 : vector<1x16x128xf32> to vector<16x128xf32>
    %1513 = arith.mulf %1512, %1506 : vector<16x128xf32>
    %1514 = arith.addf %1504, %1513 : vector<16x128xf32>
    %1515 = vector.extract_strided_slice %1480 {offsets = [0, 0], sizes = [15, 128], strides = [1, 1]} : vector<16x128xf32> to vector<15x128xf32>
    %1516 = tpu.concatenate %45, %1515 in 0 : vector<1x128xf32>, vector<15x128xf32> -> vector<16x128xf32>
    %c3_736 = arith.constant 3 : index
    %c2_737 = arith.constant 2 : index
    %1517 = memref.load %arg4[%c3_736, %c2_737] : memref<14x4xf32, #tpu.memory_space<smem>>
    %1518 = vector.broadcast %1517 : f32 to vector<16x128xf32>
    %1519 = arith.mulf %1518, %1516 : vector<16x128xf32>
    %1520 = arith.addf %1510, %1519 : vector<16x128xf32>
    %c3_738 = arith.constant 3 : index
    %c0_739 = arith.constant 0 : index
    %c0_740 = arith.constant 0 : index
    %1521 = vector.load %arg11[%c3_738, %c0_739, %c0_740] : memref<14x16x128xf32, #tpu.memory_space<vmem>>, vector<1x16x128xf32>
    %1522 = vector.shape_cast %1521 : vector<1x16x128xf32> to vector<16x128xf32>
    %1523 = arith.mulf %1522, %1516 : vector<16x128xf32>
    %1524 = arith.addf %1514, %1523 : vector<16x128xf32>
    %1525 = vector.extract_strided_slice %1482 {offsets = [0, 0], sizes = [15, 128], strides = [1, 1]} : vector<16x128xf32> to vector<15x128xf32>
    %1526 = tpu.concatenate %45, %1525 in 0 : vector<1x128xf32>, vector<15x128xf32> -> vector<16x128xf32>
    %c4_741 = arith.constant 4 : index
    %c2_742 = arith.constant 2 : index
    %1527 = memref.load %arg4[%c4_741, %c2_742] : memref<14x4xf32, #tpu.memory_space<smem>>
    %1528 = vector.broadcast %1527 : f32 to vector<16x128xf32>
    %1529 = arith.mulf %1528, %1526 : vector<16x128xf32>
    %1530 = arith.addf %1520, %1529 : vector<16x128xf32>
    %c4_743 = arith.constant 4 : index
    %c0_744 = arith.constant 0 : index
    %c0_745 = arith.constant 0 : index
    %1531 = vector.load %arg11[%c4_743, %c0_744, %c0_745] : memref<14x16x128xf32, #tpu.memory_space<vmem>>, vector<1x16x128xf32>
    %1532 = vector.shape_cast %1531 : vector<1x16x128xf32> to vector<16x128xf32>
    %1533 = arith.mulf %1532, %1526 : vector<16x128xf32>
    %1534 = arith.addf %1524, %1533 : vector<16x128xf32>
    %c5_746 = arith.constant 5 : index
    %c2_747 = arith.constant 2 : index
    %1535 = memref.load %arg4[%c5_746, %c2_747] : memref<14x4xf32, #tpu.memory_space<smem>>
    %1536 = vector.broadcast %1535 : f32 to vector<16x128xf32>
    %1537 = arith.mulf %1536, %1476 : vector<16x128xf32>
    %1538 = arith.addf %1530, %1537 : vector<16x128xf32>
    %c5_748 = arith.constant 5 : index
    %c0_749 = arith.constant 0 : index
    %c0_750 = arith.constant 0 : index
    %1539 = vector.load %arg11[%c5_748, %c0_749, %c0_750] : memref<14x16x128xf32, #tpu.memory_space<vmem>>, vector<1x16x128xf32>
    %1540 = vector.shape_cast %1539 : vector<1x16x128xf32> to vector<16x128xf32>
    %1541 = arith.mulf %1540, %1476 : vector<16x128xf32>
    %1542 = arith.addf %1534, %1541 : vector<16x128xf32>
    %c6_751 = arith.constant 6 : index
    %c2_752 = arith.constant 2 : index
    %1543 = memref.load %arg4[%c6_751, %c2_752] : memref<14x4xf32, #tpu.memory_space<smem>>
    %1544 = vector.broadcast %1543 : f32 to vector<16x128xf32>
    %1545 = arith.mulf %1544, %1478 : vector<16x128xf32>
    %1546 = arith.addf %1538, %1545 : vector<16x128xf32>
    %c6_753 = arith.constant 6 : index
    %c0_754 = arith.constant 0 : index
    %c0_755 = arith.constant 0 : index
    %1547 = vector.load %arg11[%c6_753, %c0_754, %c0_755] : memref<14x16x128xf32, #tpu.memory_space<vmem>>, vector<1x16x128xf32>
    %1548 = vector.shape_cast %1547 : vector<1x16x128xf32> to vector<16x128xf32>
    %1549 = arith.mulf %1548, %1478 : vector<16x128xf32>
    %1550 = arith.addf %1542, %1549 : vector<16x128xf32>
    %c7_756 = arith.constant 7 : index
    %c2_757 = arith.constant 2 : index
    %1551 = memref.load %arg4[%c7_756, %c2_757] : memref<14x4xf32, #tpu.memory_space<smem>>
    %1552 = vector.broadcast %1551 : f32 to vector<16x128xf32>
    %1553 = arith.mulf %1552, %1480 : vector<16x128xf32>
    %1554 = arith.addf %1546, %1553 : vector<16x128xf32>
    %c7_758 = arith.constant 7 : index
    %c0_759 = arith.constant 0 : index
    %c0_760 = arith.constant 0 : index
    %1555 = vector.load %arg11[%c7_758, %c0_759, %c0_760] : memref<14x16x128xf32, #tpu.memory_space<vmem>>, vector<1x16x128xf32>
    %1556 = vector.shape_cast %1555 : vector<1x16x128xf32> to vector<16x128xf32>
    %1557 = arith.mulf %1556, %1480 : vector<16x128xf32>
    %1558 = arith.addf %1550, %1557 : vector<16x128xf32>
    %c8_761 = arith.constant 8 : index
    %c2_762 = arith.constant 2 : index
    %1559 = memref.load %arg4[%c8_761, %c2_762] : memref<14x4xf32, #tpu.memory_space<smem>>
    %1560 = vector.broadcast %1559 : f32 to vector<16x128xf32>
    %1561 = arith.mulf %1560, %1482 : vector<16x128xf32>
    %1562 = arith.addf %1554, %1561 : vector<16x128xf32>
    %c8_763 = arith.constant 8 : index
    %c0_764 = arith.constant 0 : index
    %c0_765 = arith.constant 0 : index
    %1563 = vector.load %arg11[%c8_763, %c0_764, %c0_765] : memref<14x16x128xf32, #tpu.memory_space<vmem>>, vector<1x16x128xf32>
    %1564 = vector.shape_cast %1563 : vector<1x16x128xf32> to vector<16x128xf32>
    %1565 = arith.mulf %1564, %1482 : vector<16x128xf32>
    %1566 = arith.addf %1558, %1565 : vector<16x128xf32>
    %1567 = vector.extract_strided_slice %1476 {offsets = [1, 0], sizes = [15, 128], strides = [1, 1]} : vector<16x128xf32> to vector<15x128xf32>
    %1568 = tpu.concatenate %1567, %45 in 0 : vector<15x128xf32>, vector<1x128xf32> -> vector<16x128xf32>
    %c9_766 = arith.constant 9 : index
    %c2_767 = arith.constant 2 : index
    %1569 = memref.load %arg4[%c9_766, %c2_767] : memref<14x4xf32, #tpu.memory_space<smem>>
    %1570 = vector.broadcast %1569 : f32 to vector<16x128xf32>
    %1571 = arith.mulf %1570, %1568 : vector<16x128xf32>
    %1572 = arith.addf %1562, %1571 : vector<16x128xf32>
    %c9_768 = arith.constant 9 : index
    %c0_769 = arith.constant 0 : index
    %c0_770 = arith.constant 0 : index
    %1573 = vector.load %arg11[%c9_768, %c0_769, %c0_770] : memref<14x16x128xf32, #tpu.memory_space<vmem>>, vector<1x16x128xf32>
    %1574 = vector.shape_cast %1573 : vector<1x16x128xf32> to vector<16x128xf32>
    %1575 = arith.mulf %1574, %1568 : vector<16x128xf32>
    %1576 = arith.addf %1566, %1575 : vector<16x128xf32>
    %1577 = vector.extract_strided_slice %1478 {offsets = [1, 0], sizes = [15, 128], strides = [1, 1]} : vector<16x128xf32> to vector<15x128xf32>
    %1578 = tpu.concatenate %1577, %45 in 0 : vector<15x128xf32>, vector<1x128xf32> -> vector<16x128xf32>
    %c10_771 = arith.constant 10 : index
    %c2_772 = arith.constant 2 : index
    %1579 = memref.load %arg4[%c10_771, %c2_772] : memref<14x4xf32, #tpu.memory_space<smem>>
    %1580 = vector.broadcast %1579 : f32 to vector<16x128xf32>
    %1581 = arith.mulf %1580, %1578 : vector<16x128xf32>
    %1582 = arith.addf %1572, %1581 : vector<16x128xf32>
    %c10_773 = arith.constant 10 : index
    %c0_774 = arith.constant 0 : index
    %c0_775 = arith.constant 0 : index
    %1583 = vector.load %arg11[%c10_773, %c0_774, %c0_775] : memref<14x16x128xf32, #tpu.memory_space<vmem>>, vector<1x16x128xf32>
    %1584 = vector.shape_cast %1583 : vector<1x16x128xf32> to vector<16x128xf32>
    %1585 = arith.mulf %1584, %1578 : vector<16x128xf32>
    %1586 = arith.addf %1576, %1585 : vector<16x128xf32>
    %1587 = vector.extract_strided_slice %1474 {offsets = [1, 0], sizes = [15, 128], strides = [1, 1]} : vector<16x128xf32> to vector<15x128xf32>
    %1588 = tpu.concatenate %1587, %45 in 0 : vector<15x128xf32>, vector<1x128xf32> -> vector<16x128xf32>
    %c11_776 = arith.constant 11 : index
    %c2_777 = arith.constant 2 : index
    %1589 = memref.load %arg4[%c11_776, %c2_777] : memref<14x4xf32, #tpu.memory_space<smem>>
    %1590 = vector.broadcast %1589 : f32 to vector<16x128xf32>
    %1591 = arith.mulf %1590, %1588 : vector<16x128xf32>
    %1592 = arith.addf %1582, %1591 : vector<16x128xf32>
    %c11_778 = arith.constant 11 : index
    %c0_779 = arith.constant 0 : index
    %c0_780 = arith.constant 0 : index
    %1593 = vector.load %arg11[%c11_778, %c0_779, %c0_780] : memref<14x16x128xf32, #tpu.memory_space<vmem>>, vector<1x16x128xf32>
    %1594 = vector.shape_cast %1593 : vector<1x16x128xf32> to vector<16x128xf32>
    %1595 = arith.mulf %1594, %1588 : vector<16x128xf32>
    %1596 = arith.addf %1586, %1595 : vector<16x128xf32>
    %1597 = vector.extract_strided_slice %1480 {offsets = [1, 0], sizes = [15, 128], strides = [1, 1]} : vector<16x128xf32> to vector<15x128xf32>
    %1598 = tpu.concatenate %1597, %45 in 0 : vector<15x128xf32>, vector<1x128xf32> -> vector<16x128xf32>
    %c12_781 = arith.constant 12 : index
    %c2_782 = arith.constant 2 : index
    %1599 = memref.load %arg4[%c12_781, %c2_782] : memref<14x4xf32, #tpu.memory_space<smem>>
    %1600 = vector.broadcast %1599 : f32 to vector<16x128xf32>
    %1601 = arith.mulf %1600, %1598 : vector<16x128xf32>
    %1602 = arith.addf %1592, %1601 : vector<16x128xf32>
    %c12_783 = arith.constant 12 : index
    %c0_784 = arith.constant 0 : index
    %c0_785 = arith.constant 0 : index
    %1603 = vector.load %arg11[%c12_783, %c0_784, %c0_785] : memref<14x16x128xf32, #tpu.memory_space<vmem>>, vector<1x16x128xf32>
    %1604 = vector.shape_cast %1603 : vector<1x16x128xf32> to vector<16x128xf32>
    %1605 = arith.mulf %1604, %1598 : vector<16x128xf32>
    %1606 = arith.addf %1596, %1605 : vector<16x128xf32>
    %1607 = vector.extract_strided_slice %1482 {offsets = [1, 0], sizes = [15, 128], strides = [1, 1]} : vector<16x128xf32> to vector<15x128xf32>
    %1608 = tpu.concatenate %1607, %45 in 0 : vector<15x128xf32>, vector<1x128xf32> -> vector<16x128xf32>
    %c13_786 = arith.constant 13 : index
    %c2_787 = arith.constant 2 : index
    %1609 = memref.load %arg4[%c13_786, %c2_787] : memref<14x4xf32, #tpu.memory_space<smem>>
    %1610 = vector.broadcast %1609 : f32 to vector<16x128xf32>
    %1611 = arith.mulf %1610, %1608 : vector<16x128xf32>
    %1612 = arith.addf %1602, %1611 : vector<16x128xf32>
    %c13_788 = arith.constant 13 : index
    %c0_789 = arith.constant 0 : index
    %c0_790 = arith.constant 0 : index
    %1613 = vector.load %arg11[%c13_788, %c0_789, %c0_790] : memref<14x16x128xf32, #tpu.memory_space<vmem>>, vector<1x16x128xf32>
    %1614 = vector.shape_cast %1613 : vector<1x16x128xf32> to vector<16x128xf32>
    %1615 = arith.mulf %1614, %1608 : vector<16x128xf32>
    %1616 = arith.addf %1606, %1615 : vector<16x128xf32>
    %c0_791 = arith.constant 0 : index
    %c0_792 = arith.constant 0 : index
    %c0_793 = arith.constant 0 : index
    %c0_794 = arith.constant 0 : index
    %1617 = vector.load %arg3[%c0_791, %c0_792, %c0_793, %c0_794] : memref<1x1x16x128xf32, #tpu.memory_space<vmem>>, vector<1x1x16x128xf32>
    %1618 = vector.shape_cast %1617 : vector<1x1x16x128xf32> to vector<16x128xf32>
    %c2_795 = arith.constant 2 : index
    %1619 = memref.load %arg6[%c2_795] : memref<4xf32, #tpu.memory_space<smem>>
    %c2_796 = arith.constant 2 : index
    %1620 = memref.load %arg7[%c2_796] : memref<4xf32, #tpu.memory_space<smem>>
    %1621 = arith.mulf %1616, %1618 : vector<16x128xf32>
    %1622 = vector.broadcast %1620 : f32 to vector<16x128xf32>
    %1623 = arith.mulf %1622, %1621 : vector<16x128xf32>
    %1624 = vector.broadcast %1619 : f32 to vector<16x128xf32>
    %1625 = arith.addf %1624, %1623 : vector<16x128xf32>
    %1626 = arith.mulf %1612, %1625 : vector<16x128xf32>
    %c0_797 = arith.constant 0 : index
    %c3_798 = arith.constant 3 : index
    %c0_799 = arith.constant 0 : index
    %c0_800 = arith.constant 0 : index
    %1627 = vector.load %arg10[%c0_797, %c3_798, %c0_799, %c0_800] : memref<1x4x16x128xf32, #tpu.memory_space<vmem>>, vector<1x1x16x128xf32>
    %1628 = vector.shape_cast %1627 : vector<1x1x16x128xf32> to vector<16x128xf32>
    %1629 = arith.subf %1628, %1134 : vector<16x128xf32>
    %1630 = math.exp %1629 : vector<16x128xf32>
    %1631 = arith.mulf %1630, %1155 : vector<16x128xf32>
    %c2_i32_801 = arith.constant 2 : i32
    %1632 = tpu.dynamic_rotate %1631 by %c2_i32_801 dim 1 : vector<16x128xf32>, i32 -> vector<16x128xf32>
    %1633 = arith.mulf %1632, %11 : vector<16x128xf32>
    %c1_i32_802 = arith.constant 1 : i32
    %1634 = tpu.dynamic_rotate %1631 by %c1_i32_802 dim 1 : vector<16x128xf32>, i32 -> vector<16x128xf32>
    %1635 = arith.mulf %1634, %22 : vector<16x128xf32>
    %c127_i32_803 = arith.constant 127 : i32
    %1636 = tpu.dynamic_rotate %1631 by %c127_i32_803 dim 1 : vector<16x128xf32>, i32 -> vector<16x128xf32>
    %1637 = arith.mulf %1636, %33 : vector<16x128xf32>
    %c126_i32_804 = arith.constant 126 : i32
    %1638 = tpu.dynamic_rotate %1631 by %c126_i32_804 dim 1 : vector<16x128xf32>, i32 -> vector<16x128xf32>
    %1639 = arith.mulf %1638, %44 : vector<16x128xf32>
    %cst_805 = arith.constant 0.000000e+00 : f32
    %1640 = vector.broadcast %cst_805 : f32 to vector<16x128xf32>
    %cst_806 = arith.constant 0.000000e+00 : f32
    %1641 = vector.broadcast %cst_806 : f32 to vector<16x128xf32>
    %1642 = vector.extract_strided_slice %1633 {offsets = [0, 0], sizes = [15, 128], strides = [1, 1]} : vector<16x128xf32> to vector<15x128xf32>
    %1643 = tpu.concatenate %45, %1642 in 0 : vector<1x128xf32>, vector<15x128xf32> -> vector<16x128xf32>
    %c0_807 = arith.constant 0 : index
    %c3_808 = arith.constant 3 : index
    %1644 = memref.load %arg4[%c0_807, %c3_808] : memref<14x4xf32, #tpu.memory_space<smem>>
    %1645 = vector.broadcast %1644 : f32 to vector<16x128xf32>
    %1646 = arith.mulf %1645, %1643 : vector<16x128xf32>
    %1647 = arith.addf %1640, %1646 : vector<16x128xf32>
    %c0_809 = arith.constant 0 : index
    %c0_810 = arith.constant 0 : index
    %c0_811 = arith.constant 0 : index
    %1648 = vector.load %arg11[%c0_809, %c0_810, %c0_811] : memref<14x16x128xf32, #tpu.memory_space<vmem>>, vector<1x16x128xf32>
    %1649 = vector.shape_cast %1648 : vector<1x16x128xf32> to vector<16x128xf32>
    %1650 = arith.mulf %1649, %1643 : vector<16x128xf32>
    %1651 = arith.addf %1641, %1650 : vector<16x128xf32>
    %1652 = vector.extract_strided_slice %1635 {offsets = [0, 0], sizes = [15, 128], strides = [1, 1]} : vector<16x128xf32> to vector<15x128xf32>
    %1653 = tpu.concatenate %45, %1652 in 0 : vector<1x128xf32>, vector<15x128xf32> -> vector<16x128xf32>
    %c1_812 = arith.constant 1 : index
    %c3_813 = arith.constant 3 : index
    %1654 = memref.load %arg4[%c1_812, %c3_813] : memref<14x4xf32, #tpu.memory_space<smem>>
    %1655 = vector.broadcast %1654 : f32 to vector<16x128xf32>
    %1656 = arith.mulf %1655, %1653 : vector<16x128xf32>
    %1657 = arith.addf %1647, %1656 : vector<16x128xf32>
    %c1_814 = arith.constant 1 : index
    %c0_815 = arith.constant 0 : index
    %c0_816 = arith.constant 0 : index
    %1658 = vector.load %arg11[%c1_814, %c0_815, %c0_816] : memref<14x16x128xf32, #tpu.memory_space<vmem>>, vector<1x16x128xf32>
    %1659 = vector.shape_cast %1658 : vector<1x16x128xf32> to vector<16x128xf32>
    %1660 = arith.mulf %1659, %1653 : vector<16x128xf32>
    %1661 = arith.addf %1651, %1660 : vector<16x128xf32>
    %1662 = vector.extract_strided_slice %1631 {offsets = [0, 0], sizes = [15, 128], strides = [1, 1]} : vector<16x128xf32> to vector<15x128xf32>
    %1663 = tpu.concatenate %45, %1662 in 0 : vector<1x128xf32>, vector<15x128xf32> -> vector<16x128xf32>
    %c2_817 = arith.constant 2 : index
    %c3_818 = arith.constant 3 : index
    %1664 = memref.load %arg4[%c2_817, %c3_818] : memref<14x4xf32, #tpu.memory_space<smem>>
    %1665 = vector.broadcast %1664 : f32 to vector<16x128xf32>
    %1666 = arith.mulf %1665, %1663 : vector<16x128xf32>
    %1667 = arith.addf %1657, %1666 : vector<16x128xf32>
    %c2_819 = arith.constant 2 : index
    %c0_820 = arith.constant 0 : index
    %c0_821 = arith.constant 0 : index
    %1668 = vector.load %arg11[%c2_819, %c0_820, %c0_821] : memref<14x16x128xf32, #tpu.memory_space<vmem>>, vector<1x16x128xf32>
    %1669 = vector.shape_cast %1668 : vector<1x16x128xf32> to vector<16x128xf32>
    %1670 = arith.mulf %1669, %1663 : vector<16x128xf32>
    %1671 = arith.addf %1661, %1670 : vector<16x128xf32>
    %1672 = vector.extract_strided_slice %1637 {offsets = [0, 0], sizes = [15, 128], strides = [1, 1]} : vector<16x128xf32> to vector<15x128xf32>
    %1673 = tpu.concatenate %45, %1672 in 0 : vector<1x128xf32>, vector<15x128xf32> -> vector<16x128xf32>
    %c3_822 = arith.constant 3 : index
    %c3_823 = arith.constant 3 : index
    %1674 = memref.load %arg4[%c3_822, %c3_823] : memref<14x4xf32, #tpu.memory_space<smem>>
    %1675 = vector.broadcast %1674 : f32 to vector<16x128xf32>
    %1676 = arith.mulf %1675, %1673 : vector<16x128xf32>
    %1677 = arith.addf %1667, %1676 : vector<16x128xf32>
    %c3_824 = arith.constant 3 : index
    %c0_825 = arith.constant 0 : index
    %c0_826 = arith.constant 0 : index
    %1678 = vector.load %arg11[%c3_824, %c0_825, %c0_826] : memref<14x16x128xf32, #tpu.memory_space<vmem>>, vector<1x16x128xf32>
    %1679 = vector.shape_cast %1678 : vector<1x16x128xf32> to vector<16x128xf32>
    %1680 = arith.mulf %1679, %1673 : vector<16x128xf32>
    %1681 = arith.addf %1671, %1680 : vector<16x128xf32>
    %1682 = vector.extract_strided_slice %1639 {offsets = [0, 0], sizes = [15, 128], strides = [1, 1]} : vector<16x128xf32> to vector<15x128xf32>
    %1683 = tpu.concatenate %45, %1682 in 0 : vector<1x128xf32>, vector<15x128xf32> -> vector<16x128xf32>
    %c4_827 = arith.constant 4 : index
    %c3_828 = arith.constant 3 : index
    %1684 = memref.load %arg4[%c4_827, %c3_828] : memref<14x4xf32, #tpu.memory_space<smem>>
    %1685 = vector.broadcast %1684 : f32 to vector<16x128xf32>
    %1686 = arith.mulf %1685, %1683 : vector<16x128xf32>
    %1687 = arith.addf %1677, %1686 : vector<16x128xf32>
    %c4_829 = arith.constant 4 : index
    %c0_830 = arith.constant 0 : index
    %c0_831 = arith.constant 0 : index
    %1688 = vector.load %arg11[%c4_829, %c0_830, %c0_831] : memref<14x16x128xf32, #tpu.memory_space<vmem>>, vector<1x16x128xf32>
    %1689 = vector.shape_cast %1688 : vector<1x16x128xf32> to vector<16x128xf32>
    %1690 = arith.mulf %1689, %1683 : vector<16x128xf32>
    %1691 = arith.addf %1681, %1690 : vector<16x128xf32>
    %c5_832 = arith.constant 5 : index
    %c3_833 = arith.constant 3 : index
    %1692 = memref.load %arg4[%c5_832, %c3_833] : memref<14x4xf32, #tpu.memory_space<smem>>
    %1693 = vector.broadcast %1692 : f32 to vector<16x128xf32>
    %1694 = arith.mulf %1693, %1633 : vector<16x128xf32>
    %1695 = arith.addf %1687, %1694 : vector<16x128xf32>
    %c5_834 = arith.constant 5 : index
    %c0_835 = arith.constant 0 : index
    %c0_836 = arith.constant 0 : index
    %1696 = vector.load %arg11[%c5_834, %c0_835, %c0_836] : memref<14x16x128xf32, #tpu.memory_space<vmem>>, vector<1x16x128xf32>
    %1697 = vector.shape_cast %1696 : vector<1x16x128xf32> to vector<16x128xf32>
    %1698 = arith.mulf %1697, %1633 : vector<16x128xf32>
    %1699 = arith.addf %1691, %1698 : vector<16x128xf32>
    %c6_837 = arith.constant 6 : index
    %c3_838 = arith.constant 3 : index
    %1700 = memref.load %arg4[%c6_837, %c3_838] : memref<14x4xf32, #tpu.memory_space<smem>>
    %1701 = vector.broadcast %1700 : f32 to vector<16x128xf32>
    %1702 = arith.mulf %1701, %1635 : vector<16x128xf32>
    %1703 = arith.addf %1695, %1702 : vector<16x128xf32>
    %c6_839 = arith.constant 6 : index
    %c0_840 = arith.constant 0 : index
    %c0_841 = arith.constant 0 : index
    %1704 = vector.load %arg11[%c6_839, %c0_840, %c0_841] : memref<14x16x128xf32, #tpu.memory_space<vmem>>, vector<1x16x128xf32>
    %1705 = vector.shape_cast %1704 : vector<1x16x128xf32> to vector<16x128xf32>
    %1706 = arith.mulf %1705, %1635 : vector<16x128xf32>
    %1707 = arith.addf %1699, %1706 : vector<16x128xf32>
    %c7_842 = arith.constant 7 : index
    %c3_843 = arith.constant 3 : index
    %1708 = memref.load %arg4[%c7_842, %c3_843] : memref<14x4xf32, #tpu.memory_space<smem>>
    %1709 = vector.broadcast %1708 : f32 to vector<16x128xf32>
    %1710 = arith.mulf %1709, %1637 : vector<16x128xf32>
    %1711 = arith.addf %1703, %1710 : vector<16x128xf32>
    %c7_844 = arith.constant 7 : index
    %c0_845 = arith.constant 0 : index
    %c0_846 = arith.constant 0 : index
    %1712 = vector.load %arg11[%c7_844, %c0_845, %c0_846] : memref<14x16x128xf32, #tpu.memory_space<vmem>>, vector<1x16x128xf32>
    %1713 = vector.shape_cast %1712 : vector<1x16x128xf32> to vector<16x128xf32>
    %1714 = arith.mulf %1713, %1637 : vector<16x128xf32>
    %1715 = arith.addf %1707, %1714 : vector<16x128xf32>
    %c8_847 = arith.constant 8 : index
    %c3_848 = arith.constant 3 : index
    %1716 = memref.load %arg4[%c8_847, %c3_848] : memref<14x4xf32, #tpu.memory_space<smem>>
    %1717 = vector.broadcast %1716 : f32 to vector<16x128xf32>
    %1718 = arith.mulf %1717, %1639 : vector<16x128xf32>
    %1719 = arith.addf %1711, %1718 : vector<16x128xf32>
    %c8_849 = arith.constant 8 : index
    %c0_850 = arith.constant 0 : index
    %c0_851 = arith.constant 0 : index
    %1720 = vector.load %arg11[%c8_849, %c0_850, %c0_851] : memref<14x16x128xf32, #tpu.memory_space<vmem>>, vector<1x16x128xf32>
    %1721 = vector.shape_cast %1720 : vector<1x16x128xf32> to vector<16x128xf32>
    %1722 = arith.mulf %1721, %1639 : vector<16x128xf32>
    %1723 = arith.addf %1715, %1722 : vector<16x128xf32>
    %1724 = vector.extract_strided_slice %1633 {offsets = [1, 0], sizes = [15, 128], strides = [1, 1]} : vector<16x128xf32> to vector<15x128xf32>
    %1725 = tpu.concatenate %1724, %45 in 0 : vector<15x128xf32>, vector<1x128xf32> -> vector<16x128xf32>
    %c9_852 = arith.constant 9 : index
    %c3_853 = arith.constant 3 : index
    %1726 = memref.load %arg4[%c9_852, %c3_853] : memref<14x4xf32, #tpu.memory_space<smem>>
    %1727 = vector.broadcast %1726 : f32 to vector<16x128xf32>
    %1728 = arith.mulf %1727, %1725 : vector<16x128xf32>
    %1729 = arith.addf %1719, %1728 : vector<16x128xf32>
    %c9_854 = arith.constant 9 : index
    %c0_855 = arith.constant 0 : index
    %c0_856 = arith.constant 0 : index
    %1730 = vector.load %arg11[%c9_854, %c0_855, %c0_856] : memref<14x16x128xf32, #tpu.memory_space<vmem>>, vector<1x16x128xf32>
    %1731 = vector.shape_cast %1730 : vector<1x16x128xf32> to vector<16x128xf32>
    %1732 = arith.mulf %1731, %1725 : vector<16x128xf32>
    %1733 = arith.addf %1723, %1732 : vector<16x128xf32>
    %1734 = vector.extract_strided_slice %1635 {offsets = [1, 0], sizes = [15, 128], strides = [1, 1]} : vector<16x128xf32> to vector<15x128xf32>
    %1735 = tpu.concatenate %1734, %45 in 0 : vector<15x128xf32>, vector<1x128xf32> -> vector<16x128xf32>
    %c10_857 = arith.constant 10 : index
    %c3_858 = arith.constant 3 : index
    %1736 = memref.load %arg4[%c10_857, %c3_858] : memref<14x4xf32, #tpu.memory_space<smem>>
    %1737 = vector.broadcast %1736 : f32 to vector<16x128xf32>
    %1738 = arith.mulf %1737, %1735 : vector<16x128xf32>
    %1739 = arith.addf %1729, %1738 : vector<16x128xf32>
    %c10_859 = arith.constant 10 : index
    %c0_860 = arith.constant 0 : index
    %c0_861 = arith.constant 0 : index
    %1740 = vector.load %arg11[%c10_859, %c0_860, %c0_861] : memref<14x16x128xf32, #tpu.memory_space<vmem>>, vector<1x16x128xf32>
    %1741 = vector.shape_cast %1740 : vector<1x16x128xf32> to vector<16x128xf32>
    %1742 = arith.mulf %1741, %1735 : vector<16x128xf32>
    %1743 = arith.addf %1733, %1742 : vector<16x128xf32>
    %1744 = vector.extract_strided_slice %1631 {offsets = [1, 0], sizes = [15, 128], strides = [1, 1]} : vector<16x128xf32> to vector<15x128xf32>
    %1745 = tpu.concatenate %1744, %45 in 0 : vector<15x128xf32>, vector<1x128xf32> -> vector<16x128xf32>
    %c11_862 = arith.constant 11 : index
    %c3_863 = arith.constant 3 : index
    %1746 = memref.load %arg4[%c11_862, %c3_863] : memref<14x4xf32, #tpu.memory_space<smem>>
    %1747 = vector.broadcast %1746 : f32 to vector<16x128xf32>
    %1748 = arith.mulf %1747, %1745 : vector<16x128xf32>
    %1749 = arith.addf %1739, %1748 : vector<16x128xf32>
    %c11_864 = arith.constant 11 : index
    %c0_865 = arith.constant 0 : index
    %c0_866 = arith.constant 0 : index
    %1750 = vector.load %arg11[%c11_864, %c0_865, %c0_866] : memref<14x16x128xf32, #tpu.memory_space<vmem>>, vector<1x16x128xf32>
    %1751 = vector.shape_cast %1750 : vector<1x16x128xf32> to vector<16x128xf32>
    %1752 = arith.mulf %1751, %1745 : vector<16x128xf32>
    %1753 = arith.addf %1743, %1752 : vector<16x128xf32>
    %1754 = vector.extract_strided_slice %1637 {offsets = [1, 0], sizes = [15, 128], strides = [1, 1]} : vector<16x128xf32> to vector<15x128xf32>
    %1755 = tpu.concatenate %1754, %45 in 0 : vector<15x128xf32>, vector<1x128xf32> -> vector<16x128xf32>
    %c12_867 = arith.constant 12 : index
    %c3_868 = arith.constant 3 : index
    %1756 = memref.load %arg4[%c12_867, %c3_868] : memref<14x4xf32, #tpu.memory_space<smem>>
    %1757 = vector.broadcast %1756 : f32 to vector<16x128xf32>
    %1758 = arith.mulf %1757, %1755 : vector<16x128xf32>
    %1759 = arith.addf %1749, %1758 : vector<16x128xf32>
    %c12_869 = arith.constant 12 : index
    %c0_870 = arith.constant 0 : index
    %c0_871 = arith.constant 0 : index
    %1760 = vector.load %arg11[%c12_869, %c0_870, %c0_871] : memref<14x16x128xf32, #tpu.memory_space<vmem>>, vector<1x16x128xf32>
    %1761 = vector.shape_cast %1760 : vector<1x16x128xf32> to vector<16x128xf32>
    %1762 = arith.mulf %1761, %1755 : vector<16x128xf32>
    %1763 = arith.addf %1753, %1762 : vector<16x128xf32>
    %1764 = vector.extract_strided_slice %1639 {offsets = [1, 0], sizes = [15, 128], strides = [1, 1]} : vector<16x128xf32> to vector<15x128xf32>
    %1765 = tpu.concatenate %1764, %45 in 0 : vector<15x128xf32>, vector<1x128xf32> -> vector<16x128xf32>
    %c13_872 = arith.constant 13 : index
    %c3_873 = arith.constant 3 : index
    %1766 = memref.load %arg4[%c13_872, %c3_873] : memref<14x4xf32, #tpu.memory_space<smem>>
    %1767 = vector.broadcast %1766 : f32 to vector<16x128xf32>
    %1768 = arith.mulf %1767, %1765 : vector<16x128xf32>
    %1769 = arith.addf %1759, %1768 : vector<16x128xf32>
    %c13_874 = arith.constant 13 : index
    %c0_875 = arith.constant 0 : index
    %c0_876 = arith.constant 0 : index
    %1770 = vector.load %arg11[%c13_874, %c0_875, %c0_876] : memref<14x16x128xf32, #tpu.memory_space<vmem>>, vector<1x16x128xf32>
    %1771 = vector.shape_cast %1770 : vector<1x16x128xf32> to vector<16x128xf32>
    %1772 = arith.mulf %1771, %1765 : vector<16x128xf32>
    %1773 = arith.addf %1763, %1772 : vector<16x128xf32>
    %c0_877 = arith.constant 0 : index
    %c0_878 = arith.constant 0 : index
    %c0_879 = arith.constant 0 : index
    %c0_880 = arith.constant 0 : index
    %1774 = vector.load %arg3[%c0_877, %c0_878, %c0_879, %c0_880] : memref<1x1x16x128xf32, #tpu.memory_space<vmem>>, vector<1x1x16x128xf32>
    %1775 = vector.shape_cast %1774 : vector<1x1x16x128xf32> to vector<16x128xf32>
    %c3_881 = arith.constant 3 : index
    %1776 = memref.load %arg6[%c3_881] : memref<4xf32, #tpu.memory_space<smem>>
    %c3_882 = arith.constant 3 : index
    %1777 = memref.load %arg7[%c3_882] : memref<4xf32, #tpu.memory_space<smem>>
    %1778 = arith.mulf %1773, %1775 : vector<16x128xf32>
    %1779 = vector.broadcast %1777 : f32 to vector<16x128xf32>
    %1780 = arith.mulf %1779, %1778 : vector<16x128xf32>
    %1781 = vector.broadcast %1776 : f32 to vector<16x128xf32>
    %1782 = arith.addf %1781, %1780 : vector<16x128xf32>
    %1783 = arith.mulf %1769, %1782 : vector<16x128xf32>
    %1784 = arith.addf %1312, %1469 : vector<16x128xf32>
    %1785 = arith.addf %1784, %1626 : vector<16x128xf32>
    %1786 = arith.addf %1785, %1783 : vector<16x128xf32>
    %c0_883 = arith.constant 0 : index
    %c0_884 = arith.constant 0 : index
    %c0_885 = arith.constant 0 : index
    %c0_886 = arith.constant 0 : index
    %1787 = vector.load %arg1[%c0_883, %c0_884, %c0_885, %c0_886] : memref<1x4x16x128xf32, #tpu.memory_space<vmem>>, vector<1x1x16x128xf32>
    %1788 = vector.shape_cast %1787 : vector<1x1x16x128xf32> to vector<16x128xf32>
    %1789 = arith.subf %1786, %1312 : vector<16x128xf32>
    %1790 = arith.subf %1788, %1789 : vector<16x128xf32>
    %c0_887 = arith.constant 0 : index
    %c0_888 = arith.constant 0 : index
    %c0_889 = arith.constant 0 : index
    %c0_890 = arith.constant 0 : index
    %1791 = vector.load %arg10[%c0_887, %c0_888, %c0_889, %c0_890] : memref<1x4x16x128xf32, #tpu.memory_space<vmem>>, vector<1x1x16x128xf32>
    %1792 = vector.shape_cast %1791 : vector<1x1x16x128xf32> to vector<16x128xf32>
    %1793 = vector.shape_cast %1790 : vector<16x128xf32> to vector<1x1x16x128xf32>
    tpu.vector_store %arg10[%c0_887, %c0_888, %c0_889, %c0_890], %1793 {strides = array<i32>} : memref<1x4x16x128xf32, #tpu.memory_space<vmem>>, vector<1x1x16x128xf32>,
    %c0_891 = arith.constant 0 : index
    %c1_892 = arith.constant 1 : index
    %c0_893 = arith.constant 0 : index
    %c0_894 = arith.constant 0 : index
    %1794 = vector.load %arg1[%c0_891, %c1_892, %c0_893, %c0_894] : memref<1x4x16x128xf32, #tpu.memory_space<vmem>>, vector<1x1x16x128xf32>
    %1795 = vector.shape_cast %1794 : vector<1x1x16x128xf32> to vector<16x128xf32>
    %1796 = arith.subf %1786, %1469 : vector<16x128xf32>
    %1797 = arith.subf %1795, %1796 : vector<16x128xf32>
    %c0_895 = arith.constant 0 : index
    %c1_896 = arith.constant 1 : index
    %c0_897 = arith.constant 0 : index
    %c0_898 = arith.constant 0 : index
    %1798 = vector.load %arg10[%c0_895, %c1_896, %c0_897, %c0_898] : memref<1x4x16x128xf32, #tpu.memory_space<vmem>>, vector<1x1x16x128xf32>
    %1799 = vector.shape_cast %1798 : vector<1x1x16x128xf32> to vector<16x128xf32>
    %1800 = vector.shape_cast %1797 : vector<16x128xf32> to vector<1x1x16x128xf32>
    tpu.vector_store %arg10[%c0_895, %c1_896, %c0_897, %c0_898], %1800 {strides = array<i32>} : memref<1x4x16x128xf32, #tpu.memory_space<vmem>>, vector<1x1x16x128xf32>,
    %c0_899 = arith.constant 0 : index
    %c2_900 = arith.constant 2 : index
    %c0_901 = arith.constant 0 : index
    %c0_902 = arith.constant 0 : index
    %1801 = vector.load %arg1[%c0_899, %c2_900, %c0_901, %c0_902] : memref<1x4x16x128xf32, #tpu.memory_space<vmem>>, vector<1x1x16x128xf32>
    %1802 = vector.shape_cast %1801 : vector<1x1x16x128xf32> to vector<16x128xf32>
    %1803 = arith.subf %1786, %1626 : vector<16x128xf32>
    %1804 = arith.subf %1802, %1803 : vector<16x128xf32>
    %c0_903 = arith.constant 0 : index
    %c2_904 = arith.constant 2 : index
    %c0_905 = arith.constant 0 : index
    %c0_906 = arith.constant 0 : index
    %1805 = vector.load %arg10[%c0_903, %c2_904, %c0_905, %c0_906] : memref<1x4x16x128xf32, #tpu.memory_space<vmem>>, vector<1x1x16x128xf32>
    %1806 = vector.shape_cast %1805 : vector<1x1x16x128xf32> to vector<16x128xf32>
    %1807 = vector.shape_cast %1804 : vector<16x128xf32> to vector<1x1x16x128xf32>
    tpu.vector_store %arg10[%c0_903, %c2_904, %c0_905, %c0_906], %1807 {strides = array<i32>} : memref<1x4x16x128xf32, #tpu.memory_space<vmem>>, vector<1x1x16x128xf32>,
    %c0_907 = arith.constant 0 : index
    %c3_908 = arith.constant 3 : index
    %c0_909 = arith.constant 0 : index
    %c0_910 = arith.constant 0 : index
    %1808 = vector.load %arg1[%c0_907, %c3_908, %c0_909, %c0_910] : memref<1x4x16x128xf32, #tpu.memory_space<vmem>>, vector<1x1x16x128xf32>
    %1809 = vector.shape_cast %1808 : vector<1x1x16x128xf32> to vector<16x128xf32>
    %1810 = arith.subf %1786, %1783 : vector<16x128xf32>
    %1811 = arith.subf %1809, %1810 : vector<16x128xf32>
    %c0_911 = arith.constant 0 : index
    %c3_912 = arith.constant 3 : index
    %c0_913 = arith.constant 0 : index
    %c0_914 = arith.constant 0 : index
    %1812 = vector.load %arg10[%c0_911, %c3_912, %c0_913, %c0_914] : memref<1x4x16x128xf32, #tpu.memory_space<vmem>>, vector<1x1x16x128xf32>
    %1813 = vector.shape_cast %1812 : vector<1x1x16x128xf32> to vector<16x128xf32>
    %1814 = vector.shape_cast %1811 : vector<16x128xf32> to vector<1x1x16x128xf32>
    tpu.vector_store %arg10[%c0_911, %c3_912, %c0_913, %c0_914], %1814 {strides = array<i32>} : memref<1x4x16x128xf32, #tpu.memory_space<vmem>>, vector<1x1x16x128xf32>,
    %c0_915 = arith.constant 0 : index
    %c0_916 = arith.constant 0 : index
    %c0_917 = arith.constant 0 : index
    %c0_918 = arith.constant 0 : index
    %1815 = vector.load %arg10[%c0_915, %c0_916, %c0_917, %c0_918] : memref<1x4x16x128xf32, #tpu.memory_space<vmem>>, vector<1x1x16x128xf32>
    %1816 = vector.shape_cast %1815 : vector<1x1x16x128xf32> to vector<16x128xf32>
    %c0_919 = arith.constant 0 : index
    %c1_920 = arith.constant 1 : index
    %c0_921 = arith.constant 0 : index
    %c0_922 = arith.constant 0 : index
    %1817 = vector.load %arg10[%c0_919, %c1_920, %c0_921, %c0_922] : memref<1x4x16x128xf32, #tpu.memory_space<vmem>>, vector<1x1x16x128xf32>
    %1818 = vector.shape_cast %1817 : vector<1x1x16x128xf32> to vector<16x128xf32>
    %1819 = arith.maximumf %1816, %1818 : vector<16x128xf32>
    %c0_923 = arith.constant 0 : index
    %c2_924 = arith.constant 2 : index
    %c0_925 = arith.constant 0 : index
    %c0_926 = arith.constant 0 : index
    %1820 = vector.load %arg10[%c0_923, %c2_924, %c0_925, %c0_926] : memref<1x4x16x128xf32, #tpu.memory_space<vmem>>, vector<1x1x16x128xf32>
    %1821 = vector.shape_cast %1820 : vector<1x1x16x128xf32> to vector<16x128xf32>
    %1822 = arith.maximumf %1819, %1821 : vector<16x128xf32>
    %c0_927 = arith.constant 0 : index
    %c3_928 = arith.constant 3 : index
    %c0_929 = arith.constant 0 : index
    %c0_930 = arith.constant 0 : index
    %1823 = vector.load %arg10[%c0_927, %c3_928, %c0_929, %c0_930] : memref<1x4x16x128xf32, #tpu.memory_space<vmem>>, vector<1x1x16x128xf32>
    %1824 = vector.shape_cast %1823 : vector<1x1x16x128xf32> to vector<16x128xf32>
    %1825 = arith.maximumf %1822, %1824 : vector<16x128xf32>
    %c0_931 = arith.constant 0 : index
    %c0_932 = arith.constant 0 : index
    %c0_933 = arith.constant 0 : index
    %c0_934 = arith.constant 0 : index
    %1826 = vector.load %arg10[%c0_931, %c0_932, %c0_933, %c0_934] : memref<1x4x16x128xf32, #tpu.memory_space<vmem>>, vector<1x1x16x128xf32>
    %1827 = vector.shape_cast %1826 : vector<1x1x16x128xf32> to vector<16x128xf32>
    %1828 = arith.subf %1827, %1825 : vector<16x128xf32>
    %1829 = math.exp %1828 : vector<16x128xf32>
    %c0_935 = arith.constant 0 : index
    %c1_936 = arith.constant 1 : index
    %c0_937 = arith.constant 0 : index
    %c0_938 = arith.constant 0 : index
    %1830 = vector.load %arg10[%c0_935, %c1_936, %c0_937, %c0_938] : memref<1x4x16x128xf32, #tpu.memory_space<vmem>>, vector<1x1x16x128xf32>
    %1831 = vector.shape_cast %1830 : vector<1x1x16x128xf32> to vector<16x128xf32>
    %1832 = arith.subf %1831, %1825 : vector<16x128xf32>
    %1833 = math.exp %1832 : vector<16x128xf32>
    %1834 = arith.addf %1829, %1833 : vector<16x128xf32>
    %c0_939 = arith.constant 0 : index
    %c2_940 = arith.constant 2 : index
    %c0_941 = arith.constant 0 : index
    %c0_942 = arith.constant 0 : index
    %1835 = vector.load %arg10[%c0_939, %c2_940, %c0_941, %c0_942] : memref<1x4x16x128xf32, #tpu.memory_space<vmem>>, vector<1x1x16x128xf32>
    %1836 = vector.shape_cast %1835 : vector<1x1x16x128xf32> to vector<16x128xf32>
    %1837 = arith.subf %1836, %1825 : vector<16x128xf32>
    %1838 = math.exp %1837 : vector<16x128xf32>
    %1839 = arith.addf %1834, %1838 : vector<16x128xf32>
    %c0_943 = arith.constant 0 : index
    %c3_944 = arith.constant 3 : index
    %c0_945 = arith.constant 0 : index
    %c0_946 = arith.constant 0 : index
    %1840 = vector.load %arg10[%c0_943, %c3_944, %c0_945, %c0_946] : memref<1x4x16x128xf32, #tpu.memory_space<vmem>>, vector<1x1x16x128xf32>
    %1841 = vector.shape_cast %1840 : vector<1x1x16x128xf32> to vector<16x128xf32>
    %1842 = arith.subf %1841, %1825 : vector<16x128xf32>
    %1843 = math.exp %1842 : vector<16x128xf32>
    %1844 = arith.addf %1839, %1843 : vector<16x128xf32>
    %cst_947 = arith.constant 1.000000e+00 : f32
    %1845 = vector.broadcast %cst_947 : f32 to vector<16x128xf32>
    %1846 = arith.divf %1845, %1844 : vector<16x128xf32>
    %c0_948 = arith.constant 0 : index
    %c0_949 = arith.constant 0 : index
    %c0_950 = arith.constant 0 : index
    %c0_951 = arith.constant 0 : index
    %1847 = vector.load %arg10[%c0_948, %c0_949, %c0_950, %c0_951] : memref<1x4x16x128xf32, #tpu.memory_space<vmem>>, vector<1x1x16x128xf32>
    %1848 = vector.shape_cast %1847 : vector<1x1x16x128xf32> to vector<16x128xf32>
    %1849 = arith.subf %1848, %1825 : vector<16x128xf32>
    %1850 = math.exp %1849 : vector<16x128xf32>
    %1851 = arith.mulf %1850, %1846 : vector<16x128xf32>
    %c2_i32_952 = arith.constant 2 : i32
    %1852 = tpu.dynamic_rotate %1851 by %c2_i32_952 dim 1 : vector<16x128xf32>, i32 -> vector<16x128xf32>
    %1853 = arith.mulf %1852, %11 : vector<16x128xf32>
    %c1_i32_953 = arith.constant 1 : i32
    %1854 = tpu.dynamic_rotate %1851 by %c1_i32_953 dim 1 : vector<16x128xf32>, i32 -> vector<16x128xf32>
    %1855 = arith.mulf %1854, %22 : vector<16x128xf32>
    %c127_i32_954 = arith.constant 127 : i32
    %1856 = tpu.dynamic_rotate %1851 by %c127_i32_954 dim 1 : vector<16x128xf32>, i32 -> vector<16x128xf32>
    %1857 = arith.mulf %1856, %33 : vector<16x128xf32>
    %c126_i32_955 = arith.constant 126 : i32
    %1858 = tpu.dynamic_rotate %1851 by %c126_i32_955 dim 1 : vector<16x128xf32>, i32 -> vector<16x128xf32>
    %1859 = arith.mulf %1858, %44 : vector<16x128xf32>
    %cst_956 = arith.constant 0.000000e+00 : f32
    %1860 = vector.broadcast %cst_956 : f32 to vector<16x128xf32>
    %cst_957 = arith.constant 0.000000e+00 : f32
    %1861 = vector.broadcast %cst_957 : f32 to vector<16x128xf32>
    %1862 = vector.extract_strided_slice %1853 {offsets = [0, 0], sizes = [15, 128], strides = [1, 1]} : vector<16x128xf32> to vector<15x128xf32>
    %1863 = tpu.concatenate %45, %1862 in 0 : vector<1x128xf32>, vector<15x128xf32> -> vector<16x128xf32>
    %c0_958 = arith.constant 0 : index
    %c0_959 = arith.constant 0 : index
    %1864 = memref.load %arg4[%c0_958, %c0_959] : memref<14x4xf32, #tpu.memory_space<smem>>
    %1865 = vector.broadcast %1864 : f32 to vector<16x128xf32>
    %1866 = arith.mulf %1865, %1863 : vector<16x128xf32>
    %1867 = arith.addf %1860, %1866 : vector<16x128xf32>
    %c0_960 = arith.constant 0 : index
    %c0_961 = arith.constant 0 : index
    %c0_962 = arith.constant 0 : index
    %1868 = vector.load %arg11[%c0_960, %c0_961, %c0_962] : memref<14x16x128xf32, #tpu.memory_space<vmem>>, vector<1x16x128xf32>
    %1869 = vector.shape_cast %1868 : vector<1x16x128xf32> to vector<16x128xf32>
    %1870 = arith.mulf %1869, %1863 : vector<16x128xf32>
    %1871 = arith.addf %1861, %1870 : vector<16x128xf32>
    %1872 = vector.extract_strided_slice %1855 {offsets = [0, 0], sizes = [15, 128], strides = [1, 1]} : vector<16x128xf32> to vector<15x128xf32>
    %1873 = tpu.concatenate %45, %1872 in 0 : vector<1x128xf32>, vector<15x128xf32> -> vector<16x128xf32>
    %c1_963 = arith.constant 1 : index
    %c0_964 = arith.constant 0 : index
    %1874 = memref.load %arg4[%c1_963, %c0_964] : memref<14x4xf32, #tpu.memory_space<smem>>
    %1875 = vector.broadcast %1874 : f32 to vector<16x128xf32>
    %1876 = arith.mulf %1875, %1873 : vector<16x128xf32>
    %1877 = arith.addf %1867, %1876 : vector<16x128xf32>
    %c1_965 = arith.constant 1 : index
    %c0_966 = arith.constant 0 : index
    %c0_967 = arith.constant 0 : index
    %1878 = vector.load %arg11[%c1_965, %c0_966, %c0_967] : memref<14x16x128xf32, #tpu.memory_space<vmem>>, vector<1x16x128xf32>
    %1879 = vector.shape_cast %1878 : vector<1x16x128xf32> to vector<16x128xf32>
    %1880 = arith.mulf %1879, %1873 : vector<16x128xf32>
    %1881 = arith.addf %1871, %1880 : vector<16x128xf32>
    %1882 = vector.extract_strided_slice %1851 {offsets = [0, 0], sizes = [15, 128], strides = [1, 1]} : vector<16x128xf32> to vector<15x128xf32>
    %1883 = tpu.concatenate %45, %1882 in 0 : vector<1x128xf32>, vector<15x128xf32> -> vector<16x128xf32>
    %c2_968 = arith.constant 2 : index
    %c0_969 = arith.constant 0 : index
    %1884 = memref.load %arg4[%c2_968, %c0_969] : memref<14x4xf32, #tpu.memory_space<smem>>
    %1885 = vector.broadcast %1884 : f32 to vector<16x128xf32>
    %1886 = arith.mulf %1885, %1883 : vector<16x128xf32>
    %1887 = arith.addf %1877, %1886 : vector<16x128xf32>
    %c2_970 = arith.constant 2 : index
    %c0_971 = arith.constant 0 : index
    %c0_972 = arith.constant 0 : index
    %1888 = vector.load %arg11[%c2_970, %c0_971, %c0_972] : memref<14x16x128xf32, #tpu.memory_space<vmem>>, vector<1x16x128xf32>
    %1889 = vector.shape_cast %1888 : vector<1x16x128xf32> to vector<16x128xf32>
    %1890 = arith.mulf %1889, %1883 : vector<16x128xf32>
    %1891 = arith.addf %1881, %1890 : vector<16x128xf32>
    %1892 = vector.extract_strided_slice %1857 {offsets = [0, 0], sizes = [15, 128], strides = [1, 1]} : vector<16x128xf32> to vector<15x128xf32>
    %1893 = tpu.concatenate %45, %1892 in 0 : vector<1x128xf32>, vector<15x128xf32> -> vector<16x128xf32>
    %c3_973 = arith.constant 3 : index
    %c0_974 = arith.constant 0 : index
    %1894 = memref.load %arg4[%c3_973, %c0_974] : memref<14x4xf32, #tpu.memory_space<smem>>
    %1895 = vector.broadcast %1894 : f32 to vector<16x128xf32>
    %1896 = arith.mulf %1895, %1893 : vector<16x128xf32>
    %1897 = arith.addf %1887, %1896 : vector<16x128xf32>
    %c3_975 = arith.constant 3 : index
    %c0_976 = arith.constant 0 : index
    %c0_977 = arith.constant 0 : index
    %1898 = vector.load %arg11[%c3_975, %c0_976, %c0_977] : memref<14x16x128xf32, #tpu.memory_space<vmem>>, vector<1x16x128xf32>
    %1899 = vector.shape_cast %1898 : vector<1x16x128xf32> to vector<16x128xf32>
    %1900 = arith.mulf %1899, %1893 : vector<16x128xf32>
    %1901 = arith.addf %1891, %1900 : vector<16x128xf32>
    %1902 = vector.extract_strided_slice %1859 {offsets = [0, 0], sizes = [15, 128], strides = [1, 1]} : vector<16x128xf32> to vector<15x128xf32>
    %1903 = tpu.concatenate %45, %1902 in 0 : vector<1x128xf32>, vector<15x128xf32> -> vector<16x128xf32>
    %c4_978 = arith.constant 4 : index
    %c0_979 = arith.constant 0 : index
    %1904 = memref.load %arg4[%c4_978, %c0_979] : memref<14x4xf32, #tpu.memory_space<smem>>
    %1905 = vector.broadcast %1904 : f32 to vector<16x128xf32>
    %1906 = arith.mulf %1905, %1903 : vector<16x128xf32>
    %1907 = arith.addf %1897, %1906 : vector<16x128xf32>
    %c4_980 = arith.constant 4 : index
    %c0_981 = arith.constant 0 : index
    %c0_982 = arith.constant 0 : index
    %1908 = vector.load %arg11[%c4_980, %c0_981, %c0_982] : memref<14x16x128xf32, #tpu.memory_space<vmem>>, vector<1x16x128xf32>
    %1909 = vector.shape_cast %1908 : vector<1x16x128xf32> to vector<16x128xf32>
    %1910 = arith.mulf %1909, %1903 : vector<16x128xf32>
    %1911 = arith.addf %1901, %1910 : vector<16x128xf32>
    %c5_983 = arith.constant 5 : index
    %c0_984 = arith.constant 0 : index
    %1912 = memref.load %arg4[%c5_983, %c0_984] : memref<14x4xf32, #tpu.memory_space<smem>>
    %1913 = vector.broadcast %1912 : f32 to vector<16x128xf32>
    %1914 = arith.mulf %1913, %1853 : vector<16x128xf32>
    %1915 = arith.addf %1907, %1914 : vector<16x128xf32>
    %c5_985 = arith.constant 5 : index
    %c0_986 = arith.constant 0 : index
    %c0_987 = arith.constant 0 : index
    %1916 = vector.load %arg11[%c5_985, %c0_986, %c0_987] : memref<14x16x128xf32, #tpu.memory_space<vmem>>, vector<1x16x128xf32>
    %1917 = vector.shape_cast %1916 : vector<1x16x128xf32> to vector<16x128xf32>
    %1918 = arith.mulf %1917, %1853 : vector<16x128xf32>
    %1919 = arith.addf %1911, %1918 : vector<16x128xf32>
    %c6_988 = arith.constant 6 : index
    %c0_989 = arith.constant 0 : index
    %1920 = memref.load %arg4[%c6_988, %c0_989] : memref<14x4xf32, #tpu.memory_space<smem>>
    %1921 = vector.broadcast %1920 : f32 to vector<16x128xf32>
    %1922 = arith.mulf %1921, %1855 : vector<16x128xf32>
    %1923 = arith.addf %1915, %1922 : vector<16x128xf32>
    %c6_990 = arith.constant 6 : index
    %c0_991 = arith.constant 0 : index
    %c0_992 = arith.constant 0 : index
    %1924 = vector.load %arg11[%c6_990, %c0_991, %c0_992] : memref<14x16x128xf32, #tpu.memory_space<vmem>>, vector<1x16x128xf32>
    %1925 = vector.shape_cast %1924 : vector<1x16x128xf32> to vector<16x128xf32>
    %1926 = arith.mulf %1925, %1855 : vector<16x128xf32>
    %1927 = arith.addf %1919, %1926 : vector<16x128xf32>
    %c7_993 = arith.constant 7 : index
    %c0_994 = arith.constant 0 : index
    %1928 = memref.load %arg4[%c7_993, %c0_994] : memref<14x4xf32, #tpu.memory_space<smem>>
    %1929 = vector.broadcast %1928 : f32 to vector<16x128xf32>
    %1930 = arith.mulf %1929, %1857 : vector<16x128xf32>
    %1931 = arith.addf %1923, %1930 : vector<16x128xf32>
    %c7_995 = arith.constant 7 : index
    %c0_996 = arith.constant 0 : index
    %c0_997 = arith.constant 0 : index
    %1932 = vector.load %arg11[%c7_995, %c0_996, %c0_997] : memref<14x16x128xf32, #tpu.memory_space<vmem>>, vector<1x16x128xf32>
    %1933 = vector.shape_cast %1932 : vector<1x16x128xf32> to vector<16x128xf32>
    %1934 = arith.mulf %1933, %1857 : vector<16x128xf32>
    %1935 = arith.addf %1927, %1934 : vector<16x128xf32>
    %c8_998 = arith.constant 8 : index
    %c0_999 = arith.constant 0 : index
    %1936 = memref.load %arg4[%c8_998, %c0_999] : memref<14x4xf32, #tpu.memory_space<smem>>
    %1937 = vector.broadcast %1936 : f32 to vector<16x128xf32>
    %1938 = arith.mulf %1937, %1859 : vector<16x128xf32>
    %1939 = arith.addf %1931, %1938 : vector<16x128xf32>
    %c8_1000 = arith.constant 8 : index
    %c0_1001 = arith.constant 0 : index
    %c0_1002 = arith.constant 0 : index
    %1940 = vector.load %arg11[%c8_1000, %c0_1001, %c0_1002] : memref<14x16x128xf32, #tpu.memory_space<vmem>>, vector<1x16x128xf32>
    %1941 = vector.shape_cast %1940 : vector<1x16x128xf32> to vector<16x128xf32>
    %1942 = arith.mulf %1941, %1859 : vector<16x128xf32>
    %1943 = arith.addf %1935, %1942 : vector<16x128xf32>
    %1944 = vector.extract_strided_slice %1853 {offsets = [1, 0], sizes = [15, 128], strides = [1, 1]} : vector<16x128xf32> to vector<15x128xf32>
    %1945 = tpu.concatenate %1944, %45 in 0 : vector<15x128xf32>, vector<1x128xf32> -> vector<16x128xf32>
    %c9_1003 = arith.constant 9 : index
    %c0_1004 = arith.constant 0 : index
    %1946 = memref.load %arg4[%c9_1003, %c0_1004] : memref<14x4xf32, #tpu.memory_space<smem>>
    %1947 = vector.broadcast %1946 : f32 to vector<16x128xf32>
    %1948 = arith.mulf %1947, %1945 : vector<16x128xf32>
    %1949 = arith.addf %1939, %1948 : vector<16x128xf32>
    %c9_1005 = arith.constant 9 : index
    %c0_1006 = arith.constant 0 : index
    %c0_1007 = arith.constant 0 : index
    %1950 = vector.load %arg11[%c9_1005, %c0_1006, %c0_1007] : memref<14x16x128xf32, #tpu.memory_space<vmem>>, vector<1x16x128xf32>
    %1951 = vector.shape_cast %1950 : vector<1x16x128xf32> to vector<16x128xf32>
    %1952 = arith.mulf %1951, %1945 : vector<16x128xf32>
    %1953 = arith.addf %1943, %1952 : vector<16x128xf32>
    %1954 = vector.extract_strided_slice %1855 {offsets = [1, 0], sizes = [15, 128], strides = [1, 1]} : vector<16x128xf32> to vector<15x128xf32>
    %1955 = tpu.concatenate %1954, %45 in 0 : vector<15x128xf32>, vector<1x128xf32> -> vector<16x128xf32>
    %c10_1008 = arith.constant 10 : index
    %c0_1009 = arith.constant 0 : index
    %1956 = memref.load %arg4[%c10_1008, %c0_1009] : memref<14x4xf32, #tpu.memory_space<smem>>
    %1957 = vector.broadcast %1956 : f32 to vector<16x128xf32>
    %1958 = arith.mulf %1957, %1955 : vector<16x128xf32>
    %1959 = arith.addf %1949, %1958 : vector<16x128xf32>
    %c10_1010 = arith.constant 10 : index
    %c0_1011 = arith.constant 0 : index
    %c0_1012 = arith.constant 0 : index
    %1960 = vector.load %arg11[%c10_1010, %c0_1011, %c0_1012] : memref<14x16x128xf32, #tpu.memory_space<vmem>>, vector<1x16x128xf32>
    %1961 = vector.shape_cast %1960 : vector<1x16x128xf32> to vector<16x128xf32>
    %1962 = arith.mulf %1961, %1955 : vector<16x128xf32>
    %1963 = arith.addf %1953, %1962 : vector<16x128xf32>
    %1964 = vector.extract_strided_slice %1851 {offsets = [1, 0], sizes = [15, 128], strides = [1, 1]} : vector<16x128xf32> to vector<15x128xf32>
    %1965 = tpu.concatenate %1964, %45 in 0 : vector<15x128xf32>, vector<1x128xf32> -> vector<16x128xf32>
    %c11_1013 = arith.constant 11 : index
    %c0_1014 = arith.constant 0 : index
    %1966 = memref.load %arg4[%c11_1013, %c0_1014] : memref<14x4xf32, #tpu.memory_space<smem>>
    %1967 = vector.broadcast %1966 : f32 to vector<16x128xf32>
    %1968 = arith.mulf %1967, %1965 : vector<16x128xf32>
    %1969 = arith.addf %1959, %1968 : vector<16x128xf32>
    %c11_1015 = arith.constant 11 : index
    %c0_1016 = arith.constant 0 : index
    %c0_1017 = arith.constant 0 : index
    %1970 = vector.load %arg11[%c11_1015, %c0_1016, %c0_1017] : memref<14x16x128xf32, #tpu.memory_space<vmem>>, vector<1x16x128xf32>
    %1971 = vector.shape_cast %1970 : vector<1x16x128xf32> to vector<16x128xf32>
    %1972 = arith.mulf %1971, %1965 : vector<16x128xf32>
    %1973 = arith.addf %1963, %1972 : vector<16x128xf32>
    %1974 = vector.extract_strided_slice %1857 {offsets = [1, 0], sizes = [15, 128], strides = [1, 1]} : vector<16x128xf32> to vector<15x128xf32>
    %1975 = tpu.concatenate %1974, %45 in 0 : vector<15x128xf32>, vector<1x128xf32> -> vector<16x128xf32>
    %c12_1018 = arith.constant 12 : index
    %c0_1019 = arith.constant 0 : index
    %1976 = memref.load %arg4[%c12_1018, %c0_1019] : memref<14x4xf32, #tpu.memory_space<smem>>
    %1977 = vector.broadcast %1976 : f32 to vector<16x128xf32>
    %1978 = arith.mulf %1977, %1975 : vector<16x128xf32>
    %1979 = arith.addf %1969, %1978 : vector<16x128xf32>
    %c12_1020 = arith.constant 12 : index
    %c0_1021 = arith.constant 0 : index
    %c0_1022 = arith.constant 0 : index
    %1980 = vector.load %arg11[%c12_1020, %c0_1021, %c0_1022] : memref<14x16x128xf32, #tpu.memory_space<vmem>>, vector<1x16x128xf32>
    %1981 = vector.shape_cast %1980 : vector<1x16x128xf32> to vector<16x128xf32>
    %1982 = arith.mulf %1981, %1975 : vector<16x128xf32>
    %1983 = arith.addf %1973, %1982 : vector<16x128xf32>
    %1984 = vector.extract_strided_slice %1859 {offsets = [1, 0], sizes = [15, 128], strides = [1, 1]} : vector<16x128xf32> to vector<15x128xf32>
    %1985 = tpu.concatenate %1984, %45 in 0 : vector<15x128xf32>, vector<1x128xf32> -> vector<16x128xf32>
    %c13_1023 = arith.constant 13 : index
    %c0_1024 = arith.constant 0 : index
    %1986 = memref.load %arg4[%c13_1023, %c0_1024] : memref<14x4xf32, #tpu.memory_space<smem>>
    %1987 = vector.broadcast %1986 : f32 to vector<16x128xf32>
    %1988 = arith.mulf %1987, %1985 : vector<16x128xf32>
    %1989 = arith.addf %1979, %1988 : vector<16x128xf32>
    %c13_1025 = arith.constant 13 : index
    %c0_1026 = arith.constant 0 : index
    %c0_1027 = arith.constant 0 : index
    %1990 = vector.load %arg11[%c13_1025, %c0_1026, %c0_1027] : memref<14x16x128xf32, #tpu.memory_space<vmem>>, vector<1x16x128xf32>
    %1991 = vector.shape_cast %1990 : vector<1x16x128xf32> to vector<16x128xf32>
    %1992 = arith.mulf %1991, %1985 : vector<16x128xf32>
    %1993 = arith.addf %1983, %1992 : vector<16x128xf32>
    %c0_1028 = arith.constant 0 : index
    %c0_1029 = arith.constant 0 : index
    %c0_1030 = arith.constant 0 : index
    %c0_1031 = arith.constant 0 : index
    %1994 = vector.load %arg3[%c0_1028, %c0_1029, %c0_1030, %c0_1031] : memref<1x1x16x128xf32, #tpu.memory_space<vmem>>, vector<1x1x16x128xf32>
    %1995 = vector.shape_cast %1994 : vector<1x1x16x128xf32> to vector<16x128xf32>
    %c0_1032 = arith.constant 0 : index
    %1996 = memref.load %arg6[%c0_1032] : memref<4xf32, #tpu.memory_space<smem>>
    %c0_1033 = arith.constant 0 : index
    %1997 = memref.load %arg7[%c0_1033] : memref<4xf32, #tpu.memory_space<smem>>
    %1998 = arith.mulf %1993, %1995 : vector<16x128xf32>
    %1999 = vector.broadcast %1997 : f32 to vector<16x128xf32>
    %2000 = arith.mulf %1999, %1998 : vector<16x128xf32>
    %2001 = vector.broadcast %1996 : f32 to vector<16x128xf32>
    %2002 = arith.addf %2001, %2000 : vector<16x128xf32>
    %2003 = arith.mulf %1989, %2002 : vector<16x128xf32>
    %c0_1034 = arith.constant 0 : index
    %c1_1035 = arith.constant 1 : index
    %c0_1036 = arith.constant 0 : index
    %c0_1037 = arith.constant 0 : index
    %2004 = vector.load %arg10[%c0_1034, %c1_1035, %c0_1036, %c0_1037] : memref<1x4x16x128xf32, #tpu.memory_space<vmem>>, vector<1x1x16x128xf32>
    %2005 = vector.shape_cast %2004 : vector<1x1x16x128xf32> to vector<16x128xf32>
    %2006 = arith.subf %2005, %1825 : vector<16x128xf32>
    %2007 = math.exp %2006 : vector<16x128xf32>
    %2008 = arith.mulf %2007, %1846 : vector<16x128xf32>
    %c2_i32_1038 = arith.constant 2 : i32
    %2009 = tpu.dynamic_rotate %2008 by %c2_i32_1038 dim 1 : vector<16x128xf32>, i32 -> vector<16x128xf32>
    %2010 = arith.mulf %2009, %11 : vector<16x128xf32>
    %c1_i32_1039 = arith.constant 1 : i32
    %2011 = tpu.dynamic_rotate %2008 by %c1_i32_1039 dim 1 : vector<16x128xf32>, i32 -> vector<16x128xf32>
    %2012 = arith.mulf %2011, %22 : vector<16x128xf32>
    %c127_i32_1040 = arith.constant 127 : i32
    %2013 = tpu.dynamic_rotate %2008 by %c127_i32_1040 dim 1 : vector<16x128xf32>, i32 -> vector<16x128xf32>
    %2014 = arith.mulf %2013, %33 : vector<16x128xf32>
    %c126_i32_1041 = arith.constant 126 : i32
    %2015 = tpu.dynamic_rotate %2008 by %c126_i32_1041 dim 1 : vector<16x128xf32>, i32 -> vector<16x128xf32>
    %2016 = arith.mulf %2015, %44 : vector<16x128xf32>
    %cst_1042 = arith.constant 0.000000e+00 : f32
    %2017 = vector.broadcast %cst_1042 : f32 to vector<16x128xf32>
    %cst_1043 = arith.constant 0.000000e+00 : f32
    %2018 = vector.broadcast %cst_1043 : f32 to vector<16x128xf32>
    %2019 = vector.extract_strided_slice %2010 {offsets = [0, 0], sizes = [15, 128], strides = [1, 1]} : vector<16x128xf32> to vector<15x128xf32>
    %2020 = tpu.concatenate %45, %2019 in 0 : vector<1x128xf32>, vector<15x128xf32> -> vector<16x128xf32>
    %c0_1044 = arith.constant 0 : index
    %c1_1045 = arith.constant 1 : index
    %2021 = memref.load %arg4[%c0_1044, %c1_1045] : memref<14x4xf32, #tpu.memory_space<smem>>
    %2022 = vector.broadcast %2021 : f32 to vector<16x128xf32>
    %2023 = arith.mulf %2022, %2020 : vector<16x128xf32>
    %2024 = arith.addf %2017, %2023 : vector<16x128xf32>
    %c0_1046 = arith.constant 0 : index
    %c0_1047 = arith.constant 0 : index
    %c0_1048 = arith.constant 0 : index
    %2025 = vector.load %arg11[%c0_1046, %c0_1047, %c0_1048] : memref<14x16x128xf32, #tpu.memory_space<vmem>>, vector<1x16x128xf32>
    %2026 = vector.shape_cast %2025 : vector<1x16x128xf32> to vector<16x128xf32>
    %2027 = arith.mulf %2026, %2020 : vector<16x128xf32>
    %2028 = arith.addf %2018, %2027 : vector<16x128xf32>
    %2029 = vector.extract_strided_slice %2012 {offsets = [0, 0], sizes = [15, 128], strides = [1, 1]} : vector<16x128xf32> to vector<15x128xf32>
    %2030 = tpu.concatenate %45, %2029 in 0 : vector<1x128xf32>, vector<15x128xf32> -> vector<16x128xf32>
    %c1_1049 = arith.constant 1 : index
    %c1_1050 = arith.constant 1 : index
    %2031 = memref.load %arg4[%c1_1049, %c1_1050] : memref<14x4xf32, #tpu.memory_space<smem>>
    %2032 = vector.broadcast %2031 : f32 to vector<16x128xf32>
    %2033 = arith.mulf %2032, %2030 : vector<16x128xf32>
    %2034 = arith.addf %2024, %2033 : vector<16x128xf32>
    %c1_1051 = arith.constant 1 : index
    %c0_1052 = arith.constant 0 : index
    %c0_1053 = arith.constant 0 : index
    %2035 = vector.load %arg11[%c1_1051, %c0_1052, %c0_1053] : memref<14x16x128xf32, #tpu.memory_space<vmem>>, vector<1x16x128xf32>
    %2036 = vector.shape_cast %2035 : vector<1x16x128xf32> to vector<16x128xf32>
    %2037 = arith.mulf %2036, %2030 : vector<16x128xf32>
    %2038 = arith.addf %2028, %2037 : vector<16x128xf32>
    %2039 = vector.extract_strided_slice %2008 {offsets = [0, 0], sizes = [15, 128], strides = [1, 1]} : vector<16x128xf32> to vector<15x128xf32>
    %2040 = tpu.concatenate %45, %2039 in 0 : vector<1x128xf32>, vector<15x128xf32> -> vector<16x128xf32>
    %c2_1054 = arith.constant 2 : index
    %c1_1055 = arith.constant 1 : index
    %2041 = memref.load %arg4[%c2_1054, %c1_1055] : memref<14x4xf32, #tpu.memory_space<smem>>
    %2042 = vector.broadcast %2041 : f32 to vector<16x128xf32>
    %2043 = arith.mulf %2042, %2040 : vector<16x128xf32>
    %2044 = arith.addf %2034, %2043 : vector<16x128xf32>
    %c2_1056 = arith.constant 2 : index
    %c0_1057 = arith.constant 0 : index
    %c0_1058 = arith.constant 0 : index
    %2045 = vector.load %arg11[%c2_1056, %c0_1057, %c0_1058] : memref<14x16x128xf32, #tpu.memory_space<vmem>>, vector<1x16x128xf32>
    %2046 = vector.shape_cast %2045 : vector<1x16x128xf32> to vector<16x128xf32>
    %2047 = arith.mulf %2046, %2040 : vector<16x128xf32>
    %2048 = arith.addf %2038, %2047 : vector<16x128xf32>
    %2049 = vector.extract_strided_slice %2014 {offsets = [0, 0], sizes = [15, 128], strides = [1, 1]} : vector<16x128xf32> to vector<15x128xf32>
    %2050 = tpu.concatenate %45, %2049 in 0 : vector<1x128xf32>, vector<15x128xf32> -> vector<16x128xf32>
    %c3_1059 = arith.constant 3 : index
    %c1_1060 = arith.constant 1 : index
    %2051 = memref.load %arg4[%c3_1059, %c1_1060] : memref<14x4xf32, #tpu.memory_space<smem>>
    %2052 = vector.broadcast %2051 : f32 to vector<16x128xf32>
    %2053 = arith.mulf %2052, %2050 : vector<16x128xf32>
    %2054 = arith.addf %2044, %2053 : vector<16x128xf32>
    %c3_1061 = arith.constant 3 : index
    %c0_1062 = arith.constant 0 : index
    %c0_1063 = arith.constant 0 : index
    %2055 = vector.load %arg11[%c3_1061, %c0_1062, %c0_1063] : memref<14x16x128xf32, #tpu.memory_space<vmem>>, vector<1x16x128xf32>
    %2056 = vector.shape_cast %2055 : vector<1x16x128xf32> to vector<16x128xf32>
    %2057 = arith.mulf %2056, %2050 : vector<16x128xf32>
    %2058 = arith.addf %2048, %2057 : vector<16x128xf32>
    %2059 = vector.extract_strided_slice %2016 {offsets = [0, 0], sizes = [15, 128], strides = [1, 1]} : vector<16x128xf32> to vector<15x128xf32>
    %2060 = tpu.concatenate %45, %2059 in 0 : vector<1x128xf32>, vector<15x128xf32> -> vector<16x128xf32>
    %c4_1064 = arith.constant 4 : index
    %c1_1065 = arith.constant 1 : index
    %2061 = memref.load %arg4[%c4_1064, %c1_1065] : memref<14x4xf32, #tpu.memory_space<smem>>
    %2062 = vector.broadcast %2061 : f32 to vector<16x128xf32>
    %2063 = arith.mulf %2062, %2060 : vector<16x128xf32>
    %2064 = arith.addf %2054, %2063 : vector<16x128xf32>
    %c4_1066 = arith.constant 4 : index
    %c0_1067 = arith.constant 0 : index
    %c0_1068 = arith.constant 0 : index
    %2065 = vector.load %arg11[%c4_1066, %c0_1067, %c0_1068] : memref<14x16x128xf32, #tpu.memory_space<vmem>>, vector<1x16x128xf32>
    %2066 = vector.shape_cast %2065 : vector<1x16x128xf32> to vector<16x128xf32>
    %2067 = arith.mulf %2066, %2060 : vector<16x128xf32>
    %2068 = arith.addf %2058, %2067 : vector<16x128xf32>
    %c5_1069 = arith.constant 5 : index
    %c1_1070 = arith.constant 1 : index
    %2069 = memref.load %arg4[%c5_1069, %c1_1070] : memref<14x4xf32, #tpu.memory_space<smem>>
    %2070 = vector.broadcast %2069 : f32 to vector<16x128xf32>
    %2071 = arith.mulf %2070, %2010 : vector<16x128xf32>
    %2072 = arith.addf %2064, %2071 : vector<16x128xf32>
    %c5_1071 = arith.constant 5 : index
    %c0_1072 = arith.constant 0 : index
    %c0_1073 = arith.constant 0 : index
    %2073 = vector.load %arg11[%c5_1071, %c0_1072, %c0_1073] : memref<14x16x128xf32, #tpu.memory_space<vmem>>, vector<1x16x128xf32>
    %2074 = vector.shape_cast %2073 : vector<1x16x128xf32> to vector<16x128xf32>
    %2075 = arith.mulf %2074, %2010 : vector<16x128xf32>
    %2076 = arith.addf %2068, %2075 : vector<16x128xf32>
    %c6_1074 = arith.constant 6 : index
    %c1_1075 = arith.constant 1 : index
    %2077 = memref.load %arg4[%c6_1074, %c1_1075] : memref<14x4xf32, #tpu.memory_space<smem>>
    %2078 = vector.broadcast %2077 : f32 to vector<16x128xf32>
    %2079 = arith.mulf %2078, %2012 : vector<16x128xf32>
    %2080 = arith.addf %2072, %2079 : vector<16x128xf32>
    %c6_1076 = arith.constant 6 : index
    %c0_1077 = arith.constant 0 : index
    %c0_1078 = arith.constant 0 : index
    %2081 = vector.load %arg11[%c6_1076, %c0_1077, %c0_1078] : memref<14x16x128xf32, #tpu.memory_space<vmem>>, vector<1x16x128xf32>
    %2082 = vector.shape_cast %2081 : vector<1x16x128xf32> to vector<16x128xf32>
    %2083 = arith.mulf %2082, %2012 : vector<16x128xf32>
    %2084 = arith.addf %2076, %2083 : vector<16x128xf32>
    %c7_1079 = arith.constant 7 : index
    %c1_1080 = arith.constant 1 : index
    %2085 = memref.load %arg4[%c7_1079, %c1_1080] : memref<14x4xf32, #tpu.memory_space<smem>>
    %2086 = vector.broadcast %2085 : f32 to vector<16x128xf32>
    %2087 = arith.mulf %2086, %2014 : vector<16x128xf32>
    %2088 = arith.addf %2080, %2087 : vector<16x128xf32>
    %c7_1081 = arith.constant 7 : index
    %c0_1082 = arith.constant 0 : index
    %c0_1083 = arith.constant 0 : index
    %2089 = vector.load %arg11[%c7_1081, %c0_1082, %c0_1083] : memref<14x16x128xf32, #tpu.memory_space<vmem>>, vector<1x16x128xf32>
    %2090 = vector.shape_cast %2089 : vector<1x16x128xf32> to vector<16x128xf32>
    %2091 = arith.mulf %2090, %2014 : vector<16x128xf32>
    %2092 = arith.addf %2084, %2091 : vector<16x128xf32>
    %c8_1084 = arith.constant 8 : index
    %c1_1085 = arith.constant 1 : index
    %2093 = memref.load %arg4[%c8_1084, %c1_1085] : memref<14x4xf32, #tpu.memory_space<smem>>
    %2094 = vector.broadcast %2093 : f32 to vector<16x128xf32>
    %2095 = arith.mulf %2094, %2016 : vector<16x128xf32>
    %2096 = arith.addf %2088, %2095 : vector<16x128xf32>
    %c8_1086 = arith.constant 8 : index
    %c0_1087 = arith.constant 0 : index
    %c0_1088 = arith.constant 0 : index
    %2097 = vector.load %arg11[%c8_1086, %c0_1087, %c0_1088] : memref<14x16x128xf32, #tpu.memory_space<vmem>>, vector<1x16x128xf32>
    %2098 = vector.shape_cast %2097 : vector<1x16x128xf32> to vector<16x128xf32>
    %2099 = arith.mulf %2098, %2016 : vector<16x128xf32>
    %2100 = arith.addf %2092, %2099 : vector<16x128xf32>
    %2101 = vector.extract_strided_slice %2010 {offsets = [1, 0], sizes = [15, 128], strides = [1, 1]} : vector<16x128xf32> to vector<15x128xf32>
    %2102 = tpu.concatenate %2101, %45 in 0 : vector<15x128xf32>, vector<1x128xf32> -> vector<16x128xf32>
    %c9_1089 = arith.constant 9 : index
    %c1_1090 = arith.constant 1 : index
    %2103 = memref.load %arg4[%c9_1089, %c1_1090] : memref<14x4xf32, #tpu.memory_space<smem>>
    %2104 = vector.broadcast %2103 : f32 to vector<16x128xf32>
    %2105 = arith.mulf %2104, %2102 : vector<16x128xf32>
    %2106 = arith.addf %2096, %2105 : vector<16x128xf32>
    %c9_1091 = arith.constant 9 : index
    %c0_1092 = arith.constant 0 : index
    %c0_1093 = arith.constant 0 : index
    %2107 = vector.load %arg11[%c9_1091, %c0_1092, %c0_1093] : memref<14x16x128xf32, #tpu.memory_space<vmem>>, vector<1x16x128xf32>
    %2108 = vector.shape_cast %2107 : vector<1x16x128xf32> to vector<16x128xf32>
    %2109 = arith.mulf %2108, %2102 : vector<16x128xf32>
    %2110 = arith.addf %2100, %2109 : vector<16x128xf32>
    %2111 = vector.extract_strided_slice %2012 {offsets = [1, 0], sizes = [15, 128], strides = [1, 1]} : vector<16x128xf32> to vector<15x128xf32>
    %2112 = tpu.concatenate %2111, %45 in 0 : vector<15x128xf32>, vector<1x128xf32> -> vector<16x128xf32>
    %c10_1094 = arith.constant 10 : index
    %c1_1095 = arith.constant 1 : index
    %2113 = memref.load %arg4[%c10_1094, %c1_1095] : memref<14x4xf32, #tpu.memory_space<smem>>
    %2114 = vector.broadcast %2113 : f32 to vector<16x128xf32>
    %2115 = arith.mulf %2114, %2112 : vector<16x128xf32>
    %2116 = arith.addf %2106, %2115 : vector<16x128xf32>
    %c10_1096 = arith.constant 10 : index
    %c0_1097 = arith.constant 0 : index
    %c0_1098 = arith.constant 0 : index
    %2117 = vector.load %arg11[%c10_1096, %c0_1097, %c0_1098] : memref<14x16x128xf32, #tpu.memory_space<vmem>>, vector<1x16x128xf32>
    %2118 = vector.shape_cast %2117 : vector<1x16x128xf32> to vector<16x128xf32>
    %2119 = arith.mulf %2118, %2112 : vector<16x128xf32>
    %2120 = arith.addf %2110, %2119 : vector<16x128xf32>
    %2121 = vector.extract_strided_slice %2008 {offsets = [1, 0], sizes = [15, 128], strides = [1, 1]} : vector<16x128xf32> to vector<15x128xf32>
    %2122 = tpu.concatenate %2121, %45 in 0 : vector<15x128xf32>, vector<1x128xf32> -> vector<16x128xf32>
    %c11_1099 = arith.constant 11 : index
    %c1_1100 = arith.constant 1 : index
    %2123 = memref.load %arg4[%c11_1099, %c1_1100] : memref<14x4xf32, #tpu.memory_space<smem>>
    %2124 = vector.broadcast %2123 : f32 to vector<16x128xf32>
    %2125 = arith.mulf %2124, %2122 : vector<16x128xf32>
    %2126 = arith.addf %2116, %2125 : vector<16x128xf32>
    %c11_1101 = arith.constant 11 : index
    %c0_1102 = arith.constant 0 : index
    %c0_1103 = arith.constant 0 : index
    %2127 = vector.load %arg11[%c11_1101, %c0_1102, %c0_1103] : memref<14x16x128xf32, #tpu.memory_space<vmem>>, vector<1x16x128xf32>
    %2128 = vector.shape_cast %2127 : vector<1x16x128xf32> to vector<16x128xf32>
    %2129 = arith.mulf %2128, %2122 : vector<16x128xf32>
    %2130 = arith.addf %2120, %2129 : vector<16x128xf32>
    %2131 = vector.extract_strided_slice %2014 {offsets = [1, 0], sizes = [15, 128], strides = [1, 1]} : vector<16x128xf32> to vector<15x128xf32>
    %2132 = tpu.concatenate %2131, %45 in 0 : vector<15x128xf32>, vector<1x128xf32> -> vector<16x128xf32>
    %c12_1104 = arith.constant 12 : index
    %c1_1105 = arith.constant 1 : index
    %2133 = memref.load %arg4[%c12_1104, %c1_1105] : memref<14x4xf32, #tpu.memory_space<smem>>
    %2134 = vector.broadcast %2133 : f32 to vector<16x128xf32>
    %2135 = arith.mulf %2134, %2132 : vector<16x128xf32>
    %2136 = arith.addf %2126, %2135 : vector<16x128xf32>
    %c12_1106 = arith.constant 12 : index
    %c0_1107 = arith.constant 0 : index
    %c0_1108 = arith.constant 0 : index
    %2137 = vector.load %arg11[%c12_1106, %c0_1107, %c0_1108] : memref<14x16x128xf32, #tpu.memory_space<vmem>>, vector<1x16x128xf32>
    %2138 = vector.shape_cast %2137 : vector<1x16x128xf32> to vector<16x128xf32>
    %2139 = arith.mulf %2138, %2132 : vector<16x128xf32>
    %2140 = arith.addf %2130, %2139 : vector<16x128xf32>
    %2141 = vector.extract_strided_slice %2016 {offsets = [1, 0], sizes = [15, 128], strides = [1, 1]} : vector<16x128xf32> to vector<15x128xf32>
    %2142 = tpu.concatenate %2141, %45 in 0 : vector<15x128xf32>, vector<1x128xf32> -> vector<16x128xf32>
    %c13_1109 = arith.constant 13 : index
    %c1_1110 = arith.constant 1 : index
    %2143 = memref.load %arg4[%c13_1109, %c1_1110] : memref<14x4xf32, #tpu.memory_space<smem>>
    %2144 = vector.broadcast %2143 : f32 to vector<16x128xf32>
    %2145 = arith.mulf %2144, %2142 : vector<16x128xf32>
    %2146 = arith.addf %2136, %2145 : vector<16x128xf32>
    %c13_1111 = arith.constant 13 : index
    %c0_1112 = arith.constant 0 : index
    %c0_1113 = arith.constant 0 : index
    %2147 = vector.load %arg11[%c13_1111, %c0_1112, %c0_1113] : memref<14x16x128xf32, #tpu.memory_space<vmem>>, vector<1x16x128xf32>
    %2148 = vector.shape_cast %2147 : vector<1x16x128xf32> to vector<16x128xf32>
    %2149 = arith.mulf %2148, %2142 : vector<16x128xf32>
    %2150 = arith.addf %2140, %2149 : vector<16x128xf32>
    %c0_1114 = arith.constant 0 : index
    %c0_1115 = arith.constant 0 : index
    %c0_1116 = arith.constant 0 : index
    %c0_1117 = arith.constant 0 : index
    %2151 = vector.load %arg3[%c0_1114, %c0_1115, %c0_1116, %c0_1117] : memref<1x1x16x128xf32, #tpu.memory_space<vmem>>, vector<1x1x16x128xf32>
    %2152 = vector.shape_cast %2151 : vector<1x1x16x128xf32> to vector<16x128xf32>
    %c1_1118 = arith.constant 1 : index
    %2153 = memref.load %arg6[%c1_1118] : memref<4xf32, #tpu.memory_space<smem>>
    %c1_1119 = arith.constant 1 : index
    %2154 = memref.load %arg7[%c1_1119] : memref<4xf32, #tpu.memory_space<smem>>
    %2155 = arith.mulf %2150, %2152 : vector<16x128xf32>
    %2156 = vector.broadcast %2154 : f32 to vector<16x128xf32>
    %2157 = arith.mulf %2156, %2155 : vector<16x128xf32>
    %2158 = vector.broadcast %2153 : f32 to vector<16x128xf32>
    %2159 = arith.addf %2158, %2157 : vector<16x128xf32>
    %2160 = arith.mulf %2146, %2159 : vector<16x128xf32>
    %c0_1120 = arith.constant 0 : index
    %c2_1121 = arith.constant 2 : index
    %c0_1122 = arith.constant 0 : index
    %c0_1123 = arith.constant 0 : index
    %2161 = vector.load %arg10[%c0_1120, %c2_1121, %c0_1122, %c0_1123] : memref<1x4x16x128xf32, #tpu.memory_space<vmem>>, vector<1x1x16x128xf32>
    %2162 = vector.shape_cast %2161 : vector<1x1x16x128xf32> to vector<16x128xf32>
    %2163 = arith.subf %2162, %1825 : vector<16x128xf32>
    %2164 = math.exp %2163 : vector<16x128xf32>
    %2165 = arith.mulf %2164, %1846 : vector<16x128xf32>
    %c2_i32_1124 = arith.constant 2 : i32
    %2166 = tpu.dynamic_rotate %2165 by %c2_i32_1124 dim 1 : vector<16x128xf32>, i32 -> vector<16x128xf32>
    %2167 = arith.mulf %2166, %11 : vector<16x128xf32>
    %c1_i32_1125 = arith.constant 1 : i32
    %2168 = tpu.dynamic_rotate %2165 by %c1_i32_1125 dim 1 : vector<16x128xf32>, i32 -> vector<16x128xf32>
    %2169 = arith.mulf %2168, %22 : vector<16x128xf32>
    %c127_i32_1126 = arith.constant 127 : i32
    %2170 = tpu.dynamic_rotate %2165 by %c127_i32_1126 dim 1 : vector<16x128xf32>, i32 -> vector<16x128xf32>
    %2171 = arith.mulf %2170, %33 : vector<16x128xf32>
    %c126_i32_1127 = arith.constant 126 : i32
    %2172 = tpu.dynamic_rotate %2165 by %c126_i32_1127 dim 1 : vector<16x128xf32>, i32 -> vector<16x128xf32>
    %2173 = arith.mulf %2172, %44 : vector<16x128xf32>
    %cst_1128 = arith.constant 0.000000e+00 : f32
    %2174 = vector.broadcast %cst_1128 : f32 to vector<16x128xf32>
    %cst_1129 = arith.constant 0.000000e+00 : f32
    %2175 = vector.broadcast %cst_1129 : f32 to vector<16x128xf32>
    %2176 = vector.extract_strided_slice %2167 {offsets = [0, 0], sizes = [15, 128], strides = [1, 1]} : vector<16x128xf32> to vector<15x128xf32>
    %2177 = tpu.concatenate %45, %2176 in 0 : vector<1x128xf32>, vector<15x128xf32> -> vector<16x128xf32>
    %c0_1130 = arith.constant 0 : index
    %c2_1131 = arith.constant 2 : index
    %2178 = memref.load %arg4[%c0_1130, %c2_1131] : memref<14x4xf32, #tpu.memory_space<smem>>
    %2179 = vector.broadcast %2178 : f32 to vector<16x128xf32>
    %2180 = arith.mulf %2179, %2177 : vector<16x128xf32>
    %2181 = arith.addf %2174, %2180 : vector<16x128xf32>
    %c0_1132 = arith.constant 0 : index
    %c0_1133 = arith.constant 0 : index
    %c0_1134 = arith.constant 0 : index
    %2182 = vector.load %arg11[%c0_1132, %c0_1133, %c0_1134] : memref<14x16x128xf32, #tpu.memory_space<vmem>>, vector<1x16x128xf32>
    %2183 = vector.shape_cast %2182 : vector<1x16x128xf32> to vector<16x128xf32>
    %2184 = arith.mulf %2183, %2177 : vector<16x128xf32>
    %2185 = arith.addf %2175, %2184 : vector<16x128xf32>
    %2186 = vector.extract_strided_slice %2169 {offsets = [0, 0], sizes = [15, 128], strides = [1, 1]} : vector<16x128xf32> to vector<15x128xf32>
    %2187 = tpu.concatenate %45, %2186 in 0 : vector<1x128xf32>, vector<15x128xf32> -> vector<16x128xf32>
    %c1_1135 = arith.constant 1 : index
    %c2_1136 = arith.constant 2 : index
    %2188 = memref.load %arg4[%c1_1135, %c2_1136] : memref<14x4xf32, #tpu.memory_space<smem>>
    %2189 = vector.broadcast %2188 : f32 to vector<16x128xf32>
    %2190 = arith.mulf %2189, %2187 : vector<16x128xf32>
    %2191 = arith.addf %2181, %2190 : vector<16x128xf32>
    %c1_1137 = arith.constant 1 : index
    %c0_1138 = arith.constant 0 : index
    %c0_1139 = arith.constant 0 : index
    %2192 = vector.load %arg11[%c1_1137, %c0_1138, %c0_1139] : memref<14x16x128xf32, #tpu.memory_space<vmem>>, vector<1x16x128xf32>
    %2193 = vector.shape_cast %2192 : vector<1x16x128xf32> to vector<16x128xf32>
    %2194 = arith.mulf %2193, %2187 : vector<16x128xf32>
    %2195 = arith.addf %2185, %2194 : vector<16x128xf32>
    %2196 = vector.extract_strided_slice %2165 {offsets = [0, 0], sizes = [15, 128], strides = [1, 1]} : vector<16x128xf32> to vector<15x128xf32>
    %2197 = tpu.concatenate %45, %2196 in 0 : vector<1x128xf32>, vector<15x128xf32> -> vector<16x128xf32>
    %c2_1140 = arith.constant 2 : index
    %c2_1141 = arith.constant 2 : index
    %2198 = memref.load %arg4[%c2_1140, %c2_1141] : memref<14x4xf32, #tpu.memory_space<smem>>
    %2199 = vector.broadcast %2198 : f32 to vector<16x128xf32>
    %2200 = arith.mulf %2199, %2197 : vector<16x128xf32>
    %2201 = arith.addf %2191, %2200 : vector<16x128xf32>
    %c2_1142 = arith.constant 2 : index
    %c0_1143 = arith.constant 0 : index
    %c0_1144 = arith.constant 0 : index
    %2202 = vector.load %arg11[%c2_1142, %c0_1143, %c0_1144] : memref<14x16x128xf32, #tpu.memory_space<vmem>>, vector<1x16x128xf32>
    %2203 = vector.shape_cast %2202 : vector<1x16x128xf32> to vector<16x128xf32>
    %2204 = arith.mulf %2203, %2197 : vector<16x128xf32>
    %2205 = arith.addf %2195, %2204 : vector<16x128xf32>
    %2206 = vector.extract_strided_slice %2171 {offsets = [0, 0], sizes = [15, 128], strides = [1, 1]} : vector<16x128xf32> to vector<15x128xf32>
    %2207 = tpu.concatenate %45, %2206 in 0 : vector<1x128xf32>, vector<15x128xf32> -> vector<16x128xf32>
    %c3_1145 = arith.constant 3 : index
    %c2_1146 = arith.constant 2 : index
    %2208 = memref.load %arg4[%c3_1145, %c2_1146] : memref<14x4xf32, #tpu.memory_space<smem>>
    %2209 = vector.broadcast %2208 : f32 to vector<16x128xf32>
    %2210 = arith.mulf %2209, %2207 : vector<16x128xf32>
    %2211 = arith.addf %2201, %2210 : vector<16x128xf32>
    %c3_1147 = arith.constant 3 : index
    %c0_1148 = arith.constant 0 : index
    %c0_1149 = arith.constant 0 : index
    %2212 = vector.load %arg11[%c3_1147, %c0_1148, %c0_1149] : memref<14x16x128xf32, #tpu.memory_space<vmem>>, vector<1x16x128xf32>
    %2213 = vector.shape_cast %2212 : vector<1x16x128xf32> to vector<16x128xf32>
    %2214 = arith.mulf %2213, %2207 : vector<16x128xf32>
    %2215 = arith.addf %2205, %2214 : vector<16x128xf32>
    %2216 = vector.extract_strided_slice %2173 {offsets = [0, 0], sizes = [15, 128], strides = [1, 1]} : vector<16x128xf32> to vector<15x128xf32>
    %2217 = tpu.concatenate %45, %2216 in 0 : vector<1x128xf32>, vector<15x128xf32> -> vector<16x128xf32>
    %c4_1150 = arith.constant 4 : index
    %c2_1151 = arith.constant 2 : index
    %2218 = memref.load %arg4[%c4_1150, %c2_1151] : memref<14x4xf32, #tpu.memory_space<smem>>
    %2219 = vector.broadcast %2218 : f32 to vector<16x128xf32>
    %2220 = arith.mulf %2219, %2217 : vector<16x128xf32>
    %2221 = arith.addf %2211, %2220 : vector<16x128xf32>
    %c4_1152 = arith.constant 4 : index
    %c0_1153 = arith.constant 0 : index
    %c0_1154 = arith.constant 0 : index
    %2222 = vector.load %arg11[%c4_1152, %c0_1153, %c0_1154] : memref<14x16x128xf32, #tpu.memory_space<vmem>>, vector<1x16x128xf32>
    %2223 = vector.shape_cast %2222 : vector<1x16x128xf32> to vector<16x128xf32>
    %2224 = arith.mulf %2223, %2217 : vector<16x128xf32>
    %2225 = arith.addf %2215, %2224 : vector<16x128xf32>
    %c5_1155 = arith.constant 5 : index
    %c2_1156 = arith.constant 2 : index
    %2226 = memref.load %arg4[%c5_1155, %c2_1156] : memref<14x4xf32, #tpu.memory_space<smem>>
    %2227 = vector.broadcast %2226 : f32 to vector<16x128xf32>
    %2228 = arith.mulf %2227, %2167 : vector<16x128xf32>
    %2229 = arith.addf %2221, %2228 : vector<16x128xf32>
    %c5_1157 = arith.constant 5 : index
    %c0_1158 = arith.constant 0 : index
    %c0_1159 = arith.constant 0 : index
    %2230 = vector.load %arg11[%c5_1157, %c0_1158, %c0_1159] : memref<14x16x128xf32, #tpu.memory_space<vmem>>, vector<1x16x128xf32>
    %2231 = vector.shape_cast %2230 : vector<1x16x128xf32> to vector<16x128xf32>
    %2232 = arith.mulf %2231, %2167 : vector<16x128xf32>
    %2233 = arith.addf %2225, %2232 : vector<16x128xf32>
    %c6_1160 = arith.constant 6 : index
    %c2_1161 = arith.constant 2 : index
    %2234 = memref.load %arg4[%c6_1160, %c2_1161] : memref<14x4xf32, #tpu.memory_space<smem>>
    %2235 = vector.broadcast %2234 : f32 to vector<16x128xf32>
    %2236 = arith.mulf %2235, %2169 : vector<16x128xf32>
    %2237 = arith.addf %2229, %2236 : vector<16x128xf32>
    %c6_1162 = arith.constant 6 : index
    %c0_1163 = arith.constant 0 : index
    %c0_1164 = arith.constant 0 : index
    %2238 = vector.load %arg11[%c6_1162, %c0_1163, %c0_1164] : memref<14x16x128xf32, #tpu.memory_space<vmem>>, vector<1x16x128xf32>
    %2239 = vector.shape_cast %2238 : vector<1x16x128xf32> to vector<16x128xf32>
    %2240 = arith.mulf %2239, %2169 : vector<16x128xf32>
    %2241 = arith.addf %2233, %2240 : vector<16x128xf32>
    %c7_1165 = arith.constant 7 : index
    %c2_1166 = arith.constant 2 : index
    %2242 = memref.load %arg4[%c7_1165, %c2_1166] : memref<14x4xf32, #tpu.memory_space<smem>>
    %2243 = vector.broadcast %2242 : f32 to vector<16x128xf32>
    %2244 = arith.mulf %2243, %2171 : vector<16x128xf32>
    %2245 = arith.addf %2237, %2244 : vector<16x128xf32>
    %c7_1167 = arith.constant 7 : index
    %c0_1168 = arith.constant 0 : index
    %c0_1169 = arith.constant 0 : index
    %2246 = vector.load %arg11[%c7_1167, %c0_1168, %c0_1169] : memref<14x16x128xf32, #tpu.memory_space<vmem>>, vector<1x16x128xf32>
    %2247 = vector.shape_cast %2246 : vector<1x16x128xf32> to vector<16x128xf32>
    %2248 = arith.mulf %2247, %2171 : vector<16x128xf32>
    %2249 = arith.addf %2241, %2248 : vector<16x128xf32>
    %c8_1170 = arith.constant 8 : index
    %c2_1171 = arith.constant 2 : index
    %2250 = memref.load %arg4[%c8_1170, %c2_1171] : memref<14x4xf32, #tpu.memory_space<smem>>
    %2251 = vector.broadcast %2250 : f32 to vector<16x128xf32>
    %2252 = arith.mulf %2251, %2173 : vector<16x128xf32>
    %2253 = arith.addf %2245, %2252 : vector<16x128xf32>
    %c8_1172 = arith.constant 8 : index
    %c0_1173 = arith.constant 0 : index
    %c0_1174 = arith.constant 0 : index
    %2254 = vector.load %arg11[%c8_1172, %c0_1173, %c0_1174] : memref<14x16x128xf32, #tpu.memory_space<vmem>>, vector<1x16x128xf32>
    %2255 = vector.shape_cast %2254 : vector<1x16x128xf32> to vector<16x128xf32>
    %2256 = arith.mulf %2255, %2173 : vector<16x128xf32>
    %2257 = arith.addf %2249, %2256 : vector<16x128xf32>
    %2258 = vector.extract_strided_slice %2167 {offsets = [1, 0], sizes = [15, 128], strides = [1, 1]} : vector<16x128xf32> to vector<15x128xf32>
    %2259 = tpu.concatenate %2258, %45 in 0 : vector<15x128xf32>, vector<1x128xf32> -> vector<16x128xf32>
    %c9_1175 = arith.constant 9 : index
    %c2_1176 = arith.constant 2 : index
    %2260 = memref.load %arg4[%c9_1175, %c2_1176] : memref<14x4xf32, #tpu.memory_space<smem>>
    %2261 = vector.broadcast %2260 : f32 to vector<16x128xf32>
    %2262 = arith.mulf %2261, %2259 : vector<16x128xf32>
    %2263 = arith.addf %2253, %2262 : vector<16x128xf32>
    %c9_1177 = arith.constant 9 : index
    %c0_1178 = arith.constant 0 : index
    %c0_1179 = arith.constant 0 : index
    %2264 = vector.load %arg11[%c9_1177, %c0_1178, %c0_1179] : memref<14x16x128xf32, #tpu.memory_space<vmem>>, vector<1x16x128xf32>
    %2265 = vector.shape_cast %2264 : vector<1x16x128xf32> to vector<16x128xf32>
    %2266 = arith.mulf %2265, %2259 : vector<16x128xf32>
    %2267 = arith.addf %2257, %2266 : vector<16x128xf32>
    %2268 = vector.extract_strided_slice %2169 {offsets = [1, 0], sizes = [15, 128], strides = [1, 1]} : vector<16x128xf32> to vector<15x128xf32>
    %2269 = tpu.concatenate %2268, %45 in 0 : vector<15x128xf32>, vector<1x128xf32> -> vector<16x128xf32>
    %c10_1180 = arith.constant 10 : index
    %c2_1181 = arith.constant 2 : index
    %2270 = memref.load %arg4[%c10_1180, %c2_1181] : memref<14x4xf32, #tpu.memory_space<smem>>
    %2271 = vector.broadcast %2270 : f32 to vector<16x128xf32>
    %2272 = arith.mulf %2271, %2269 : vector<16x128xf32>
    %2273 = arith.addf %2263, %2272 : vector<16x128xf32>
    %c10_1182 = arith.constant 10 : index
    %c0_1183 = arith.constant 0 : index
    %c0_1184 = arith.constant 0 : index
    %2274 = vector.load %arg11[%c10_1182, %c0_1183, %c0_1184] : memref<14x16x128xf32, #tpu.memory_space<vmem>>, vector<1x16x128xf32>
    %2275 = vector.shape_cast %2274 : vector<1x16x128xf32> to vector<16x128xf32>
    %2276 = arith.mulf %2275, %2269 : vector<16x128xf32>
    %2277 = arith.addf %2267, %2276 : vector<16x128xf32>
    %2278 = vector.extract_strided_slice %2165 {offsets = [1, 0], sizes = [15, 128], strides = [1, 1]} : vector<16x128xf32> to vector<15x128xf32>
    %2279 = tpu.concatenate %2278, %45 in 0 : vector<15x128xf32>, vector<1x128xf32> -> vector<16x128xf32>
    %c11_1185 = arith.constant 11 : index
    %c2_1186 = arith.constant 2 : index
    %2280 = memref.load %arg4[%c11_1185, %c2_1186] : memref<14x4xf32, #tpu.memory_space<smem>>
    %2281 = vector.broadcast %2280 : f32 to vector<16x128xf32>
    %2282 = arith.mulf %2281, %2279 : vector<16x128xf32>
    %2283 = arith.addf %2273, %2282 : vector<16x128xf32>
    %c11_1187 = arith.constant 11 : index
    %c0_1188 = arith.constant 0 : index
    %c0_1189 = arith.constant 0 : index
    %2284 = vector.load %arg11[%c11_1187, %c0_1188, %c0_1189] : memref<14x16x128xf32, #tpu.memory_space<vmem>>, vector<1x16x128xf32>
    %2285 = vector.shape_cast %2284 : vector<1x16x128xf32> to vector<16x128xf32>
    %2286 = arith.mulf %2285, %2279 : vector<16x128xf32>
    %2287 = arith.addf %2277, %2286 : vector<16x128xf32>
    %2288 = vector.extract_strided_slice %2171 {offsets = [1, 0], sizes = [15, 128], strides = [1, 1]} : vector<16x128xf32> to vector<15x128xf32>
    %2289 = tpu.concatenate %2288, %45 in 0 : vector<15x128xf32>, vector<1x128xf32> -> vector<16x128xf32>
    %c12_1190 = arith.constant 12 : index
    %c2_1191 = arith.constant 2 : index
    %2290 = memref.load %arg4[%c12_1190, %c2_1191] : memref<14x4xf32, #tpu.memory_space<smem>>
    %2291 = vector.broadcast %2290 : f32 to vector<16x128xf32>
    %2292 = arith.mulf %2291, %2289 : vector<16x128xf32>
    %2293 = arith.addf %2283, %2292 : vector<16x128xf32>
    %c12_1192 = arith.constant 12 : index
    %c0_1193 = arith.constant 0 : index
    %c0_1194 = arith.constant 0 : index
    %2294 = vector.load %arg11[%c12_1192, %c0_1193, %c0_1194] : memref<14x16x128xf32, #tpu.memory_space<vmem>>, vector<1x16x128xf32>
    %2295 = vector.shape_cast %2294 : vector<1x16x128xf32> to vector<16x128xf32>
    %2296 = arith.mulf %2295, %2289 : vector<16x128xf32>
    %2297 = arith.addf %2287, %2296 : vector<16x128xf32>
    %2298 = vector.extract_strided_slice %2173 {offsets = [1, 0], sizes = [15, 128], strides = [1, 1]} : vector<16x128xf32> to vector<15x128xf32>
    %2299 = tpu.concatenate %2298, %45 in 0 : vector<15x128xf32>, vector<1x128xf32> -> vector<16x128xf32>
    %c13_1195 = arith.constant 13 : index
    %c2_1196 = arith.constant 2 : index
    %2300 = memref.load %arg4[%c13_1195, %c2_1196] : memref<14x4xf32, #tpu.memory_space<smem>>
    %2301 = vector.broadcast %2300 : f32 to vector<16x128xf32>
    %2302 = arith.mulf %2301, %2299 : vector<16x128xf32>
    %2303 = arith.addf %2293, %2302 : vector<16x128xf32>
    %c13_1197 = arith.constant 13 : index
    %c0_1198 = arith.constant 0 : index
    %c0_1199 = arith.constant 0 : index
    %2304 = vector.load %arg11[%c13_1197, %c0_1198, %c0_1199] : memref<14x16x128xf32, #tpu.memory_space<vmem>>, vector<1x16x128xf32>
    %2305 = vector.shape_cast %2304 : vector<1x16x128xf32> to vector<16x128xf32>
    %2306 = arith.mulf %2305, %2299 : vector<16x128xf32>
    %2307 = arith.addf %2297, %2306 : vector<16x128xf32>
    %c0_1200 = arith.constant 0 : index
    %c0_1201 = arith.constant 0 : index
    %c0_1202 = arith.constant 0 : index
    %c0_1203 = arith.constant 0 : index
    %2308 = vector.load %arg3[%c0_1200, %c0_1201, %c0_1202, %c0_1203] : memref<1x1x16x128xf32, #tpu.memory_space<vmem>>, vector<1x1x16x128xf32>
    %2309 = vector.shape_cast %2308 : vector<1x1x16x128xf32> to vector<16x128xf32>
    %c2_1204 = arith.constant 2 : index
    %2310 = memref.load %arg6[%c2_1204] : memref<4xf32, #tpu.memory_space<smem>>
    %c2_1205 = arith.constant 2 : index
    %2311 = memref.load %arg7[%c2_1205] : memref<4xf32, #tpu.memory_space<smem>>
    %2312 = arith.mulf %2307, %2309 : vector<16x128xf32>
    %2313 = vector.broadcast %2311 : f32 to vector<16x128xf32>
    %2314 = arith.mulf %2313, %2312 : vector<16x128xf32>
    %2315 = vector.broadcast %2310 : f32 to vector<16x128xf32>
    %2316 = arith.addf %2315, %2314 : vector<16x128xf32>
    %2317 = arith.mulf %2303, %2316 : vector<16x128xf32>
    %c0_1206 = arith.constant 0 : index
    %c3_1207 = arith.constant 3 : index
    %c0_1208 = arith.constant 0 : index
    %c0_1209 = arith.constant 0 : index
    %2318 = vector.load %arg10[%c0_1206, %c3_1207, %c0_1208, %c0_1209] : memref<1x4x16x128xf32, #tpu.memory_space<vmem>>, vector<1x1x16x128xf32>
    %2319 = vector.shape_cast %2318 : vector<1x1x16x128xf32> to vector<16x128xf32>
    %2320 = arith.subf %2319, %1825 : vector<16x128xf32>
    %2321 = math.exp %2320 : vector<16x128xf32>
    %2322 = arith.mulf %2321, %1846 : vector<16x128xf32>
    %c2_i32_1210 = arith.constant 2 : i32
    %2323 = tpu.dynamic_rotate %2322 by %c2_i32_1210 dim 1 : vector<16x128xf32>, i32 -> vector<16x128xf32>
    %2324 = arith.mulf %2323, %11 : vector<16x128xf32>
    %c1_i32_1211 = arith.constant 1 : i32
    %2325 = tpu.dynamic_rotate %2322 by %c1_i32_1211 dim 1 : vector<16x128xf32>, i32 -> vector<16x128xf32>
    %2326 = arith.mulf %2325, %22 : vector<16x128xf32>
    %c127_i32_1212 = arith.constant 127 : i32
    %2327 = tpu.dynamic_rotate %2322 by %c127_i32_1212 dim 1 : vector<16x128xf32>, i32 -> vector<16x128xf32>
    %2328 = arith.mulf %2327, %33 : vector<16x128xf32>
    %c126_i32_1213 = arith.constant 126 : i32
    %2329 = tpu.dynamic_rotate %2322 by %c126_i32_1213 dim 1 : vector<16x128xf32>, i32 -> vector<16x128xf32>
    %2330 = arith.mulf %2329, %44 : vector<16x128xf32>
    %cst_1214 = arith.constant 0.000000e+00 : f32
    %2331 = vector.broadcast %cst_1214 : f32 to vector<16x128xf32>
    %cst_1215 = arith.constant 0.000000e+00 : f32
    %2332 = vector.broadcast %cst_1215 : f32 to vector<16x128xf32>
    %2333 = vector.extract_strided_slice %2324 {offsets = [0, 0], sizes = [15, 128], strides = [1, 1]} : vector<16x128xf32> to vector<15x128xf32>
    %2334 = tpu.concatenate %45, %2333 in 0 : vector<1x128xf32>, vector<15x128xf32> -> vector<16x128xf32>
    %c0_1216 = arith.constant 0 : index
    %c3_1217 = arith.constant 3 : index
    %2335 = memref.load %arg4[%c0_1216, %c3_1217] : memref<14x4xf32, #tpu.memory_space<smem>>
    %2336 = vector.broadcast %2335 : f32 to vector<16x128xf32>
    %2337 = arith.mulf %2336, %2334 : vector<16x128xf32>
    %2338 = arith.addf %2331, %2337 : vector<16x128xf32>
    %c0_1218 = arith.constant 0 : index
    %c0_1219 = arith.constant 0 : index
    %c0_1220 = arith.constant 0 : index
    %2339 = vector.load %arg11[%c0_1218, %c0_1219, %c0_1220] : memref<14x16x128xf32, #tpu.memory_space<vmem>>, vector<1x16x128xf32>
    %2340 = vector.shape_cast %2339 : vector<1x16x128xf32> to vector<16x128xf32>
    %2341 = arith.mulf %2340, %2334 : vector<16x128xf32>
    %2342 = arith.addf %2332, %2341 : vector<16x128xf32>
    %2343 = vector.extract_strided_slice %2326 {offsets = [0, 0], sizes = [15, 128], strides = [1, 1]} : vector<16x128xf32> to vector<15x128xf32>
    %2344 = tpu.concatenate %45, %2343 in 0 : vector<1x128xf32>, vector<15x128xf32> -> vector<16x128xf32>
    %c1_1221 = arith.constant 1 : index
    %c3_1222 = arith.constant 3 : index
    %2345 = memref.load %arg4[%c1_1221, %c3_1222] : memref<14x4xf32, #tpu.memory_space<smem>>
    %2346 = vector.broadcast %2345 : f32 to vector<16x128xf32>
    %2347 = arith.mulf %2346, %2344 : vector<16x128xf32>
    %2348 = arith.addf %2338, %2347 : vector<16x128xf32>
    %c1_1223 = arith.constant 1 : index
    %c0_1224 = arith.constant 0 : index
    %c0_1225 = arith.constant 0 : index
    %2349 = vector.load %arg11[%c1_1223, %c0_1224, %c0_1225] : memref<14x16x128xf32, #tpu.memory_space<vmem>>, vector<1x16x128xf32>
    %2350 = vector.shape_cast %2349 : vector<1x16x128xf32> to vector<16x128xf32>
    %2351 = arith.mulf %2350, %2344 : vector<16x128xf32>
    %2352 = arith.addf %2342, %2351 : vector<16x128xf32>
    %2353 = vector.extract_strided_slice %2322 {offsets = [0, 0], sizes = [15, 128], strides = [1, 1]} : vector<16x128xf32> to vector<15x128xf32>
    %2354 = tpu.concatenate %45, %2353 in 0 : vector<1x128xf32>, vector<15x128xf32> -> vector<16x128xf32>
    %c2_1226 = arith.constant 2 : index
    %c3_1227 = arith.constant 3 : index
    %2355 = memref.load %arg4[%c2_1226, %c3_1227] : memref<14x4xf32, #tpu.memory_space<smem>>
    %2356 = vector.broadcast %2355 : f32 to vector<16x128xf32>
    %2357 = arith.mulf %2356, %2354 : vector<16x128xf32>
    %2358 = arith.addf %2348, %2357 : vector<16x128xf32>
    %c2_1228 = arith.constant 2 : index
    %c0_1229 = arith.constant 0 : index
    %c0_1230 = arith.constant 0 : index
    %2359 = vector.load %arg11[%c2_1228, %c0_1229, %c0_1230] : memref<14x16x128xf32, #tpu.memory_space<vmem>>, vector<1x16x128xf32>
    %2360 = vector.shape_cast %2359 : vector<1x16x128xf32> to vector<16x128xf32>
    %2361 = arith.mulf %2360, %2354 : vector<16x128xf32>
    %2362 = arith.addf %2352, %2361 : vector<16x128xf32>
    %2363 = vector.extract_strided_slice %2328 {offsets = [0, 0], sizes = [15, 128], strides = [1, 1]} : vector<16x128xf32> to vector<15x128xf32>
    %2364 = tpu.concatenate %45, %2363 in 0 : vector<1x128xf32>, vector<15x128xf32> -> vector<16x128xf32>
    %c3_1231 = arith.constant 3 : index
    %c3_1232 = arith.constant 3 : index
    %2365 = memref.load %arg4[%c3_1231, %c3_1232] : memref<14x4xf32, #tpu.memory_space<smem>>
    %2366 = vector.broadcast %2365 : f32 to vector<16x128xf32>
    %2367 = arith.mulf %2366, %2364 : vector<16x128xf32>
    %2368 = arith.addf %2358, %2367 : vector<16x128xf32>
    %c3_1233 = arith.constant 3 : index
    %c0_1234 = arith.constant 0 : index
    %c0_1235 = arith.constant 0 : index
    %2369 = vector.load %arg11[%c3_1233, %c0_1234, %c0_1235] : memref<14x16x128xf32, #tpu.memory_space<vmem>>, vector<1x16x128xf32>
    %2370 = vector.shape_cast %2369 : vector<1x16x128xf32> to vector<16x128xf32>
    %2371 = arith.mulf %2370, %2364 : vector<16x128xf32>
    %2372 = arith.addf %2362, %2371 : vector<16x128xf32>
    %2373 = vector.extract_strided_slice %2330 {offsets = [0, 0], sizes = [15, 128], strides = [1, 1]} : vector<16x128xf32> to vector<15x128xf32>
    %2374 = tpu.concatenate %45, %2373 in 0 : vector<1x128xf32>, vector<15x128xf32> -> vector<16x128xf32>
    %c4_1236 = arith.constant 4 : index
    %c3_1237 = arith.constant 3 : index
    %2375 = memref.load %arg4[%c4_1236, %c3_1237] : memref<14x4xf32, #tpu.memory_space<smem>>
    %2376 = vector.broadcast %2375 : f32 to vector<16x128xf32>
    %2377 = arith.mulf %2376, %2374 : vector<16x128xf32>
    %2378 = arith.addf %2368, %2377 : vector<16x128xf32>
    %c4_1238 = arith.constant 4 : index
    %c0_1239 = arith.constant 0 : index
    %c0_1240 = arith.constant 0 : index
    %2379 = vector.load %arg11[%c4_1238, %c0_1239, %c0_1240] : memref<14x16x128xf32, #tpu.memory_space<vmem>>, vector<1x16x128xf32>
    %2380 = vector.shape_cast %2379 : vector<1x16x128xf32> to vector<16x128xf32>
    %2381 = arith.mulf %2380, %2374 : vector<16x128xf32>
    %2382 = arith.addf %2372, %2381 : vector<16x128xf32>
    %c5_1241 = arith.constant 5 : index
    %c3_1242 = arith.constant 3 : index
    %2383 = memref.load %arg4[%c5_1241, %c3_1242] : memref<14x4xf32, #tpu.memory_space<smem>>
    %2384 = vector.broadcast %2383 : f32 to vector<16x128xf32>
    %2385 = arith.mulf %2384, %2324 : vector<16x128xf32>
    %2386 = arith.addf %2378, %2385 : vector<16x128xf32>
    %c5_1243 = arith.constant 5 : index
    %c0_1244 = arith.constant 0 : index
    %c0_1245 = arith.constant 0 : index
    %2387 = vector.load %arg11[%c5_1243, %c0_1244, %c0_1245] : memref<14x16x128xf32, #tpu.memory_space<vmem>>, vector<1x16x128xf32>
    %2388 = vector.shape_cast %2387 : vector<1x16x128xf32> to vector<16x128xf32>
    %2389 = arith.mulf %2388, %2324 : vector<16x128xf32>
    %2390 = arith.addf %2382, %2389 : vector<16x128xf32>
    %c6_1246 = arith.constant 6 : index
    %c3_1247 = arith.constant 3 : index
    %2391 = memref.load %arg4[%c6_1246, %c3_1247] : memref<14x4xf32, #tpu.memory_space<smem>>
    %2392 = vector.broadcast %2391 : f32 to vector<16x128xf32>
    %2393 = arith.mulf %2392, %2326 : vector<16x128xf32>
    %2394 = arith.addf %2386, %2393 : vector<16x128xf32>
    %c6_1248 = arith.constant 6 : index
    %c0_1249 = arith.constant 0 : index
    %c0_1250 = arith.constant 0 : index
    %2395 = vector.load %arg11[%c6_1248, %c0_1249, %c0_1250] : memref<14x16x128xf32, #tpu.memory_space<vmem>>, vector<1x16x128xf32>
    %2396 = vector.shape_cast %2395 : vector<1x16x128xf32> to vector<16x128xf32>
    %2397 = arith.mulf %2396, %2326 : vector<16x128xf32>
    %2398 = arith.addf %2390, %2397 : vector<16x128xf32>
    %c7_1251 = arith.constant 7 : index
    %c3_1252 = arith.constant 3 : index
    %2399 = memref.load %arg4[%c7_1251, %c3_1252] : memref<14x4xf32, #tpu.memory_space<smem>>
    %2400 = vector.broadcast %2399 : f32 to vector<16x128xf32>
    %2401 = arith.mulf %2400, %2328 : vector<16x128xf32>
    %2402 = arith.addf %2394, %2401 : vector<16x128xf32>
    %c7_1253 = arith.constant 7 : index
    %c0_1254 = arith.constant 0 : index
    %c0_1255 = arith.constant 0 : index
    %2403 = vector.load %arg11[%c7_1253, %c0_1254, %c0_1255] : memref<14x16x128xf32, #tpu.memory_space<vmem>>, vector<1x16x128xf32>
    %2404 = vector.shape_cast %2403 : vector<1x16x128xf32> to vector<16x128xf32>
    %2405 = arith.mulf %2404, %2328 : vector<16x128xf32>
    %2406 = arith.addf %2398, %2405 : vector<16x128xf32>
    %c8_1256 = arith.constant 8 : index
    %c3_1257 = arith.constant 3 : index
    %2407 = memref.load %arg4[%c8_1256, %c3_1257] : memref<14x4xf32, #tpu.memory_space<smem>>
    %2408 = vector.broadcast %2407 : f32 to vector<16x128xf32>
    %2409 = arith.mulf %2408, %2330 : vector<16x128xf32>
    %2410 = arith.addf %2402, %2409 : vector<16x128xf32>
    %c8_1258 = arith.constant 8 : index
    %c0_1259 = arith.constant 0 : index
    %c0_1260 = arith.constant 0 : index
    %2411 = vector.load %arg11[%c8_1258, %c0_1259, %c0_1260] : memref<14x16x128xf32, #tpu.memory_space<vmem>>, vector<1x16x128xf32>
    %2412 = vector.shape_cast %2411 : vector<1x16x128xf32> to vector<16x128xf32>
    %2413 = arith.mulf %2412, %2330 : vector<16x128xf32>
    %2414 = arith.addf %2406, %2413 : vector<16x128xf32>
    %2415 = vector.extract_strided_slice %2324 {offsets = [1, 0], sizes = [15, 128], strides = [1, 1]} : vector<16x128xf32> to vector<15x128xf32>
    %2416 = tpu.concatenate %2415, %45 in 0 : vector<15x128xf32>, vector<1x128xf32> -> vector<16x128xf32>
    %c9_1261 = arith.constant 9 : index
    %c3_1262 = arith.constant 3 : index
    %2417 = memref.load %arg4[%c9_1261, %c3_1262] : memref<14x4xf32, #tpu.memory_space<smem>>
    %2418 = vector.broadcast %2417 : f32 to vector<16x128xf32>
    %2419 = arith.mulf %2418, %2416 : vector<16x128xf32>
    %2420 = arith.addf %2410, %2419 : vector<16x128xf32>
    %c9_1263 = arith.constant 9 : index
    %c0_1264 = arith.constant 0 : index
    %c0_1265 = arith.constant 0 : index
    %2421 = vector.load %arg11[%c9_1263, %c0_1264, %c0_1265] : memref<14x16x128xf32, #tpu.memory_space<vmem>>, vector<1x16x128xf32>
    %2422 = vector.shape_cast %2421 : vector<1x16x128xf32> to vector<16x128xf32>
    %2423 = arith.mulf %2422, %2416 : vector<16x128xf32>
    %2424 = arith.addf %2414, %2423 : vector<16x128xf32>
    %2425 = vector.extract_strided_slice %2326 {offsets = [1, 0], sizes = [15, 128], strides = [1, 1]} : vector<16x128xf32> to vector<15x128xf32>
    %2426 = tpu.concatenate %2425, %45 in 0 : vector<15x128xf32>, vector<1x128xf32> -> vector<16x128xf32>
    %c10_1266 = arith.constant 10 : index
    %c3_1267 = arith.constant 3 : index
    %2427 = memref.load %arg4[%c10_1266, %c3_1267] : memref<14x4xf32, #tpu.memory_space<smem>>
    %2428 = vector.broadcast %2427 : f32 to vector<16x128xf32>
    %2429 = arith.mulf %2428, %2426 : vector<16x128xf32>
    %2430 = arith.addf %2420, %2429 : vector<16x128xf32>
    %c10_1268 = arith.constant 10 : index
    %c0_1269 = arith.constant 0 : index
    %c0_1270 = arith.constant 0 : index
    %2431 = vector.load %arg11[%c10_1268, %c0_1269, %c0_1270] : memref<14x16x128xf32, #tpu.memory_space<vmem>>, vector<1x16x128xf32>
    %2432 = vector.shape_cast %2431 : vector<1x16x128xf32> to vector<16x128xf32>
    %2433 = arith.mulf %2432, %2426 : vector<16x128xf32>
    %2434 = arith.addf %2424, %2433 : vector<16x128xf32>
    %2435 = vector.extract_strided_slice %2322 {offsets = [1, 0], sizes = [15, 128], strides = [1, 1]} : vector<16x128xf32> to vector<15x128xf32>
    %2436 = tpu.concatenate %2435, %45 in 0 : vector<15x128xf32>, vector<1x128xf32> -> vector<16x128xf32>
    %c11_1271 = arith.constant 11 : index
    %c3_1272 = arith.constant 3 : index
    %2437 = memref.load %arg4[%c11_1271, %c3_1272] : memref<14x4xf32, #tpu.memory_space<smem>>
    %2438 = vector.broadcast %2437 : f32 to vector<16x128xf32>
    %2439 = arith.mulf %2438, %2436 : vector<16x128xf32>
    %2440 = arith.addf %2430, %2439 : vector<16x128xf32>
    %c11_1273 = arith.constant 11 : index
    %c0_1274 = arith.constant 0 : index
    %c0_1275 = arith.constant 0 : index
    %2441 = vector.load %arg11[%c11_1273, %c0_1274, %c0_1275] : memref<14x16x128xf32, #tpu.memory_space<vmem>>, vector<1x16x128xf32>
    %2442 = vector.shape_cast %2441 : vector<1x16x128xf32> to vector<16x128xf32>
    %2443 = arith.mulf %2442, %2436 : vector<16x128xf32>
    %2444 = arith.addf %2434, %2443 : vector<16x128xf32>
    %2445 = vector.extract_strided_slice %2328 {offsets = [1, 0], sizes = [15, 128], strides = [1, 1]} : vector<16x128xf32> to vector<15x128xf32>
    %2446 = tpu.concatenate %2445, %45 in 0 : vector<15x128xf32>, vector<1x128xf32> -> vector<16x128xf32>
    %c12_1276 = arith.constant 12 : index
    %c3_1277 = arith.constant 3 : index
    %2447 = memref.load %arg4[%c12_1276, %c3_1277] : memref<14x4xf32, #tpu.memory_space<smem>>
    %2448 = vector.broadcast %2447 : f32 to vector<16x128xf32>
    %2449 = arith.mulf %2448, %2446 : vector<16x128xf32>
    %2450 = arith.addf %2440, %2449 : vector<16x128xf32>
    %c12_1278 = arith.constant 12 : index
    %c0_1279 = arith.constant 0 : index
    %c0_1280 = arith.constant 0 : index
    %2451 = vector.load %arg11[%c12_1278, %c0_1279, %c0_1280] : memref<14x16x128xf32, #tpu.memory_space<vmem>>, vector<1x16x128xf32>
    %2452 = vector.shape_cast %2451 : vector<1x16x128xf32> to vector<16x128xf32>
    %2453 = arith.mulf %2452, %2446 : vector<16x128xf32>
    %2454 = arith.addf %2444, %2453 : vector<16x128xf32>
    %2455 = vector.extract_strided_slice %2330 {offsets = [1, 0], sizes = [15, 128], strides = [1, 1]} : vector<16x128xf32> to vector<15x128xf32>
    %2456 = tpu.concatenate %2455, %45 in 0 : vector<15x128xf32>, vector<1x128xf32> -> vector<16x128xf32>
    %c13_1281 = arith.constant 13 : index
    %c3_1282 = arith.constant 3 : index
    %2457 = memref.load %arg4[%c13_1281, %c3_1282] : memref<14x4xf32, #tpu.memory_space<smem>>
    %2458 = vector.broadcast %2457 : f32 to vector<16x128xf32>
    %2459 = arith.mulf %2458, %2456 : vector<16x128xf32>
    %2460 = arith.addf %2450, %2459 : vector<16x128xf32>
    %c13_1283 = arith.constant 13 : index
    %c0_1284 = arith.constant 0 : index
    %c0_1285 = arith.constant 0 : index
    %2461 = vector.load %arg11[%c13_1283, %c0_1284, %c0_1285] : memref<14x16x128xf32, #tpu.memory_space<vmem>>, vector<1x16x128xf32>
    %2462 = vector.shape_cast %2461 : vector<1x16x128xf32> to vector<16x128xf32>
    %2463 = arith.mulf %2462, %2456 : vector<16x128xf32>
    %2464 = arith.addf %2454, %2463 : vector<16x128xf32>
    %c0_1286 = arith.constant 0 : index
    %c0_1287 = arith.constant 0 : index
    %c0_1288 = arith.constant 0 : index
    %c0_1289 = arith.constant 0 : index
    %2465 = vector.load %arg3[%c0_1286, %c0_1287, %c0_1288, %c0_1289] : memref<1x1x16x128xf32, #tpu.memory_space<vmem>>, vector<1x1x16x128xf32>
    %2466 = vector.shape_cast %2465 : vector<1x1x16x128xf32> to vector<16x128xf32>
    %c3_1290 = arith.constant 3 : index
    %2467 = memref.load %arg6[%c3_1290] : memref<4xf32, #tpu.memory_space<smem>>
    %c3_1291 = arith.constant 3 : index
    %2468 = memref.load %arg7[%c3_1291] : memref<4xf32, #tpu.memory_space<smem>>
    %2469 = arith.mulf %2464, %2466 : vector<16x128xf32>
    %2470 = vector.broadcast %2468 : f32 to vector<16x128xf32>
    %2471 = arith.mulf %2470, %2469 : vector<16x128xf32>
    %2472 = vector.broadcast %2467 : f32 to vector<16x128xf32>
    %2473 = arith.addf %2472, %2471 : vector<16x128xf32>
    %2474 = arith.mulf %2460, %2473 : vector<16x128xf32>
    %2475 = arith.addf %2003, %2160 : vector<16x128xf32>
    %2476 = arith.addf %2475, %2317 : vector<16x128xf32>
    %2477 = arith.addf %2476, %2474 : vector<16x128xf32>
    %c0_1292 = arith.constant 0 : index
    %c0_1293 = arith.constant 0 : index
    %c0_1294 = arith.constant 0 : index
    %c0_1295 = arith.constant 0 : index
    %2478 = vector.load %arg1[%c0_1292, %c0_1293, %c0_1294, %c0_1295] : memref<1x4x16x128xf32, #tpu.memory_space<vmem>>, vector<1x1x16x128xf32>
    %2479 = vector.shape_cast %2478 : vector<1x1x16x128xf32> to vector<16x128xf32>
    %2480 = arith.subf %2477, %2003 : vector<16x128xf32>
    %2481 = arith.subf %2479, %2480 : vector<16x128xf32>
    %c0_1296 = arith.constant 0 : index
    %c0_1297 = arith.constant 0 : index
    %c0_1298 = arith.constant 0 : index
    %c0_1299 = arith.constant 0 : index
    %2482 = vector.load %arg10[%c0_1296, %c0_1297, %c0_1298, %c0_1299] : memref<1x4x16x128xf32, #tpu.memory_space<vmem>>, vector<1x1x16x128xf32>
    %2483 = vector.shape_cast %2482 : vector<1x1x16x128xf32> to vector<16x128xf32>
    %2484 = vector.shape_cast %2481 : vector<16x128xf32> to vector<1x1x16x128xf32>
    tpu.vector_store %arg10[%c0_1296, %c0_1297, %c0_1298, %c0_1299], %2484 {strides = array<i32>} : memref<1x4x16x128xf32, #tpu.memory_space<vmem>>, vector<1x1x16x128xf32>,
    %c0_1300 = arith.constant 0 : index
    %c1_1301 = arith.constant 1 : index
    %c0_1302 = arith.constant 0 : index
    %c0_1303 = arith.constant 0 : index
    %2485 = vector.load %arg1[%c0_1300, %c1_1301, %c0_1302, %c0_1303] : memref<1x4x16x128xf32, #tpu.memory_space<vmem>>, vector<1x1x16x128xf32>
    %2486 = vector.shape_cast %2485 : vector<1x1x16x128xf32> to vector<16x128xf32>
    %2487 = arith.subf %2477, %2160 : vector<16x128xf32>
    %2488 = arith.subf %2486, %2487 : vector<16x128xf32>
    %c0_1304 = arith.constant 0 : index
    %c1_1305 = arith.constant 1 : index
    %c0_1306 = arith.constant 0 : index
    %c0_1307 = arith.constant 0 : index
    %2489 = vector.load %arg10[%c0_1304, %c1_1305, %c0_1306, %c0_1307] : memref<1x4x16x128xf32, #tpu.memory_space<vmem>>, vector<1x1x16x128xf32>
    %2490 = vector.shape_cast %2489 : vector<1x1x16x128xf32> to vector<16x128xf32>
    %2491 = vector.shape_cast %2488 : vector<16x128xf32> to vector<1x1x16x128xf32>
    tpu.vector_store %arg10[%c0_1304, %c1_1305, %c0_1306, %c0_1307], %2491 {strides = array<i32>} : memref<1x4x16x128xf32, #tpu.memory_space<vmem>>, vector<1x1x16x128xf32>,
    %c0_1308 = arith.constant 0 : index
    %c2_1309 = arith.constant 2 : index
    %c0_1310 = arith.constant 0 : index
    %c0_1311 = arith.constant 0 : index
    %2492 = vector.load %arg1[%c0_1308, %c2_1309, %c0_1310, %c0_1311] : memref<1x4x16x128xf32, #tpu.memory_space<vmem>>, vector<1x1x16x128xf32>
    %2493 = vector.shape_cast %2492 : vector<1x1x16x128xf32> to vector<16x128xf32>
    %2494 = arith.subf %2477, %2317 : vector<16x128xf32>
    %2495 = arith.subf %2493, %2494 : vector<16x128xf32>
    %c0_1312 = arith.constant 0 : index
    %c2_1313 = arith.constant 2 : index
    %c0_1314 = arith.constant 0 : index
    %c0_1315 = arith.constant 0 : index
    %2496 = vector.load %arg10[%c0_1312, %c2_1313, %c0_1314, %c0_1315] : memref<1x4x16x128xf32, #tpu.memory_space<vmem>>, vector<1x1x16x128xf32>
    %2497 = vector.shape_cast %2496 : vector<1x1x16x128xf32> to vector<16x128xf32>
    %2498 = vector.shape_cast %2495 : vector<16x128xf32> to vector<1x1x16x128xf32>
    tpu.vector_store %arg10[%c0_1312, %c2_1313, %c0_1314, %c0_1315], %2498 {strides = array<i32>} : memref<1x4x16x128xf32, #tpu.memory_space<vmem>>, vector<1x1x16x128xf32>,
    %c0_1316 = arith.constant 0 : index
    %c3_1317 = arith.constant 3 : index
    %c0_1318 = arith.constant 0 : index
    %c0_1319 = arith.constant 0 : index
    %2499 = vector.load %arg1[%c0_1316, %c3_1317, %c0_1318, %c0_1319] : memref<1x4x16x128xf32, #tpu.memory_space<vmem>>, vector<1x1x16x128xf32>
    %2500 = vector.shape_cast %2499 : vector<1x1x16x128xf32> to vector<16x128xf32>
    %2501 = arith.subf %2477, %2474 : vector<16x128xf32>
    %2502 = arith.subf %2500, %2501 : vector<16x128xf32>
    %c0_1320 = arith.constant 0 : index
    %c3_1321 = arith.constant 3 : index
    %c0_1322 = arith.constant 0 : index
    %c0_1323 = arith.constant 0 : index
    %2503 = vector.load %arg10[%c0_1320, %c3_1321, %c0_1322, %c0_1323] : memref<1x4x16x128xf32, #tpu.memory_space<vmem>>, vector<1x1x16x128xf32>
    %2504 = vector.shape_cast %2503 : vector<1x1x16x128xf32> to vector<16x128xf32>
    %2505 = vector.shape_cast %2502 : vector<16x128xf32> to vector<1x1x16x128xf32>
    tpu.vector_store %arg10[%c0_1320, %c3_1321, %c0_1322, %c0_1323], %2505 {strides = array<i32>} : memref<1x4x16x128xf32, #tpu.memory_space<vmem>>, vector<1x1x16x128xf32>,
    return
  }
  func.func @transform_0(%arg0: i32) -> (i32, i32, i32, i32) {
    %c0_i32 = arith.constant 0 : i32
    %c0_i32_0 = arith.constant 0 : i32
    %c0_i32_1 = arith.constant 0 : i32
    %c0_i32_2 = arith.constant 0 : i32
    return %arg0, %c0_i32, %c0_i32_0, %c0_i32_1 : i32, i32, i32, i32
  }
  func.func @transform_1(%arg0: i32) -> (i32, i32, i32, i32) {
    %c0_i32 = arith.constant 0 : i32
    %c0_i32_0 = arith.constant 0 : i32
    %c0_i32_1 = arith.constant 0 : i32
    %c0_i32_2 = arith.constant 0 : i32
    return %arg0, %c0_i32, %c0_i32_0, %c0_i32_1 : i32, i32, i32, i32
  }
  func.func @transform_2(%arg0: i32) -> (i32, i32, i32, i32) {
    %c0_i32 = arith.constant 0 : i32
    %c0_i32_0 = arith.constant 0 : i32
    %c0_i32_1 = arith.constant 0 : i32
    %c0_i32_2 = arith.constant 0 : i32
    return %arg0, %c0_i32, %c0_i32_0, %c0_i32_1 : i32, i32, i32, i32
  }
  func.func @transform_3(%arg0: i32) -> (i32, i32) {
    %c0_i32 = arith.constant 0 : i32
    %c0_i32_0 = arith.constant 0 : i32
    %c0_i32_1 = arith.constant 0 : i32
    return %c0_i32, %c0_i32_0 : i32, i32
  }
  func.func @transform_4(%arg0: i32) -> (i32, i32) {
    %c0_i32 = arith.constant 0 : i32
    %c0_i32_0 = arith.constant 0 : i32
    %c0_i32_1 = arith.constant 0 : i32
    return %c0_i32, %c0_i32_0 : i32, i32
  }
  func.func @transform_5(%arg0: i32) -> i32 {
    %c0_i32 = arith.constant 0 : i32
    %c0_i32_0 = arith.constant 0 : i32
    return %c0_i32 : i32
  }
  func.func @transform_6(%arg0: i32) -> i32 {
    %c0_i32 = arith.constant 0 : i32
    %c0_i32_0 = arith.constant 0 : i32
    return %c0_i32 : i32
  }
  func.func @transform_7(%arg0: i32) -> i32 {
    %c0_i32 = arith.constant 0 : i32
    %c0_i32_0 = arith.constant 0 : i32
    return %c0_i32 : i32
  }
  func.func @transform_8(%arg0: i32) -> (i32, i32) {
    %c0_i32 = arith.constant 0 : i32
    %c0_i32_0 = arith.constant 0 : i32
    %c0_i32_1 = arith.constant 0 : i32
    return %c0_i32, %c0_i32_0 : i32, i32
  }
  func.func @transform_9(%arg0: i32) -> (i32, i32, i32, i32) {
    %c0_i32 = arith.constant 0 : i32
    %c0_i32_0 = arith.constant 0 : i32
    %c0_i32_1 = arith.constant 0 : i32
    %c0_i32_2 = arith.constant 0 : i32
    return %arg0, %c0_i32, %c0_i32_0, %c0_i32_1 : i32, i32, i32, i32
  }
}

</mosaic_0001>

<llo_original>
// kernel: tpu_custom_call.1
$region0: #{tpu_custom_call.1}
  #allocation0 [shape = 'u32[]', space=smem, size = 0x4, offset = 0x4, fixed_abs, tag = 'smem constant byte address 0x4 - core index']
  #allocation1 [shape = 'u32[144,128]{1,0:T(1,128)}', space=vmem, size = 0x12000, scoped, tag = 'internal scratch']
  #allocation2 [shape = 'f32[14,16,128]{2,1,0:T(8,128)}', space=vmem, size = 0x1c000, scoped, tag = 'scratch operand']
  %s0 = inlined_call_operand.hbm [shape: f32[2,4,16,128], index: 0, kind: input, shape index: {}]
  %s1 = inlined_call_operand.hbm [shape: f32[2,3,16,128], index: 1, kind: input, shape index: {}]
  %s2 = inlined_call_operand.vmem [shape: f32[2,1,16,128], index: 2, kind: input, shape index: {}]
  %s3 = inlined_call_operand.vmem [shape: f32[14,4], index: 3, kind: input, shape index: {}]
  %s4 = inlined_call_operand.vmem [shape: f32[14,4], index: 4, kind: input, shape index: {}]
  %s5 = inlined_call_operand.vmem [shape: f32[4], index: 5, kind: input, shape index: {}]
  %s6 = inlined_call_operand.vmem [shape: f32[4], index: 6, kind: input, shape index: {}]
  %s7 = inlined_call_operand.vmem [shape: f32[4], index: 7, kind: input, shape index: {}]
  %s8 = inlined_call_operand.vmem [shape: f32[4,4], index: 8, kind: input, shape index: {}]
  %s9 = inlined_call_operand.hbm [shape: f32[2,4,16,128], index: 9, kind: output, shape index: {}]
  %s10 = sld [smem:[#allocation0]]
  $region101: #{tpu_custom_call.1} parent=0
    _
  %s12 = ssub.s32 1, %s10
  %s13 = scalar_select 0, %s12, %s10
  $region1: #{tpu_custom_call.1} parent=0
    #allocation3 [shape = 'u8[65536]{0}', space=vmem, size = 0x10000, scoped, tag = 'input window, operand 0']
    #allocation4 [shape = 's32[2]{0}', space=sflag, size = 0x8, scoped, tag = 'scoped memory for tpu_custom_call.1']
    #allocation5 [shape = 's32[2]{0}', space=sflag, size = 0x8, scoped, tag = 'scoped memory for tpu_custom_call.1']
    #allocation6 [shape = 's32[2]{0}', space=sflag, size = 0x8, scoped, tag = 'scoped memory for tpu_custom_call.1']
    #allocation7 [shape = 'u8[49152]{0}', space=vmem, size = 0xc000, scoped, tag = 'input window, operand 1']
    #allocation8 [shape = 's32[2]{0}', space=sflag, size = 0x8, scoped, tag = 'scoped memory for tpu_custom_call.1']
    #allocation9 [shape = 'u8[8192]{0}', space=smem, size = 0x2000, scoped, tag = 'input window, operand 3, single buffered']
    #allocation10 [shape = 'u8[8192]{0}', space=smem, size = 0x2000, scoped, tag = 'input window, operand 4, single buffered']
    #allocation11 [shape = 's32[1]{0}', space=sflag, size = 0x4, scoped, tag = 'scoped memory for tpu_custom_call.1']
    #allocation12 [shape = 'u8[512]{0}', space=smem, size = 0x200, scoped, tag = 'input window, operand 5, single buffered']
    #allocation13 [shape = 'u8[512]{0}', space=smem, size = 0x200, scoped, tag = 'input window, operand 6, single buffered']
    #allocation14 [shape = 's32[1]{0}', space=sflag, size = 0x4, scoped, tag = 'scoped memory for tpu_custom_call.1']
    #allocation15 [shape = 'u8[512]{0}', space=smem, size = 0x200, scoped, tag = 'input window, operand 7, single buffered']
    #allocation16 [shape = 'u8[2048]{0}', space=smem, size = 0x800, scoped, tag = 'input window, operand 8, single buffered']
    #allocation17 [shape = 's32[1]{0}', space=sflag, size = 0x4, scoped, tag = 'scoped memory for tpu_custom_call.1']
    #allocation18 [shape = 'u8[65536]{0}', space=vmem, size = 0x10000, scoped, tag = 'output window, operand 0']
    %14 = vsyncpa [#allocation4], 0
    %s15 = scalar_lea.sflag [#allocation4], 1
    %16 = vsyncpa %s15, 0
    %17 = vsyncpa [#allocation8], 0
    %s18 = scalar_lea.sflag [#allocation8], 1
    %19 = vsyncpa %s18, 0
    %20 = vsyncpa [#allocation6], 0
    %21 = vsyncpa [#allocation11], 0
    %22 = vsyncpa [#allocation14], 0
    %23 = vsyncpa [#allocation17], 0
    %24 = vsyncpa [#allocation5], 0
    %s25 = scalar_lea.sflag [#allocation5], 1
    %26 = vsyncpa %s25, 0
    loop: start=0, step=1, limit=4
    $region2: #{tpu_custom_call.1} parent=1 // loop_pre_header
      _
    $region3: #{tpu_custom_call.1} parent=1 // loop_header
      %s28 = sphi 0, %s32
      %p29 = scmp.ge.s32.totalorder %s28, 4
      %s38 = sphi 0, %s40
      %s41 = sphi 0, %s38
      %s42 = sphi 0, %s41
      %s58 = sphi 0, %s42
      %s64 = sphi 0, %s66
      %s67 = sphi 0, %s64
      %s68 = sphi 0, %s67
      %s84 = sphi 0, %s68
      %s90 = sphi 0, %s92
      %s93 = sphi 0, %s90
      %s94 = sphi 0, %s93
      %s110 = sphi 0, %s94
      %s114 = sphi 0, %s114
      %s116 = sphi 0, %s114
      %s117 = sphi 0, %s116
      %s131 = sphi 0, %s117
      %s135 = sphi 0, %s135
      %s137 = sphi 0, %s135
      %s138 = sphi 0, %s137
      %s152 = sphi 0, %s138
      %s156 = sphi 0, %s156
      %s158 = sphi 0, %s156
      %s159 = sphi 0, %s158
      %s173 = sphi 0, %s159
      %s177 = sphi 0, %s177
      %s179 = sphi 0, %s177
      %s180 = sphi 0, %s179
      %s194 = sphi 0, %s180
      %s198 = sphi 0, %s198
      %s200 = sphi 0, %s198
      %s201 = sphi 0, %s200
      %s215 = sphi 0, %s201
      %s219 = sphi 0, %s219
      %s221 = sphi 0, %s219
      %s222 = sphi 0, %s221
      %s236 = sphi 0, %s222
      %s242 = sphi 0, %s244
      %s245 = sphi 0, %s242
      %s246 = sphi 0, %s245
      %s262 = sphi 0, %s246
    $region4: #{tpu_custom_call.1} parent=1 // loop_header_branch
      %31 = sbr.rel (%p29) target = $region8
    $region5: #{tpu_custom_call.1} parent=1 // loop_body
      %s33 = ssub.s32 %s28, 1
      %s34 = ssub.s32 %s28, 2
      %s35 = sadd.s32 %s28, 1
      %s36 = ssub.s32 %s28, %s35
      %p37 = scmp.eq.s32.totalorder %s36, 0
      %s39 = sadd.s32 %s38, 1
      %s40 = scalar_select %p37, %s38, %s39
      %p43 = pneg %p37
      %p44 = scmp.eq.s32.totalorder %s28, 1
      %p45 = por %p43, %p44
      %p46 = scmp.ne.s32.totalorder %s38, %s41
      %p47 = scmp.eq.s32.totalorder %s28, 0
      %p48 = por %p46, %p47
      %p49 = scmp.ne.s32.totalorder %s38, %s41
      %p50 = scmp.eq.s32.totalorder %s33, 1
      %p51 = por %p49, %p50
      %p52 = scmp.ne.s32.totalorder %s41, %s42
      %p53 = scmp.eq.s32.totalorder %s33, 0
      %p54 = por %p52, %p53
      %p55 = scmp.ne.s32.totalorder %s41, %s42
      %p56 = scmp.eq.s32.totalorder %s34, 1
      %p57 = por %p55, %p56
      %p59 = scmp.ne.s32.totalorder %s42, %s58
      %p60 = scmp.eq.s32.totalorder %s34, 0
      %p61 = por %p59, %p60
      %s62 = ssub.s32 %s28, %s35
      %p63 = scmp.eq.s32.totalorder %s62, 0
      %s65 = sadd.s32 %s64, 1
      %s66 = scalar_select %p63, %s64, %s65
      %p69 = pneg %p63
      %p70 = scmp.eq.s32.totalorder %s28, 1
      %p71 = por %p69, %p70
      %p72 = scmp.ne.s32.totalorder %s64, %s67
      %p73 = scmp.eq.s32.totalorder %s28, 0
      %p74 = por %p72, %p73
      %p75 = scmp.ne.s32.totalorder %s64, %s67
      %p76 = scmp.eq.s32.totalorder %s33, 1
      %p77 = por %p75, %p76
      %p78 = scmp.ne.s32.totalorder %s67, %s68
      %p79 = scmp.eq.s32.totalorder %s33, 0
      %p80 = por %p78, %p79
      %p81 = scmp.ne.s32.totalorder %s67, %s68
      %p82 = scmp.eq.s32.totalorder %s34, 1
      %p83 = por %p81, %p82
      %p85 = scmp.ne.s32.totalorder %s68, %s84
      %p86 = scmp.eq.s32.totalorder %s34, 0
      %p87 = por %p85, %p86
      %s88 = ssub.s32 %s28, %s35
      %p89 = scmp.eq.s32.totalorder %s88, 0
      %s91 = sadd.s32 %s90, 1
      %s92 = scalar_select %p89, %s90, %s91
      %p95 = pneg %p89
      %p96 = scmp.eq.s32.totalorder %s28, 1
      %p97 = por %p95, %p96
      %p98 = scmp.ne.s32.totalorder %s90, %s93
      %p99 = scmp.eq.s32.totalorder %s28, 0
      %p100 = por %p98, %p99
      %p101 = scmp.ne.s32.totalorder %s90, %s93
      %p102 = scmp.eq.s32.totalorder %s33, 1
      %p103 = por %p101, %p102
      %p104 = scmp.ne.s32.totalorder %s93, %s94
      %p105 = scmp.eq.s32.totalorder %s33, 0
      %p106 = por %p104, %p105
      %p107 = scmp.ne.s32.totalorder %s93, %s94
      %p108 = scmp.eq.s32.totalorder %s34, 1
      %p109 = por %p107, %p108
      %p111 = scmp.ne.s32.totalorder %s94, %s110
      %p112 = scmp.eq.s32.totalorder %s34, 0
      %p113 = por %p111, %p112
      %s115 = sadd.s32 %s114, 1
      %p118 = scmp.eq.s32.totalorder %s28, 1
      %p119 = scmp.ne.s32.totalorder %s114, %s116
      %p120 = scmp.eq.s32.totalorder %s28, 0
      %p121 = por %p119, %p120
      %p122 = scmp.ne.s32.totalorder %s114, %s116
      %p123 = scmp.eq.s32.totalorder %s33, 1
      %p124 = por %p122, %p123
      %p125 = scmp.ne.s32.totalorder %s116, %s117
      %p126 = scmp.eq.s32.totalorder %s33, 0
      %p127 = por %p125, %p126
      %p128 = scmp.ne.s32.totalorder %s116, %s117
      %p129 = scmp.eq.s32.totalorder %s34, 1
      %p130 = por %p128, %p129
      %p132 = scmp.ne.s32.totalorder %s117, %s131
      %p133 = scmp.eq.s32.totalorder %s34, 0
      %p134 = por %p132, %p133
      %s136 = sadd.s32 %s135, 1
      %p139 = scmp.eq.s32.totalorder %s28, 1
      %p140 = scmp.ne.s32.totalorder %s135, %s137
      %p141 = scmp.eq.s32.totalorder %s28, 0
      %p142 = por %p140, %p141
      %p143 = scmp.ne.s32.totalorder %s135, %s137
      %p144 = scmp.eq.s32.totalorder %s33, 1
      %p145 = por %p143, %p144
      %p146 = scmp.ne.s32.totalorder %s137, %s138
      %p147 = scmp.eq.s32.totalorder %s33, 0
      %p148 = por %p146, %p147
      %p149 = scmp.ne.s32.totalorder %s137, %s138
      %p150 = scmp.eq.s32.totalorder %s34, 1
      %p151 = por %p149, %p150
      %p153 = scmp.ne.s32.totalorder %s138, %s152
      %p154 = scmp.eq.s32.totalorder %s34, 0
      %p155 = por %p153, %p154
      %s157 = sadd.s32 %s156, 1
      %p160 = scmp.eq.s32.totalorder %s28, 1
      %p161 = scmp.ne.s32.totalorder %s156, %s158
      %p162 = scmp.eq.s32.totalorder %s28, 0
      %p163 = por %p161, %p162
      %p164 = scmp.ne.s32.totalorder %s156, %s158
      %p165 = scmp.eq.s32.totalorder %s33, 1
      %p166 = por %p164, %p165
      %p167 = scmp.ne.s32.totalorder %s158, %s159
      %p168 = scmp.eq.s32.totalorder %s33, 0
      %p169 = por %p167, %p168
      %p170 = scmp.ne.s32.totalorder %s158, %s159
      %p171 = scmp.eq.s32.totalorder %s34, 1
      %p172 = por %p170, %p171
      %p174 = scmp.ne.s32.totalorder %s159, %s173
      %p175 = scmp.eq.s32.totalorder %s34, 0
      %p176 = por %p174, %p175
      %s178 = sadd.s32 %s177, 1
      %p181 = scmp.eq.s32.totalorder %s28, 1
      %p182 = scmp.ne.s32.totalorder %s177, %s179
      %p183 = scmp.eq.s32.totalorder %s28, 0
      %p184 = por %p182, %p183
      %p185 = scmp.ne.s32.totalorder %s177, %s179
      %p186 = scmp.eq.s32.totalorder %s33, 1
      %p187 = por %p185, %p186
      %p188 = scmp.ne.s32.totalorder %s179, %s180
      %p189 = scmp.eq.s32.totalorder %s33, 0
      %p190 = por %p188, %p189
      %p191 = scmp.ne.s32.totalorder %s179, %s180
      %p192 = scmp.eq.s32.totalorder %s34, 1
      %p193 = por %p191, %p192
      %p195 = scmp.ne.s32.totalorder %s180, %s194
      %p196 = scmp.eq.s32.totalorder %s34, 0
      %p197 = por %p195, %p196
      %s199 = sadd.s32 %s198, 1
      %p202 = scmp.eq.s32.totalorder %s28, 1
      %p203 = scmp.ne.s32.totalorder %s198, %s200
      %p204 = scmp.eq.s32.totalorder %s28, 0
      %p205 = por %p203, %p204
      %p206 = scmp.ne.s32.totalorder %s198, %s200
      %p207 = scmp.eq.s32.totalorder %s33, 1
      %p208 = por %p206, %p207
      %p209 = scmp.ne.s32.totalorder %s200, %s201
      %p210 = scmp.eq.s32.totalorder %s33, 0
      %p211 = por %p209, %p210
      %p212 = scmp.ne.s32.totalorder %s200, %s201
      %p213 = scmp.eq.s32.totalorder %s34, 1
      %p214 = por %p212, %p213
      %p216 = scmp.ne.s32.totalorder %s201, %s215
      %p217 = scmp.eq.s32.totalorder %s34, 0
      %p218 = por %p216, %p217
      %s220 = sadd.s32 %s219, 1
      %p223 = scmp.eq.s32.totalorder %s28, 1
      %p224 = scmp.ne.s32.totalorder %s219, %s221
      %p225 = scmp.eq.s32.totalorder %s28, 0
      %p226 = por %p224, %p225
      %p227 = scmp.ne.s32.totalorder %s219, %s221
      %p228 = scmp.eq.s32.totalorder %s33, 1
      %p229 = por %p227, %p228
      %p230 = scmp.ne.s32.totalorder %s221, %s222
      %p231 = scmp.eq.s32.totalorder %s33, 0
      %p232 = por %p230, %p231
      %p233 = scmp.ne.s32.totalorder %s221, %s222
      %p234 = scmp.eq.s32.totalorder %s34, 1
      %p235 = por %p233, %p234
      %p237 = scmp.ne.s32.totalorder %s222, %s236
      %p238 = scmp.eq.s32.totalorder %s34, 0
      %p239 = por %p237, %p238
      %s240 = ssub.s32 %s28, %s35
      %p241 = scmp.eq.s32.totalorder %s240, 0
      %s243 = sadd.s32 %s242, 1
      %s244 = scalar_select %p241, %s242, %s243
      %p247 = pneg %p241
      %p248 = scmp.eq.s32.totalorder %s28, 1
      %p249 = por %p247, %p248
      %p250 = scmp.ne.s32.totalorder %s242, %s245
      %p251 = scmp.eq.s32.totalorder %s28, 0
      %p252 = por %p250, %p251
      %p253 = scmp.ne.s32.totalorder %s242, %s245
      %p254 = scmp.eq.s32.totalorder %s33, 1
      %p255 = por %p253, %p254
      %p256 = scmp.ne.s32.totalorder %s245, %s246
      %p257 = scmp.eq.s32.totalorder %s33, 0
      %p258 = por %p256, %p257
      %p259 = scmp.ne.s32.totalorder %s245, %s246
      %p260 = scmp.eq.s32.totalorder %s34, 1
      %p261 = por %p259, %p260
      %p263 = scmp.ne.s32.totalorder %s246, %s262
      %p264 = scmp.eq.s32.totalorder %s34, 0
      %p265 = por %p263, %p264
      %p266 = scmp.le.s32.totalorder 1, %s28
      %p267 = scmp.lt.s32.totalorder %s28, 3
      %p268 = pnand %p266, %p267
      %p269 = pneg %p268
      // Predicated region
      $region9: #{tpu_custom_call.1} parent=5 // pred_check
        _
      $region10: #{tpu_custom_call.1} parent=5 // pred_check_branch
        %271 = sbr.rel (%p268) target = $region12
      $region11: #{tpu_custom_call.1} parent=5 // pred_region
        %s272 = ssub.s32 %s28, 1
        // Predicated region
        $region13: #{tpu_custom_call.1} parent=11 // pred_check
          %p273 = pneg %p127
        $region14: #{tpu_custom_call.1} parent=11 // pred_check_branch
          %275 = sbr.rel (%p273) target = $region16
        $region15: #{tpu_custom_call.1} parent=11 // pred_region
          %s277 = ssub.s32 256, 256
          %278 = vsyncadd [#allocation6], %s277
          %s279 = sshll.u32 %s3, 4
          %s280 = int_to_ptr.vmem [resolvable:$true] %s279
          %285 = dma.vmem_to_smem %s280, 256, [#allocation9], [#allocation6], 128, 128, 8
        $region16: #{tpu_custom_call.1} parent=11 // pred_fallthru
          _
        // Predicated region
        $region17: #{tpu_custom_call.1} parent=11 // pred_check
          %p286 = pneg %p148
        $region18: #{tpu_custom_call.1} parent=11 // pred_check_branch
          %288 = sbr.rel (%p286) target = $region20
        $region19: #{tpu_custom_call.1} parent=11 // pred_region
          %s290 = ssub.s32 256, 256
          %291 = vsyncadd [#allocation11], %s290
          %s292 = sshll.u32 %s4, 4
          %s293 = int_to_ptr.vmem [resolvable:$true] %s292
          %298 = dma.vmem_to_smem %s293, 256, [#allocation10], [#allocation11], 128, 128, 8
        $region20: #{tpu_custom_call.1} parent=11 // pred_fallthru
          _
        // Predicated region
        $region21: #{tpu_custom_call.1} parent=11 // pred_check
          %p299 = pneg %p169
        $region22: #{tpu_custom_call.1} parent=11 // pred_check_branch
          %301 = sbr.rel (%p299) target = $region24
        $region23: #{tpu_custom_call.1} parent=11 // pred_region
          %s303 = ssub.s32 16, 16
          %304 = vsyncadd [#allocation11], %s303
          %s306 = sshll.u32 %s5, 4
          %s307 = int_to_ptr.vmem [resolvable:$true] %s306
          %309 = dma.vmem_to_smem %s307, 16, [#allocation12], [#allocation11]
        $region24: #{tpu_custom_call.1} parent=11 // pred_fallthru
          _
        // Predicated region
        $region25: #{tpu_custom_call.1} parent=11 // pred_check
          %p310 = pneg %p190
        $region26: #{tpu_custom_call.1} parent=11 // pred_check_branch
          %312 = sbr.rel (%p310) target = $region28
        $region27: #{tpu_custom_call.1} parent=11 // pred_region
          %s314 = ssub.s32 16, 16
          %315 = vsyncadd [#allocation14], %s314
          %s317 = sshll.u32 %s6, 4
          %s318 = int_to_ptr.vmem [resolvable:$true] %s317
          %320 = dma.vmem_to_smem %s318, 16, [#allocation13], [#allocation14]
        $region28: #{tpu_custom_call.1} parent=11 // pred_fallthru
          _
        // Predicated region
        $region29: #{tpu_custom_call.1} parent=11 // pred_check
          %p321 = pneg %p211
        $region30: #{tpu_custom_call.1} parent=11 // pred_check_branch
          %323 = sbr.rel (%p321) target = $region32
        $region31: #{tpu_custom_call.1} parent=11 // pred_region
          %s325 = ssub.s32 16, 16
          %326 = vsyncadd [#allocation14], %s325
          %s328 = sshll.u32 %s7, 4
          %s329 = int_to_ptr.vmem [resolvable:$true] %s328
          %331 = dma.vmem_to_smem %s329, 16, [#allocation15], [#allocation14]
        $region32: #{tpu_custom_call.1} parent=11 // pred_fallthru
          _
        // Predicated region
        $region33: #{tpu_custom_call.1} parent=11 // pred_check
          %p332 = pneg %p232
        $region34: #{tpu_custom_call.1} parent=11 // pred_check_branch
          %334 = sbr.rel (%p332) target = $region36
        $region35: #{tpu_custom_call.1} parent=11 // pred_region
          %s336 = ssub.s32 64, 64
          %337 = vsyncadd [#allocation17], %s336
          %s339 = sshll.u32 %s8, 4
          %s340 = int_to_ptr.vmem [resolvable:$true] %s339
          %342 = dma.vmem_to_smem %s340, 64, [#allocation16], [#allocation17]
        $region36: #{tpu_custom_call.1} parent=11 // pred_fallthru
          _
      $region12: #{tpu_custom_call.1} parent=5 // pred_fallthru
        _
      %p343 = scmp.lt.s32.totalorder %s28, 2
      // Predicated region
      $region37: #{tpu_custom_call.1} parent=5 // pred_check
        %p344 = pneg %p343
      $region38: #{tpu_custom_call.1} parent=5 // pred_check_branch
        %346 = sbr.rel (%p344) target = $region40
      $region39: #{tpu_custom_call.1} parent=5 // pred_region
        // Predicated region
        $region41: #{tpu_custom_call.1} parent=39 // pred_check
          %p347 = pneg %p48
        $region42: #{tpu_custom_call.1} parent=39 // pred_check_branch
          %349 = sbr.rel (%p347) target = $region44
        $region43: #{tpu_custom_call.1} parent=39 // pred_region
          %s350 = sand.u32 %s38, 1
          %s351 = scalar_lea.sflag [#allocation4], %s350
          %s352 = sand.u32 %s38, 1
          %s353 = smul.addr %s352, 64
          %s354 = scalar_lea.vmem [#allocation3], %s353
          %s356 = ssub.s32 1024, 1024
          %357 = vsyncadd %s351, %s356
          %s358 = smul.addr %s28, 8
          %s359 = smul.addr %s358, 128
          %s360 = scalar_lea.hbm %s0, %s359
          %s361 = sshll.u32 %s354, 4
          %s362 = int_to_ptr.vmem [resolvable:$true] %s361
          %367 = dma.hbm_to_vmem [thread:$0]  %s360, 1024, %s362, %s351, 128, 128, 8
        $region44: #{tpu_custom_call.1} parent=39 // pred_fallthru
          _
        // Predicated region
        $region45: #{tpu_custom_call.1} parent=39 // pred_check
          %p368 = pneg %p74
        $region46: #{tpu_custom_call.1} parent=39 // pred_check_branch
          %370 = sbr.rel (%p368) target = $region48
        $region47: #{tpu_custom_call.1} parent=39 // pred_region
          %s371 = sand.u32 %s64, 1
          %s372 = scalar_lea.sflag [#allocation8], %s371
          %s373 = sand.u32 %s64, 1
          %s374 = smul.addr %s373, 48
          %s375 = scalar_lea.vmem [#allocation7], %s374
          %s377 = ssub.s32 768, 768
          %378 = vsyncadd %s372, %s377
          %s379 = smul.addr %s28, 6
          %s380 = smul.addr %s379, 128
          %s381 = scalar_lea.hbm %s1, %s380
          %s382 = sshll.u32 %s375, 4
          %s383 = int_to_ptr.vmem [resolvable:$true] %s382
          %388 = dma.hbm_to_vmem [thread:$0]  %s381, 768, %s383, %s372, 128, 128, 8
        $region48: #{tpu_custom_call.1} parent=39 // pred_fallthru
          _
        // Predicated region
        $region49: #{tpu_custom_call.1} parent=39 // pred_check
          %p389 = pneg %p100
        $region50: #{tpu_custom_call.1} parent=39 // pred_check_branch
          %391 = sbr.rel (%p389) target = $region52
        $region51: #{tpu_custom_call.1} parent=39 // pred_region
          %p392 = scmp.lt.s32.totalorder %s28, 1
          %s393 = scalar_select %p392, %s28, 1
          %s394 = smul.addr %s393, 2
          %s395 = smul.addr %s394, 8
          %s396 = scalar_lea.vmem %s2, %s395
        $region52: #{tpu_custom_call.1} parent=39 // pred_fallthru
          _
      $region40: #{tpu_custom_call.1} parent=5 // pred_fallthru
        _
      %p397 = scmp.le.s32.totalorder 1, %s28
      %p398 = scmp.lt.s32.totalorder %s28, 3
      %p399 = pnand %p397, %p398
      %p400 = pneg %p399
      // Predicated region
      $region53: #{tpu_custom_call.1} parent=5 // pred_check
        _
      $region54: #{tpu_custom_call.1} parent=5 // pred_check_branch
        %402 = sbr.rel (%p399) target = $region56
      $region55: #{tpu_custom_call.1} parent=5 // pred_region
        %s403 = ssub.s32 %s28, 1
        %s404 = sand.u32 %s41, 1
        %s405 = scalar_lea.sflag [#allocation4], %s404
        %s406 = sand.u32 %s41, 1
        %s407 = smul.addr %s406, 64
        %s408 = scalar_lea.vmem [#allocation3], %s407
        // Predicated region
        $region57: #{tpu_custom_call.1} parent=55 // pred_check
          %p409 = pneg %p54
        $region58: #{tpu_custom_call.1} parent=55 // pred_check_branch
          %411 = sbr.rel (%p409) target = $region60
        $region59: #{tpu_custom_call.1} parent=55 // pred_region
          %412 = dma.done %s405, 1024
        $region60: #{tpu_custom_call.1} parent=55 // pred_fallthru
          _
        %s413 = sand.u32 %s67, 1
        %s414 = scalar_lea.sflag [#allocation8], %s413
        %s415 = sand.u32 %s67, 1
        %s416 = smul.addr %s415, 48
        %s417 = scalar_lea.vmem [#allocation7], %s416
        // Predicated region
        $region61: #{tpu_custom_call.1} parent=55 // pred_check
          %p418 = pneg %p80
        $region62: #{tpu_custom_call.1} parent=55 // pred_check_branch
          %420 = sbr.rel (%p418) target = $region64
        $region63: #{tpu_custom_call.1} parent=55 // pred_region
          %421 = dma.done %s414, 768
        $region64: #{tpu_custom_call.1} parent=55 // pred_fallthru
          _
        // Predicated region
        $region65: #{tpu_custom_call.1} parent=55 // pred_check
          %p422 = pneg %p127
        $region66: #{tpu_custom_call.1} parent=55 // pred_check_branch
          %424 = sbr.rel (%p422) target = $region68
        $region67: #{tpu_custom_call.1} parent=55 // pred_region
          %425 = dma.done [#allocation6], 256
        $region68: #{tpu_custom_call.1} parent=55 // pred_fallthru
          _
        // Predicated region
        $region69: #{tpu_custom_call.1} parent=55 // pred_check
          %p426 = pneg %p148
        $region70: #{tpu_custom_call.1} parent=55 // pred_check_branch
          %428 = sbr.rel (%p426) target = $region72
        $region71: #{tpu_custom_call.1} parent=55 // pred_region
          %429 = dma.done [#allocation11], 256
        $region72: #{tpu_custom_call.1} parent=55 // pred_fallthru
          _
        // Predicated region
        $region73: #{tpu_custom_call.1} parent=55 // pred_check
          %p430 = pneg %p169
        $region74: #{tpu_custom_call.1} parent=55 // pred_check_branch
          %432 = sbr.rel (%p430) target = $region76
        $region75: #{tpu_custom_call.1} parent=55 // pred_region
          %433 = dma.done [#allocation11], 16
        $region76: #{tpu_custom_call.1} parent=55 // pred_fallthru
          _
        // Predicated region
        $region77: #{tpu_custom_call.1} parent=55 // pred_check
          %p434 = pneg %p190
        $region78: #{tpu_custom_call.1} parent=55 // pred_check_branch
          %436 = sbr.rel (%p434) target = $region80
        $region79: #{tpu_custom_call.1} parent=55 // pred_region
          %437 = dma.done [#allocation14], 16
        $region80: #{tpu_custom_call.1} parent=55 // pred_fallthru
          _
        // Predicated region
        $region81: #{tpu_custom_call.1} parent=55 // pred_check
          %p438 = pneg %p211
        $region82: #{tpu_custom_call.1} parent=55 // pred_check_branch
          %440 = sbr.rel (%p438) target = $region84
        $region83: #{tpu_custom_call.1} parent=55 // pred_region
          %441 = dma.done [#allocation14], 16
        $region84: #{tpu_custom_call.1} parent=55 // pred_fallthru
          _
        // Predicated region
        $region85: #{tpu_custom_call.1} parent=55 // pred_check
          %p442 = pneg %p232
        $region86: #{tpu_custom_call.1} parent=55 // pred_check_branch
          %444 = sbr.rel (%p442) target = $region88
        $region87: #{tpu_custom_call.1} parent=55 // pred_region
          %445 = dma.done [#allocation17], 64
        $region88: #{tpu_custom_call.1} parent=55 // pred_fallthru
          _
        %446 = sfence
        %s447 = sand.u32 %s41, 1
        %s448 = scalar_lea.sflag [#allocation4], %s447
        %s449 = sand.u32 %s41, 1
        %s450 = smul.addr %s449, 64
        %s451 = scalar_lea.vmem [#allocation3], %s450
        %p452 = pneg %p54
        %p453 = pneg %p51
        %s454 = sand.u32 %s67, 1
        %s455 = scalar_lea.sflag [#allocation8], %s454
        %s456 = sand.u32 %s67, 1
        %s457 = smul.addr %s456, 48
        %s458 = scalar_lea.vmem [#allocation7], %s457
        %p459 = pneg %p80
        %p460 = pneg %p77
        %p461 = scmp.lt.s32.totalorder %s33, 1
        %s462 = scalar_select %p461, %s33, 1
        %s463 = smul.addr %s462, 2
        %s464 = smul.addr %s463, 8
        %s465 = scalar_lea.vmem %s2, %s464
        %p466 = pneg %p106
        %p467 = pneg %p103
        %p468 = pneg %p127
        %p469 = pneg %p124
        %p470 = pneg %p148
        %p471 = pneg %p145
        %p472 = pneg %p169
        %p473 = pneg %p166
        %p474 = pneg %p190
        %p475 = pneg %p187
        %p476 = pneg %p211
        %p477 = pneg %p208
        %p478 = pneg %p232
        %p479 = pneg %p229
        %p480 = pneg %p258
        %p481 = pneg %p255
        %s482 = sand.u32 %s245, 1
        %s483 = scalar_lea.sflag [#allocation5], %s482
        %s484 = sand.u32 %s245, 1
        %s485 = smul.addr %s484, 64
        %s486 = scalar_lea.vmem [#allocation18], %s485
        %p487 = scmp.lt.s32.totalorder %s33, 1
        %s488 = scalar_select %p487, %s33, 1
        %s489 = smul.addr %s488, 2
        %s490 = smul.addr %s489, 8
        %s491 = scalar_lea.vmem %s2, %s490
        %v492 = vlaneseq
        %v493 = vand.u32 %v492, 127
        %v494 = vadd.s32 %v493, 4294967294
        %vm495 = vcmp.ge.s32.totalorder %v494, 0
        %vm496 = vcmp.lt.s32.totalorder %v494, 128
        %vm497 = vmand %vm495, %vm496
        %v498 = vsel %vm497, 1, 0
        %v499 = vcvt.s32.f32 %v498
        %v500 = vadd.s32 %v493, 4294967295
        %vm501 = vcmp.ge.s32.totalorder %v500, 0
        %vm502 = vcmp.lt.s32.totalorder %v500, 128
        %vm503 = vmand %vm501, %vm502
        %v504 = vsel %vm503, 1, 0
        %v505 = vcvt.s32.f32 %v504
        %v506 = vadd.s32 %v493, 1
        %vm507 = vcmp.ge.s32.totalorder %v506, 0
        %vm508 = vcmp.lt.s32.totalorder %v506, 128
        %vm509 = vmand %vm507, %vm508
        %v510 = vsel %vm509, 1, 0
        %v511 = vcvt.s32.f32 %v510
        %v512 = vadd.s32 %v493, 2
        %vm513 = vcmp.ge.s32.totalorder %v512, 0
        %vm514 = vcmp.lt.s32.totalorder %v512, 128
        %vm515 = vmand %vm513, %vm514
        %v516 = vsel %vm515, 1, 0
        %v517 = vcvt.s32.f32 %v516
        %v518 = vld [vmem:[%s417] sm:$0xff]
        %v519 = vld [vmem:[%s417 + $0x8] sm:$0xff]
        %s520 = scalar_lea.vmem %s417, 16 [#allocation7]
        %v521 = vld [vmem:[%s520] sm:$0xff]
        %v522 = vld [vmem:[%s520 + $0x8] sm:$0xff]
        %s523 = scalar_lea.vmem %s417, 32 [#allocation7]
        %v524 = vld [vmem:[%s523] sm:$0xff]
        %v525 = vld [vmem:[%s523 + $0x8] sm:$0xff]
        %v526 = vld [vmem:[%s491] sm:$0xff]
        %v527 = vld [vmem:[%s491 + $0x8] sm:$0xff]
        %528 = vrot.lane.b32.xlu0 %v518, 2
        %v529 = vpop.permute.xlu0 %528
        %530 = vrot.lane.b32.xlu0 %v519, 2
        %v531 = vpop.permute.xlu0 %530
        %v532 = vmul.f32 %v529, %v499
        %v533 = vmul.f32 %v531, %v499
        %534 = vrot.lane.b32.xlu0 %v521, 2
        %v535 = vpop.permute.xlu0 %534
        %536 = vrot.lane.b32.xlu0 %v522, 2
        %v537 = vpop.permute.xlu0 %536
        %v538 = vmul.f32 %v535, %v499
        %v539 = vmul.f32 %v537, %v499
        %540 = vrot.lane.b32.xlu0 %v524, 2
        %v541 = vpop.permute.xlu0 %540
        %542 = vrot.lane.b32.xlu0 %v525, 2
        %v543 = vpop.permute.xlu0 %542
        %v544 = vmul.f32 %v541, %v499
        %v545 = vmul.f32 %v543, %v499
        %546 = vrot.lane.b32.xlu0 %v518, 1
        %v547 = vpop.permute.xlu0 %546
        %548 = vrot.lane.b32.xlu0 %v519, 1
        %v549 = vpop.permute.xlu0 %548
        %v550 = vmul.f32 %v547, %v505
        %v551 = vmul.f32 %v549, %v505
        %552 = vrot.lane.b32.xlu0 %v521, 1
        %v553 = vpop.permute.xlu0 %552
        %554 = vrot.lane.b32.xlu0 %v522, 1
        %v555 = vpop.permute.xlu0 %554
        %v556 = vmul.f32 %v553, %v505
        %v557 = vmul.f32 %v555, %v505
        %558 = vrot.lane.b32.xlu0 %v524, 1
        %v559 = vpop.permute.xlu0 %558
        %560 = vrot.lane.b32.xlu0 %v525, 1
        %v561 = vpop.permute.xlu0 %560
        %v562 = vmul.f32 %v559, %v505
        %v563 = vmul.f32 %v561, %v505
        %564 = vrot.lane.b32.xlu0 %v518, 127
        %v565 = vpop.permute.xlu0 %564
        %566 = vrot.lane.b32.xlu0 %v519, 127
        %v567 = vpop.permute.xlu0 %566
        %v568 = vmul.f32 %v565, %v511
        %v569 = vmul.f32 %v567, %v511
        %570 = vrot.lane.b32.xlu0 %v521, 127
        %v571 = vpop.permute.xlu0 %570
        %572 = vrot.lane.b32.xlu0 %v522, 127
        %v573 = vpop.permute.xlu0 %572
        %v574 = vmul.f32 %v571, %v511
        %v575 = vmul.f32 %v573, %v511
        %576 = vrot.lane.b32.xlu0 %v524, 127
        %v577 = vpop.permute.xlu0 %576
        %578 = vrot.lane.b32.xlu0 %v525, 127
        %v579 = vpop.permute.xlu0 %578
        %v580 = vmul.f32 %v577, %v511
        %v581 = vmul.f32 %v579, %v511
        %582 = vrot.lane.b32.xlu0 %v518, 126
        %v583 = vpop.permute.xlu0 %582
        %584 = vrot.lane.b32.xlu0 %v519, 126
        %v585 = vpop.permute.xlu0 %584
        %v586 = vmul.f32 %v583, %v517
        %v587 = vmul.f32 %v585, %v517
        %588 = vrot.lane.b32.xlu0 %v521, 126
        %v589 = vpop.permute.xlu0 %588
        %590 = vrot.lane.b32.xlu0 %v522, 126
        %v591 = vpop.permute.xlu0 %590
        %v592 = vmul.f32 %v589, %v517
        %v593 = vmul.f32 %v591, %v517
        %594 = vrot.lane.b32.xlu0 %v524, 126
        %v595 = vpop.permute.xlu0 %594
        %596 = vrot.lane.b32.xlu0 %v525, 126
        %v597 = vpop.permute.xlu0 %596
        %v598 = vmul.f32 %v595, %v517
        %v599 = vmul.f32 %v597, %v517
        %600 = vrot.lane.b32.xlu0 %v526, 2
        %v601 = vpop.permute.xlu0 %600
        %602 = vrot.lane.b32.xlu0 %v527, 2
        %v603 = vpop.permute.xlu0 %602
        %v604 = vmul.f32 %v601, %v499
        %v605 = vmul.f32 %v603, %v499
        %606 = vrot.lane.b32.xlu0 %v526, 1
        %v607 = vpop.permute.xlu0 %606
        %608 = vrot.lane.b32.xlu0 %v527, 1
        %v609 = vpop.permute.xlu0 %608
        %v610 = vmul.f32 %v607, %v505
        %v611 = vmul.f32 %v609, %v505
        %612 = vrot.lane.b32.xlu0 %v526, 127
        %v613 = vpop.permute.xlu0 %612
        %614 = vrot.lane.b32.xlu0 %v527, 127
        %v615 = vpop.permute.xlu0 %614
        %v616 = vmul.f32 %v613, %v511
        %v617 = vmul.f32 %v615, %v511
        %618 = vrot.lane.b32.xlu0 %v526, 126
        %v619 = vpop.permute.xlu0 %618
        %620 = vrot.lane.b32.xlu0 %v527, 126
        %v621 = vpop.permute.xlu0 %620
        %v622 = vmul.f32 %v619, %v517
        %v623 = vmul.f32 %v621, %v517
        %s624 = sld [smem:[#allocation15]]
        %vm627 = vcmask 1040384
        %v628 = vrot.slane %v604, 7
        %v629 = vrot.slane %v605, 7
        %v630 = vsel %vm627, %v628, %v629
        %v633 = vsel %vm627, 0.0, %v628
        %v636 = vrot.slane %v532, 7
        %v637 = vrot.slane %v533, 7
        %v638 = vsel %vm627, %v636, %v637
        %v641 = vsel %vm627, 0.0, %v636
        %v642 = vsub.f32 %v641, %v518
        %v643 = vsub.f32 %v638, %v519
        %v644 = vmul.f32 %v642, %v642
        %v645 = vmul.f32 %v643, %v643
        %v646 = vadd.f32 %v644, 0.0
        %v647 = vadd.f32 %v645, 0.0
        %v650 = vrot.slane %v538, 7
        %v651 = vrot.slane %v539, 7
        %v652 = vsel %vm627, %v650, %v651
        %v655 = vsel %vm627, 0.0, %v650
        %v656 = vsub.f32 %v655, %v521
        %v657 = vsub.f32 %v652, %v522
        %v658 = vmul.f32 %v656, %v656
        %v659 = vmul.f32 %v657, %v657
        %v660 = vadd.f32 %v646, %v658
        %v661 = vadd.f32 %v647, %v659
        %v664 = vrot.slane %v544, 7
        %v665 = vrot.slane %v545, 7
        %v666 = vsel %vm627, %v664, %v665
        %v669 = vsel %vm627, 0.0, %v664
        %v670 = vsub.f32 %v669, %v524
        %v671 = vsub.f32 %v666, %v525
        %v672 = vmul.f32 %v670, %v670
        %v673 = vmul.f32 %v671, %v671
        %v674 = vadd.f32 %v660, %v672
        %v675 = vadd.f32 %v661, %v673
        %v676 = vsub.f32 0.0, %v674
        %v677 = vsub.f32 0.0, %v675
        %v678 = vstv %s624
        %v679 = vmul.f32 %v676, %v678
        %v680 = vmul.f32 %v677, %v678
        %v681 = vmul.f32 %v679, 1.442695
        %v682 = vpow.pop %v681
        %v683 = vmul.f32 %v680, 1.442695
        %v684 = vpow.pop %v683
        %v685 = vmul.f32 %v682, %v633
        %v686 = vmul.f32 %v684, %v630
        %687 = vst [vmem:[#allocation2] sm:$0xff] %v685
        %688 = vst [vmem:[#allocation2 + $0x8] sm:$0xff] %v686
        %v691 = vrot.slane %v610, 7
        %v692 = vrot.slane %v611, 7
        %v693 = vsel %vm627, %v691, %v692
        %v696 = vsel %vm627, 0.0, %v691
        %v699 = vrot.slane %v550, 7
        %v700 = vrot.slane %v551, 7
        %v701 = vsel %vm627, %v699, %v700
        %v704 = vsel %vm627, 0.0, %v699
        %v705 = vsub.f32 %v704, %v518
        %v706 = vsub.f32 %v701, %v519
        %v707 = vmul.f32 %v705, %v705
        %v708 = vmul.f32 %v706, %v706
        %v709 = vadd.f32 %v707, 0.0
        %v710 = vadd.f32 %v708, 0.0
        %v713 = vrot.slane %v556, 7
        %v714 = vrot.slane %v557, 7
        %v715 = vsel %vm627, %v713, %v714
        %v718 = vsel %vm627, 0.0, %v713
        %v719 = vsub.f32 %v718, %v521
        %v720 = vsub.f32 %v715, %v522
        %v721 = vmul.f32 %v719, %v719
        %v722 = vmul.f32 %v720, %v720
        %v723 = vadd.f32 %v709, %v721
        %v724 = vadd.f32 %v710, %v722
        %v727 = vrot.slane %v562, 7
        %v728 = vrot.slane %v563, 7
        %v729 = vsel %vm627, %v727, %v728
        %v732 = vsel %vm627, 0.0, %v727
        %v733 = vsub.f32 %v732, %v524
        %v734 = vsub.f32 %v729, %v525
        %v735 = vmul.f32 %v733, %v733
        %v736 = vmul.f32 %v734, %v734
        %v737 = vadd.f32 %v723, %v735
        %v738 = vadd.f32 %v724, %v736
        %v739 = vsub.f32 0.0, %v737
        %v740 = vsub.f32 0.0, %v738
        %v741 = vmul.f32 %v739, %v678
        %v742 = vmul.f32 %v740, %v678
        %v743 = vmul.f32 %v741, 1.442695
        %v744 = vpow.pop %v743
        %v745 = vmul.f32 %v742, 1.442695
        %v746 = vpow.pop %v745
        %v747 = vmul.f32 %v744, %v696
        %v748 = vmul.f32 %v746, %v693
        %s749 = scalar_lea.vmem [#allocation2], 16
        %750 = vst [vmem:[%s749] sm:$0xff] %v747
        %751 = vst [vmem:[%s749 + $0x8] sm:$0xff] %v748
        %v754 = vrot.slane %v526, 7
        %v755 = vrot.slane %v527, 7
        %v756 = vsel %vm627, %v754, %v755
        %v759 = vsel %vm627, 0.0, %v754
        %v762 = vrot.slane %v518, 7
        %v763 = vrot.slane %v519, 7
        %v764 = vsel %vm627, %v762, %v763
        %v767 = vsel %vm627, 0.0, %v762
        %v768 = vsub.f32 %v767, %v518
        %v769 = vsub.f32 %v764, %v519
        %v770 = vmul.f32 %v768, %v768
        %v771 = vmul.f32 %v769, %v769
        %v772 = vadd.f32 %v770, 0.0
        %v773 = vadd.f32 %v771, 0.0
        %v776 = vrot.slane %v521, 7
        %v777 = vrot.slane %v522, 7
        %v778 = vsel %vm627, %v776, %v777
        %v781 = vsel %vm627, 0.0, %v776
        %v782 = vsub.f32 %v781, %v521
        %v783 = vsub.f32 %v778, %v522
        %v784 = vmul.f32 %v782, %v782
        %v785 = vmul.f32 %v783, %v783
        %v786 = vadd.f32 %v772, %v784
        %v787 = vadd.f32 %v773, %v785
        %v790 = vrot.slane %v524, 7
        %v791 = vrot.slane %v525, 7
        %v792 = vsel %vm627, %v790, %v791
        %v795 = vsel %vm627, 0.0, %v790
        %v796 = vsub.f32 %v795, %v524
        %v797 = vsub.f32 %v792, %v525
        %v798 = vmul.f32 %v796, %v796
        %v799 = vmul.f32 %v797, %v797
        %v800 = vadd.f32 %v786, %v798
        %v801 = vadd.f32 %v787, %v799
        %v802 = vsub.f32 0.0, %v800
        %v803 = vsub.f32 0.0, %v801
        %v804 = vmul.f32 %v802, %v678
        %v805 = vmul.f32 %v803, %v678
        %v806 = vmul.f32 %v804, 1.442695
        %v807 = vpow.pop %v806
        %v808 = vmul.f32 %v805, 1.442695
        %v809 = vpow.pop %v808
        %v810 = vmul.f32 %v807, %v759
        %v811 = vmul.f32 %v809, %v756
        %s812 = scalar_lea.vmem [#allocation2], 32
        %813 = vst [vmem:[%s812] sm:$0xff] %v810
        %814 = vst [vmem:[%s812 + $0x8] sm:$0xff] %v811
        %v817 = vrot.slane %v616, 7
        %v818 = vrot.slane %v617, 7
        %v819 = vsel %vm627, %v817, %v818
        %v822 = vsel %vm627, 0.0, %v817
        %v825 = vrot.slane %v568, 7
        %v826 = vrot.slane %v569, 7
        %v827 = vsel %vm627, %v825, %v826
        %v830 = vsel %vm627, 0.0, %v825
        %v831 = vsub.f32 %v830, %v518
        %v832 = vsub.f32 %v827, %v519
        %v833 = vmul.f32 %v831, %v831
        %v834 = vmul.f32 %v832, %v832
        %v835 = vadd.f32 %v833, 0.0
        %v836 = vadd.f32 %v834, 0.0
        %v839 = vrot.slane %v574, 7
        %v840 = vrot.slane %v575, 7
        %v841 = vsel %vm627, %v839, %v840
        %v844 = vsel %vm627, 0.0, %v839
        %v845 = vsub.f32 %v844, %v521
        %v846 = vsub.f32 %v841, %v522
        %v847 = vmul.f32 %v845, %v845
        %v848 = vmul.f32 %v846, %v846
        %v849 = vadd.f32 %v835, %v847
        %v850 = vadd.f32 %v836, %v848
        %v853 = vrot.slane %v580, 7
        %v854 = vrot.slane %v581, 7
        %v855 = vsel %vm627, %v853, %v854
        %v858 = vsel %vm627, 0.0, %v853
        %v859 = vsub.f32 %v858, %v524
        %v860 = vsub.f32 %v855, %v525
        %v861 = vmul.f32 %v859, %v859
        %v862 = vmul.f32 %v860, %v860
        %v863 = vadd.f32 %v849, %v861
        %v864 = vadd.f32 %v850, %v862
        %v865 = vsub.f32 0.0, %v863
        %v866 = vsub.f32 0.0, %v864
        %v867 = vmul.f32 %v865, %v678
        %v868 = vmul.f32 %v866, %v678
        %v869 = vmul.f32 %v867, 1.442695
        %v870 = vpow.pop %v869
        %v871 = vmul.f32 %v868, 1.442695
        %v872 = vpow.pop %v871
        %v873 = vmul.f32 %v870, %v822
        %v874 = vmul.f32 %v872, %v819
        %s875 = scalar_lea.vmem [#allocation2], 48
        %876 = vst [vmem:[%s875] sm:$0xff] %v873
        %877 = vst [vmem:[%s875 + $0x8] sm:$0xff] %v874
        %v880 = vrot.slane %v622, 7
        %v881 = vrot.slane %v623, 7
        %v882 = vsel %vm627, %v880, %v881
        %v885 = vsel %vm627, 0.0, %v880
        %v888 = vrot.slane %v586, 7
        %v889 = vrot.slane %v587, 7
        %v890 = vsel %vm627, %v888, %v889
        %v893 = vsel %vm627, 0.0, %v888
        %v894 = vsub.f32 %v893, %v518
        %v895 = vsub.f32 %v890, %v519
        %v896 = vmul.f32 %v894, %v894
        %v897 = vmul.f32 %v895, %v895
        %v898 = vadd.f32 %v896, 0.0
        %v899 = vadd.f32 %v897, 0.0
        %v902 = vrot.slane %v592, 7
        %v903 = vrot.slane %v593, 7
        %v904 = vsel %vm627, %v902, %v903
        %v907 = vsel %vm627, 0.0, %v902
        %v908 = vsub.f32 %v907, %v521
        %v909 = vsub.f32 %v904, %v522
        %v910 = vmul.f32 %v908, %v908
        %v911 = vmul.f32 %v909, %v909
        %v912 = vadd.f32 %v898, %v910
        %v913 = vadd.f32 %v899, %v911
        %v916 = vrot.slane %v598, 7
        %v917 = vrot.slane %v599, 7
        %v918 = vsel %vm627, %v916, %v917
        %v921 = vsel %vm627, 0.0, %v916
        %v922 = vsub.f32 %v921, %v524
        %v923 = vsub.f32 %v918, %v525
        %v924 = vmul.f32 %v922, %v922
        %v925 = vmul.f32 %v923, %v923
        %v926 = vadd.f32 %v912, %v924
        %v927 = vadd.f32 %v913, %v925
        %v928 = vsub.f32 0.0, %v926
        %v929 = vsub.f32 0.0, %v927
        %v930 = vmul.f32 %v928, %v678
        %v931 = vmul.f32 %v929, %v678
        %v932 = vmul.f32 %v930, 1.442695
        %v933 = vpow.pop %v932
        %v934 = vmul.f32 %v931, 1.442695
        %v935 = vpow.pop %v934
        %v936 = vmul.f32 %v933, %v885
        %v937 = vmul.f32 %v935, %v882
        %s938 = scalar_lea.vmem [#allocation2], 64
        %939 = vst [vmem:[%s938] sm:$0xff] %v936
        %940 = vst [vmem:[%s938 + $0x8] sm:$0xff] %v937
        %v941 = vsub.f32 %v532, %v518
        %v942 = vsub.f32 %v533, %v519
        %v943 = vmul.f32 %v941, %v941
        %v944 = vmul.f32 %v942, %v942
        %v945 = vadd.f32 %v943, 0.0
        %v946 = vadd.f32 %v944, 0.0
        %v947 = vsub.f32 %v538, %v521
        %v948 = vsub.f32 %v539, %v522
        %v949 = vmul.f32 %v947, %v947
        %v950 = vmul.f32 %v948, %v948
        %v951 = vadd.f32 %v945, %v949
        %v952 = vadd.f32 %v946, %v950
        %v953 = vsub.f32 %v544, %v524
        %v954 = vsub.f32 %v545, %v525
        %v955 = vmul.f32 %v953, %v953
        %v956 = vmul.f32 %v954, %v954
        %v957 = vadd.f32 %v951, %v955
        %v958 = vadd.f32 %v952, %v956
        %v959 = vsub.f32 0.0, %v957
        %v960 = vsub.f32 0.0, %v958
        %v961 = vmul.f32 %v959, %v678
        %v962 = vmul.f32 %v960, %v678
        %v963 = vmul.f32 %v961, 1.442695
        %v964 = vpow.pop %v963
        %v965 = vmul.f32 %v962, 1.442695
        %v966 = vpow.pop %v965
        %v967 = vmul.f32 %v964, %v604
        %v968 = vmul.f32 %v966, %v605
        %s969 = scalar_lea.vmem [#allocation2], 80
        %970 = vst [vmem:[%s969] sm:$0xff] %v967
        %971 = vst [vmem:[%s969 + $0x8] sm:$0xff] %v968
        %v972 = vsub.f32 %v550, %v518
        %v973 = vsub.f32 %v551, %v519
        %v974 = vmul.f32 %v972, %v972
        %v975 = vmul.f32 %v973, %v973
        %v976 = vadd.f32 %v974, 0.0
        %v977 = vadd.f32 %v975, 0.0
        %v978 = vsub.f32 %v556, %v521
        %v979 = vsub.f32 %v557, %v522
        %v980 = vmul.f32 %v978, %v978
        %v981 = vmul.f32 %v979, %v979
        %v982 = vadd.f32 %v976, %v980
        %v983 = vadd.f32 %v977, %v981
        %v984 = vsub.f32 %v562, %v524
        %v985 = vsub.f32 %v563, %v525
        %v986 = vmul.f32 %v984, %v984
        %v987 = vmul.f32 %v985, %v985
        %v988 = vadd.f32 %v982, %v986
        %v989 = vadd.f32 %v983, %v987
        %v990 = vsub.f32 0.0, %v988
        %v991 = vsub.f32 0.0, %v989
        %v992 = vmul.f32 %v990, %v678
        %v993 = vmul.f32 %v991, %v678
        %v994 = vmul.f32 %v992, 1.442695
        %v995 = vpow.pop %v994
        %v996 = vmul.f32 %v993, 1.442695
        %v997 = vpow.pop %v996
        %v998 = vmul.f32 %v995, %v610
        %v999 = vmul.f32 %v997, %v611
        %s1000 = scalar_lea.vmem [#allocation2], 96
        %1001 = vst [vmem:[%s1000] sm:$0xff] %v998
        %1002 = vst [vmem:[%s1000 + $0x8] sm:$0xff] %v999
        %v1003 = vsub.f32 %v568, %v518
        %v1004 = vsub.f32 %v569, %v519
        %v1005 = vmul.f32 %v1003, %v1003
        %v1006 = vmul.f32 %v1004, %v1004
        %v1007 = vadd.f32 %v1005, 0.0
        %v1008 = vadd.f32 %v1006, 0.0
        %v1009 = vsub.f32 %v574, %v521
        %v1010 = vsub.f32 %v575, %v522
        %v1011 = vmul.f32 %v1009, %v1009
        %v1012 = vmul.f32 %v1010, %v1010
        %v1013 = vadd.f32 %v1007, %v1011
        %v1014 = vadd.f32 %v1008, %v1012
        %v1015 = vsub.f32 %v580, %v524
        %v1016 = vsub.f32 %v581, %v525
        %v1017 = vmul.f32 %v1015, %v1015
        %v1018 = vmul.f32 %v1016, %v1016
        %v1019 = vadd.f32 %v1013, %v1017
        %v1020 = vadd.f32 %v1014, %v1018
        %v1021 = vsub.f32 0.0, %v1019
        %v1022 = vsub.f32 0.0, %v1020
        %v1023 = vmul.f32 %v1021, %v678
        %v1024 = vmul.f32 %v1022, %v678
        %v1025 = vmul.f32 %v1023, 1.442695
        %v1026 = vpow.pop %v1025
        %v1027 = vmul.f32 %v1024, 1.442695
        %v1028 = vpow.pop %v1027
        %v1029 = vmul.f32 %v1026, %v616
        %v1030 = vmul.f32 %v1028, %v617
        %s1031 = scalar_lea.vmem [#allocation2], 112
        %1032 = vst [vmem:[%s1031] sm:$0xff] %v1029
        %1033 = vst [vmem:[%s1031 + $0x8] sm:$0xff] %v1030
        %v1034 = vsub.f32 %v586, %v518
        %v1035 = vsub.f32 %v587, %v519
        %v1036 = vmul.f32 %v1034, %v1034
        %v1037 = vmul.f32 %v1035, %v1035
        %v1038 = vadd.f32 %v1036, 0.0
        %v1039 = vadd.f32 %v1037, 0.0
        %v1040 = vsub.f32 %v592, %v521
        %v1041 = vsub.f32 %v593, %v522
        %v1042 = vmul.f32 %v1040, %v1040
        %v1043 = vmul.f32 %v1041, %v1041
        %v1044 = vadd.f32 %v1038, %v1042
        %v1045 = vadd.f32 %v1039, %v1043
        %v1046 = vsub.f32 %v598, %v524
        %v1047 = vsub.f32 %v599, %v525
        %v1048 = vmul.f32 %v1046, %v1046
        %v1049 = vmul.f32 %v1047, %v1047
        %v1050 = vadd.f32 %v1044, %v1048
        %v1051 = vadd.f32 %v1045, %v1049
        %v1052 = vsub.f32 0.0, %v1050
        %v1053 = vsub.f32 0.0, %v1051
        %v1054 = vmul.f32 %v1052, %v678
        %v1055 = vmul.f32 %v1053, %v678
        %v1056 = vmul.f32 %v1054, 1.442695
        %v1057 = vpow.pop %v1056
        %v1058 = vmul.f32 %v1055, 1.442695
        %v1059 = vpow.pop %v1058
        %v1060 = vmul.f32 %v1057, %v622
        %v1061 = vmul.f32 %v1059, %v623
        %s1062 = scalar_lea.vmem [#allocation2], 128
        %1063 = vst [vmem:[%s1062] sm:$0xff] %v1060
        %1064 = vst [vmem:[%s1062 + $0x8] sm:$0xff] %v1061
        %vm1065 = vcmask 1046528
        %v1066 = vrot.slane %v604, 1
        %v1067 = vrot.slane %v605, 1
        %v1068 = vsel %vm1065, %v1066, %v1067
        %v1071 = vsel %vm1065, %v1067, 0.0
        %v1072 = vrot.slane %v532, 1
        %v1073 = vrot.slane %v533, 1
        %v1074 = vsel %vm1065, %v1072, %v1073
        %v1077 = vsel %vm1065, %v1073, 0.0
        %v1078 = vsub.f32 %v1074, %v518
        %v1079 = vsub.f32 %v1077, %v519
        %v1080 = vmul.f32 %v1078, %v1078
        %v1081 = vmul.f32 %v1079, %v1079
        %v1082 = vadd.f32 %v1080, 0.0
        %v1083 = vadd.f32 %v1081, 0.0
        %v1084 = vrot.slane %v538, 1
        %v1085 = vrot.slane %v539, 1
        %v1086 = vsel %vm1065, %v1084, %v1085
        %v1089 = vsel %vm1065, %v1085, 0.0
        %v1090 = vsub.f32 %v1086, %v521
        %v1091 = vsub.f32 %v1089, %v522
        %v1092 = vmul.f32 %v1090, %v1090
        %v1093 = vmul.f32 %v1091, %v1091
        %v1094 = vadd.f32 %v1082, %v1092
        %v1095 = vadd.f32 %v1083, %v1093
        %v1096 = vrot.slane %v544, 1
        %v1097 = vrot.slane %v545, 1
        %v1098 = vsel %vm1065, %v1096, %v1097
        %v1101 = vsel %vm1065, %v1097, 0.0
        %v1102 = vsub.f32 %v1098, %v524
        %v1103 = vsub.f32 %v1101, %v525
        %v1104 = vmul.f32 %v1102, %v1102
        %v1105 = vmul.f32 %v1103, %v1103
        %v1106 = vadd.f32 %v1094, %v1104
        %v1107 = vadd.f32 %v1095, %v1105
        %v1108 = vsub.f32 0.0, %v1106
        %v1109 = vsub.f32 0.0, %v1107
        %v1110 = vmul.f32 %v1108, %v678
        %v1111 = vmul.f32 %v1109, %v678
        %v1112 = vmul.f32 %v1110, 1.442695
        %v1113 = vpow.pop %v1112
        %v1114 = vmul.f32 %v1111, 1.442695
        %v1115 = vpow.pop %v1114
        %v1116 = vmul.f32 %v1113, %v1068
        %v1117 = vmul.f32 %v1115, %v1071
        %s1118 = scalar_lea.vmem [#allocation2], 144
        %1119 = vst [vmem:[%s1118] sm:$0xff] %v1116
        %1120 = vst [vmem:[%s1118 + $0x8] sm:$0xff] %v1117
        %v1121 = vrot.slane %v610, 1
        %v1122 = vrot.slane %v611, 1
        %v1123 = vsel %vm1065, %v1121, %v1122
        %v1126 = vsel %vm1065, %v1122, 0.0
        %v1127 = vrot.slane %v550, 1
        %v1128 = vrot.slane %v551, 1
        %v1129 = vsel %vm1065, %v1127, %v1128
        %v1132 = vsel %vm1065, %v1128, 0.0
        %v1133 = vsub.f32 %v1129, %v518
        %v1134 = vsub.f32 %v1132, %v519
        %v1135 = vmul.f32 %v1133, %v1133
        %v1136 = vmul.f32 %v1134, %v1134
        %v1137 = vadd.f32 %v1135, 0.0
        %v1138 = vadd.f32 %v1136, 0.0
        %v1139 = vrot.slane %v556, 1
        %v1140 = vrot.slane %v557, 1
        %v1141 = vsel %vm1065, %v1139, %v1140
        %v1144 = vsel %vm1065, %v1140, 0.0
        %v1145 = vsub.f32 %v1141, %v521
        %v1146 = vsub.f32 %v1144, %v522
        %v1147 = vmul.f32 %v1145, %v1145
        %v1148 = vmul.f32 %v1146, %v1146
        %v1149 = vadd.f32 %v1137, %v1147
        %v1150 = vadd.f32 %v1138, %v1148
        %v1151 = vrot.slane %v562, 1
        %v1152 = vrot.slane %v563, 1
        %v1153 = vsel %vm1065, %v1151, %v1152
        %v1156 = vsel %vm1065, %v1152, 0.0
        %v1157 = vsub.f32 %v1153, %v524
        %v1158 = vsub.f32 %v1156, %v525
        %v1159 = vmul.f32 %v1157, %v1157
        %v1160 = vmul.f32 %v1158, %v1158
        %v1161 = vadd.f32 %v1149, %v1159
        %v1162 = vadd.f32 %v1150, %v1160
        %v1163 = vsub.f32 0.0, %v1161
        %v1164 = vsub.f32 0.0, %v1162
        %v1165 = vmul.f32 %v1163, %v678
        %v1166 = vmul.f32 %v1164, %v678
        %v1167 = vmul.f32 %v1165, 1.442695
        %v1168 = vpow.pop %v1167
        %v1169 = vmul.f32 %v1166, 1.442695
        %v1170 = vpow.pop %v1169
        %v1171 = vmul.f32 %v1168, %v1123
        %v1172 = vmul.f32 %v1170, %v1126
        %s1173 = scalar_lea.vmem [#allocation2], 160
        %1174 = vst [vmem:[%s1173] sm:$0xff] %v1171
        %1175 = vst [vmem:[%s1173 + $0x8] sm:$0xff] %v1172
        %v1176 = vrot.slane %v526, 1
        %v1177 = vrot.slane %v527, 1
        %v1178 = vsel %vm1065, %v1176, %v1177
        %v1181 = vsel %vm1065, %v1177, 0.0
        %v1182 = vrot.slane %v518, 1
        %v1183 = vrot.slane %v519, 1
        %v1184 = vsel %vm1065, %v1182, %v1183
        %v1187 = vsel %vm1065, %v1183, 0.0
        %v1188 = vsub.f32 %v1184, %v518
        %v1189 = vsub.f32 %v1187, %v519
        %v1190 = vmul.f32 %v1188, %v1188
        %v1191 = vmul.f32 %v1189, %v1189
        %v1192 = vadd.f32 %v1190, 0.0
        %v1193 = vadd.f32 %v1191, 0.0
        %v1194 = vrot.slane %v521, 1
        %v1195 = vrot.slane %v522, 1
        %v1196 = vsel %vm1065, %v1194, %v1195
        %v1199 = vsel %vm1065, %v1195, 0.0
        %v1200 = vsub.f32 %v1196, %v521
        %v1201 = vsub.f32 %v1199, %v522
        %v1202 = vmul.f32 %v1200, %v1200
        %v1203 = vmul.f32 %v1201, %v1201
        %v1204 = vadd.f32 %v1192, %v1202
        %v1205 = vadd.f32 %v1193, %v1203
        %v1206 = vrot.slane %v524, 1
        %v1207 = vrot.slane %v525, 1
        %v1208 = vsel %vm1065, %v1206, %v1207
        %v1211 = vsel %vm1065, %v1207, 0.0
        %v1212 = vsub.f32 %v1208, %v524
        %v1213 = vsub.f32 %v1211, %v525
        %v1214 = vmul.f32 %v1212, %v1212
        %v1215 = vmul.f32 %v1213, %v1213
        %v1216 = vadd.f32 %v1204, %v1214
        %v1217 = vadd.f32 %v1205, %v1215
        %v1218 = vsub.f32 0.0, %v1216
        %v1219 = vsub.f32 0.0, %v1217
        %v1220 = vmul.f32 %v1218, %v678
        %v1221 = vmul.f32 %v1219, %v678
        %v1222 = vmul.f32 %v1220, 1.442695
        %v1223 = vpow.pop %v1222
        %v1224 = vmul.f32 %v1221, 1.442695
        %v1225 = vpow.pop %v1224
        %v1226 = vmul.f32 %v1223, %v1178
        %v1227 = vmul.f32 %v1225, %v1181
        %s1228 = scalar_lea.vmem [#allocation2], 176
        %1229 = vst [vmem:[%s1228] sm:$0xff] %v1226
        %1230 = vst [vmem:[%s1228 + $0x8] sm:$0xff] %v1227
        %v1231 = vrot.slane %v616, 1
        %v1232 = vrot.slane %v617, 1
        %v1233 = vsel %vm1065, %v1231, %v1232
        %v1236 = vsel %vm1065, %v1232, 0.0
        %v1237 = vrot.slane %v568, 1
        %v1238 = vrot.slane %v569, 1
        %v1239 = vsel %vm1065, %v1237, %v1238
        %v1242 = vsel %vm1065, %v1238, 0.0
        %v1243 = vsub.f32 %v1239, %v518
        %v1244 = vsub.f32 %v1242, %v519
        %v1245 = vmul.f32 %v1243, %v1243
        %v1246 = vmul.f32 %v1244, %v1244
        %v1247 = vadd.f32 %v1245, 0.0
        %v1248 = vadd.f32 %v1246, 0.0
        %v1249 = vrot.slane %v574, 1
        %v1250 = vrot.slane %v575, 1
        %v1251 = vsel %vm1065, %v1249, %v1250
        %v1254 = vsel %vm1065, %v1250, 0.0
        %v1255 = vsub.f32 %v1251, %v521
        %v1256 = vsub.f32 %v1254, %v522
        %v1257 = vmul.f32 %v1255, %v1255
        %v1258 = vmul.f32 %v1256, %v1256
        %v1259 = vadd.f32 %v1247, %v1257
        %v1260 = vadd.f32 %v1248, %v1258
        %v1261 = vrot.slane %v580, 1
        %v1262 = vrot.slane %v581, 1
        %v1263 = vsel %vm1065, %v1261, %v1262
        %v1266 = vsel %vm1065, %v1262, 0.0
        %v1267 = vsub.f32 %v1263, %v524
        %v1268 = vsub.f32 %v1266, %v525
        %v1269 = vmul.f32 %v1267, %v1267
        %v1270 = vmul.f32 %v1268, %v1268
        %v1271 = vadd.f32 %v1259, %v1269
        %v1272 = vadd.f32 %v1260, %v1270
        %v1273 = vsub.f32 0.0, %v1271
        %v1274 = vsub.f32 0.0, %v1272
        %v1275 = vmul.f32 %v1273, %v678
        %v1276 = vmul.f32 %v1274, %v678
        %v1277 = vmul.f32 %v1275, 1.442695
        %v1278 = vpow.pop %v1277
        %v1279 = vmul.f32 %v1276, 1.442695
        %v1280 = vpow.pop %v1279
        %v1281 = vmul.f32 %v1278, %v1233
        %v1282 = vmul.f32 %v1280, %v1236
        %s1283 = scalar_lea.vmem [#allocation2], 192
        %1284 = vst [vmem:[%s1283] sm:$0xff] %v1281
        %1285 = vst [vmem:[%s1283 + $0x8] sm:$0xff] %v1282
        %v1286 = vrot.slane %v622, 1
        %v1287 = vrot.slane %v623, 1
        %v1288 = vsel %vm1065, %v1286, %v1287
        %v1291 = vsel %vm1065, %v1287, 0.0
        %v1292 = vrot.slane %v586, 1
        %v1293 = vrot.slane %v587, 1
        %v1294 = vsel %vm1065, %v1292, %v1293
        %v1297 = vsel %vm1065, %v1293, 0.0
        %v1298 = vsub.f32 %v1294, %v518
        %v1299 = vsub.f32 %v1297, %v519
        %v1300 = vmul.f32 %v1298, %v1298
        %v1301 = vmul.f32 %v1299, %v1299
        %v1302 = vadd.f32 %v1300, 0.0
        %v1303 = vadd.f32 %v1301, 0.0
        %v1304 = vrot.slane %v592, 1
        %v1305 = vrot.slane %v593, 1
        %v1306 = vsel %vm1065, %v1304, %v1305
        %v1309 = vsel %vm1065, %v1305, 0.0
        %v1310 = vsub.f32 %v1306, %v521
        %v1311 = vsub.f32 %v1309, %v522
        %v1312 = vmul.f32 %v1310, %v1310
        %v1313 = vmul.f32 %v1311, %v1311
        %v1314 = vadd.f32 %v1302, %v1312
        %v1315 = vadd.f32 %v1303, %v1313
        %v1316 = vrot.slane %v598, 1
        %v1317 = vrot.slane %v599, 1
        %v1318 = vsel %vm1065, %v1316, %v1317
        %v1321 = vsel %vm1065, %v1317, 0.0
        %v1322 = vsub.f32 %v1318, %v524
        %v1323 = vsub.f32 %v1321, %v525
        %v1324 = vmul.f32 %v1322, %v1322
        %v1325 = vmul.f32 %v1323, %v1323
        %v1326 = vadd.f32 %v1314, %v1324
        %v1327 = vadd.f32 %v1315, %v1325
        %v1328 = vsub.f32 0.0, %v1326
        %v1329 = vsub.f32 0.0, %v1327
        %v1330 = vmul.f32 %v1328, %v678
        %v1331 = vmul.f32 %v1329, %v678
        %v1332 = vmul.f32 %v1330, 1.442695
        %v1333 = vpow.pop %v1332
        %v1334 = vmul.f32 %v1331, 1.442695
        %v1335 = vpow.pop %v1334
        %v1336 = vmul.f32 %v1333, %v1288
        %v1337 = vmul.f32 %v1335, %v1291
        %s1338 = scalar_lea.vmem [#allocation2], 208
        %1339 = vst [vmem:[%s1338] sm:$0xff] %v1336
        %1340 = vst [vmem:[%s1338 + $0x8] sm:$0xff] %v1337
        %v1341 = vld [vmem:[%s408] sm:$0xff]
        %v1342 = vld [vmem:[%s408 + $0x8] sm:$0xff]
        %s1343 = scalar_lea.vmem %s408, 16 [#allocation3]
        %v1344 = vld [vmem:[%s1343] sm:$0xff]
        %v1345 = vld [vmem:[%s1343 + $0x8] sm:$0xff]
        %v1346 = vmax.f32 %v1341, %v1344
        %v1347 = vmax.f32 %v1342, %v1345
        %s1348 = scalar_lea.vmem %s408, 32 [#allocation3]
        %v1349 = vld [vmem:[%s1348] sm:$0xff]
        %v1350 = vld [vmem:[%s1348 + $0x8] sm:$0xff]
        %v1351 = vmax.f32 %v1346, %v1349
        %v1352 = vmax.f32 %v1347, %v1350
        %s1353 = scalar_lea.vmem %s408, 48 [#allocation3]
        %v1354 = vld [vmem:[%s1353] sm:$0xff]
        %v1355 = vld [vmem:[%s1353 + $0x8] sm:$0xff]
        %v1356 = vmax.f32 %v1351, %v1354
        %v1357 = vmax.f32 %v1352, %v1355
        %v1358 = vsub.f32 %v1341, %v1356
        %v1359 = vsub.f32 %v1342, %v1357
        %v1360 = vmul.f32 %v1358, 1.442695
        %v1361 = vpow.pop %v1360
        %v1362 = vmul.f32 %v1359, 1.442695
        %v1363 = vpow.pop %v1362
        %v1364 = vsub.f32 %v1344, %v1356
        %v1365 = vsub.f32 %v1345, %v1357
        %v1366 = vmul.f32 %v1364, 1.442695
        %v1367 = vpow.pop %v1366
        %v1368 = vmul.f32 %v1365, 1.442695
        %v1369 = vpow.pop %v1368
        %v1370 = vadd.f32 %v1361, %v1367
        %v1371 = vadd.f32 %v1363, %v1369
        %v1372 = vsub.f32 %v1349, %v1356
        %v1373 = vsub.f32 %v1350, %v1357
        %v1374 = vmul.f32 %v1372, 1.442695
        %v1375 = vpow.pop %v1374
        %v1376 = vmul.f32 %v1373, 1.442695
        %v1377 = vpow.pop %v1376
        %v1378 = vadd.f32 %v1370, %v1375
        %v1379 = vadd.f32 %v1371, %v1377
        %v1380 = vsub.f32 %v1354, %v1356
        %v1381 = vsub.f32 %v1355, %v1357
        %v1382 = vmul.f32 %v1380, 1.442695
        %v1383 = vpow.pop %v1382
        %v1384 = vmul.f32 %v1381, 1.442695
        %v1385 = vpow.pop %v1384
        %v1386 = vadd.f32 %v1378, %v1383
        %v1387 = vadd.f32 %v1379, %v1385
        %v1388 = vrcp.pop %v1386
        %v1389 = vmul.f32 1.0, %v1388
        %v1390 = vrcp.pop %v1387
        %v1391 = vmul.f32 1.0, %v1390
        %v1392 = vmul.f32 %v1361, %v1389
        %v1393 = vmul.f32 %v1363, %v1391
        %1394 = vrot.lane.b32.xlu0 %v1392, 2
        %v1395 = vpop.permute.xlu0 %1394
        %1396 = vrot.lane.b32.xlu0 %v1393, 2
        %v1397 = vpop.permute.xlu0 %1396
        %v1398 = vmul.f32 %v1395, %v499
        %v1399 = vmul.f32 %v1397, %v499
        %1400 = vrot.lane.b32.xlu0 %v1392, 1
        %v1401 = vpop.permute.xlu0 %1400
        %1402 = vrot.lane.b32.xlu0 %v1393, 1
        %v1403 = vpop.permute.xlu0 %1402
        %v1404 = vmul.f32 %v1401, %v505
        %v1405 = vmul.f32 %v1403, %v505
        %1406 = vrot.lane.b32.xlu0 %v1392, 127
        %v1407 = vpop.permute.xlu0 %1406
        %1408 = vrot.lane.b32.xlu0 %v1393, 127
        %v1409 = vpop.permute.xlu0 %1408
        %v1410 = vmul.f32 %v1407, %v511
        %v1411 = vmul.f32 %v1409, %v511
        %1412 = vrot.lane.b32.xlu0 %v1392, 126
        %v1413 = vpop.permute.xlu0 %1412
        %1414 = vrot.lane.b32.xlu0 %v1393, 126
        %v1415 = vpop.permute.xlu0 %1414
        %v1416 = vmul.f32 %v1413, %v517
        %v1417 = vmul.f32 %v1415, %v517
        %v1420 = vrot.slane %v1398, 7
        %v1421 = vrot.slane %v1399, 7
        %v1422 = vsel %vm627, %v1420, %v1421
        %v1425 = vsel %vm627, 0.0, %v1420
        %s1426 = sld [smem:[#allocation9]]
        %v1427 = vstv %s1426
        %v1428 = vmul.f32 %v1427, %v1425
        %v1429 = vmul.f32 %v1427, %v1422
        %v1430 = vadd.f32 %v1428, 0.0
        %v1431 = vadd.f32 %v1429, 0.0
        %v1432 = vld [vmem:[#allocation2] sm:$0xff]
        %v1433 = vld [vmem:[#allocation2 + $0x8] sm:$0xff]
        %v1434 = vmul.f32 %v1432, %v1425
        %v1435 = vmul.f32 %v1433, %v1422
        %v1436 = vadd.f32 %v1434, 0.0
        %v1437 = vadd.f32 %v1435, 0.0
        %v1440 = vrot.slane %v1404, 7
        %v1441 = vrot.slane %v1405, 7
        %v1442 = vsel %vm627, %v1440, %v1441
        %v1445 = vsel %vm627, 0.0, %v1440
        %s1446 = sld [smem:[#allocation9 + $0x80]]
        %v1447 = vstv %s1446
        %v1448 = vmul.f32 %v1447, %v1445
        %v1449 = vmul.f32 %v1447, %v1442
        %v1450 = vadd.f32 %v1430, %v1448
        %v1451 = vadd.f32 %v1431, %v1449
        %v1452 = vld [vmem:[%s749] sm:$0xff]
        %v1453 = vld [vmem:[%s749 + $0x8] sm:$0xff]
        %v1454 = vmul.f32 %v1452, %v1445
        %v1455 = vmul.f32 %v1453, %v1442
        %v1456 = vadd.f32 %v1436, %v1454
        %v1457 = vadd.f32 %v1437, %v1455
        %v1460 = vrot.slane %v1392, 7
        %v1461 = vrot.slane %v1393, 7
        %v1462 = vsel %vm627, %v1460, %v1461
        %v1465 = vsel %vm627, 0.0, %v1460
        %s1466 = sld [smem:[#allocation9 + $0x100]]
        %v1467 = vstv %s1466
        %v1468 = vmul.f32 %v1467, %v1465
        %v1469 = vmul.f32 %v1467, %v1462
        %v1470 = vadd.f32 %v1450, %v1468
        %v1471 = vadd.f32 %v1451, %v1469
        %v1472 = vld [vmem:[%s812] sm:$0xff]
        %v1473 = vld [vmem:[%s812 + $0x8] sm:$0xff]
        %v1474 = vmul.f32 %v1472, %v1465
        %v1475 = vmul.f32 %v1473, %v1462
        %v1476 = vadd.f32 %v1456, %v1474
        %v1477 = vadd.f32 %v1457, %v1475
        %v1480 = vrot.slane %v1410, 7
        %v1481 = vrot.slane %v1411, 7
        %v1482 = vsel %vm627, %v1480, %v1481
        %v1485 = vsel %vm627, 0.0, %v1480
        %s1486 = sld [smem:[#allocation9 + $0x180]]
        %v1487 = vstv %s1486
        %v1488 = vmul.f32 %v1487, %v1485
        %v1489 = vmul.f32 %v1487, %v1482
        %v1490 = vadd.f32 %v1470, %v1488
        %v1491 = vadd.f32 %v1471, %v1489
        %v1492 = vld [vmem:[%s875] sm:$0xff]
        %v1493 = vld [vmem:[%s875 + $0x8] sm:$0xff]
        %v1494 = vmul.f32 %v1492, %v1485
        %v1495 = vmul.f32 %v1493, %v1482
        %v1496 = vadd.f32 %v1476, %v1494
        %v1497 = vadd.f32 %v1477, %v1495
        %v1500 = vrot.slane %v1416, 7
        %v1501 = vrot.slane %v1417, 7
        %v1502 = vsel %vm627, %v1500, %v1501
        %v1505 = vsel %vm627, 0.0, %v1500
        %s1506 = sld [smem:[#allocation9 + $0x200]]
        %v1507 = vstv %s1506
        %v1508 = vmul.f32 %v1507, %v1505
        %v1509 = vmul.f32 %v1507, %v1502
        %v1510 = vadd.f32 %v1490, %v1508
        %v1511 = vadd.f32 %v1491, %v1509
        %v1512 = vld [vmem:[%s938] sm:$0xff]
        %v1513 = vld [vmem:[%s938 + $0x8] sm:$0xff]
        %v1514 = vmul.f32 %v1512, %v1505
        %v1515 = vmul.f32 %v1513, %v1502
        %v1516 = vadd.f32 %v1496, %v1514
        %v1517 = vadd.f32 %v1497, %v1515
        %s1518 = sld [smem:[#allocation9 + $0x280]]
        %v1519 = vstv %s1518
        %v1520 = vmul.f32 %v1519, %v1398
        %v1521 = vmul.f32 %v1519, %v1399
        %v1522 = vadd.f32 %v1510, %v1520
        %v1523 = vadd.f32 %v1511, %v1521
        %v1524 = vld [vmem:[%s969] sm:$0xff]
        %v1525 = vld [vmem:[%s969 + $0x8] sm:$0xff]
        %v1526 = vmul.f32 %v1524, %v1398
        %v1527 = vmul.f32 %v1525, %v1399
        %v1528 = vadd.f32 %v1516, %v1526
        %v1529 = vadd.f32 %v1517, %v1527
        %s1530 = sld [smem:[#allocation9 + $0x300]]
        %v1531 = vstv %s1530
        %v1532 = vmul.f32 %v1531, %v1404
        %v1533 = vmul.f32 %v1531, %v1405
        %v1534 = vadd.f32 %v1522, %v1532
        %v1535 = vadd.f32 %v1523, %v1533
        %v1536 = vld [vmem:[%s1000] sm:$0xff]
        %v1537 = vld [vmem:[%s1000 + $0x8] sm:$0xff]
        %v1538 = vmul.f32 %v1536, %v1404
        %v1539 = vmul.f32 %v1537, %v1405
        %v1540 = vadd.f32 %v1528, %v1538
        %v1541 = vadd.f32 %v1529, %v1539
        %s1542 = sld [smem:[#allocation9 + $0x380]]
        %v1543 = vstv %s1542
        %v1544 = vmul.f32 %v1543, %v1410
        %v1545 = vmul.f32 %v1543, %v1411
        %v1546 = vadd.f32 %v1534, %v1544
        %v1547 = vadd.f32 %v1535, %v1545
        %v1548 = vld [vmem:[%s1031] sm:$0xff]
        %v1549 = vld [vmem:[%s1031 + $0x8] sm:$0xff]
        %v1550 = vmul.f32 %v1548, %v1410
        %v1551 = vmul.f32 %v1549, %v1411
        %v1552 = vadd.f32 %v1540, %v1550
        %v1553 = vadd.f32 %v1541, %v1551
        %s1554 = sld [smem:[#allocation9 + $0x400]]
        %v1555 = vstv %s1554
        %v1556 = vmul.f32 %v1555, %v1416
        %v1557 = vmul.f32 %v1555, %v1417
        %v1558 = vadd.f32 %v1546, %v1556
        %v1559 = vadd.f32 %v1547, %v1557
        %v1560 = vld [vmem:[%s1062] sm:$0xff]
        %v1561 = vld [vmem:[%s1062 + $0x8] sm:$0xff]
        %v1562 = vmul.f32 %v1560, %v1416
        %v1563 = vmul.f32 %v1561, %v1417
        %v1564 = vadd.f32 %v1552, %v1562
        %v1565 = vadd.f32 %v1553, %v1563
        %v1566 = vrot.slane %v1398, 1
        %v1567 = vrot.slane %v1399, 1
        %v1568 = vsel %vm1065, %v1566, %v1567
        %v1571 = vsel %vm1065, %v1567, 0.0
        %s1572 = sld [smem:[#allocation9 + $0x480]]
        %v1573 = vstv %s1572
        %v1574 = vmul.f32 %v1573, %v1568
        %v1575 = vmul.f32 %v1573, %v1571
        %v1576 = vadd.f32 %v1558, %v1574
        %v1577 = vadd.f32 %v1559, %v1575
        %v1578 = vld [vmem:[%s1118] sm:$0xff]
        %v1579 = vld [vmem:[%s1118 + $0x8] sm:$0xff]
        %v1580 = vmul.f32 %v1578, %v1568
        %v1581 = vmul.f32 %v1579, %v1571
        %v1582 = vadd.f32 %v1564, %v1580
        %v1583 = vadd.f32 %v1565, %v1581
        %v1584 = vrot.slane %v1404, 1
        %v1585 = vrot.slane %v1405, 1
        %v1586 = vsel %vm1065, %v1584, %v1585
        %v1589 = vsel %vm1065, %v1585, 0.0
        %s1590 = sld [smem:[#allocation9 + $0x500]]
        %v1591 = vstv %s1590
        %v1592 = vmul.f32 %v1591, %v1586
        %v1593 = vmul.f32 %v1591, %v1589
        %v1594 = vadd.f32 %v1576, %v1592
        %v1595 = vadd.f32 %v1577, %v1593
        %v1596 = vld [vmem:[%s1173] sm:$0xff]
        %v1597 = vld [vmem:[%s1173 + $0x8] sm:$0xff]
        %v1598 = vmul.f32 %v1596, %v1586
        %v1599 = vmul.f32 %v1597, %v1589
        %v1600 = vadd.f32 %v1582, %v1598
        %v1601 = vadd.f32 %v1583, %v1599
        %v1602 = vrot.slane %v1392, 1
        %v1603 = vrot.slane %v1393, 1
        %v1604 = vsel %vm1065, %v1602, %v1603
        %v1607 = vsel %vm1065, %v1603, 0.0
        %s1608 = sld [smem:[#allocation9 + $0x580]]
        %v1609 = vstv %s1608
        %v1610 = vmul.f32 %v1609, %v1604
        %v1611 = vmul.f32 %v1609, %v1607
        %v1612 = vadd.f32 %v1594, %v1610
        %v1613 = vadd.f32 %v1595, %v1611
        %v1614 = vld [vmem:[%s1228] sm:$0xff]
        %v1615 = vld [vmem:[%s1228 + $0x8] sm:$0xff]
        %v1616 = vmul.f32 %v1614, %v1604
        %v1617 = vmul.f32 %v1615, %v1607
        %v1618 = vadd.f32 %v1600, %v1616
        %v1619 = vadd.f32 %v1601, %v1617
        %v1620 = vrot.slane %v1410, 1
        %v1621 = vrot.slane %v1411, 1
        %v1622 = vsel %vm1065, %v1620, %v1621
        %v1625 = vsel %vm1065, %v1621, 0.0
        %s1626 = sld [smem:[#allocation9 + $0x600]]
        %v1627 = vstv %s1626
        %v1628 = vmul.f32 %v1627, %v1622
        %v1629 = vmul.f32 %v1627, %v1625
        %v1630 = vadd.f32 %v1612, %v1628
        %v1631 = vadd.f32 %v1613, %v1629
        %v1632 = vld [vmem:[%s1283] sm:$0xff]
        %v1633 = vld [vmem:[%s1283 + $0x8] sm:$0xff]
        %v1634 = vmul.f32 %v1632, %v1622
        %v1635 = vmul.f32 %v1633, %v1625
        %v1636 = vadd.f32 %v1618, %v1634
        %v1637 = vadd.f32 %v1619, %v1635
        %v1638 = vrot.slane %v1416, 1
        %v1639 = vrot.slane %v1417, 1
        %v1640 = vsel %vm1065, %v1638, %v1639
        %v1643 = vsel %vm1065, %v1639, 0.0
        %s1644 = sld [smem:[#allocation9 + $0x680]]
        %v1645 = vstv %s1644
        %v1646 = vmul.f32 %v1645, %v1640
        %v1647 = vmul.f32 %v1645, %v1643
        %v1648 = vadd.f32 %v1630, %v1646
        %v1649 = vadd.f32 %v1631, %v1647
        %v1650 = vld [vmem:[%s1338] sm:$0xff]
        %v1651 = vld [vmem:[%s1338 + $0x8] sm:$0xff]
        %v1652 = vmul.f32 %v1650, %v1640
        %v1653 = vmul.f32 %v1651, %v1643
        %v1654 = vadd.f32 %v1636, %v1652
        %v1655 = vadd.f32 %v1637, %v1653
        %v1656 = vld [vmem:[%s491] sm:$0xff]
        %v1657 = vld [vmem:[%s491 + $0x8] sm:$0xff]
        %s1658 = sld [smem:[#allocation12]]
        %s1659 = sld [smem:[#allocation13]]
        %v1660 = vmul.f32 %v1654, %v1656
        %v1661 = vmul.f32 %v1655, %v1657
        %v1662 = vstv %s1659
        %v1663 = vmul.f32 %v1662, %v1660
        %v1664 = vmul.f32 %v1662, %v1661
        %v1665 = vstv %s1658
        %v1666 = vadd.f32 %v1665, %v1663
        %v1667 = vadd.f32 %v1665, %v1664
        %v1668 = vmul.f32 %v1648, %v1666
        %v1669 = vmul.f32 %v1649, %v1667
        %v1670 = vmul.f32 %v1367, %v1389
        %v1671 = vmul.f32 %v1369, %v1391
        %1672 = vrot.lane.b32.xlu0 %v1670, 2
        %v1673 = vpop.permute.xlu0 %1672
        %1674 = vrot.lane.b32.xlu0 %v1671, 2
        %v1675 = vpop.permute.xlu0 %1674
        %v1676 = vmul.f32 %v1673, %v499
        %v1677 = vmul.f32 %v1675, %v499
        %1678 = vrot.lane.b32.xlu0 %v1670, 1
        %v1679 = vpop.permute.xlu0 %1678
        %1680 = vrot.lane.b32.xlu0 %v1671, 1
        %v1681 = vpop.permute.xlu0 %1680
        %v1682 = vmul.f32 %v1679, %v505
        %v1683 = vmul.f32 %v1681, %v505
        %1684 = vrot.lane.b32.xlu0 %v1670, 127
        %v1685 = vpop.permute.xlu0 %1684
        %1686 = vrot.lane.b32.xlu0 %v1671, 127
        %v1687 = vpop.permute.xlu0 %1686
        %v1688 = vmul.f32 %v1685, %v511
        %v1689 = vmul.f32 %v1687, %v511
        %1690 = vrot.lane.b32.xlu0 %v1670, 126
        %v1691 = vpop.permute.xlu0 %1690
        %1692 = vrot.lane.b32.xlu0 %v1671, 126
        %v1693 = vpop.permute.xlu0 %1692
        %v1694 = vmul.f32 %v1691, %v517
        %v1695 = vmul.f32 %v1693, %v517
        %v1698 = vrot.slane %v1676, 7
        %v1699 = vrot.slane %v1677, 7
        %v1700 = vsel %vm627, %v1698, %v1699
        %v1703 = vsel %vm627, 0.0, %v1698
        %s1704 = sld [smem:[#allocation9 + $0x1]]
        %v1705 = vstv %s1704
        %v1706 = vmul.f32 %v1705, %v1703
        %v1707 = vmul.f32 %v1705, %v1700
        %v1708 = vadd.f32 %v1706, 0.0
        %v1709 = vadd.f32 %v1707, 0.0
        %v1710 = vmul.f32 %v1432, %v1703
        %v1711 = vmul.f32 %v1433, %v1700
        %v1712 = vadd.f32 %v1710, 0.0
        %v1713 = vadd.f32 %v1711, 0.0
        %v1716 = vrot.slane %v1682, 7
        %v1717 = vrot.slane %v1683, 7
        %v1718 = vsel %vm627, %v1716, %v1717
        %v1721 = vsel %vm627, 0.0, %v1716
        %s1722 = sld [smem:[#allocation9 + $0x81]]
        %v1723 = vstv %s1722
        %v1724 = vmul.f32 %v1723, %v1721
        %v1725 = vmul.f32 %v1723, %v1718
        %v1726 = vadd.f32 %v1708, %v1724
        %v1727 = vadd.f32 %v1709, %v1725
        %v1728 = vmul.f32 %v1452, %v1721
        %v1729 = vmul.f32 %v1453, %v1718
        %v1730 = vadd.f32 %v1712, %v1728
        %v1731 = vadd.f32 %v1713, %v1729
        %v1734 = vrot.slane %v1670, 7
        %v1735 = vrot.slane %v1671, 7
        %v1736 = vsel %vm627, %v1734, %v1735
        %v1739 = vsel %vm627, 0.0, %v1734
        %s1740 = sld [smem:[#allocation9 + $0x101]]
        %v1741 = vstv %s1740
        %v1742 = vmul.f32 %v1741, %v1739
        %v1743 = vmul.f32 %v1741, %v1736
        %v1744 = vadd.f32 %v1726, %v1742
        %v1745 = vadd.f32 %v1727, %v1743
        %v1746 = vmul.f32 %v1472, %v1739
        %v1747 = vmul.f32 %v1473, %v1736
        %v1748 = vadd.f32 %v1730, %v1746
        %v1749 = vadd.f32 %v1731, %v1747
        %v1752 = vrot.slane %v1688, 7
        %v1753 = vrot.slane %v1689, 7
        %v1754 = vsel %vm627, %v1752, %v1753
        %v1757 = vsel %vm627, 0.0, %v1752
        %s1758 = sld [smem:[#allocation9 + $0x181]]
        %v1759 = vstv %s1758
        %v1760 = vmul.f32 %v1759, %v1757
        %v1761 = vmul.f32 %v1759, %v1754
        %v1762 = vadd.f32 %v1744, %v1760
        %v1763 = vadd.f32 %v1745, %v1761
        %v1764 = vmul.f32 %v1492, %v1757
        %v1765 = vmul.f32 %v1493, %v1754
        %v1766 = vadd.f32 %v1748, %v1764
        %v1767 = vadd.f32 %v1749, %v1765
        %v1770 = vrot.slane %v1694, 7
        %v1771 = vrot.slane %v1695, 7
        %v1772 = vsel %vm627, %v1770, %v1771
        %v1775 = vsel %vm627, 0.0, %v1770
        %s1776 = sld [smem:[#allocation9 + $0x201]]
        %v1777 = vstv %s1776
        %v1778 = vmul.f32 %v1777, %v1775
        %v1779 = vmul.f32 %v1777, %v1772
        %v1780 = vadd.f32 %v1762, %v1778
        %v1781 = vadd.f32 %v1763, %v1779
        %v1782 = vmul.f32 %v1512, %v1775
        %v1783 = vmul.f32 %v1513, %v1772
        %v1784 = vadd.f32 %v1766, %v1782
        %v1785 = vadd.f32 %v1767, %v1783
        %s1786 = sld [smem:[#allocation9 + $0x281]]
        %v1787 = vstv %s1786
        %v1788 = vmul.f32 %v1787, %v1676
        %v1789 = vmul.f32 %v1787, %v1677
        %v1790 = vadd.f32 %v1780, %v1788
        %v1791 = vadd.f32 %v1781, %v1789
        %v1792 = vmul.f32 %v1524, %v1676
        %v1793 = vmul.f32 %v1525, %v1677
        %v1794 = vadd.f32 %v1784, %v1792
        %v1795 = vadd.f32 %v1785, %v1793
        %s1796 = sld [smem:[#allocation9 + $0x301]]
        %v1797 = vstv %s1796
        %v1798 = vmul.f32 %v1797, %v1682
        %v1799 = vmul.f32 %v1797, %v1683
        %v1800 = vadd.f32 %v1790, %v1798
        %v1801 = vadd.f32 %v1791, %v1799
        %v1802 = vmul.f32 %v1536, %v1682
        %v1803 = vmul.f32 %v1537, %v1683
        %v1804 = vadd.f32 %v1794, %v1802
        %v1805 = vadd.f32 %v1795, %v1803
        %s1806 = sld [smem:[#allocation9 + $0x381]]
        %v1807 = vstv %s1806
        %v1808 = vmul.f32 %v1807, %v1688
        %v1809 = vmul.f32 %v1807, %v1689
        %v1810 = vadd.f32 %v1800, %v1808
        %v1811 = vadd.f32 %v1801, %v1809
        %v1812 = vmul.f32 %v1548, %v1688
        %v1813 = vmul.f32 %v1549, %v1689
        %v1814 = vadd.f32 %v1804, %v1812
        %v1815 = vadd.f32 %v1805, %v1813
        %s1816 = sld [smem:[#allocation9 + $0x401]]
        %v1817 = vstv %s1816
        %v1818 = vmul.f32 %v1817, %v1694
        %v1819 = vmul.f32 %v1817, %v1695
        %v1820 = vadd.f32 %v1810, %v1818
        %v1821 = vadd.f32 %v1811, %v1819
        %v1822 = vmul.f32 %v1560, %v1694
        %v1823 = vmul.f32 %v1561, %v1695
        %v1824 = vadd.f32 %v1814, %v1822
        %v1825 = vadd.f32 %v1815, %v1823
        %v1826 = vrot.slane %v1676, 1
        %v1827 = vrot.slane %v1677, 1
        %v1828 = vsel %vm1065, %v1826, %v1827
        %v1831 = vsel %vm1065, %v1827, 0.0
        %s1832 = sld [smem:[#allocation9 + $0x481]]
        %v1833 = vstv %s1832
        %v1834 = vmul.f32 %v1833, %v1828
        %v1835 = vmul.f32 %v1833, %v1831
        %v1836 = vadd.f32 %v1820, %v1834
        %v1837 = vadd.f32 %v1821, %v1835
        %v1838 = vmul.f32 %v1578, %v1828
        %v1839 = vmul.f32 %v1579, %v1831
        %v1840 = vadd.f32 %v1824, %v1838
        %v1841 = vadd.f32 %v1825, %v1839
        %v1842 = vrot.slane %v1682, 1
        %v1843 = vrot.slane %v1683, 1
        %v1844 = vsel %vm1065, %v1842, %v1843
        %v1847 = vsel %vm1065, %v1843, 0.0
        %s1848 = sld [smem:[#allocation9 + $0x501]]
        %v1849 = vstv %s1848
        %v1850 = vmul.f32 %v1849, %v1844
        %v1851 = vmul.f32 %v1849, %v1847
        %v1852 = vadd.f32 %v1836, %v1850
        %v1853 = vadd.f32 %v1837, %v1851
        %v1854 = vmul.f32 %v1596, %v1844
        %v1855 = vmul.f32 %v1597, %v1847
        %v1856 = vadd.f32 %v1840, %v1854
        %v1857 = vadd.f32 %v1841, %v1855
        %v1858 = vrot.slane %v1670, 1
        %v1859 = vrot.slane %v1671, 1
        %v1860 = vsel %vm1065, %v1858, %v1859
        %v1863 = vsel %vm1065, %v1859, 0.0
        %s1864 = sld [smem:[#allocation9 + $0x581]]
        %v1865 = vstv %s1864
        %v1866 = vmul.f32 %v1865, %v1860
        %v1867 = vmul.f32 %v1865, %v1863
        %v1868 = vadd.f32 %v1852, %v1866
        %v1869 = vadd.f32 %v1853, %v1867
        %v1870 = vmul.f32 %v1614, %v1860
        %v1871 = vmul.f32 %v1615, %v1863
        %v1872 = vadd.f32 %v1856, %v1870
        %v1873 = vadd.f32 %v1857, %v1871
        %v1874 = vrot.slane %v1688, 1
        %v1875 = vrot.slane %v1689, 1
        %v1876 = vsel %vm1065, %v1874, %v1875
        %v1879 = vsel %vm1065, %v1875, 0.0
        %s1880 = sld [smem:[#allocation9 + $0x601]]
        %v1881 = vstv %s1880
        %v1882 = vmul.f32 %v1881, %v1876
        %v1883 = vmul.f32 %v1881, %v1879
        %v1884 = vadd.f32 %v1868, %v1882
        %v1885 = vadd.f32 %v1869, %v1883
        %v1886 = vmul.f32 %v1632, %v1876
        %v1887 = vmul.f32 %v1633, %v1879
        %v1888 = vadd.f32 %v1872, %v1886
        %v1889 = vadd.f32 %v1873, %v1887
        %v1890 = vrot.slane %v1694, 1
        %v1891 = vrot.slane %v1695, 1
        %v1892 = vsel %vm1065, %v1890, %v1891
        %v1895 = vsel %vm1065, %v1891, 0.0
        %s1896 = sld [smem:[#allocation9 + $0x681]]
        %v1897 = vstv %s1896
        %v1898 = vmul.f32 %v1897, %v1892
        %v1899 = vmul.f32 %v1897, %v1895
        %v1900 = vadd.f32 %v1884, %v1898
        %v1901 = vadd.f32 %v1885, %v1899
        %v1902 = vmul.f32 %v1650, %v1892
        %v1903 = vmul.f32 %v1651, %v1895
        %v1904 = vadd.f32 %v1888, %v1902
        %v1905 = vadd.f32 %v1889, %v1903
        %s1906 = sld [smem:[#allocation12 + $0x1]]
        %s1907 = sld [smem:[#allocation13 + $0x1]]
        %v1908 = vmul.f32 %v1904, %v1656
        %v1909 = vmul.f32 %v1905, %v1657
        %v1910 = vstv %s1907
        %v1911 = vmul.f32 %v1910, %v1908
        %v1912 = vmul.f32 %v1910, %v1909
        %v1913 = vstv %s1906
        %v1914 = vadd.f32 %v1913, %v1911
        %v1915 = vadd.f32 %v1913, %v1912
        %v1916 = vmul.f32 %v1900, %v1914
        %v1917 = vmul.f32 %v1901, %v1915
        %v1918 = vmul.f32 %v1375, %v1389
        %v1919 = vmul.f32 %v1377, %v1391
        %1920 = vrot.lane.b32.xlu0 %v1918, 2
        %v1921 = vpop.permute.xlu0 %1920
        %1922 = vrot.lane.b32.xlu0 %v1919, 2
        %v1923 = vpop.permute.xlu0 %1922
        %v1924 = vmul.f32 %v1921, %v499
        %v1925 = vmul.f32 %v1923, %v499
        %1926 = vrot.lane.b32.xlu0 %v1918, 1
        %v1927 = vpop.permute.xlu0 %1926
        %1928 = vrot.lane.b32.xlu0 %v1919, 1
        %v1929 = vpop.permute.xlu0 %1928
        %v1930 = vmul.f32 %v1927, %v505
        %v1931 = vmul.f32 %v1929, %v505
        %1932 = vrot.lane.b32.xlu0 %v1918, 127
        %v1933 = vpop.permute.xlu0 %1932
        %1934 = vrot.lane.b32.xlu0 %v1919, 127
        %v1935 = vpop.permute.xlu0 %1934
        %v1936 = vmul.f32 %v1933, %v511
        %v1937 = vmul.f32 %v1935, %v511
        %1938 = vrot.lane.b32.xlu0 %v1918, 126
        %v1939 = vpop.permute.xlu0 %1938
        %1940 = vrot.lane.b32.xlu0 %v1919, 126
        %v1941 = vpop.permute.xlu0 %1940
        %v1942 = vmul.f32 %v1939, %v517
        %v1943 = vmul.f32 %v1941, %v517
        %v1946 = vrot.slane %v1924, 7
        %v1947 = vrot.slane %v1925, 7
        %v1948 = vsel %vm627, %v1946, %v1947
        %v1951 = vsel %vm627, 0.0, %v1946
        %s1952 = sld [smem:[#allocation9 + $0x2]]
        %v1953 = vstv %s1952
        %v1954 = vmul.f32 %v1953, %v1951
        %v1955 = vmul.f32 %v1953, %v1948
        %v1956 = vadd.f32 %v1954, 0.0
        %v1957 = vadd.f32 %v1955, 0.0
        %v1958 = vmul.f32 %v1432, %v1951
        %v1959 = vmul.f32 %v1433, %v1948
        %v1960 = vadd.f32 %v1958, 0.0
        %v1961 = vadd.f32 %v1959, 0.0
        %v1964 = vrot.slane %v1930, 7
        %v1965 = vrot.slane %v1931, 7
        %v1966 = vsel %vm627, %v1964, %v1965
        %v1969 = vsel %vm627, 0.0, %v1964
        %s1970 = sld [smem:[#allocation9 + $0x82]]
        %v1971 = vstv %s1970
        %v1972 = vmul.f32 %v1971, %v1969
        %v1973 = vmul.f32 %v1971, %v1966
        %v1974 = vadd.f32 %v1956, %v1972
        %v1975 = vadd.f32 %v1957, %v1973
        %v1976 = vmul.f32 %v1452, %v1969
        %v1977 = vmul.f32 %v1453, %v1966
        %v1978 = vadd.f32 %v1960, %v1976
        %v1979 = vadd.f32 %v1961, %v1977
        %v1982 = vrot.slane %v1918, 7
        %v1983 = vrot.slane %v1919, 7
        %v1984 = vsel %vm627, %v1982, %v1983
        %v1987 = vsel %vm627, 0.0, %v1982
        %s1988 = sld [smem:[#allocation9 + $0x102]]
        %v1989 = vstv %s1988
        %v1990 = vmul.f32 %v1989, %v1987
        %v1991 = vmul.f32 %v1989, %v1984
        %v1992 = vadd.f32 %v1974, %v1990
        %v1993 = vadd.f32 %v1975, %v1991
        %v1994 = vmul.f32 %v1472, %v1987
        %v1995 = vmul.f32 %v1473, %v1984
        %v1996 = vadd.f32 %v1978, %v1994
        %v1997 = vadd.f32 %v1979, %v1995
        %v2000 = vrot.slane %v1936, 7
        %v2001 = vrot.slane %v1937, 7
        %v2002 = vsel %vm627, %v2000, %v2001
        %v2005 = vsel %vm627, 0.0, %v2000
        %s2006 = sld [smem:[#allocation9 + $0x182]]
        %v2007 = vstv %s2006
        %v2008 = vmul.f32 %v2007, %v2005
        %v2009 = vmul.f32 %v2007, %v2002
        %v2010 = vadd.f32 %v1992, %v2008
        %v2011 = vadd.f32 %v1993, %v2009
        %v2012 = vmul.f32 %v1492, %v2005
        %v2013 = vmul.f32 %v1493, %v2002
        %v2014 = vadd.f32 %v1996, %v2012
        %v2015 = vadd.f32 %v1997, %v2013
        %v2018 = vrot.slane %v1942, 7
        %v2019 = vrot.slane %v1943, 7
        %v2020 = vsel %vm627, %v2018, %v2019
        %v2023 = vsel %vm627, 0.0, %v2018
        %s2024 = sld [smem:[#allocation9 + $0x202]]
        %v2025 = vstv %s2024
        %v2026 = vmul.f32 %v2025, %v2023
        %v2027 = vmul.f32 %v2025, %v2020
        %v2028 = vadd.f32 %v2010, %v2026
        %v2029 = vadd.f32 %v2011, %v2027
        %v2030 = vmul.f32 %v1512, %v2023
        %v2031 = vmul.f32 %v1513, %v2020
        %v2032 = vadd.f32 %v2014, %v2030
        %v2033 = vadd.f32 %v2015, %v2031
        %s2034 = sld [smem:[#allocation9 + $0x282]]
        %v2035 = vstv %s2034
        %v2036 = vmul.f32 %v2035, %v1924
        %v2037 = vmul.f32 %v2035, %v1925
        %v2038 = vadd.f32 %v2028, %v2036
        %v2039 = vadd.f32 %v2029, %v2037
        %v2040 = vmul.f32 %v1524, %v1924
        %v2041 = vmul.f32 %v1525, %v1925
        %v2042 = vadd.f32 %v2032, %v2040
        %v2043 = vadd.f32 %v2033, %v2041
        %s2044 = sld [smem:[#allocation9 + $0x302]]
        %v2045 = vstv %s2044
        %v2046 = vmul.f32 %v2045, %v1930
        %v2047 = vmul.f32 %v2045, %v1931
        %v2048 = vadd.f32 %v2038, %v2046
        %v2049 = vadd.f32 %v2039, %v2047
        %v2050 = vmul.f32 %v1536, %v1930
        %v2051 = vmul.f32 %v1537, %v1931
        %v2052 = vadd.f32 %v2042, %v2050
        %v2053 = vadd.f32 %v2043, %v2051
        %s2054 = sld [smem:[#allocation9 + $0x382]]
        %v2055 = vstv %s2054
        %v2056 = vmul.f32 %v2055, %v1936
        %v2057 = vmul.f32 %v2055, %v1937
        %v2058 = vadd.f32 %v2048, %v2056
        %v2059 = vadd.f32 %v2049, %v2057
        %v2060 = vmul.f32 %v1548, %v1936
        %v2061 = vmul.f32 %v1549, %v1937
        %v2062 = vadd.f32 %v2052, %v2060
        %v2063 = vadd.f32 %v2053, %v2061
        %s2064 = sld [smem:[#allocation9 + $0x402]]
        %v2065 = vstv %s2064
        %v2066 = vmul.f32 %v2065, %v1942
        %v2067 = vmul.f32 %v2065, %v1943
        %v2068 = vadd.f32 %v2058, %v2066
        %v2069 = vadd.f32 %v2059, %v2067
        %v2070 = vmul.f32 %v1560, %v1942
        %v2071 = vmul.f32 %v1561, %v1943
        %v2072 = vadd.f32 %v2062, %v2070
        %v2073 = vadd.f32 %v2063, %v2071
        %v2074 = vrot.slane %v1924, 1
        %v2075 = vrot.slane %v1925, 1
        %v2076 = vsel %vm1065, %v2074, %v2075
        %v2079 = vsel %vm1065, %v2075, 0.0
        %s2080 = sld [smem:[#allocation9 + $0x482]]
        %v2081 = vstv %s2080
        %v2082 = vmul.f32 %v2081, %v2076
        %v2083 = vmul.f32 %v2081, %v2079
        %v2084 = vadd.f32 %v2068, %v2082
        %v2085 = vadd.f32 %v2069, %v2083
        %v2086 = vmul.f32 %v1578, %v2076
        %v2087 = vmul.f32 %v1579, %v2079
        %v2088 = vadd.f32 %v2072, %v2086
        %v2089 = vadd.f32 %v2073, %v2087
        %v2090 = vrot.slane %v1930, 1
        %v2091 = vrot.slane %v1931, 1
        %v2092 = vsel %vm1065, %v2090, %v2091
        %v2095 = vsel %vm1065, %v2091, 0.0
        %s2096 = sld [smem:[#allocation9 + $0x502]]
        %v2097 = vstv %s2096
        %v2098 = vmul.f32 %v2097, %v2092
        %v2099 = vmul.f32 %v2097, %v2095
        %v2100 = vadd.f32 %v2084, %v2098
        %v2101 = vadd.f32 %v2085, %v2099
        %v2102 = vmul.f32 %v1596, %v2092
        %v2103 = vmul.f32 %v1597, %v2095
        %v2104 = vadd.f32 %v2088, %v2102
        %v2105 = vadd.f32 %v2089, %v2103
        %v2106 = vrot.slane %v1918, 1
        %v2107 = vrot.slane %v1919, 1
        %v2108 = vsel %vm1065, %v2106, %v2107
        %v2111 = vsel %vm1065, %v2107, 0.0
        %s2112 = sld [smem:[#allocation9 + $0x582]]
        %v2113 = vstv %s2112
        %v2114 = vmul.f32 %v2113, %v2108
        %v2115 = vmul.f32 %v2113, %v2111
        %v2116 = vadd.f32 %v2100, %v2114
        %v2117 = vadd.f32 %v2101, %v2115
        %v2118 = vmul.f32 %v1614, %v2108
        %v2119 = vmul.f32 %v1615, %v2111
        %v2120 = vadd.f32 %v2104, %v2118
        %v2121 = vadd.f32 %v2105, %v2119
        %v2122 = vrot.slane %v1936, 1
        %v2123 = vrot.slane %v1937, 1
        %v2124 = vsel %vm1065, %v2122, %v2123
        %v2127 = vsel %vm1065, %v2123, 0.0
        %s2128 = sld [smem:[#allocation9 + $0x602]]
        %v2129 = vstv %s2128
        %v2130 = vmul.f32 %v2129, %v2124
        %v2131 = vmul.f32 %v2129, %v2127
        %v2132 = vadd.f32 %v2116, %v2130
        %v2133 = vadd.f32 %v2117, %v2131
        %v2134 = vmul.f32 %v1632, %v2124
        %v2135 = vmul.f32 %v1633, %v2127
        %v2136 = vadd.f32 %v2120, %v2134
        %v2137 = vadd.f32 %v2121, %v2135
        %v2138 = vrot.slane %v1942, 1
        %v2139 = vrot.slane %v1943, 1
        %v2140 = vsel %vm1065, %v2138, %v2139
        %v2143 = vsel %vm1065, %v2139, 0.0
        %s2144 = sld [smem:[#allocation9 + $0x682]]
        %v2145 = vstv %s2144
        %v2146 = vmul.f32 %v2145, %v2140
        %v2147 = vmul.f32 %v2145, %v2143
        %v2148 = vadd.f32 %v2132, %v2146
        %v2149 = vadd.f32 %v2133, %v2147
        %v2150 = vmul.f32 %v1650, %v2140
        %v2151 = vmul.f32 %v1651, %v2143
        %v2152 = vadd.f32 %v2136, %v2150
        %v2153 = vadd.f32 %v2137, %v2151
        %s2154 = sld [smem:[#allocation12 + $0x2]]
        %s2155 = sld [smem:[#allocation13 + $0x2]]
        %v2156 = vmul.f32 %v2152, %v1656
        %v2157 = vmul.f32 %v2153, %v1657
        %v2158 = vstv %s2155
        %v2159 = vmul.f32 %v2158, %v2156
        %v2160 = vmul.f32 %v2158, %v2157
        %v2161 = vstv %s2154
        %v2162 = vadd.f32 %v2161, %v2159
        %v2163 = vadd.f32 %v2161, %v2160
        %v2164 = vmul.f32 %v2148, %v2162
        %v2165 = vmul.f32 %v2149, %v2163
        %v2166 = vmul.f32 %v1383, %v1389
        %v2167 = vmul.f32 %v1385, %v1391
        %2168 = vrot.lane.b32.xlu0 %v2166, 2
        %v2169 = vpop.permute.xlu0 %2168
        %2170 = vrot.lane.b32.xlu0 %v2167, 2
        %v2171 = vpop.permute.xlu0 %2170
        %v2172 = vmul.f32 %v2169, %v499
        %v2173 = vmul.f32 %v2171, %v499
        %2174 = vrot.lane.b32.xlu0 %v2166, 1
        %v2175 = vpop.permute.xlu0 %2174
        %2176 = vrot.lane.b32.xlu0 %v2167, 1
        %v2177 = vpop.permute.xlu0 %2176
        %v2178 = vmul.f32 %v2175, %v505
        %v2179 = vmul.f32 %v2177, %v505
        %2180 = vrot.lane.b32.xlu0 %v2166, 127
        %v2181 = vpop.permute.xlu0 %2180
        %2182 = vrot.lane.b32.xlu0 %v2167, 127
        %v2183 = vpop.permute.xlu0 %2182
        %v2184 = vmul.f32 %v2181, %v511
        %v2185 = vmul.f32 %v2183, %v511
        %2186 = vrot.lane.b32.xlu0 %v2166, 126
        %v2187 = vpop.permute.xlu0 %2186
        %2188 = vrot.lane.b32.xlu0 %v2167, 126
        %v2189 = vpop.permute.xlu0 %2188
        %v2190 = vmul.f32 %v2187, %v517
        %v2191 = vmul.f32 %v2189, %v517
        %v2194 = vrot.slane %v2172, 7
        %v2195 = vrot.slane %v2173, 7
        %v2196 = vsel %vm627, %v2194, %v2195
        %v2199 = vsel %vm627, 0.0, %v2194
        %s2200 = sld [smem:[#allocation9 + $0x3]]
        %v2201 = vstv %s2200
        %v2202 = vmul.f32 %v2201, %v2199
        %v2203 = vmul.f32 %v2201, %v2196
        %v2204 = vadd.f32 %v2202, 0.0
        %v2205 = vadd.f32 %v2203, 0.0
        %v2206 = vmul.f32 %v1432, %v2199
        %v2207 = vmul.f32 %v1433, %v2196
        %v2208 = vadd.f32 %v2206, 0.0
        %v2209 = vadd.f32 %v2207, 0.0
        %v2212 = vrot.slane %v2178, 7
        %v2213 = vrot.slane %v2179, 7
        %v2214 = vsel %vm627, %v2212, %v2213
        %v2217 = vsel %vm627, 0.0, %v2212
        %s2218 = sld [smem:[#allocation9 + $0x83]]
        %v2219 = vstv %s2218
        %v2220 = vmul.f32 %v2219, %v2217
        %v2221 = vmul.f32 %v2219, %v2214
        %v2222 = vadd.f32 %v2204, %v2220
        %v2223 = vadd.f32 %v2205, %v2221
        %v2224 = vmul.f32 %v1452, %v2217
        %v2225 = vmul.f32 %v1453, %v2214
        %v2226 = vadd.f32 %v2208, %v2224
        %v2227 = vadd.f32 %v2209, %v2225
        %v2230 = vrot.slane %v2166, 7
        %v2231 = vrot.slane %v2167, 7
        %v2232 = vsel %vm627, %v2230, %v2231
        %v2235 = vsel %vm627, 0.0, %v2230
        %s2236 = sld [smem:[#allocation9 + $0x103]]
        %v2237 = vstv %s2236
        %v2238 = vmul.f32 %v2237, %v2235
        %v2239 = vmul.f32 %v2237, %v2232
        %v2240 = vadd.f32 %v2222, %v2238
        %v2241 = vadd.f32 %v2223, %v2239
        %v2242 = vmul.f32 %v1472, %v2235
        %v2243 = vmul.f32 %v1473, %v2232
        %v2244 = vadd.f32 %v2226, %v2242
        %v2245 = vadd.f32 %v2227, %v2243
        %v2248 = vrot.slane %v2184, 7
        %v2249 = vrot.slane %v2185, 7
        %v2250 = vsel %vm627, %v2248, %v2249
        %v2253 = vsel %vm627, 0.0, %v2248
        %s2254 = sld [smem:[#allocation9 + $0x183]]
        %v2255 = vstv %s2254
        %v2256 = vmul.f32 %v2255, %v2253
        %v2257 = vmul.f32 %v2255, %v2250
        %v2258 = vadd.f32 %v2240, %v2256
        %v2259 = vadd.f32 %v2241, %v2257
        %v2260 = vmul.f32 %v1492, %v2253
        %v2261 = vmul.f32 %v1493, %v2250
        %v2262 = vadd.f32 %v2244, %v2260
        %v2263 = vadd.f32 %v2245, %v2261
        %v2266 = vrot.slane %v2190, 7
        %v2267 = vrot.slane %v2191, 7
        %v2268 = vsel %vm627, %v2266, %v2267
        %v2271 = vsel %vm627, 0.0, %v2266
        %s2272 = sld [smem:[#allocation9 + $0x203]]
        %v2273 = vstv %s2272
        %v2274 = vmul.f32 %v2273, %v2271
        %v2275 = vmul.f32 %v2273, %v2268
        %v2276 = vadd.f32 %v2258, %v2274
        %v2277 = vadd.f32 %v2259, %v2275
        %v2278 = vmul.f32 %v1512, %v2271
        %v2279 = vmul.f32 %v1513, %v2268
        %v2280 = vadd.f32 %v2262, %v2278
        %v2281 = vadd.f32 %v2263, %v2279
        %s2282 = sld [smem:[#allocation9 + $0x283]]
        %v2283 = vstv %s2282
        %v2284 = vmul.f32 %v2283, %v2172
        %v2285 = vmul.f32 %v2283, %v2173
        %v2286 = vadd.f32 %v2276, %v2284
        %v2287 = vadd.f32 %v2277, %v2285
        %v2288 = vmul.f32 %v1524, %v2172
        %v2289 = vmul.f32 %v1525, %v2173
        %v2290 = vadd.f32 %v2280, %v2288
        %v2291 = vadd.f32 %v2281, %v2289
        %s2292 = sld [smem:[#allocation9 + $0x303]]
        %v2293 = vstv %s2292
        %v2294 = vmul.f32 %v2293, %v2178
        %v2295 = vmul.f32 %v2293, %v2179
        %v2296 = vadd.f32 %v2286, %v2294
        %v2297 = vadd.f32 %v2287, %v2295
        %v2298 = vmul.f32 %v1536, %v2178
        %v2299 = vmul.f32 %v1537, %v2179
        %v2300 = vadd.f32 %v2290, %v2298
        %v2301 = vadd.f32 %v2291, %v2299
        %s2302 = sld [smem:[#allocation9 + $0x383]]
        %v2303 = vstv %s2302
        %v2304 = vmul.f32 %v2303, %v2184
        %v2305 = vmul.f32 %v2303, %v2185
        %v2306 = vadd.f32 %v2296, %v2304
        %v2307 = vadd.f32 %v2297, %v2305
        %v2308 = vmul.f32 %v1548, %v2184
        %v2309 = vmul.f32 %v1549, %v2185
        %v2310 = vadd.f32 %v2300, %v2308
        %v2311 = vadd.f32 %v2301, %v2309
        %s2312 = sld [smem:[#allocation9 + $0x403]]
        %v2313 = vstv %s2312
        %v2314 = vmul.f32 %v2313, %v2190
        %v2315 = vmul.f32 %v2313, %v2191
        %v2316 = vadd.f32 %v2306, %v2314
        %v2317 = vadd.f32 %v2307, %v2315
        %v2318 = vmul.f32 %v1560, %v2190
        %v2319 = vmul.f32 %v1561, %v2191
        %v2320 = vadd.f32 %v2310, %v2318
        %v2321 = vadd.f32 %v2311, %v2319
        %v2322 = vrot.slane %v2172, 1
        %v2323 = vrot.slane %v2173, 1
        %v2324 = vsel %vm1065, %v2322, %v2323
        %v2327 = vsel %vm1065, %v2323, 0.0
        %s2328 = sld [smem:[#allocation9 + $0x483]]
        %v2329 = vstv %s2328
        %v2330 = vmul.f32 %v2329, %v2324
        %v2331 = vmul.f32 %v2329, %v2327
        %v2332 = vadd.f32 %v2316, %v2330
        %v2333 = vadd.f32 %v2317, %v2331
        %v2334 = vmul.f32 %v1578, %v2324
        %v2335 = vmul.f32 %v1579, %v2327
        %v2336 = vadd.f32 %v2320, %v2334
        %v2337 = vadd.f32 %v2321, %v2335
        %v2338 = vrot.slane %v2178, 1
        %v2339 = vrot.slane %v2179, 1
        %v2340 = vsel %vm1065, %v2338, %v2339
        %v2343 = vsel %vm1065, %v2339, 0.0
        %s2344 = sld [smem:[#allocation9 + $0x503]]
        %v2345 = vstv %s2344
        %v2346 = vmul.f32 %v2345, %v2340
        %v2347 = vmul.f32 %v2345, %v2343
        %v2348 = vadd.f32 %v2332, %v2346
        %v2349 = vadd.f32 %v2333, %v2347
        %v2350 = vmul.f32 %v1596, %v2340
        %v2351 = vmul.f32 %v1597, %v2343
        %v2352 = vadd.f32 %v2336, %v2350
        %v2353 = vadd.f32 %v2337, %v2351
        %v2354 = vrot.slane %v2166, 1
        %v2355 = vrot.slane %v2167, 1
        %v2356 = vsel %vm1065, %v2354, %v2355
        %v2359 = vsel %vm1065, %v2355, 0.0
        %s2360 = sld [smem:[#allocation9 + $0x583]]
        %v2361 = vstv %s2360
        %v2362 = vmul.f32 %v2361, %v2356
        %v2363 = vmul.f32 %v2361, %v2359
        %v2364 = vadd.f32 %v2348, %v2362
        %v2365 = vadd.f32 %v2349, %v2363
        %v2366 = vmul.f32 %v1614, %v2356
        %v2367 = vmul.f32 %v1615, %v2359
        %v2368 = vadd.f32 %v2352, %v2366
        %v2369 = vadd.f32 %v2353, %v2367
        %v2370 = vrot.slane %v2184, 1
        %v2371 = vrot.slane %v2185, 1
        %v2372 = vsel %vm1065, %v2370, %v2371
        %v2375 = vsel %vm1065, %v2371, 0.0
        %s2376 = sld [smem:[#allocation9 + $0x603]]
        %v2377 = vstv %s2376
        %v2378 = vmul.f32 %v2377, %v2372
        %v2379 = vmul.f32 %v2377, %v2375
        %v2380 = vadd.f32 %v2364, %v2378
        %v2381 = vadd.f32 %v2365, %v2379
        %v2382 = vmul.f32 %v1632, %v2372
        %v2383 = vmul.f32 %v1633, %v2375
        %v2384 = vadd.f32 %v2368, %v2382
        %v2385 = vadd.f32 %v2369, %v2383
        %v2386 = vrot.slane %v2190, 1
        %v2387 = vrot.slane %v2191, 1
        %v2388 = vsel %vm1065, %v2386, %v2387
        %v2391 = vsel %vm1065, %v2387, 0.0
        %s2392 = sld [smem:[#allocation9 + $0x683]]
        %v2393 = vstv %s2392
        %v2394 = vmul.f32 %v2393, %v2388
        %v2395 = vmul.f32 %v2393, %v2391
        %v2396 = vadd.f32 %v2380, %v2394
        %v2397 = vadd.f32 %v2381, %v2395
        %v2398 = vmul.f32 %v1650, %v2388
        %v2399 = vmul.f32 %v1651, %v2391
        %v2400 = vadd.f32 %v2384, %v2398
        %v2401 = vadd.f32 %v2385, %v2399
        %s2402 = sld [smem:[#allocation12 + $0x3]]
        %s2403 = sld [smem:[#allocation13 + $0x3]]
        %v2404 = vmul.f32 %v2400, %v1656
        %v2405 = vmul.f32 %v2401, %v1657
        %v2406 = vstv %s2403
        %v2407 = vmul.f32 %v2406, %v2404
        %v2408 = vmul.f32 %v2406, %v2405
        %v2409 = vstv %s2402
        %v2410 = vadd.f32 %v2409, %v2407
        %v2411 = vadd.f32 %v2409, %v2408
        %v2412 = vmul.f32 %v2396, %v2410
        %v2413 = vmul.f32 %v2397, %v2411
        %v2414 = vadd.f32 %v1668, %v1916
        %v2415 = vadd.f32 %v1669, %v1917
        %v2416 = vadd.f32 %v2414, %v2164
        %v2417 = vadd.f32 %v2415, %v2165
        %v2418 = vadd.f32 %v2416, %v2412
        %v2419 = vadd.f32 %v2417, %v2413
        %v2420 = vsub.f32 %v2418, %v1668
        %v2421 = vsub.f32 %v2419, %v1669
        %v2422 = vsub.f32 %v1341, %v2420
        %v2423 = vsub.f32 %v1342, %v2421
        %2424 = vst [vmem:[%s486] sm:$0xff] %v2422
        %2425 = vst [vmem:[%s486 + $0x8] sm:$0xff] %v2423
        %v2426 = vld [vmem:[%s1343] sm:$0xff]
        %v2427 = vld [vmem:[%s1343 + $0x8] sm:$0xff]
        %v2428 = vsub.f32 %v2418, %v1916
        %v2429 = vsub.f32 %v2419, %v1917
        %v2430 = vsub.f32 %v2426, %v2428
        %v2431 = vsub.f32 %v2427, %v2429
        %s2432 = scalar_lea.vmem %s486, 16 [#allocation18]
        %2433 = vst [vmem:[%s2432] sm:$0xff] %v2430
        %2434 = vst [vmem:[%s2432 + $0x8] sm:$0xff] %v2431
        %v2435 = vld [vmem:[%s1348] sm:$0xff]
        %v2436 = vld [vmem:[%s1348 + $0x8] sm:$0xff]
        %v2437 = vsub.f32 %v2418, %v2164
        %v2438 = vsub.f32 %v2419, %v2165
        %v2439 = vsub.f32 %v2435, %v2437
        %v2440 = vsub.f32 %v2436, %v2438
        %s2441 = scalar_lea.vmem %s486, 32 [#allocation18]
        %2442 = vst [vmem:[%s2441] sm:$0xff] %v2439
        %2443 = vst [vmem:[%s2441 + $0x8] sm:$0xff] %v2440
        %v2444 = vld [vmem:[%s1353] sm:$0xff]
        %v2445 = vld [vmem:[%s1353 + $0x8] sm:$0xff]
        %v2446 = vsub.f32 %v2418, %v2412
        %v2447 = vsub.f32 %v2419, %v2413
        %v2448 = vsub.f32 %v2444, %v2446
        %v2449 = vsub.f32 %v2445, %v2447
        %s2450 = scalar_lea.vmem %s486, 48 [#allocation18]
        %2451 = vst [vmem:[%s2450] sm:$0xff] %v2448
        %2452 = vst [vmem:[%s2450 + $0x8] sm:$0xff] %v2449
        %v2453 = vld [vmem:[%s486] sm:$0xff]
        %v2454 = vld [vmem:[%s486 + $0x8] sm:$0xff]
        %v2455 = vld [vmem:[%s2432] sm:$0xff]
        %v2456 = vld [vmem:[%s2432 + $0x8] sm:$0xff]
        %v2457 = vmax.f32 %v2453, %v2455
        %v2458 = vmax.f32 %v2454, %v2456
        %v2459 = vld [vmem:[%s2441] sm:$0xff]
        %v2460 = vld [vmem:[%s2441 + $0x8] sm:$0xff]
        %v2461 = vmax.f32 %v2457, %v2459
        %v2462 = vmax.f32 %v2458, %v2460
        %v2463 = vld [vmem:[%s2450] sm:$0xff]
        %v2464 = vld [vmem:[%s2450 + $0x8] sm:$0xff]
        %v2465 = vmax.f32 %v2461, %v2463
        %v2466 = vmax.f32 %v2462, %v2464
        %v2467 = vsub.f32 %v2453, %v2465
        %v2468 = vsub.f32 %v2454, %v2466
        %v2469 = vmul.f32 %v2467, 1.442695
        %v2470 = vpow.pop %v2469
        %v2471 = vmul.f32 %v2468, 1.442695
        %v2472 = vpow.pop %v2471
        %v2473 = vsub.f32 %v2455, %v2465
        %v2474 = vsub.f32 %v2456, %v2466
        %v2475 = vmul.f32 %v2473, 1.442695
        %v2476 = vpow.pop %v2475
        %v2477 = vmul.f32 %v2474, 1.442695
        %v2478 = vpow.pop %v2477
        %v2479 = vadd.f32 %v2470, %v2476
        %v2480 = vadd.f32 %v2472, %v2478
        %v2481 = vsub.f32 %v2459, %v2465
        %v2482 = vsub.f32 %v2460, %v2466
        %v2483 = vmul.f32 %v2481, 1.442695
        %v2484 = vpow.pop %v2483
        %v2485 = vmul.f32 %v2482, 1.442695
        %v2486 = vpow.pop %v2485
        %v2487 = vadd.f32 %v2479, %v2484
        %v2488 = vadd.f32 %v2480, %v2486
        %v2489 = vsub.f32 %v2463, %v2465
        %v2490 = vsub.f32 %v2464, %v2466
        %v2491 = vmul.f32 %v2489, 1.442695
        %v2492 = vpow.pop %v2491
        %v2493 = vmul.f32 %v2490, 1.442695
        %v2494 = vpow.pop %v2493
        %v2495 = vadd.f32 %v2487, %v2492
        %v2496 = vadd.f32 %v2488, %v2494
        %v2497 = vrcp.pop %v2495
        %v2498 = vmul.f32 1.0, %v2497
        %v2499 = vrcp.pop %v2496
        %v2500 = vmul.f32 1.0, %v2499
        %v2501 = vmul.f32 %v2470, %v2498
        %v2502 = vmul.f32 %v2472, %v2500
        %2503 = vrot.lane.b32.xlu0 %v2501, 2
        %v2504 = vpop.permute.xlu0 %2503
        %2505 = vrot.lane.b32.xlu0 %v2502, 2
        %v2506 = vpop.permute.xlu0 %2505
        %v2507 = vmul.f32 %v2504, %v499
        %v2508 = vmul.f32 %v2506, %v499
        %2509 = vrot.lane.b32.xlu0 %v2501, 1
        %v2510 = vpop.permute.xlu0 %2509
        %2511 = vrot.lane.b32.xlu0 %v2502, 1
        %v2512 = vpop.permute.xlu0 %2511
        %v2513 = vmul.f32 %v2510, %v505
        %v2514 = vmul.f32 %v2512, %v505
        %2515 = vrot.lane.b32.xlu0 %v2501, 127
        %v2516 = vpop.permute.xlu0 %2515
        %2517 = vrot.lane.b32.xlu0 %v2502, 127
        %v2518 = vpop.permute.xlu0 %2517
        %v2519 = vmul.f32 %v2516, %v511
        %v2520 = vmul.f32 %v2518, %v511
        %2521 = vrot.lane.b32.xlu0 %v2501, 126
        %v2522 = vpop.permute.xlu0 %2521
        %2523 = vrot.lane.b32.xlu0 %v2502, 126
        %v2524 = vpop.permute.xlu0 %2523
        %v2525 = vmul.f32 %v2522, %v517
        %v2526 = vmul.f32 %v2524, %v517
        %v2529 = vrot.slane %v2507, 7
        %v2530 = vrot.slane %v2508, 7
        %v2531 = vsel %vm627, %v2529, %v2530
        %v2534 = vsel %vm627, 0.0, %v2529
        %s2535 = sld [smem:[#allocation9]]
        %v2536 = vstv %s2535
        %v2537 = vmul.f32 %v2536, %v2534
        %v2538 = vmul.f32 %v2536, %v2531
        %v2539 = vadd.f32 %v2537, 0.0
        %v2540 = vadd.f32 %v2538, 0.0
        %v2541 = vld [vmem:[#allocation2] sm:$0xff]
        %v2542 = vld [vmem:[#allocation2 + $0x8] sm:$0xff]
        %v2543 = vmul.f32 %v2541, %v2534
        %v2544 = vmul.f32 %v2542, %v2531
        %v2545 = vadd.f32 %v2543, 0.0
        %v2546 = vadd.f32 %v2544, 0.0
        %v2549 = vrot.slane %v2513, 7
        %v2550 = vrot.slane %v2514, 7
        %v2551 = vsel %vm627, %v2549, %v2550
        %v2554 = vsel %vm627, 0.0, %v2549
        %s2555 = sld [smem:[#allocation9 + $0x80]]
        %v2556 = vstv %s2555
        %v2557 = vmul.f32 %v2556, %v2554
        %v2558 = vmul.f32 %v2556, %v2551
        %v2559 = vadd.f32 %v2539, %v2557
        %v2560 = vadd.f32 %v2540, %v2558
        %v2561 = vld [vmem:[%s749] sm:$0xff]
        %v2562 = vld [vmem:[%s749 + $0x8] sm:$0xff]
        %v2563 = vmul.f32 %v2561, %v2554
        %v2564 = vmul.f32 %v2562, %v2551
        %v2565 = vadd.f32 %v2545, %v2563
        %v2566 = vadd.f32 %v2546, %v2564
        %v2569 = vrot.slane %v2501, 7
        %v2570 = vrot.slane %v2502, 7
        %v2571 = vsel %vm627, %v2569, %v2570
        %v2574 = vsel %vm627, 0.0, %v2569
        %s2575 = sld [smem:[#allocation9 + $0x100]]
        %v2576 = vstv %s2575
        %v2577 = vmul.f32 %v2576, %v2574
        %v2578 = vmul.f32 %v2576, %v2571
        %v2579 = vadd.f32 %v2559, %v2577
        %v2580 = vadd.f32 %v2560, %v2578
        %v2581 = vld [vmem:[%s812] sm:$0xff]
        %v2582 = vld [vmem:[%s812 + $0x8] sm:$0xff]
        %v2583 = vmul.f32 %v2581, %v2574
        %v2584 = vmul.f32 %v2582, %v2571
        %v2585 = vadd.f32 %v2565, %v2583
        %v2586 = vadd.f32 %v2566, %v2584
        %v2589 = vrot.slane %v2519, 7
        %v2590 = vrot.slane %v2520, 7
        %v2591 = vsel %vm627, %v2589, %v2590
        %v2594 = vsel %vm627, 0.0, %v2589
        %s2595 = sld [smem:[#allocation9 + $0x180]]
        %v2596 = vstv %s2595
        %v2597 = vmul.f32 %v2596, %v2594
        %v2598 = vmul.f32 %v2596, %v2591
        %v2599 = vadd.f32 %v2579, %v2597
        %v2600 = vadd.f32 %v2580, %v2598
        %v2601 = vld [vmem:[%s875] sm:$0xff]
        %v2602 = vld [vmem:[%s875 + $0x8] sm:$0xff]
        %v2603 = vmul.f32 %v2601, %v2594
        %v2604 = vmul.f32 %v2602, %v2591
        %v2605 = vadd.f32 %v2585, %v2603
        %v2606 = vadd.f32 %v2586, %v2604
        %v2609 = vrot.slane %v2525, 7
        %v2610 = vrot.slane %v2526, 7
        %v2611 = vsel %vm627, %v2609, %v2610
        %v2614 = vsel %vm627, 0.0, %v2609
        %s2615 = sld [smem:[#allocation9 + $0x200]]
        %v2616 = vstv %s2615
        %v2617 = vmul.f32 %v2616, %v2614
        %v2618 = vmul.f32 %v2616, %v2611
        %v2619 = vadd.f32 %v2599, %v2617
        %v2620 = vadd.f32 %v2600, %v2618
        %v2621 = vld [vmem:[%s938] sm:$0xff]
        %v2622 = vld [vmem:[%s938 + $0x8] sm:$0xff]
        %v2623 = vmul.f32 %v2621, %v2614
        %v2624 = vmul.f32 %v2622, %v2611
        %v2625 = vadd.f32 %v2605, %v2623
        %v2626 = vadd.f32 %v2606, %v2624
        %s2627 = sld [smem:[#allocation9 + $0x280]]
        %v2628 = vstv %s2627
        %v2629 = vmul.f32 %v2628, %v2507
        %v2630 = vmul.f32 %v2628, %v2508
        %v2631 = vadd.f32 %v2619, %v2629
        %v2632 = vadd.f32 %v2620, %v2630
        %v2633 = vld [vmem:[%s969] sm:$0xff]
        %v2634 = vld [vmem:[%s969 + $0x8] sm:$0xff]
        %v2635 = vmul.f32 %v2633, %v2507
        %v2636 = vmul.f32 %v2634, %v2508
        %v2637 = vadd.f32 %v2625, %v2635
        %v2638 = vadd.f32 %v2626, %v2636
        %s2639 = sld [smem:[#allocation9 + $0x300]]
        %v2640 = vstv %s2639
        %v2641 = vmul.f32 %v2640, %v2513
        %v2642 = vmul.f32 %v2640, %v2514
        %v2643 = vadd.f32 %v2631, %v2641
        %v2644 = vadd.f32 %v2632, %v2642
        %v2645 = vld [vmem:[%s1000] sm:$0xff]
        %v2646 = vld [vmem:[%s1000 + $0x8] sm:$0xff]
        %v2647 = vmul.f32 %v2645, %v2513
        %v2648 = vmul.f32 %v2646, %v2514
        %v2649 = vadd.f32 %v2637, %v2647
        %v2650 = vadd.f32 %v2638, %v2648
        %s2651 = sld [smem:[#allocation9 + $0x380]]
        %v2652 = vstv %s2651
        %v2653 = vmul.f32 %v2652, %v2519
        %v2654 = vmul.f32 %v2652, %v2520
        %v2655 = vadd.f32 %v2643, %v2653
        %v2656 = vadd.f32 %v2644, %v2654
        %v2657 = vld [vmem:[%s1031] sm:$0xff]
        %v2658 = vld [vmem:[%s1031 + $0x8] sm:$0xff]
        %v2659 = vmul.f32 %v2657, %v2519
        %v2660 = vmul.f32 %v2658, %v2520
        %v2661 = vadd.f32 %v2649, %v2659
        %v2662 = vadd.f32 %v2650, %v2660
        %s2663 = sld [smem:[#allocation9 + $0x400]]
        %v2664 = vstv %s2663
        %v2665 = vmul.f32 %v2664, %v2525
        %v2666 = vmul.f32 %v2664, %v2526
        %v2667 = vadd.f32 %v2655, %v2665
        %v2668 = vadd.f32 %v2656, %v2666
        %v2669 = vld [vmem:[%s1062] sm:$0xff]
        %v2670 = vld [vmem:[%s1062 + $0x8] sm:$0xff]
        %v2671 = vmul.f32 %v2669, %v2525
        %v2672 = vmul.f32 %v2670, %v2526
        %v2673 = vadd.f32 %v2661, %v2671
        %v2674 = vadd.f32 %v2662, %v2672
        %v2675 = vrot.slane %v2507, 1
        %v2676 = vrot.slane %v2508, 1
        %v2677 = vsel %vm1065, %v2675, %v2676
        %v2680 = vsel %vm1065, %v2676, 0.0
        %s2681 = sld [smem:[#allocation9 + $0x480]]
        %v2682 = vstv %s2681
        %v2683 = vmul.f32 %v2682, %v2677
        %v2684 = vmul.f32 %v2682, %v2680
        %v2685 = vadd.f32 %v2667, %v2683
        %v2686 = vadd.f32 %v2668, %v2684
        %v2687 = vld [vmem:[%s1118] sm:$0xff]
        %v2688 = vld [vmem:[%s1118 + $0x8] sm:$0xff]
        %v2689 = vmul.f32 %v2687, %v2677
        %v2690 = vmul.f32 %v2688, %v2680
        %v2691 = vadd.f32 %v2673, %v2689
        %v2692 = vadd.f32 %v2674, %v2690
        %v2693 = vrot.slane %v2513, 1
        %v2694 = vrot.slane %v2514, 1
        %v2695 = vsel %vm1065, %v2693, %v2694
        %v2698 = vsel %vm1065, %v2694, 0.0
        %s2699 = sld [smem:[#allocation9 + $0x500]]
        %v2700 = vstv %s2699
        %v2701 = vmul.f32 %v2700, %v2695
        %v2702 = vmul.f32 %v2700, %v2698
        %v2703 = vadd.f32 %v2685, %v2701
        %v2704 = vadd.f32 %v2686, %v2702
        %v2705 = vld [vmem:[%s1173] sm:$0xff]
        %v2706 = vld [vmem:[%s1173 + $0x8] sm:$0xff]
        %v2707 = vmul.f32 %v2705, %v2695
        %v2708 = vmul.f32 %v2706, %v2698
        %v2709 = vadd.f32 %v2691, %v2707
        %v2710 = vadd.f32 %v2692, %v2708
        %v2711 = vrot.slane %v2501, 1
        %v2712 = vrot.slane %v2502, 1
        %v2713 = vsel %vm1065, %v2711, %v2712
        %v2716 = vsel %vm1065, %v2712, 0.0
        %s2717 = sld [smem:[#allocation9 + $0x580]]
        %v2718 = vstv %s2717
        %v2719 = vmul.f32 %v2718, %v2713
        %v2720 = vmul.f32 %v2718, %v2716
        %v2721 = vadd.f32 %v2703, %v2719
        %v2722 = vadd.f32 %v2704, %v2720
        %v2723 = vld [vmem:[%s1228] sm:$0xff]
        %v2724 = vld [vmem:[%s1228 + $0x8] sm:$0xff]
        %v2725 = vmul.f32 %v2723, %v2713
        %v2726 = vmul.f32 %v2724, %v2716
        %v2727 = vadd.f32 %v2709, %v2725
        %v2728 = vadd.f32 %v2710, %v2726
        %v2729 = vrot.slane %v2519, 1
        %v2730 = vrot.slane %v2520, 1
        %v2731 = vsel %vm1065, %v2729, %v2730
        %v2734 = vsel %vm1065, %v2730, 0.0
        %s2735 = sld [smem:[#allocation9 + $0x600]]
        %v2736 = vstv %s2735
        %v2737 = vmul.f32 %v2736, %v2731
        %v2738 = vmul.f32 %v2736, %v2734
        %v2739 = vadd.f32 %v2721, %v2737
        %v2740 = vadd.f32 %v2722, %v2738
        %v2741 = vld [vmem:[%s1283] sm:$0xff]
        %v2742 = vld [vmem:[%s1283 + $0x8] sm:$0xff]
        %v2743 = vmul.f32 %v2741, %v2731
        %v2744 = vmul.f32 %v2742, %v2734
        %v2745 = vadd.f32 %v2727, %v2743
        %v2746 = vadd.f32 %v2728, %v2744
        %v2747 = vrot.slane %v2525, 1
        %v2748 = vrot.slane %v2526, 1
        %v2749 = vsel %vm1065, %v2747, %v2748
        %v2752 = vsel %vm1065, %v2748, 0.0
        %s2753 = sld [smem:[#allocation9 + $0x680]]
        %v2754 = vstv %s2753
        %v2755 = vmul.f32 %v2754, %v2749
        %v2756 = vmul.f32 %v2754, %v2752
        %v2757 = vadd.f32 %v2739, %v2755
        %v2758 = vadd.f32 %v2740, %v2756
        %v2759 = vld [vmem:[%s1338] sm:$0xff]
        %v2760 = vld [vmem:[%s1338 + $0x8] sm:$0xff]
        %v2761 = vmul.f32 %v2759, %v2749
        %v2762 = vmul.f32 %v2760, %v2752
        %v2763 = vadd.f32 %v2745, %v2761
        %v2764 = vadd.f32 %v2746, %v2762
        %v2765 = vld [vmem:[%s491] sm:$0xff]
        %v2766 = vld [vmem:[%s491 + $0x8] sm:$0xff]
        %s2767 = sld [smem:[#allocation12]]
        %s2768 = sld [smem:[#allocation13]]
        %v2769 = vmul.f32 %v2763, %v2765
        %v2770 = vmul.f32 %v2764, %v2766
        %v2771 = vstv %s2768
        %v2772 = vmul.f32 %v2771, %v2769
        %v2773 = vmul.f32 %v2771, %v2770
        %v2774 = vstv %s2767
        %v2775 = vadd.f32 %v2774, %v2772
        %v2776 = vadd.f32 %v2774, %v2773
        %v2777 = vmul.f32 %v2757, %v2775
        %v2778 = vmul.f32 %v2758, %v2776
        %v2779 = vmul.f32 %v2476, %v2498
        %v2780 = vmul.f32 %v2478, %v2500
        %2781 = vrot.lane.b32.xlu0 %v2779, 2
        %v2782 = vpop.permute.xlu0 %2781
        %2783 = vrot.lane.b32.xlu0 %v2780, 2
        %v2784 = vpop.permute.xlu0 %2783
        %v2785 = vmul.f32 %v2782, %v499
        %v2786 = vmul.f32 %v2784, %v499
        %2787 = vrot.lane.b32.xlu0 %v2779, 1
        %v2788 = vpop.permute.xlu0 %2787
        %2789 = vrot.lane.b32.xlu0 %v2780, 1
        %v2790 = vpop.permute.xlu0 %2789
        %v2791 = vmul.f32 %v2788, %v505
        %v2792 = vmul.f32 %v2790, %v505
        %2793 = vrot.lane.b32.xlu0 %v2779, 127
        %v2794 = vpop.permute.xlu0 %2793
        %2795 = vrot.lane.b32.xlu0 %v2780, 127
        %v2796 = vpop.permute.xlu0 %2795
        %v2797 = vmul.f32 %v2794, %v511
        %v2798 = vmul.f32 %v2796, %v511
        %2799 = vrot.lane.b32.xlu0 %v2779, 126
        %v2800 = vpop.permute.xlu0 %2799
        %2801 = vrot.lane.b32.xlu0 %v2780, 126
        %v2802 = vpop.permute.xlu0 %2801
        %v2803 = vmul.f32 %v2800, %v517
        %v2804 = vmul.f32 %v2802, %v517
        %v2807 = vrot.slane %v2785, 7
        %v2808 = vrot.slane %v2786, 7
        %v2809 = vsel %vm627, %v2807, %v2808
        %v2812 = vsel %vm627, 0.0, %v2807
        %s2813 = sld [smem:[#allocation9 + $0x1]]
        %v2814 = vstv %s2813
        %v2815 = vmul.f32 %v2814, %v2812
        %v2816 = vmul.f32 %v2814, %v2809
        %v2817 = vadd.f32 %v2815, 0.0
        %v2818 = vadd.f32 %v2816, 0.0
        %v2819 = vmul.f32 %v2541, %v2812
        %v2820 = vmul.f32 %v2542, %v2809
        %v2821 = vadd.f32 %v2819, 0.0
        %v2822 = vadd.f32 %v2820, 0.0
        %v2825 = vrot.slane %v2791, 7
        %v2826 = vrot.slane %v2792, 7
        %v2827 = vsel %vm627, %v2825, %v2826
        %v2830 = vsel %vm627, 0.0, %v2825
        %s2831 = sld [smem:[#allocation9 + $0x81]]
        %v2832 = vstv %s2831
        %v2833 = vmul.f32 %v2832, %v2830
        %v2834 = vmul.f32 %v2832, %v2827
        %v2835 = vadd.f32 %v2817, %v2833
        %v2836 = vadd.f32 %v2818, %v2834
        %v2837 = vmul.f32 %v2561, %v2830
        %v2838 = vmul.f32 %v2562, %v2827
        %v2839 = vadd.f32 %v2821, %v2837
        %v2840 = vadd.f32 %v2822, %v2838
        %v2843 = vrot.slane %v2779, 7
        %v2844 = vrot.slane %v2780, 7
        %v2845 = vsel %vm627, %v2843, %v2844
        %v2848 = vsel %vm627, 0.0, %v2843
        %s2849 = sld [smem:[#allocation9 + $0x101]]
        %v2850 = vstv %s2849
        %v2851 = vmul.f32 %v2850, %v2848
        %v2852 = vmul.f32 %v2850, %v2845
        %v2853 = vadd.f32 %v2835, %v2851
        %v2854 = vadd.f32 %v2836, %v2852
        %v2855 = vmul.f32 %v2581, %v2848
        %v2856 = vmul.f32 %v2582, %v2845
        %v2857 = vadd.f32 %v2839, %v2855
        %v2858 = vadd.f32 %v2840, %v2856
        %v2861 = vrot.slane %v2797, 7
        %v2862 = vrot.slane %v2798, 7
        %v2863 = vsel %vm627, %v2861, %v2862
        %v2866 = vsel %vm627, 0.0, %v2861
        %s2867 = sld [smem:[#allocation9 + $0x181]]
        %v2868 = vstv %s2867
        %v2869 = vmul.f32 %v2868, %v2866
        %v2870 = vmul.f32 %v2868, %v2863
        %v2871 = vadd.f32 %v2853, %v2869
        %v2872 = vadd.f32 %v2854, %v2870
        %v2873 = vmul.f32 %v2601, %v2866
        %v2874 = vmul.f32 %v2602, %v2863
        %v2875 = vadd.f32 %v2857, %v2873
        %v2876 = vadd.f32 %v2858, %v2874
        %v2879 = vrot.slane %v2803, 7
        %v2880 = vrot.slane %v2804, 7
        %v2881 = vsel %vm627, %v2879, %v2880
        %v2884 = vsel %vm627, 0.0, %v2879
        %s2885 = sld [smem:[#allocation9 + $0x201]]
        %v2886 = vstv %s2885
        %v2887 = vmul.f32 %v2886, %v2884
        %v2888 = vmul.f32 %v2886, %v2881
        %v2889 = vadd.f32 %v2871, %v2887
        %v2890 = vadd.f32 %v2872, %v2888
        %v2891 = vmul.f32 %v2621, %v2884
        %v2892 = vmul.f32 %v2622, %v2881
        %v2893 = vadd.f32 %v2875, %v2891
        %v2894 = vadd.f32 %v2876, %v2892
        %s2895 = sld [smem:[#allocation9 + $0x281]]
        %v2896 = vstv %s2895
        %v2897 = vmul.f32 %v2896, %v2785
        %v2898 = vmul.f32 %v2896, %v2786
        %v2899 = vadd.f32 %v2889, %v2897
        %v2900 = vadd.f32 %v2890, %v2898
        %v2901 = vmul.f32 %v2633, %v2785
        %v2902 = vmul.f32 %v2634, %v2786
        %v2903 = vadd.f32 %v2893, %v2901
        %v2904 = vadd.f32 %v2894, %v2902
        %s2905 = sld [smem:[#allocation9 + $0x301]]
        %v2906 = vstv %s2905
        %v2907 = vmul.f32 %v2906, %v2791
        %v2908 = vmul.f32 %v2906, %v2792
        %v2909 = vadd.f32 %v2899, %v2907
        %v2910 = vadd.f32 %v2900, %v2908
        %v2911 = vmul.f32 %v2645, %v2791
        %v2912 = vmul.f32 %v2646, %v2792
        %v2913 = vadd.f32 %v2903, %v2911
        %v2914 = vadd.f32 %v2904, %v2912
        %s2915 = sld [smem:[#allocation9 + $0x381]]
        %v2916 = vstv %s2915
        %v2917 = vmul.f32 %v2916, %v2797
        %v2918 = vmul.f32 %v2916, %v2798
        %v2919 = vadd.f32 %v2909, %v2917
        %v2920 = vadd.f32 %v2910, %v2918
        %v2921 = vmul.f32 %v2657, %v2797
        %v2922 = vmul.f32 %v2658, %v2798
        %v2923 = vadd.f32 %v2913, %v2921
        %v2924 = vadd.f32 %v2914, %v2922
        %s2925 = sld [smem:[#allocation9 + $0x401]]
        %v2926 = vstv %s2925
        %v2927 = vmul.f32 %v2926, %v2803
        %v2928 = vmul.f32 %v2926, %v2804
        %v2929 = vadd.f32 %v2919, %v2927
        %v2930 = vadd.f32 %v2920, %v2928
        %v2931 = vmul.f32 %v2669, %v2803
        %v2932 = vmul.f32 %v2670, %v2804
        %v2933 = vadd.f32 %v2923, %v2931
        %v2934 = vadd.f32 %v2924, %v2932
        %v2935 = vrot.slane %v2785, 1
        %v2936 = vrot.slane %v2786, 1
        %v2937 = vsel %vm1065, %v2935, %v2936
        %v2940 = vsel %vm1065, %v2936, 0.0
        %s2941 = sld [smem:[#allocation9 + $0x481]]
        %v2942 = vstv %s2941
        %v2943 = vmul.f32 %v2942, %v2937
        %v2944 = vmul.f32 %v2942, %v2940
        %v2945 = vadd.f32 %v2929, %v2943
        %v2946 = vadd.f32 %v2930, %v2944
        %v2947 = vmul.f32 %v2687, %v2937
        %v2948 = vmul.f32 %v2688, %v2940
        %v2949 = vadd.f32 %v2933, %v2947
        %v2950 = vadd.f32 %v2934, %v2948
        %v2951 = vrot.slane %v2791, 1
        %v2952 = vrot.slane %v2792, 1
        %v2953 = vsel %vm1065, %v2951, %v2952
        %v2956 = vsel %vm1065, %v2952, 0.0
        %s2957 = sld [smem:[#allocation9 + $0x501]]
        %v2958 = vstv %s2957
        %v2959 = vmul.f32 %v2958, %v2953
        %v2960 = vmul.f32 %v2958, %v2956
        %v2961 = vadd.f32 %v2945, %v2959
        %v2962 = vadd.f32 %v2946, %v2960
        %v2963 = vmul.f32 %v2705, %v2953
        %v2964 = vmul.f32 %v2706, %v2956
        %v2965 = vadd.f32 %v2949, %v2963
        %v2966 = vadd.f32 %v2950, %v2964
        %v2967 = vrot.slane %v2779, 1
        %v2968 = vrot.slane %v2780, 1
        %v2969 = vsel %vm1065, %v2967, %v2968
        %v2972 = vsel %vm1065, %v2968, 0.0
        %s2973 = sld [smem:[#allocation9 + $0x581]]
        %v2974 = vstv %s2973
        %v2975 = vmul.f32 %v2974, %v2969
        %v2976 = vmul.f32 %v2974, %v2972
        %v2977 = vadd.f32 %v2961, %v2975
        %v2978 = vadd.f32 %v2962, %v2976
        %v2979 = vmul.f32 %v2723, %v2969
        %v2980 = vmul.f32 %v2724, %v2972
        %v2981 = vadd.f32 %v2965, %v2979
        %v2982 = vadd.f32 %v2966, %v2980
        %v2983 = vrot.slane %v2797, 1
        %v2984 = vrot.slane %v2798, 1
        %v2985 = vsel %vm1065, %v2983, %v2984
        %v2988 = vsel %vm1065, %v2984, 0.0
        %s2989 = sld [smem:[#allocation9 + $0x601]]
        %v2990 = vstv %s2989
        %v2991 = vmul.f32 %v2990, %v2985
        %v2992 = vmul.f32 %v2990, %v2988
        %v2993 = vadd.f32 %v2977, %v2991
        %v2994 = vadd.f32 %v2978, %v2992
        %v2995 = vmul.f32 %v2741, %v2985
        %v2996 = vmul.f32 %v2742, %v2988
        %v2997 = vadd.f32 %v2981, %v2995
        %v2998 = vadd.f32 %v2982, %v2996
        %v2999 = vrot.slane %v2803, 1
        %v3000 = vrot.slane %v2804, 1
        %v3001 = vsel %vm1065, %v2999, %v3000
        %v3004 = vsel %vm1065, %v3000, 0.0
        %s3005 = sld [smem:[#allocation9 + $0x681]]
        %v3006 = vstv %s3005
        %v3007 = vmul.f32 %v3006, %v3001
        %v3008 = vmul.f32 %v3006, %v3004
        %v3009 = vadd.f32 %v2993, %v3007
        %v3010 = vadd.f32 %v2994, %v3008
        %v3011 = vmul.f32 %v2759, %v3001
        %v3012 = vmul.f32 %v2760, %v3004
        %v3013 = vadd.f32 %v2997, %v3011
        %v3014 = vadd.f32 %v2998, %v3012
        %s3015 = sld [smem:[#allocation12 + $0x1]]
        %s3016 = sld [smem:[#allocation13 + $0x1]]
        %v3017 = vmul.f32 %v3013, %v2765
        %v3018 = vmul.f32 %v3014, %v2766
        %v3019 = vstv %s3016
        %v3020 = vmul.f32 %v3019, %v3017
        %v3021 = vmul.f32 %v3019, %v3018
        %v3022 = vstv %s3015
        %v3023 = vadd.f32 %v3022, %v3020
        %v3024 = vadd.f32 %v3022, %v3021
        %v3025 = vmul.f32 %v3009, %v3023
        %v3026 = vmul.f32 %v3010, %v3024
        %v3027 = vmul.f32 %v2484, %v2498
        %v3028 = vmul.f32 %v2486, %v2500
        %3029 = vrot.lane.b32.xlu0 %v3027, 2
        %v3030 = vpop.permute.xlu0 %3029
        %3031 = vrot.lane.b32.xlu0 %v3028, 2
        %v3032 = vpop.permute.xlu0 %3031
        %v3033 = vmul.f32 %v3030, %v499
        %v3034 = vmul.f32 %v3032, %v499
        %3035 = vrot.lane.b32.xlu0 %v3027, 1
        %v3036 = vpop.permute.xlu0 %3035
        %3037 = vrot.lane.b32.xlu0 %v3028, 1
        %v3038 = vpop.permute.xlu0 %3037
        %v3039 = vmul.f32 %v3036, %v505
        %v3040 = vmul.f32 %v3038, %v505
        %3041 = vrot.lane.b32.xlu0 %v3027, 127
        %v3042 = vpop.permute.xlu0 %3041
        %3043 = vrot.lane.b32.xlu0 %v3028, 127
        %v3044 = vpop.permute.xlu0 %3043
        %v3045 = vmul.f32 %v3042, %v511
        %v3046 = vmul.f32 %v3044, %v511
        %3047 = vrot.lane.b32.xlu0 %v3027, 126
        %v3048 = vpop.permute.xlu0 %3047
        %3049 = vrot.lane.b32.xlu0 %v3028, 126
        %v3050 = vpop.permute.xlu0 %3049
        %v3051 = vmul.f32 %v3048, %v517
        %v3052 = vmul.f32 %v3050, %v517
        %v3055 = vrot.slane %v3033, 7
        %v3056 = vrot.slane %v3034, 7
        %v3057 = vsel %vm627, %v3055, %v3056
        %v3060 = vsel %vm627, 0.0, %v3055
        %s3061 = sld [smem:[#allocation9 + $0x2]]
        %v3062 = vstv %s3061
        %v3063 = vmul.f32 %v3062, %v3060
        %v3064 = vmul.f32 %v3062, %v3057
        %v3065 = vadd.f32 %v3063, 0.0
        %v3066 = vadd.f32 %v3064, 0.0
        %v3067 = vmul.f32 %v2541, %v3060
        %v3068 = vmul.f32 %v2542, %v3057
        %v3069 = vadd.f32 %v3067, 0.0
        %v3070 = vadd.f32 %v3068, 0.0
        %v3073 = vrot.slane %v3039, 7
        %v3074 = vrot.slane %v3040, 7
        %v3075 = vsel %vm627, %v3073, %v3074
        %v3078 = vsel %vm627, 0.0, %v3073
        %s3079 = sld [smem:[#allocation9 + $0x82]]
        %v3080 = vstv %s3079
        %v3081 = vmul.f32 %v3080, %v3078
        %v3082 = vmul.f32 %v3080, %v3075
        %v3083 = vadd.f32 %v3065, %v3081
        %v3084 = vadd.f32 %v3066, %v3082
        %v3085 = vmul.f32 %v2561, %v3078
        %v3086 = vmul.f32 %v2562, %v3075
        %v3087 = vadd.f32 %v3069, %v3085
        %v3088 = vadd.f32 %v3070, %v3086
        %v3091 = vrot.slane %v3027, 7
        %v3092 = vrot.slane %v3028, 7
        %v3093 = vsel %vm627, %v3091, %v3092
        %v3096 = vsel %vm627, 0.0, %v3091
        %s3097 = sld [smem:[#allocation9 + $0x102]]
        %v3098 = vstv %s3097
        %v3099 = vmul.f32 %v3098, %v3096
        %v3100 = vmul.f32 %v3098, %v3093
        %v3101 = vadd.f32 %v3083, %v3099
        %v3102 = vadd.f32 %v3084, %v3100
        %v3103 = vmul.f32 %v2581, %v3096
        %v3104 = vmul.f32 %v2582, %v3093
        %v3105 = vadd.f32 %v3087, %v3103
        %v3106 = vadd.f32 %v3088, %v3104
        %v3109 = vrot.slane %v3045, 7
        %v3110 = vrot.slane %v3046, 7
        %v3111 = vsel %vm627, %v3109, %v3110
        %v3114 = vsel %vm627, 0.0, %v3109
        %s3115 = sld [smem:[#allocation9 + $0x182]]
        %v3116 = vstv %s3115
        %v3117 = vmul.f32 %v3116, %v3114
        %v3118 = vmul.f32 %v3116, %v3111
        %v3119 = vadd.f32 %v3101, %v3117
        %v3120 = vadd.f32 %v3102, %v3118
        %v3121 = vmul.f32 %v2601, %v3114
        %v3122 = vmul.f32 %v2602, %v3111
        %v3123 = vadd.f32 %v3105, %v3121
        %v3124 = vadd.f32 %v3106, %v3122
        %v3127 = vrot.slane %v3051, 7
        %v3128 = vrot.slane %v3052, 7
        %v3129 = vsel %vm627, %v3127, %v3128
        %v3132 = vsel %vm627, 0.0, %v3127
        %s3133 = sld [smem:[#allocation9 + $0x202]]
        %v3134 = vstv %s3133
        %v3135 = vmul.f32 %v3134, %v3132
        %v3136 = vmul.f32 %v3134, %v3129
        %v3137 = vadd.f32 %v3119, %v3135
        %v3138 = vadd.f32 %v3120, %v3136
        %v3139 = vmul.f32 %v2621, %v3132
        %v3140 = vmul.f32 %v2622, %v3129
        %v3141 = vadd.f32 %v3123, %v3139
        %v3142 = vadd.f32 %v3124, %v3140
        %s3143 = sld [smem:[#allocation9 + $0x282]]
        %v3144 = vstv %s3143
        %v3145 = vmul.f32 %v3144, %v3033
        %v3146 = vmul.f32 %v3144, %v3034
        %v3147 = vadd.f32 %v3137, %v3145
        %v3148 = vadd.f32 %v3138, %v3146
        %v3149 = vmul.f32 %v2633, %v3033
        %v3150 = vmul.f32 %v2634, %v3034
        %v3151 = vadd.f32 %v3141, %v3149
        %v3152 = vadd.f32 %v3142, %v3150
        %s3153 = sld [smem:[#allocation9 + $0x302]]
        %v3154 = vstv %s3153
        %v3155 = vmul.f32 %v3154, %v3039
        %v3156 = vmul.f32 %v3154, %v3040
        %v3157 = vadd.f32 %v3147, %v3155
        %v3158 = vadd.f32 %v3148, %v3156
        %v3159 = vmul.f32 %v2645, %v3039
        %v3160 = vmul.f32 %v2646, %v3040
        %v3161 = vadd.f32 %v3151, %v3159
        %v3162 = vadd.f32 %v3152, %v3160
        %s3163 = sld [smem:[#allocation9 + $0x382]]
        %v3164 = vstv %s3163
        %v3165 = vmul.f32 %v3164, %v3045
        %v3166 = vmul.f32 %v3164, %v3046
        %v3167 = vadd.f32 %v3157, %v3165
        %v3168 = vadd.f32 %v3158, %v3166
        %v3169 = vmul.f32 %v2657, %v3045
        %v3170 = vmul.f32 %v2658, %v3046
        %v3171 = vadd.f32 %v3161, %v3169
        %v3172 = vadd.f32 %v3162, %v3170
        %s3173 = sld [smem:[#allocation9 + $0x402]]
        %v3174 = vstv %s3173
        %v3175 = vmul.f32 %v3174, %v3051
        %v3176 = vmul.f32 %v3174, %v3052
        %v3177 = vadd.f32 %v3167, %v3175
        %v3178 = vadd.f32 %v3168, %v3176
        %v3179 = vmul.f32 %v2669, %v3051
        %v3180 = vmul.f32 %v2670, %v3052
        %v3181 = vadd.f32 %v3171, %v3179
        %v3182 = vadd.f32 %v3172, %v3180
        %v3183 = vrot.slane %v3033, 1
        %v3184 = vrot.slane %v3034, 1
        %v3185 = vsel %vm1065, %v3183, %v3184
        %v3188 = vsel %vm1065, %v3184, 0.0
        %s3189 = sld [smem:[#allocation9 + $0x482]]
        %v3190 = vstv %s3189
        %v3191 = vmul.f32 %v3190, %v3185
        %v3192 = vmul.f32 %v3190, %v3188
        %v3193 = vadd.f32 %v3177, %v3191
        %v3194 = vadd.f32 %v3178, %v3192
        %v3195 = vmul.f32 %v2687, %v3185
        %v3196 = vmul.f32 %v2688, %v3188
        %v3197 = vadd.f32 %v3181, %v3195
        %v3198 = vadd.f32 %v3182, %v3196
        %v3199 = vrot.slane %v3039, 1
        %v3200 = vrot.slane %v3040, 1
        %v3201 = vsel %vm1065, %v3199, %v3200
        %v3204 = vsel %vm1065, %v3200, 0.0
        %s3205 = sld [smem:[#allocation9 + $0x502]]
        %v3206 = vstv %s3205
        %v3207 = vmul.f32 %v3206, %v3201
        %v3208 = vmul.f32 %v3206, %v3204
        %v3209 = vadd.f32 %v3193, %v3207
        %v3210 = vadd.f32 %v3194, %v3208
        %v3211 = vmul.f32 %v2705, %v3201
        %v3212 = vmul.f32 %v2706, %v3204
        %v3213 = vadd.f32 %v3197, %v3211
        %v3214 = vadd.f32 %v3198, %v3212
        %v3215 = vrot.slane %v3027, 1
        %v3216 = vrot.slane %v3028, 1
        %v3217 = vsel %vm1065, %v3215, %v3216
        %v3220 = vsel %vm1065, %v3216, 0.0
        %s3221 = sld [smem:[#allocation9 + $0x582]]
        %v3222 = vstv %s3221
        %v3223 = vmul.f32 %v3222, %v3217
        %v3224 = vmul.f32 %v3222, %v3220
        %v3225 = vadd.f32 %v3209, %v3223
        %v3226 = vadd.f32 %v3210, %v3224
        %v3227 = vmul.f32 %v2723, %v3217
        %v3228 = vmul.f32 %v2724, %v3220
        %v3229 = vadd.f32 %v3213, %v3227
        %v3230 = vadd.f32 %v3214, %v3228
        %v3231 = vrot.slane %v3045, 1
        %v3232 = vrot.slane %v3046, 1
        %v3233 = vsel %vm1065, %v3231, %v3232
        %v3236 = vsel %vm1065, %v3232, 0.0
        %s3237 = sld [smem:[#allocation9 + $0x602]]
        %v3238 = vstv %s3237
        %v3239 = vmul.f32 %v3238, %v3233
        %v3240 = vmul.f32 %v3238, %v3236
        %v3241 = vadd.f32 %v3225, %v3239
        %v3242 = vadd.f32 %v3226, %v3240
        %v3243 = vmul.f32 %v2741, %v3233
        %v3244 = vmul.f32 %v2742, %v3236
        %v3245 = vadd.f32 %v3229, %v3243
        %v3246 = vadd.f32 %v3230, %v3244
        %v3247 = vrot.slane %v3051, 1
        %v3248 = vrot.slane %v3052, 1
        %v3249 = vsel %vm1065, %v3247, %v3248
        %v3252 = vsel %vm1065, %v3248, 0.0
        %s3253 = sld [smem:[#allocation9 + $0x682]]
        %v3254 = vstv %s3253
        %v3255 = vmul.f32 %v3254, %v3249
        %v3256 = vmul.f32 %v3254, %v3252
        %v3257 = vadd.f32 %v3241, %v3255
        %v3258 = vadd.f32 %v3242, %v3256
        %v3259 = vmul.f32 %v2759, %v3249
        %v3260 = vmul.f32 %v2760, %v3252
        %v3261 = vadd.f32 %v3245, %v3259
        %v3262 = vadd.f32 %v3246, %v3260
        %s3263 = sld [smem:[#allocation12 + $0x2]]
        %s3264 = sld [smem:[#allocation13 + $0x2]]
        %v3265 = vmul.f32 %v3261, %v2765
        %v3266 = vmul.f32 %v3262, %v2766
        %v3267 = vstv %s3264
        %v3268 = vmul.f32 %v3267, %v3265
        %v3269 = vmul.f32 %v3267, %v3266
        %v3270 = vstv %s3263
        %v3271 = vadd.f32 %v3270, %v3268
        %v3272 = vadd.f32 %v3270, %v3269
        %v3273 = vmul.f32 %v3257, %v3271
        %v3274 = vmul.f32 %v3258, %v3272
        %v3275 = vmul.f32 %v2492, %v2498
        %v3276 = vmul.f32 %v2494, %v2500
        %3277 = vrot.lane.b32.xlu0 %v3275, 2
        %v3278 = vpop.permute.xlu0 %3277
        %3279 = vrot.lane.b32.xlu0 %v3276, 2
        %v3280 = vpop.permute.xlu0 %3279
        %v3281 = vmul.f32 %v3278, %v499
        %v3282 = vmul.f32 %v3280, %v499
        %3283 = vrot.lane.b32.xlu0 %v3275, 1
        %v3284 = vpop.permute.xlu0 %3283
        %3285 = vrot.lane.b32.xlu0 %v3276, 1
        %v3286 = vpop.permute.xlu0 %3285
        %v3287 = vmul.f32 %v3284, %v505
        %v3288 = vmul.f32 %v3286, %v505
        %3289 = vrot.lane.b32.xlu0 %v3275, 127
        %v3290 = vpop.permute.xlu0 %3289
        %3291 = vrot.lane.b32.xlu0 %v3276, 127
        %v3292 = vpop.permute.xlu0 %3291
        %v3293 = vmul.f32 %v3290, %v511
        %v3294 = vmul.f32 %v3292, %v511
        %3295 = vrot.lane.b32.xlu0 %v3275, 126
        %v3296 = vpop.permute.xlu0 %3295
        %3297 = vrot.lane.b32.xlu0 %v3276, 126
        %v3298 = vpop.permute.xlu0 %3297
        %v3299 = vmul.f32 %v3296, %v517
        %v3300 = vmul.f32 %v3298, %v517
        %v3303 = vrot.slane %v3281, 7
        %v3304 = vrot.slane %v3282, 7
        %v3305 = vsel %vm627, %v3303, %v3304
        %v3308 = vsel %vm627, 0.0, %v3303
        %s3309 = sld [smem:[#allocation9 + $0x3]]
        %v3310 = vstv %s3309
        %v3311 = vmul.f32 %v3310, %v3308
        %v3312 = vmul.f32 %v3310, %v3305
        %v3313 = vadd.f32 %v3311, 0.0
        %v3314 = vadd.f32 %v3312, 0.0
        %v3315 = vmul.f32 %v2541, %v3308
        %v3316 = vmul.f32 %v2542, %v3305
        %v3317 = vadd.f32 %v3315, 0.0
        %v3318 = vadd.f32 %v3316, 0.0
        %v3321 = vrot.slane %v3287, 7
        %v3322 = vrot.slane %v3288, 7
        %v3323 = vsel %vm627, %v3321, %v3322
        %v3326 = vsel %vm627, 0.0, %v3321
        %s3327 = sld [smem:[#allocation9 + $0x83]]
        %v3328 = vstv %s3327
        %v3329 = vmul.f32 %v3328, %v3326
        %v3330 = vmul.f32 %v3328, %v3323
        %v3331 = vadd.f32 %v3313, %v3329
        %v3332 = vadd.f32 %v3314, %v3330
        %v3333 = vmul.f32 %v2561, %v3326
        %v3334 = vmul.f32 %v2562, %v3323
        %v3335 = vadd.f32 %v3317, %v3333
        %v3336 = vadd.f32 %v3318, %v3334
        %v3339 = vrot.slane %v3275, 7
        %v3340 = vrot.slane %v3276, 7
        %v3341 = vsel %vm627, %v3339, %v3340
        %v3344 = vsel %vm627, 0.0, %v3339
        %s3345 = sld [smem:[#allocation9 + $0x103]]
        %v3346 = vstv %s3345
        %v3347 = vmul.f32 %v3346, %v3344
        %v3348 = vmul.f32 %v3346, %v3341
        %v3349 = vadd.f32 %v3331, %v3347
        %v3350 = vadd.f32 %v3332, %v3348
        %v3351 = vmul.f32 %v2581, %v3344
        %v3352 = vmul.f32 %v2582, %v3341
        %v3353 = vadd.f32 %v3335, %v3351
        %v3354 = vadd.f32 %v3336, %v3352
        %v3357 = vrot.slane %v3293, 7
        %v3358 = vrot.slane %v3294, 7
        %v3359 = vsel %vm627, %v3357, %v3358
        %v3362 = vsel %vm627, 0.0, %v3357
        %s3363 = sld [smem:[#allocation9 + $0x183]]
        %v3364 = vstv %s3363
        %v3365 = vmul.f32 %v3364, %v3362
        %v3366 = vmul.f32 %v3364, %v3359
        %v3367 = vadd.f32 %v3349, %v3365
        %v3368 = vadd.f32 %v3350, %v3366
        %v3369 = vmul.f32 %v2601, %v3362
        %v3370 = vmul.f32 %v2602, %v3359
        %v3371 = vadd.f32 %v3353, %v3369
        %v3372 = vadd.f32 %v3354, %v3370
        %v3375 = vrot.slane %v3299, 7
        %v3376 = vrot.slane %v3300, 7
        %v3377 = vsel %vm627, %v3375, %v3376
        %v3380 = vsel %vm627, 0.0, %v3375
        %s3381 = sld [smem:[#allocation9 + $0x203]]
        %v3382 = vstv %s3381
        %v3383 = vmul.f32 %v3382, %v3380
        %v3384 = vmul.f32 %v3382, %v3377
        %v3385 = vadd.f32 %v3367, %v3383
        %v3386 = vadd.f32 %v3368, %v3384
        %v3387 = vmul.f32 %v2621, %v3380
        %v3388 = vmul.f32 %v2622, %v3377
        %v3389 = vadd.f32 %v3371, %v3387
        %v3390 = vadd.f32 %v3372, %v3388
        %s3391 = sld [smem:[#allocation9 + $0x283]]
        %v3392 = vstv %s3391
        %v3393 = vmul.f32 %v3392, %v3281
        %v3394 = vmul.f32 %v3392, %v3282
        %v3395 = vadd.f32 %v3385, %v3393
        %v3396 = vadd.f32 %v3386, %v3394
        %v3397 = vmul.f32 %v2633, %v3281
        %v3398 = vmul.f32 %v2634, %v3282
        %v3399 = vadd.f32 %v3389, %v3397
        %v3400 = vadd.f32 %v3390, %v3398
        %s3401 = sld [smem:[#allocation9 + $0x303]]
        %v3402 = vstv %s3401
        %v3403 = vmul.f32 %v3402, %v3287
        %v3404 = vmul.f32 %v3402, %v3288
        %v3405 = vadd.f32 %v3395, %v3403
        %v3406 = vadd.f32 %v3396, %v3404
        %v3407 = vmul.f32 %v2645, %v3287
        %v3408 = vmul.f32 %v2646, %v3288
        %v3409 = vadd.f32 %v3399, %v3407
        %v3410 = vadd.f32 %v3400, %v3408
        %s3411 = sld [smem:[#allocation9 + $0x383]]
        %v3412 = vstv %s3411
        %v3413 = vmul.f32 %v3412, %v3293
        %v3414 = vmul.f32 %v3412, %v3294
        %v3415 = vadd.f32 %v3405, %v3413
        %v3416 = vadd.f32 %v3406, %v3414
        %v3417 = vmul.f32 %v2657, %v3293
        %v3418 = vmul.f32 %v2658, %v3294
        %v3419 = vadd.f32 %v3409, %v3417
        %v3420 = vadd.f32 %v3410, %v3418
        %s3421 = sld [smem:[#allocation9 + $0x403]]
        %v3422 = vstv %s3421
        %v3423 = vmul.f32 %v3422, %v3299
        %v3424 = vmul.f32 %v3422, %v3300
        %v3425 = vadd.f32 %v3415, %v3423
        %v3426 = vadd.f32 %v3416, %v3424
        %v3427 = vmul.f32 %v2669, %v3299
        %v3428 = vmul.f32 %v2670, %v3300
        %v3429 = vadd.f32 %v3419, %v3427
        %v3430 = vadd.f32 %v3420, %v3428
        %v3431 = vrot.slane %v3281, 1
        %v3432 = vrot.slane %v3282, 1
        %v3433 = vsel %vm1065, %v3431, %v3432
        %v3436 = vsel %vm1065, %v3432, 0.0
        %s3437 = sld [smem:[#allocation9 + $0x483]]
        %v3438 = vstv %s3437
        %v3439 = vmul.f32 %v3438, %v3433
        %v3440 = vmul.f32 %v3438, %v3436
        %v3441 = vadd.f32 %v3425, %v3439
        %v3442 = vadd.f32 %v3426, %v3440
        %v3443 = vmul.f32 %v2687, %v3433
        %v3444 = vmul.f32 %v2688, %v3436
        %v3445 = vadd.f32 %v3429, %v3443
        %v3446 = vadd.f32 %v3430, %v3444
        %v3447 = vrot.slane %v3287, 1
        %v3448 = vrot.slane %v3288, 1
        %v3449 = vsel %vm1065, %v3447, %v3448
        %v3452 = vsel %vm1065, %v3448, 0.0
        %s3453 = sld [smem:[#allocation9 + $0x503]]
        %v3454 = vstv %s3453
        %v3455 = vmul.f32 %v3454, %v3449
        %v3456 = vmul.f32 %v3454, %v3452
        %v3457 = vadd.f32 %v3441, %v3455
        %v3458 = vadd.f32 %v3442, %v3456
        %v3459 = vmul.f32 %v2705, %v3449
        %v3460 = vmul.f32 %v2706, %v3452
        %v3461 = vadd.f32 %v3445, %v3459
        %v3462 = vadd.f32 %v3446, %v3460
        %v3463 = vrot.slane %v3275, 1
        %v3464 = vrot.slane %v3276, 1
        %v3465 = vsel %vm1065, %v3463, %v3464
        %v3468 = vsel %vm1065, %v3464, 0.0
        %s3469 = sld [smem:[#allocation9 + $0x583]]
        %v3470 = vstv %s3469
        %v3471 = vmul.f32 %v3470, %v3465
        %v3472 = vmul.f32 %v3470, %v3468
        %v3473 = vadd.f32 %v3457, %v3471
        %v3474 = vadd.f32 %v3458, %v3472
        %v3475 = vmul.f32 %v2723, %v3465
        %v3476 = vmul.f32 %v2724, %v3468
        %v3477 = vadd.f32 %v3461, %v3475
        %v3478 = vadd.f32 %v3462, %v3476
        %v3479 = vrot.slane %v3293, 1
        %v3480 = vrot.slane %v3294, 1
        %v3481 = vsel %vm1065, %v3479, %v3480
        %v3484 = vsel %vm1065, %v3480, 0.0
        %s3485 = sld [smem:[#allocation9 + $0x603]]
        %v3486 = vstv %s3485
        %v3487 = vmul.f32 %v3486, %v3481
        %v3488 = vmul.f32 %v3486, %v3484
        %v3489 = vadd.f32 %v3473, %v3487
        %v3490 = vadd.f32 %v3474, %v3488
        %v3491 = vmul.f32 %v2741, %v3481
        %v3492 = vmul.f32 %v2742, %v3484
        %v3493 = vadd.f32 %v3477, %v3491
        %v3494 = vadd.f32 %v3478, %v3492
        %v3495 = vrot.slane %v3299, 1
        %v3496 = vrot.slane %v3300, 1
        %v3497 = vsel %vm1065, %v3495, %v3496
        %v3500 = vsel %vm1065, %v3496, 0.0
        %s3501 = sld [smem:[#allocation9 + $0x683]]
        %v3502 = vstv %s3501
        %v3503 = vmul.f32 %v3502, %v3497
        %v3504 = vmul.f32 %v3502, %v3500
        %v3505 = vadd.f32 %v3489, %v3503
        %v3506 = vadd.f32 %v3490, %v3504
        %v3507 = vmul.f32 %v2759, %v3497
        %v3508 = vmul.f32 %v2760, %v3500
        %v3509 = vadd.f32 %v3493, %v3507
        %v3510 = vadd.f32 %v3494, %v3508
        %s3511 = sld [smem:[#allocation12 + $0x3]]
        %s3512 = sld [smem:[#allocation13 + $0x3]]
        %v3513 = vmul.f32 %v3509, %v2765
        %v3514 = vmul.f32 %v3510, %v2766
        %v3515 = vstv %s3512
        %v3516 = vmul.f32 %v3515, %v3513
        %v3517 = vmul.f32 %v3515, %v3514
        %v3518 = vstv %s3511
        %v3519 = vadd.f32 %v3518, %v3516
        %v3520 = vadd.f32 %v3518, %v3517
        %v3521 = vmul.f32 %v3505, %v3519
        %v3522 = vmul.f32 %v3506, %v3520
        %v3523 = vadd.f32 %v2777, %v3025
        %v3524 = vadd.f32 %v2778, %v3026
        %v3525 = vadd.f32 %v3523, %v3273
        %v3526 = vadd.f32 %v3524, %v3274
        %v3527 = vadd.f32 %v3525, %v3521
        %v3528 = vadd.f32 %v3526, %v3522
        %v3529 = vld [vmem:[%s408] sm:$0xff]
        %v3530 = vld [vmem:[%s408 + $0x8] sm:$0xff]
        %v3531 = vsub.f32 %v3527, %v2777
        %v3532 = vsub.f32 %v3528, %v2778
        %v3533 = vsub.f32 %v3529, %v3531
        %v3534 = vsub.f32 %v3530, %v3532
        %3535 = vst [vmem:[%s486] sm:$0xff] %v3533
        %3536 = vst [vmem:[%s486 + $0x8] sm:$0xff] %v3534
        %v3537 = vld [vmem:[%s1343] sm:$0xff]
        %v3538 = vld [vmem:[%s1343 + $0x8] sm:$0xff]
        %v3539 = vsub.f32 %v3527, %v3025
        %v3540 = vsub.f32 %v3528, %v3026
        %v3541 = vsub.f32 %v3537, %v3539
        %v3542 = vsub.f32 %v3538, %v3540
        %3543 = vst [vmem:[%s2432] sm:$0xff] %v3541
        %3544 = vst [vmem:[%s2432 + $0x8] sm:$0xff] %v3542
        %v3545 = vld [vmem:[%s1348] sm:$0xff]
        %v3546 = vld [vmem:[%s1348 + $0x8] sm:$0xff]
        %v3547 = vsub.f32 %v3527, %v3273
        %v3548 = vsub.f32 %v3528, %v3274
        %v3549 = vsub.f32 %v3545, %v3547
        %v3550 = vsub.f32 %v3546, %v3548
        %3551 = vst [vmem:[%s2441] sm:$0xff] %v3549
        %3552 = vst [vmem:[%s2441 + $0x8] sm:$0xff] %v3550
        %v3553 = vld [vmem:[%s1353] sm:$0xff]
        %v3554 = vld [vmem:[%s1353 + $0x8] sm:$0xff]
        %v3555 = vsub.f32 %v3527, %v3521
        %v3556 = vsub.f32 %v3528, %v3522
        %v3557 = vsub.f32 %v3553, %v3555
        %v3558 = vsub.f32 %v3554, %v3556
        %3559 = vst [vmem:[%s2450] sm:$0xff] %v3557
        %3560 = vst [vmem:[%s2450 + $0x8] sm:$0xff] %v3558
        %v3561 = vld [vmem:[%s486] sm:$0xff]
        %v3562 = vld [vmem:[%s486 + $0x8] sm:$0xff]
        %v3563 = vld [vmem:[%s2432] sm:$0xff]
        %v3564 = vld [vmem:[%s2432 + $0x8] sm:$0xff]
        %v3565 = vmax.f32 %v3561, %v3563
        %v3566 = vmax.f32 %v3562, %v3564
        %v3567 = vld [vmem:[%s2441] sm:$0xff]
        %v3568 = vld [vmem:[%s2441 + $0x8] sm:$0xff]
        %v3569 = vmax.f32 %v3565, %v3567
        %v3570 = vmax.f32 %v3566, %v3568
        %v3571 = vld [vmem:[%s2450] sm:$0xff]
        %v3572 = vld [vmem:[%s2450 + $0x8] sm:$0xff]
        %v3573 = vmax.f32 %v3569, %v3571
        %v3574 = vmax.f32 %v3570, %v3572
        %v3575 = vsub.f32 %v3561, %v3573
        %v3576 = vsub.f32 %v3562, %v3574
        %v3577 = vmul.f32 %v3575, 1.442695
        %v3578 = vpow.pop %v3577
        %v3579 = vmul.f32 %v3576, 1.442695
        %v3580 = vpow.pop %v3579
        %v3581 = vsub.f32 %v3563, %v3573
        %v3582 = vsub.f32 %v3564, %v3574
        %v3583 = vmul.f32 %v3581, 1.442695
        %v3584 = vpow.pop %v3583
        %v3585 = vmul.f32 %v3582, 1.442695
        %v3586 = vpow.pop %v3585
        %v3587 = vadd.f32 %v3578, %v3584
        %v3588 = vadd.f32 %v3580, %v3586
        %v3589 = vsub.f32 %v3567, %v3573
        %v3590 = vsub.f32 %v3568, %v3574
        %v3591 = vmul.f32 %v3589, 1.442695
        %v3592 = vpow.pop %v3591
        %v3593 = vmul.f32 %v3590, 1.442695
        %v3594 = vpow.pop %v3593
        %v3595 = vadd.f32 %v3587, %v3592
        %v3596 = vadd.f32 %v3588, %v3594
        %v3597 = vsub.f32 %v3571, %v3573
        %v3598 = vsub.f32 %v3572, %v3574
        %v3599 = vmul.f32 %v3597, 1.442695
        %v3600 = vpow.pop %v3599
        %v3601 = vmul.f32 %v3598, 1.442695
        %v3602 = vpow.pop %v3601
        %v3603 = vadd.f32 %v3595, %v3600
        %v3604 = vadd.f32 %v3596, %v3602
        %v3605 = vrcp.pop %v3603
        %v3606 = vmul.f32 1.0, %v3605
        %v3607 = vrcp.pop %v3604
        %v3608 = vmul.f32 1.0, %v3607
        %v3609 = vmul.f32 %v3578, %v3606
        %v3610 = vmul.f32 %v3580, %v3608
        %3611 = vrot.lane.b32.xlu0 %v3609, 2
        %v3612 = vpop.permute.xlu0 %3611
        %3613 = vrot.lane.b32.xlu0 %v3610, 2
        %v3614 = vpop.permute.xlu0 %3613
        %v3615 = vmul.f32 %v3612, %v499
        %v3616 = vmul.f32 %v3614, %v499
        %3617 = vrot.lane.b32.xlu0 %v3609, 1
        %v3618 = vpop.permute.xlu0 %3617
        %3619 = vrot.lane.b32.xlu0 %v3610, 1
        %v3620 = vpop.permute.xlu0 %3619
        %v3621 = vmul.f32 %v3618, %v505
        %v3622 = vmul.f32 %v3620, %v505
        %3623 = vrot.lane.b32.xlu0 %v3609, 127
        %v3624 = vpop.permute.xlu0 %3623
        %3625 = vrot.lane.b32.xlu0 %v3610, 127
        %v3626 = vpop.permute.xlu0 %3625
        %v3627 = vmul.f32 %v3624, %v511
        %v3628 = vmul.f32 %v3626, %v511
        %3629 = vrot.lane.b32.xlu0 %v3609, 126
        %v3630 = vpop.permute.xlu0 %3629
        %3631 = vrot.lane.b32.xlu0 %v3610, 126
        %v3632 = vpop.permute.xlu0 %3631
        %v3633 = vmul.f32 %v3630, %v517
        %v3634 = vmul.f32 %v3632, %v517
        %v3637 = vrot.slane %v3615, 7
        %v3638 = vrot.slane %v3616, 7
        %v3639 = vsel %vm627, %v3637, %v3638
        %v3642 = vsel %vm627, 0.0, %v3637
        %s3643 = sld [smem:[#allocation9]]
        %v3644 = vstv %s3643
        %v3645 = vmul.f32 %v3644, %v3642
        %v3646 = vmul.f32 %v3644, %v3639
        %v3647 = vadd.f32 %v3645, 0.0
        %v3648 = vadd.f32 %v3646, 0.0
        %v3649 = vld [vmem:[#allocation2] sm:$0xff]
        %v3650 = vld [vmem:[#allocation2 + $0x8] sm:$0xff]
        %v3651 = vmul.f32 %v3649, %v3642
        %v3652 = vmul.f32 %v3650, %v3639
        %v3653 = vadd.f32 %v3651, 0.0
        %v3654 = vadd.f32 %v3652, 0.0
        %v3657 = vrot.slane %v3621, 7
        %v3658 = vrot.slane %v3622, 7
        %v3659 = vsel %vm627, %v3657, %v3658
        %v3662 = vsel %vm627, 0.0, %v3657
        %s3663 = sld [smem:[#allocation9 + $0x80]]
        %v3664 = vstv %s3663
        %v3665 = vmul.f32 %v3664, %v3662
        %v3666 = vmul.f32 %v3664, %v3659
        %v3667 = vadd.f32 %v3647, %v3665
        %v3668 = vadd.f32 %v3648, %v3666
        %v3669 = vld [vmem:[%s749] sm:$0xff]
        %v3670 = vld [vmem:[%s749 + $0x8] sm:$0xff]
        %v3671 = vmul.f32 %v3669, %v3662
        %v3672 = vmul.f32 %v3670, %v3659
        %v3673 = vadd.f32 %v3653, %v3671
        %v3674 = vadd.f32 %v3654, %v3672
        %v3677 = vrot.slane %v3609, 7
        %v3678 = vrot.slane %v3610, 7
        %v3679 = vsel %vm627, %v3677, %v3678
        %v3682 = vsel %vm627, 0.0, %v3677
        %s3683 = sld [smem:[#allocation9 + $0x100]]
        %v3684 = vstv %s3683
        %v3685 = vmul.f32 %v3684, %v3682
        %v3686 = vmul.f32 %v3684, %v3679
        %v3687 = vadd.f32 %v3667, %v3685
        %v3688 = vadd.f32 %v3668, %v3686
        %v3689 = vld [vmem:[%s812] sm:$0xff]
        %v3690 = vld [vmem:[%s812 + $0x8] sm:$0xff]
        %v3691 = vmul.f32 %v3689, %v3682
        %v3692 = vmul.f32 %v3690, %v3679
        %v3693 = vadd.f32 %v3673, %v3691
        %v3694 = vadd.f32 %v3674, %v3692
        %v3697 = vrot.slane %v3627, 7
        %v3698 = vrot.slane %v3628, 7
        %v3699 = vsel %vm627, %v3697, %v3698
        %v3702 = vsel %vm627, 0.0, %v3697
        %s3703 = sld [smem:[#allocation9 + $0x180]]
        %v3704 = vstv %s3703
        %v3705 = vmul.f32 %v3704, %v3702
        %v3706 = vmul.f32 %v3704, %v3699
        %v3707 = vadd.f32 %v3687, %v3705
        %v3708 = vadd.f32 %v3688, %v3706
        %v3709 = vld [vmem:[%s875] sm:$0xff]
        %v3710 = vld [vmem:[%s875 + $0x8] sm:$0xff]
        %v3711 = vmul.f32 %v3709, %v3702
        %v3712 = vmul.f32 %v3710, %v3699
        %v3713 = vadd.f32 %v3693, %v3711
        %v3714 = vadd.f32 %v3694, %v3712
        %v3717 = vrot.slane %v3633, 7
        %v3718 = vrot.slane %v3634, 7
        %v3719 = vsel %vm627, %v3717, %v3718
        %v3722 = vsel %vm627, 0.0, %v3717
        %s3723 = sld [smem:[#allocation9 + $0x200]]
        %v3724 = vstv %s3723
        %v3725 = vmul.f32 %v3724, %v3722
        %v3726 = vmul.f32 %v3724, %v3719
        %v3727 = vadd.f32 %v3707, %v3725
        %v3728 = vadd.f32 %v3708, %v3726
        %v3729 = vld [vmem:[%s938] sm:$0xff]
        %v3730 = vld [vmem:[%s938 + $0x8] sm:$0xff]
        %v3731 = vmul.f32 %v3729, %v3722
        %v3732 = vmul.f32 %v3730, %v3719
        %v3733 = vadd.f32 %v3713, %v3731
        %v3734 = vadd.f32 %v3714, %v3732
        %s3735 = sld [smem:[#allocation9 + $0x280]]
        %v3736 = vstv %s3735
        %v3737 = vmul.f32 %v3736, %v3615
        %v3738 = vmul.f32 %v3736, %v3616
        %v3739 = vadd.f32 %v3727, %v3737
        %v3740 = vadd.f32 %v3728, %v3738
        %v3741 = vld [vmem:[%s969] sm:$0xff]
        %v3742 = vld [vmem:[%s969 + $0x8] sm:$0xff]
        %v3743 = vmul.f32 %v3741, %v3615
        %v3744 = vmul.f32 %v3742, %v3616
        %v3745 = vadd.f32 %v3733, %v3743
        %v3746 = vadd.f32 %v3734, %v3744
        %s3747 = sld [smem:[#allocation9 + $0x300]]
        %v3748 = vstv %s3747
        %v3749 = vmul.f32 %v3748, %v3621
        %v3750 = vmul.f32 %v3748, %v3622
        %v3751 = vadd.f32 %v3739, %v3749
        %v3752 = vadd.f32 %v3740, %v3750
        %v3753 = vld [vmem:[%s1000] sm:$0xff]
        %v3754 = vld [vmem:[%s1000 + $0x8] sm:$0xff]
        %v3755 = vmul.f32 %v3753, %v3621
        %v3756 = vmul.f32 %v3754, %v3622
        %v3757 = vadd.f32 %v3745, %v3755
        %v3758 = vadd.f32 %v3746, %v3756
        %s3759 = sld [smem:[#allocation9 + $0x380]]
        %v3760 = vstv %s3759
        %v3761 = vmul.f32 %v3760, %v3627
        %v3762 = vmul.f32 %v3760, %v3628
        %v3763 = vadd.f32 %v3751, %v3761
        %v3764 = vadd.f32 %v3752, %v3762
        %v3765 = vld [vmem:[%s1031] sm:$0xff]
        %v3766 = vld [vmem:[%s1031 + $0x8] sm:$0xff]
        %v3767 = vmul.f32 %v3765, %v3627
        %v3768 = vmul.f32 %v3766, %v3628
        %v3769 = vadd.f32 %v3757, %v3767
        %v3770 = vadd.f32 %v3758, %v3768
        %s3771 = sld [smem:[#allocation9 + $0x400]]
        %v3772 = vstv %s3771
        %v3773 = vmul.f32 %v3772, %v3633
        %v3774 = vmul.f32 %v3772, %v3634
        %v3775 = vadd.f32 %v3763, %v3773
        %v3776 = vadd.f32 %v3764, %v3774
        %v3777 = vld [vmem:[%s1062] sm:$0xff]
        %v3778 = vld [vmem:[%s1062 + $0x8] sm:$0xff]
        %v3779 = vmul.f32 %v3777, %v3633
        %v3780 = vmul.f32 %v3778, %v3634
        %v3781 = vadd.f32 %v3769, %v3779
        %v3782 = vadd.f32 %v3770, %v3780
        %v3783 = vrot.slane %v3615, 1
        %v3784 = vrot.slane %v3616, 1
        %v3785 = vsel %vm1065, %v3783, %v3784
        %v3788 = vsel %vm1065, %v3784, 0.0
        %s3789 = sld [smem:[#allocation9 + $0x480]]
        %v3790 = vstv %s3789
        %v3791 = vmul.f32 %v3790, %v3785
        %v3792 = vmul.f32 %v3790, %v3788
        %v3793 = vadd.f32 %v3775, %v3791
        %v3794 = vadd.f32 %v3776, %v3792
        %v3795 = vld [vmem:[%s1118] sm:$0xff]
        %v3796 = vld [vmem:[%s1118 + $0x8] sm:$0xff]
        %v3797 = vmul.f32 %v3795, %v3785
        %v3798 = vmul.f32 %v3796, %v3788
        %v3799 = vadd.f32 %v3781, %v3797
        %v3800 = vadd.f32 %v3782, %v3798
        %v3801 = vrot.slane %v3621, 1
        %v3802 = vrot.slane %v3622, 1
        %v3803 = vsel %vm1065, %v3801, %v3802
        %v3806 = vsel %vm1065, %v3802, 0.0
        %s3807 = sld [smem:[#allocation9 + $0x500]]
        %v3808 = vstv %s3807
        %v3809 = vmul.f32 %v3808, %v3803
        %v3810 = vmul.f32 %v3808, %v3806
        %v3811 = vadd.f32 %v3793, %v3809
        %v3812 = vadd.f32 %v3794, %v3810
        %v3813 = vld [vmem:[%s1173] sm:$0xff]
        %v3814 = vld [vmem:[%s1173 + $0x8] sm:$0xff]
        %v3815 = vmul.f32 %v3813, %v3803
        %v3816 = vmul.f32 %v3814, %v3806
        %v3817 = vadd.f32 %v3799, %v3815
        %v3818 = vadd.f32 %v3800, %v3816
        %v3819 = vrot.slane %v3609, 1
        %v3820 = vrot.slane %v3610, 1
        %v3821 = vsel %vm1065, %v3819, %v3820
        %v3824 = vsel %vm1065, %v3820, 0.0
        %s3825 = sld [smem:[#allocation9 + $0x580]]
        %v3826 = vstv %s3825
        %v3827 = vmul.f32 %v3826, %v3821
        %v3828 = vmul.f32 %v3826, %v3824
        %v3829 = vadd.f32 %v3811, %v3827
        %v3830 = vadd.f32 %v3812, %v3828
        %v3831 = vld [vmem:[%s1228] sm:$0xff]
        %v3832 = vld [vmem:[%s1228 + $0x8] sm:$0xff]
        %v3833 = vmul.f32 %v3831, %v3821
        %v3834 = vmul.f32 %v3832, %v3824
        %v3835 = vadd.f32 %v3817, %v3833
        %v3836 = vadd.f32 %v3818, %v3834
        %v3837 = vrot.slane %v3627, 1
        %v3838 = vrot.slane %v3628, 1
        %v3839 = vsel %vm1065, %v3837, %v3838
        %v3842 = vsel %vm1065, %v3838, 0.0
        %s3843 = sld [smem:[#allocation9 + $0x600]]
        %v3844 = vstv %s3843
        %v3845 = vmul.f32 %v3844, %v3839
        %v3846 = vmul.f32 %v3844, %v3842
        %v3847 = vadd.f32 %v3829, %v3845
        %v3848 = vadd.f32 %v3830, %v3846
        %v3849 = vld [vmem:[%s1283] sm:$0xff]
        %v3850 = vld [vmem:[%s1283 + $0x8] sm:$0xff]
        %v3851 = vmul.f32 %v3849, %v3839
        %v3852 = vmul.f32 %v3850, %v3842
        %v3853 = vadd.f32 %v3835, %v3851
        %v3854 = vadd.f32 %v3836, %v3852
        %v3855 = vrot.slane %v3633, 1
        %v3856 = vrot.slane %v3634, 1
        %v3857 = vsel %vm1065, %v3855, %v3856
        %v3860 = vsel %vm1065, %v3856, 0.0
        %s3861 = sld [smem:[#allocation9 + $0x680]]
        %v3862 = vstv %s3861
        %v3863 = vmul.f32 %v3862, %v3857
        %v3864 = vmul.f32 %v3862, %v3860
        %v3865 = vadd.f32 %v3847, %v3863
        %v3866 = vadd.f32 %v3848, %v3864
        %v3867 = vld [vmem:[%s1338] sm:$0xff]
        %v3868 = vld [vmem:[%s1338 + $0x8] sm:$0xff]
        %v3869 = vmul.f32 %v3867, %v3857
        %v3870 = vmul.f32 %v3868, %v3860
        %v3871 = vadd.f32 %v3853, %v3869
        %v3872 = vadd.f32 %v3854, %v3870
        %v3873 = vld [vmem:[%s491] sm:$0xff]
        %v3874 = vld [vmem:[%s491 + $0x8] sm:$0xff]
        %s3875 = sld [smem:[#allocation12]]
        %s3876 = sld [smem:[#allocation13]]
        %v3877 = vmul.f32 %v3871, %v3873
        %v3878 = vmul.f32 %v3872, %v3874
        %v3879 = vstv %s3876
        %v3880 = vmul.f32 %v3879, %v3877
        %v3881 = vmul.f32 %v3879, %v3878
        %v3882 = vstv %s3875
        %v3883 = vadd.f32 %v3882, %v3880
        %v3884 = vadd.f32 %v3882, %v3881
        %v3885 = vmul.f32 %v3865, %v3883
        %v3886 = vmul.f32 %v3866, %v3884
        %v3887 = vmul.f32 %v3584, %v3606
        %v3888 = vmul.f32 %v3586, %v3608
        %3889 = vrot.lane.b32.xlu0 %v3887, 2
        %v3890 = vpop.permute.xlu0 %3889
        %3891 = vrot.lane.b32.xlu0 %v3888, 2
        %v3892 = vpop.permute.xlu0 %3891
        %v3893 = vmul.f32 %v3890, %v499
        %v3894 = vmul.f32 %v3892, %v499
        %3895 = vrot.lane.b32.xlu0 %v3887, 1
        %v3896 = vpop.permute.xlu0 %3895
        %3897 = vrot.lane.b32.xlu0 %v3888, 1
        %v3898 = vpop.permute.xlu0 %3897
        %v3899 = vmul.f32 %v3896, %v505
        %v3900 = vmul.f32 %v3898, %v505
        %3901 = vrot.lane.b32.xlu0 %v3887, 127
        %v3902 = vpop.permute.xlu0 %3901
        %3903 = vrot.lane.b32.xlu0 %v3888, 127
        %v3904 = vpop.permute.xlu0 %3903
        %v3905 = vmul.f32 %v3902, %v511
        %v3906 = vmul.f32 %v3904, %v511
        %3907 = vrot.lane.b32.xlu0 %v3887, 126
        %v3908 = vpop.permute.xlu0 %3907
        %3909 = vrot.lane.b32.xlu0 %v3888, 126
        %v3910 = vpop.permute.xlu0 %3909
        %v3911 = vmul.f32 %v3908, %v517
        %v3912 = vmul.f32 %v3910, %v517
        %v3915 = vrot.slane %v3893, 7
        %v3916 = vrot.slane %v3894, 7
        %v3917 = vsel %vm627, %v3915, %v3916
        %v3920 = vsel %vm627, 0.0, %v3915
        %s3921 = sld [smem:[#allocation9 + $0x1]]
        %v3922 = vstv %s3921
        %v3923 = vmul.f32 %v3922, %v3920
        %v3924 = vmul.f32 %v3922, %v3917
        %v3925 = vadd.f32 %v3923, 0.0
        %v3926 = vadd.f32 %v3924, 0.0
        %v3927 = vmul.f32 %v3649, %v3920
        %v3928 = vmul.f32 %v3650, %v3917
        %v3929 = vadd.f32 %v3927, 0.0
        %v3930 = vadd.f32 %v3928, 0.0
        %v3933 = vrot.slane %v3899, 7
        %v3934 = vrot.slane %v3900, 7
        %v3935 = vsel %vm627, %v3933, %v3934
        %v3938 = vsel %vm627, 0.0, %v3933
        %s3939 = sld [smem:[#allocation9 + $0x81]]
        %v3940 = vstv %s3939
        %v3941 = vmul.f32 %v3940, %v3938
        %v3942 = vmul.f32 %v3940, %v3935
        %v3943 = vadd.f32 %v3925, %v3941
        %v3944 = vadd.f32 %v3926, %v3942
        %v3945 = vmul.f32 %v3669, %v3938
        %v3946 = vmul.f32 %v3670, %v3935
        %v3947 = vadd.f32 %v3929, %v3945
        %v3948 = vadd.f32 %v3930, %v3946
        %v3951 = vrot.slane %v3887, 7
        %v3952 = vrot.slane %v3888, 7
        %v3953 = vsel %vm627, %v3951, %v3952
        %v3956 = vsel %vm627, 0.0, %v3951
        %s3957 = sld [smem:[#allocation9 + $0x101]]
        %v3958 = vstv %s3957
        %v3959 = vmul.f32 %v3958, %v3956
        %v3960 = vmul.f32 %v3958, %v3953
        %v3961 = vadd.f32 %v3943, %v3959
        %v3962 = vadd.f32 %v3944, %v3960
        %v3963 = vmul.f32 %v3689, %v3956
        %v3964 = vmul.f32 %v3690, %v3953
        %v3965 = vadd.f32 %v3947, %v3963
        %v3966 = vadd.f32 %v3948, %v3964
        %v3969 = vrot.slane %v3905, 7
        %v3970 = vrot.slane %v3906, 7
        %v3971 = vsel %vm627, %v3969, %v3970
        %v3974 = vsel %vm627, 0.0, %v3969
        %s3975 = sld [smem:[#allocation9 + $0x181]]
        %v3976 = vstv %s3975
        %v3977 = vmul.f32 %v3976, %v3974
        %v3978 = vmul.f32 %v3976, %v3971
        %v3979 = vadd.f32 %v3961, %v3977
        %v3980 = vadd.f32 %v3962, %v3978
        %v3981 = vmul.f32 %v3709, %v3974
        %v3982 = vmul.f32 %v3710, %v3971
        %v3983 = vadd.f32 %v3965, %v3981
        %v3984 = vadd.f32 %v3966, %v3982
        %v3987 = vrot.slane %v3911, 7
        %v3988 = vrot.slane %v3912, 7
        %v3989 = vsel %vm627, %v3987, %v3988
        %v3992 = vsel %vm627, 0.0, %v3987
        %s3993 = sld [smem:[#allocation9 + $0x201]]
        %v3994 = vstv %s3993
        %v3995 = vmul.f32 %v3994, %v3992
        %v3996 = vmul.f32 %v3994, %v3989
        %v3997 = vadd.f32 %v3979, %v3995
        %v3998 = vadd.f32 %v3980, %v3996
        %v3999 = vmul.f32 %v3729, %v3992
        %v4000 = vmul.f32 %v3730, %v3989
        %v4001 = vadd.f32 %v3983, %v3999
        %v4002 = vadd.f32 %v3984, %v4000
        %s4003 = sld [smem:[#allocation9 + $0x281]]
        %v4004 = vstv %s4003
        %v4005 = vmul.f32 %v4004, %v3893
        %v4006 = vmul.f32 %v4004, %v3894
        %v4007 = vadd.f32 %v3997, %v4005
        %v4008 = vadd.f32 %v3998, %v4006
        %v4009 = vmul.f32 %v3741, %v3893
        %v4010 = vmul.f32 %v3742, %v3894
        %v4011 = vadd.f32 %v4001, %v4009
        %v4012 = vadd.f32 %v4002, %v4010
        %s4013 = sld [smem:[#allocation9 + $0x301]]
        %v4014 = vstv %s4013
        %v4015 = vmul.f32 %v4014, %v3899
        %v4016 = vmul.f32 %v4014, %v3900
        %v4017 = vadd.f32 %v4007, %v4015
        %v4018 = vadd.f32 %v4008, %v4016
        %v4019 = vmul.f32 %v3753, %v3899
        %v4020 = vmul.f32 %v3754, %v3900
        %v4021 = vadd.f32 %v4011, %v4019
        %v4022 = vadd.f32 %v4012, %v4020
        %s4023 = sld [smem:[#allocation9 + $0x381]]
        %v4024 = vstv %s4023
        %v4025 = vmul.f32 %v4024, %v3905
        %v4026 = vmul.f32 %v4024, %v3906
        %v4027 = vadd.f32 %v4017, %v4025
        %v4028 = vadd.f32 %v4018, %v4026
        %v4029 = vmul.f32 %v3765, %v3905
        %v4030 = vmul.f32 %v3766, %v3906
        %v4031 = vadd.f32 %v4021, %v4029
        %v4032 = vadd.f32 %v4022, %v4030
        %s4033 = sld [smem:[#allocation9 + $0x401]]
        %v4034 = vstv %s4033
        %v4035 = vmul.f32 %v4034, %v3911
        %v4036 = vmul.f32 %v4034, %v3912
        %v4037 = vadd.f32 %v4027, %v4035
        %v4038 = vadd.f32 %v4028, %v4036
        %v4039 = vmul.f32 %v3777, %v3911
        %v4040 = vmul.f32 %v3778, %v3912
        %v4041 = vadd.f32 %v4031, %v4039
        %v4042 = vadd.f32 %v4032, %v4040
        %v4043 = vrot.slane %v3893, 1
        %v4044 = vrot.slane %v3894, 1
        %v4045 = vsel %vm1065, %v4043, %v4044
        %v4048 = vsel %vm1065, %v4044, 0.0
        %s4049 = sld [smem:[#allocation9 + $0x481]]
        %v4050 = vstv %s4049
        %v4051 = vmul.f32 %v4050, %v4045
        %v4052 = vmul.f32 %v4050, %v4048
        %v4053 = vadd.f32 %v4037, %v4051
        %v4054 = vadd.f32 %v4038, %v4052
        %v4055 = vmul.f32 %v3795, %v4045
        %v4056 = vmul.f32 %v3796, %v4048
        %v4057 = vadd.f32 %v4041, %v4055
        %v4058 = vadd.f32 %v4042, %v4056
        %v4059 = vrot.slane %v3899, 1
        %v4060 = vrot.slane %v3900, 1
        %v4061 = vsel %vm1065, %v4059, %v4060
        %v4064 = vsel %vm1065, %v4060, 0.0
        %s4065 = sld [smem:[#allocation9 + $0x501]]
        %v4066 = vstv %s4065
        %v4067 = vmul.f32 %v4066, %v4061
        %v4068 = vmul.f32 %v4066, %v4064
        %v4069 = vadd.f32 %v4053, %v4067
        %v4070 = vadd.f32 %v4054, %v4068
        %v4071 = vmul.f32 %v3813, %v4061
        %v4072 = vmul.f32 %v3814, %v4064
        %v4073 = vadd.f32 %v4057, %v4071
        %v4074 = vadd.f32 %v4058, %v4072
        %v4075 = vrot.slane %v3887, 1
        %v4076 = vrot.slane %v3888, 1
        %v4077 = vsel %vm1065, %v4075, %v4076
        %v4080 = vsel %vm1065, %v4076, 0.0
        %s4081 = sld [smem:[#allocation9 + $0x581]]
        %v4082 = vstv %s4081
        %v4083 = vmul.f32 %v4082, %v4077
        %v4084 = vmul.f32 %v4082, %v4080
        %v4085 = vadd.f32 %v4069, %v4083
        %v4086 = vadd.f32 %v4070, %v4084
        %v4087 = vmul.f32 %v3831, %v4077
        %v4088 = vmul.f32 %v3832, %v4080
        %v4089 = vadd.f32 %v4073, %v4087
        %v4090 = vadd.f32 %v4074, %v4088
        %v4091 = vrot.slane %v3905, 1
        %v4092 = vrot.slane %v3906, 1
        %v4093 = vsel %vm1065, %v4091, %v4092
        %v4096 = vsel %vm1065, %v4092, 0.0
        %s4097 = sld [smem:[#allocation9 + $0x601]]
        %v4098 = vstv %s4097
        %v4099 = vmul.f32 %v4098, %v4093
        %v4100 = vmul.f32 %v4098, %v4096
        %v4101 = vadd.f32 %v4085, %v4099
        %v4102 = vadd.f32 %v4086, %v4100
        %v4103 = vmul.f32 %v3849, %v4093
        %v4104 = vmul.f32 %v3850, %v4096
        %v4105 = vadd.f32 %v4089, %v4103
        %v4106 = vadd.f32 %v4090, %v4104
        %v4107 = vrot.slane %v3911, 1
        %v4108 = vrot.slane %v3912, 1
        %v4109 = vsel %vm1065, %v4107, %v4108
        %v4112 = vsel %vm1065, %v4108, 0.0
        %s4113 = sld [smem:[#allocation9 + $0x681]]
        %v4114 = vstv %s4113
        %v4115 = vmul.f32 %v4114, %v4109
        %v4116 = vmul.f32 %v4114, %v4112
        %v4117 = vadd.f32 %v4101, %v4115
        %v4118 = vadd.f32 %v4102, %v4116
        %v4119 = vmul.f32 %v3867, %v4109
        %v4120 = vmul.f32 %v3868, %v4112
        %v4121 = vadd.f32 %v4105, %v4119
        %v4122 = vadd.f32 %v4106, %v4120
        %s4123 = sld [smem:[#allocation12 + $0x1]]
        %s4124 = sld [smem:[#allocation13 + $0x1]]
        %v4125 = vmul.f32 %v4121, %v3873
        %v4126 = vmul.f32 %v4122, %v3874
        %v4127 = vstv %s4124
        %v4128 = vmul.f32 %v4127, %v4125
        %v4129 = vmul.f32 %v4127, %v4126
        %v4130 = vstv %s4123
        %v4131 = vadd.f32 %v4130, %v4128
        %v4132 = vadd.f32 %v4130, %v4129
        %v4133 = vmul.f32 %v4117, %v4131
        %v4134 = vmul.f32 %v4118, %v4132
        %v4135 = vmul.f32 %v3592, %v3606
        %v4136 = vmul.f32 %v3594, %v3608
        %4137 = vrot.lane.b32.xlu0 %v4135, 2
        %v4138 = vpop.permute.xlu0 %4137
        %4139 = vrot.lane.b32.xlu0 %v4136, 2
        %v4140 = vpop.permute.xlu0 %4139
        %v4141 = vmul.f32 %v4138, %v499
        %v4142 = vmul.f32 %v4140, %v499
        %4143 = vrot.lane.b32.xlu0 %v4135, 1
        %v4144 = vpop.permute.xlu0 %4143
        %4145 = vrot.lane.b32.xlu0 %v4136, 1
        %v4146 = vpop.permute.xlu0 %4145
        %v4147 = vmul.f32 %v4144, %v505
        %v4148 = vmul.f32 %v4146, %v505
        %4149 = vrot.lane.b32.xlu0 %v4135, 127
        %v4150 = vpop.permute.xlu0 %4149
        %4151 = vrot.lane.b32.xlu0 %v4136, 127
        %v4152 = vpop.permute.xlu0 %4151
        %v4153 = vmul.f32 %v4150, %v511
        %v4154 = vmul.f32 %v4152, %v511
        %4155 = vrot.lane.b32.xlu0 %v4135, 126
        %v4156 = vpop.permute.xlu0 %4155
        %4157 = vrot.lane.b32.xlu0 %v4136, 126
        %v4158 = vpop.permute.xlu0 %4157
        %v4159 = vmul.f32 %v4156, %v517
        %v4160 = vmul.f32 %v4158, %v517
        %v4163 = vrot.slane %v4141, 7
        %v4164 = vrot.slane %v4142, 7
        %v4165 = vsel %vm627, %v4163, %v4164
        %v4168 = vsel %vm627, 0.0, %v4163
        %s4169 = sld [smem:[#allocation9 + $0x2]]
        %v4170 = vstv %s4169
        %v4171 = vmul.f32 %v4170, %v4168
        %v4172 = vmul.f32 %v4170, %v4165
        %v4173 = vadd.f32 %v4171, 0.0
        %v4174 = vadd.f32 %v4172, 0.0
        %v4175 = vmul.f32 %v3649, %v4168
        %v4176 = vmul.f32 %v3650, %v4165
        %v4177 = vadd.f32 %v4175, 0.0
        %v4178 = vadd.f32 %v4176, 0.0
        %v4181 = vrot.slane %v4147, 7
        %v4182 = vrot.slane %v4148, 7
        %v4183 = vsel %vm627, %v4181, %v4182
        %v4186 = vsel %vm627, 0.0, %v4181
        %s4187 = sld [smem:[#allocation9 + $0x82]]
        %v4188 = vstv %s4187
        %v4189 = vmul.f32 %v4188, %v4186
        %v4190 = vmul.f32 %v4188, %v4183
        %v4191 = vadd.f32 %v4173, %v4189
        %v4192 = vadd.f32 %v4174, %v4190
        %v4193 = vmul.f32 %v3669, %v4186
        %v4194 = vmul.f32 %v3670, %v4183
        %v4195 = vadd.f32 %v4177, %v4193
        %v4196 = vadd.f32 %v4178, %v4194
        %v4199 = vrot.slane %v4135, 7
        %v4200 = vrot.slane %v4136, 7
        %v4201 = vsel %vm627, %v4199, %v4200
        %v4204 = vsel %vm627, 0.0, %v4199
        %s4205 = sld [smem:[#allocation9 + $0x102]]
        %v4206 = vstv %s4205
        %v4207 = vmul.f32 %v4206, %v4204
        %v4208 = vmul.f32 %v4206, %v4201
        %v4209 = vadd.f32 %v4191, %v4207
        %v4210 = vadd.f32 %v4192, %v4208
        %v4211 = vmul.f32 %v3689, %v4204
        %v4212 = vmul.f32 %v3690, %v4201
        %v4213 = vadd.f32 %v4195, %v4211
        %v4214 = vadd.f32 %v4196, %v4212
        %v4217 = vrot.slane %v4153, 7
        %v4218 = vrot.slane %v4154, 7
        %v4219 = vsel %vm627, %v4217, %v4218
        %v4222 = vsel %vm627, 0.0, %v4217
        %s4223 = sld [smem:[#allocation9 + $0x182]]
        %v4224 = vstv %s4223
        %v4225 = vmul.f32 %v4224, %v4222
        %v4226 = vmul.f32 %v4224, %v4219
        %v4227 = vadd.f32 %v4209, %v4225
        %v4228 = vadd.f32 %v4210, %v4226
        %v4229 = vmul.f32 %v3709, %v4222
        %v4230 = vmul.f32 %v3710, %v4219
        %v4231 = vadd.f32 %v4213, %v4229
        %v4232 = vadd.f32 %v4214, %v4230
        %v4235 = vrot.slane %v4159, 7
        %v4236 = vrot.slane %v4160, 7
        %v4237 = vsel %vm627, %v4235, %v4236
        %v4240 = vsel %vm627, 0.0, %v4235
        %s4241 = sld [smem:[#allocation9 + $0x202]]
        %v4242 = vstv %s4241
        %v4243 = vmul.f32 %v4242, %v4240
        %v4244 = vmul.f32 %v4242, %v4237
        %v4245 = vadd.f32 %v4227, %v4243
        %v4246 = vadd.f32 %v4228, %v4244
        %v4247 = vmul.f32 %v3729, %v4240
        %v4248 = vmul.f32 %v3730, %v4237
        %v4249 = vadd.f32 %v4231, %v4247
        %v4250 = vadd.f32 %v4232, %v4248
        %s4251 = sld [smem:[#allocation9 + $0x282]]
        %v4252 = vstv %s4251
        %v4253 = vmul.f32 %v4252, %v4141
        %v4254 = vmul.f32 %v4252, %v4142
        %v4255 = vadd.f32 %v4245, %v4253
        %v4256 = vadd.f32 %v4246, %v4254
        %v4257 = vmul.f32 %v3741, %v4141
        %v4258 = vmul.f32 %v3742, %v4142
        %v4259 = vadd.f32 %v4249, %v4257
        %v4260 = vadd.f32 %v4250, %v4258
        %s4261 = sld [smem:[#allocation9 + $0x302]]
        %v4262 = vstv %s4261
        %v4263 = vmul.f32 %v4262, %v4147
        %v4264 = vmul.f32 %v4262, %v4148
        %v4265 = vadd.f32 %v4255, %v4263
        %v4266 = vadd.f32 %v4256, %v4264
        %v4267 = vmul.f32 %v3753, %v4147
        %v4268 = vmul.f32 %v3754, %v4148
        %v4269 = vadd.f32 %v4259, %v4267
        %v4270 = vadd.f32 %v4260, %v4268
        %s4271 = sld [smem:[#allocation9 + $0x382]]
        %v4272 = vstv %s4271
        %v4273 = vmul.f32 %v4272, %v4153
        %v4274 = vmul.f32 %v4272, %v4154
        %v4275 = vadd.f32 %v4265, %v4273
        %v4276 = vadd.f32 %v4266, %v4274
        %v4277 = vmul.f32 %v3765, %v4153
        %v4278 = vmul.f32 %v3766, %v4154
        %v4279 = vadd.f32 %v4269, %v4277
        %v4280 = vadd.f32 %v4270, %v4278
        %s4281 = sld [smem:[#allocation9 + $0x402]]
        %v4282 = vstv %s4281
        %v4283 = vmul.f32 %v4282, %v4159
        %v4284 = vmul.f32 %v4282, %v4160
        %v4285 = vadd.f32 %v4275, %v4283
        %v4286 = vadd.f32 %v4276, %v4284
        %v4287 = vmul.f32 %v3777, %v4159
        %v4288 = vmul.f32 %v3778, %v4160
        %v4289 = vadd.f32 %v4279, %v4287
        %v4290 = vadd.f32 %v4280, %v4288
        %v4291 = vrot.slane %v4141, 1
        %v4292 = vrot.slane %v4142, 1
        %v4293 = vsel %vm1065, %v4291, %v4292
        %v4296 = vsel %vm1065, %v4292, 0.0
        %s4297 = sld [smem:[#allocation9 + $0x482]]
        %v4298 = vstv %s4297
        %v4299 = vmul.f32 %v4298, %v4293
        %v4300 = vmul.f32 %v4298, %v4296
        %v4301 = vadd.f32 %v4285, %v4299
        %v4302 = vadd.f32 %v4286, %v4300
        %v4303 = vmul.f32 %v3795, %v4293
        %v4304 = vmul.f32 %v3796, %v4296
        %v4305 = vadd.f32 %v4289, %v4303
        %v4306 = vadd.f32 %v4290, %v4304
        %v4307 = vrot.slane %v4147, 1
        %v4308 = vrot.slane %v4148, 1
        %v4309 = vsel %vm1065, %v4307, %v4308
        %v4312 = vsel %vm1065, %v4308, 0.0
        %s4313 = sld [smem:[#allocation9 + $0x502]]
        %v4314 = vstv %s4313
        %v4315 = vmul.f32 %v4314, %v4309
        %v4316 = vmul.f32 %v4314, %v4312
        %v4317 = vadd.f32 %v4301, %v4315
        %v4318 = vadd.f32 %v4302, %v4316
        %v4319 = vmul.f32 %v3813, %v4309
        %v4320 = vmul.f32 %v3814, %v4312
        %v4321 = vadd.f32 %v4305, %v4319
        %v4322 = vadd.f32 %v4306, %v4320
        %v4323 = vrot.slane %v4135, 1
        %v4324 = vrot.slane %v4136, 1
        %v4325 = vsel %vm1065, %v4323, %v4324
        %v4328 = vsel %vm1065, %v4324, 0.0
        %s4329 = sld [smem:[#allocation9 + $0x582]]
        %v4330 = vstv %s4329
        %v4331 = vmul.f32 %v4330, %v4325
        %v4332 = vmul.f32 %v4330, %v4328
        %v4333 = vadd.f32 %v4317, %v4331
        %v4334 = vadd.f32 %v4318, %v4332
        %v4335 = vmul.f32 %v3831, %v4325
        %v4336 = vmul.f32 %v3832, %v4328
        %v4337 = vadd.f32 %v4321, %v4335
        %v4338 = vadd.f32 %v4322, %v4336
        %v4339 = vrot.slane %v4153, 1
        %v4340 = vrot.slane %v4154, 1
        %v4341 = vsel %vm1065, %v4339, %v4340
        %v4344 = vsel %vm1065, %v4340, 0.0
        %s4345 = sld [smem:[#allocation9 + $0x602]]
        %v4346 = vstv %s4345
        %v4347 = vmul.f32 %v4346, %v4341
        %v4348 = vmul.f32 %v4346, %v4344
        %v4349 = vadd.f32 %v4333, %v4347
        %v4350 = vadd.f32 %v4334, %v4348
        %v4351 = vmul.f32 %v3849, %v4341
        %v4352 = vmul.f32 %v3850, %v4344
        %v4353 = vadd.f32 %v4337, %v4351
        %v4354 = vadd.f32 %v4338, %v4352
        %v4355 = vrot.slane %v4159, 1
        %v4356 = vrot.slane %v4160, 1
        %v4357 = vsel %vm1065, %v4355, %v4356
        %v4360 = vsel %vm1065, %v4356, 0.0
        %s4361 = sld [smem:[#allocation9 + $0x682]]
        %v4362 = vstv %s4361
        %v4363 = vmul.f32 %v4362, %v4357
        %v4364 = vmul.f32 %v4362, %v4360
        %v4365 = vadd.f32 %v4349, %v4363
        %v4366 = vadd.f32 %v4350, %v4364
        %v4367 = vmul.f32 %v3867, %v4357
        %v4368 = vmul.f32 %v3868, %v4360
        %v4369 = vadd.f32 %v4353, %v4367
        %v4370 = vadd.f32 %v4354, %v4368
        %s4371 = sld [smem:[#allocation12 + $0x2]]
        %s4372 = sld [smem:[#allocation13 + $0x2]]
        %v4373 = vmul.f32 %v4369, %v3873
        %v4374 = vmul.f32 %v4370, %v3874
        %v4375 = vstv %s4372
        %v4376 = vmul.f32 %v4375, %v4373
        %v4377 = vmul.f32 %v4375, %v4374
        %v4378 = vstv %s4371
        %v4379 = vadd.f32 %v4378, %v4376
        %v4380 = vadd.f32 %v4378, %v4377
        %v4381 = vmul.f32 %v4365, %v4379
        %v4382 = vmul.f32 %v4366, %v4380
        %v4383 = vmul.f32 %v3600, %v3606
        %v4384 = vmul.f32 %v3602, %v3608
        %4385 = vrot.lane.b32.xlu0 %v4383, 2
        %v4386 = vpop.permute.xlu0 %4385
        %4387 = vrot.lane.b32.xlu0 %v4384, 2
        %v4388 = vpop.permute.xlu0 %4387
        %v4389 = vmul.f32 %v4386, %v499
        %v4390 = vmul.f32 %v4388, %v499
        %4391 = vrot.lane.b32.xlu0 %v4383, 1
        %v4392 = vpop.permute.xlu0 %4391
        %4393 = vrot.lane.b32.xlu0 %v4384, 1
        %v4394 = vpop.permute.xlu0 %4393
        %v4395 = vmul.f32 %v4392, %v505
        %v4396 = vmul.f32 %v4394, %v505
        %4397 = vrot.lane.b32.xlu0 %v4383, 127
        %v4398 = vpop.permute.xlu0 %4397
        %4399 = vrot.lane.b32.xlu0 %v4384, 127
        %v4400 = vpop.permute.xlu0 %4399
        %v4401 = vmul.f32 %v4398, %v511
        %v4402 = vmul.f32 %v4400, %v511
        %4403 = vrot.lane.b32.xlu0 %v4383, 126
        %v4404 = vpop.permute.xlu0 %4403
        %4405 = vrot.lane.b32.xlu0 %v4384, 126
        %v4406 = vpop.permute.xlu0 %4405
        %v4407 = vmul.f32 %v4404, %v517
        %v4408 = vmul.f32 %v4406, %v517
        %v4411 = vrot.slane %v4389, 7
        %v4412 = vrot.slane %v4390, 7
        %v4413 = vsel %vm627, %v4411, %v4412
        %v4416 = vsel %vm627, 0.0, %v4411
        %s4417 = sld [smem:[#allocation9 + $0x3]]
        %v4418 = vstv %s4417
        %v4419 = vmul.f32 %v4418, %v4416
        %v4420 = vmul.f32 %v4418, %v4413
        %v4421 = vadd.f32 %v4419, 0.0
        %v4422 = vadd.f32 %v4420, 0.0
        %v4423 = vmul.f32 %v3649, %v4416
        %v4424 = vmul.f32 %v3650, %v4413
        %v4425 = vadd.f32 %v4423, 0.0
        %v4426 = vadd.f32 %v4424, 0.0
        %v4429 = vrot.slane %v4395, 7
        %v4430 = vrot.slane %v4396, 7
        %v4431 = vsel %vm627, %v4429, %v4430
        %v4434 = vsel %vm627, 0.0, %v4429
        %s4435 = sld [smem:[#allocation9 + $0x83]]
        %v4436 = vstv %s4435
        %v4437 = vmul.f32 %v4436, %v4434
        %v4438 = vmul.f32 %v4436, %v4431
        %v4439 = vadd.f32 %v4421, %v4437
        %v4440 = vadd.f32 %v4422, %v4438
        %v4441 = vmul.f32 %v3669, %v4434
        %v4442 = vmul.f32 %v3670, %v4431
        %v4443 = vadd.f32 %v4425, %v4441
        %v4444 = vadd.f32 %v4426, %v4442
        %v4447 = vrot.slane %v4383, 7
        %v4448 = vrot.slane %v4384, 7
        %v4449 = vsel %vm627, %v4447, %v4448
        %v4452 = vsel %vm627, 0.0, %v4447
        %s4453 = sld [smem:[#allocation9 + $0x103]]
        %v4454 = vstv %s4453
        %v4455 = vmul.f32 %v4454, %v4452
        %v4456 = vmul.f32 %v4454, %v4449
        %v4457 = vadd.f32 %v4439, %v4455
        %v4458 = vadd.f32 %v4440, %v4456
        %v4459 = vmul.f32 %v3689, %v4452
        %v4460 = vmul.f32 %v3690, %v4449
        %v4461 = vadd.f32 %v4443, %v4459
        %v4462 = vadd.f32 %v4444, %v4460
        %v4465 = vrot.slane %v4401, 7
        %v4466 = vrot.slane %v4402, 7
        %v4467 = vsel %vm627, %v4465, %v4466
        %v4470 = vsel %vm627, 0.0, %v4465
        %s4471 = sld [smem:[#allocation9 + $0x183]]
        %v4472 = vstv %s4471
        %v4473 = vmul.f32 %v4472, %v4470
        %v4474 = vmul.f32 %v4472, %v4467
        %v4475 = vadd.f32 %v4457, %v4473
        %v4476 = vadd.f32 %v4458, %v4474
        %v4477 = vmul.f32 %v3709, %v4470
        %v4478 = vmul.f32 %v3710, %v4467
        %v4479 = vadd.f32 %v4461, %v4477
        %v4480 = vadd.f32 %v4462, %v4478
        %v4483 = vrot.slane %v4407, 7
        %v4484 = vrot.slane %v4408, 7
        %v4485 = vsel %vm627, %v4483, %v4484
        %v4488 = vsel %vm627, 0.0, %v4483
        %s4489 = sld [smem:[#allocation9 + $0x203]]
        %v4490 = vstv %s4489
        %v4491 = vmul.f32 %v4490, %v4488
        %v4492 = vmul.f32 %v4490, %v4485
        %v4493 = vadd.f32 %v4475, %v4491
        %v4494 = vadd.f32 %v4476, %v4492
        %v4495 = vmul.f32 %v3729, %v4488
        %v4496 = vmul.f32 %v3730, %v4485
        %v4497 = vadd.f32 %v4479, %v4495
        %v4498 = vadd.f32 %v4480, %v4496
        %s4499 = sld [smem:[#allocation9 + $0x283]]
        %v4500 = vstv %s4499
        %v4501 = vmul.f32 %v4500, %v4389
        %v4502 = vmul.f32 %v4500, %v4390
        %v4503 = vadd.f32 %v4493, %v4501
        %v4504 = vadd.f32 %v4494, %v4502
        %v4505 = vmul.f32 %v3741, %v4389
        %v4506 = vmul.f32 %v3742, %v4390
        %v4507 = vadd.f32 %v4497, %v4505
        %v4508 = vadd.f32 %v4498, %v4506
        %s4509 = sld [smem:[#allocation9 + $0x303]]
        %v4510 = vstv %s4509
        %v4511 = vmul.f32 %v4510, %v4395
        %v4512 = vmul.f32 %v4510, %v4396
        %v4513 = vadd.f32 %v4503, %v4511
        %v4514 = vadd.f32 %v4504, %v4512
        %v4515 = vmul.f32 %v3753, %v4395
        %v4516 = vmul.f32 %v3754, %v4396
        %v4517 = vadd.f32 %v4507, %v4515
        %v4518 = vadd.f32 %v4508, %v4516
        %s4519 = sld [smem:[#allocation9 + $0x383]]
        %v4520 = vstv %s4519
        %v4521 = vmul.f32 %v4520, %v4401
        %v4522 = vmul.f32 %v4520, %v4402
        %v4523 = vadd.f32 %v4513, %v4521
        %v4524 = vadd.f32 %v4514, %v4522
        %v4525 = vmul.f32 %v3765, %v4401
        %v4526 = vmul.f32 %v3766, %v4402
        %v4527 = vadd.f32 %v4517, %v4525
        %v4528 = vadd.f32 %v4518, %v4526
        %s4529 = sld [smem:[#allocation9 + $0x403]]
        %v4530 = vstv %s4529
        %v4531 = vmul.f32 %v4530, %v4407
        %v4532 = vmul.f32 %v4530, %v4408
        %v4533 = vadd.f32 %v4523, %v4531
        %v4534 = vadd.f32 %v4524, %v4532
        %v4535 = vmul.f32 %v3777, %v4407
        %v4536 = vmul.f32 %v3778, %v4408
        %v4537 = vadd.f32 %v4527, %v4535
        %v4538 = vadd.f32 %v4528, %v4536
        %v4539 = vrot.slane %v4389, 1
        %v4540 = vrot.slane %v4390, 1
        %v4541 = vsel %vm1065, %v4539, %v4540
        %v4544 = vsel %vm1065, %v4540, 0.0
        %s4545 = sld [smem:[#allocation9 + $0x483]]
        %v4546 = vstv %s4545
        %v4547 = vmul.f32 %v4546, %v4541
        %v4548 = vmul.f32 %v4546, %v4544
        %v4549 = vadd.f32 %v4533, %v4547
        %v4550 = vadd.f32 %v4534, %v4548
        %v4551 = vmul.f32 %v3795, %v4541
        %v4552 = vmul.f32 %v3796, %v4544
        %v4553 = vadd.f32 %v4537, %v4551
        %v4554 = vadd.f32 %v4538, %v4552
        %v4555 = vrot.slane %v4395, 1
        %v4556 = vrot.slane %v4396, 1
        %v4557 = vsel %vm1065, %v4555, %v4556
        %v4560 = vsel %vm1065, %v4556, 0.0
        %s4561 = sld [smem:[#allocation9 + $0x503]]
        %v4562 = vstv %s4561
        %v4563 = vmul.f32 %v4562, %v4557
        %v4564 = vmul.f32 %v4562, %v4560
        %v4565 = vadd.f32 %v4549, %v4563
        %v4566 = vadd.f32 %v4550, %v4564
        %v4567 = vmul.f32 %v3813, %v4557
        %v4568 = vmul.f32 %v3814, %v4560
        %v4569 = vadd.f32 %v4553, %v4567
        %v4570 = vadd.f32 %v4554, %v4568
        %v4571 = vrot.slane %v4383, 1
        %v4572 = vrot.slane %v4384, 1
        %v4573 = vsel %vm1065, %v4571, %v4572
        %v4576 = vsel %vm1065, %v4572, 0.0
        %s4577 = sld [smem:[#allocation9 + $0x583]]
        %v4578 = vstv %s4577
        %v4579 = vmul.f32 %v4578, %v4573
        %v4580 = vmul.f32 %v4578, %v4576
        %v4581 = vadd.f32 %v4565, %v4579
        %v4582 = vadd.f32 %v4566, %v4580
        %v4583 = vmul.f32 %v3831, %v4573
        %v4584 = vmul.f32 %v3832, %v4576
        %v4585 = vadd.f32 %v4569, %v4583
        %v4586 = vadd.f32 %v4570, %v4584
        %v4587 = vrot.slane %v4401, 1
        %v4588 = vrot.slane %v4402, 1
        %v4589 = vsel %vm1065, %v4587, %v4588
        %v4592 = vsel %vm1065, %v4588, 0.0
        %s4593 = sld [smem:[#allocation9 + $0x603]]
        %v4594 = vstv %s4593
        %v4595 = vmul.f32 %v4594, %v4589
        %v4596 = vmul.f32 %v4594, %v4592
        %v4597 = vadd.f32 %v4581, %v4595
        %v4598 = vadd.f32 %v4582, %v4596
        %v4599 = vmul.f32 %v3849, %v4589
        %v4600 = vmul.f32 %v3850, %v4592
        %v4601 = vadd.f32 %v4585, %v4599
        %v4602 = vadd.f32 %v4586, %v4600
        %v4603 = vrot.slane %v4407, 1
        %v4604 = vrot.slane %v4408, 1
        %v4605 = vsel %vm1065, %v4603, %v4604
        %v4608 = vsel %vm1065, %v4604, 0.0
        %s4609 = sld [smem:[#allocation9 + $0x683]]
        %v4610 = vstv %s4609
        %v4611 = vmul.f32 %v4610, %v4605
        %v4612 = vmul.f32 %v4610, %v4608
        %v4613 = vadd.f32 %v4597, %v4611
        %v4614 = vadd.f32 %v4598, %v4612
        %v4615 = vmul.f32 %v3867, %v4605
        %v4616 = vmul.f32 %v3868, %v4608
        %v4617 = vadd.f32 %v4601, %v4615
        %v4618 = vadd.f32 %v4602, %v4616
        %s4619 = sld [smem:[#allocation12 + $0x3]]
        %s4620 = sld [smem:[#allocation13 + $0x3]]
        %v4621 = vmul.f32 %v4617, %v3873
        %v4622 = vmul.f32 %v4618, %v3874
        %v4623 = vstv %s4620
        %v4624 = vmul.f32 %v4623, %v4621
        %v4625 = vmul.f32 %v4623, %v4622
        %v4626 = vstv %s4619
        %v4627 = vadd.f32 %v4626, %v4624
        %v4628 = vadd.f32 %v4626, %v4625
        %v4629 = vmul.f32 %v4613, %v4627
        %v4630 = vmul.f32 %v4614, %v4628
        %v4631 = vadd.f32 %v3885, %v4133
        %v4632 = vadd.f32 %v3886, %v4134
        %v4633 = vadd.f32 %v4631, %v4381
        %v4634 = vadd.f32 %v4632, %v4382
        %v4635 = vadd.f32 %v4633, %v4629
        %v4636 = vadd.f32 %v4634, %v4630
        %v4637 = vld [vmem:[%s408] sm:$0xff]
        %v4638 = vld [vmem:[%s408 + $0x8] sm:$0xff]
        %v4639 = vsub.f32 %v4635, %v3885
        %v4640 = vsub.f32 %v4636, %v3886
        %v4641 = vsub.f32 %v4637, %v4639
        %v4642 = vsub.f32 %v4638, %v4640
        %4643 = vst [vmem:[%s486] sm:$0xff] %v4641
        %4644 = vst [vmem:[%s486 + $0x8] sm:$0xff] %v4642
        %v4645 = vld [vmem:[%s1343] sm:$0xff]
        %v4646 = vld [vmem:[%s1343 + $0x8] sm:$0xff]
        %v4647 = vsub.f32 %v4635, %v4133
        %v4648 = vsub.f32 %v4636, %v4134
        %v4649 = vsub.f32 %v4645, %v4647
        %v4650 = vsub.f32 %v4646, %v4648
        %4651 = vst [vmem:[%s2432] sm:$0xff] %v4649
        %4652 = vst [vmem:[%s2432 + $0x8] sm:$0xff] %v4650
        %v4653 = vld [vmem:[%s1348] sm:$0xff]
        %v4654 = vld [vmem:[%s1348 + $0x8] sm:$0xff]
        %v4655 = vsub.f32 %v4635, %v4381
        %v4656 = vsub.f32 %v4636, %v4382
        %v4657 = vsub.f32 %v4653, %v4655
        %v4658 = vsub.f32 %v4654, %v4656
        %4659 = vst [vmem:[%s2441] sm:$0xff] %v4657
        %4660 = vst [vmem:[%s2441 + $0x8] sm:$0xff] %v4658
        %v4661 = vld [vmem:[%s1353] sm:$0xff]
        %v4662 = vld [vmem:[%s1353 + $0x8] sm:$0xff]
        %v4663 = vsub.f32 %v4635, %v4629
        %v4664 = vsub.f32 %v4636, %v4630
        %v4665 = vsub.f32 %v4661, %v4663
        %v4666 = vsub.f32 %v4662, %v4664
        %4667 = vst [vmem:[%s2450] sm:$0xff] %v4665
        %4668 = vst [vmem:[%s2450 + $0x8] sm:$0xff] %v4666
        %s4669 = sand.u32 %s245, 1
        %s4670 = scalar_lea.sflag [#allocation5], %s4669
        %s4671 = sand.u32 %s245, 1
        %s4672 = smul.addr %s4671, 64
        %s4673 = scalar_lea.vmem [#allocation18], %s4672
        // Predicated region
        $region89: #{tpu_custom_call.1} parent=55 // pred_check
          %p4674 = pneg %p255
        $region90: #{tpu_custom_call.1} parent=55 // pred_check_branch
          %4676 = sbr.rel (%p4674) target = $region92
        $region91: #{tpu_custom_call.1} parent=55 // pred_region
          %s4678 = ssub.s32 1024, 1024
          %4679 = vsyncadd %s4670, %s4678
          %s4680 = smul.addr %s33, 8
          %s4681 = smul.addr %s4680, 128
          %s4682 = scalar_lea.hbm %s9, %s4681
          %s4683 = sshll.u32 %s4673, 4
          %s4684 = int_to_ptr.vmem [resolvable:$true] %s4683
          %4689 = dma.vmem_to_hbm [thread:$0]  %s4684, 1024, %s4682, %s4670, 128, 128, 8
        $region92: #{tpu_custom_call.1} parent=55 // pred_fallthru
          _
      $region56: #{tpu_custom_call.1} parent=5 // pred_fallthru
        _
      %p4690 = scmp.le.s32.totalorder 2, %s28
      // Predicated region
      $region93: #{tpu_custom_call.1} parent=5 // pred_check
        %p4691 = pneg %p4690
      $region94: #{tpu_custom_call.1} parent=5 // pred_check_branch
        %4693 = sbr.rel (%p4691) target = $region96
      $region95: #{tpu_custom_call.1} parent=5 // pred_region
        %s4694 = ssub.s32 %s28, 2
        // Predicated region
        $region97: #{tpu_custom_call.1} parent=95 // pred_check
          %p4695 = pneg %p261
        $region98: #{tpu_custom_call.1} parent=95 // pred_check_branch
          %4697 = sbr.rel (%p4695) target = $region100
        $region99: #{tpu_custom_call.1} parent=95 // pred_region
          %s4698 = sand.u32 %s246, 1
          %s4699 = scalar_lea.sflag [#allocation5], %s4698
          %s4700 = sand.u32 %s246, 1
          %s4701 = smul.addr %s4700, 64
          %s4702 = scalar_lea.vmem [#allocation18], %s4701
          %4703 = dma.done %s4699, 1024
        $region100: #{tpu_custom_call.1} parent=95 // pred_fallthru
          _
      $region96: #{tpu_custom_call.1} parent=5 // pred_fallthru
        _
    $region6: #{tpu_custom_call.1} parent=1 // loop_footer
      %s32 = sadd.s32 1, %s28
    $region7: #{tpu_custom_call.1} parent=1 // loop_footer_branch
      %27 = sbr.rel target = $region3
    $region8: #{tpu_custom_call.1} parent=1 // loop_exit
      _
    %4704 = vsyncpa [#allocation4], 1
    %s4705 = scalar_lea.sflag [#allocation4], 1
    %4706 = vsyncpa %s4705, 1
    %4707 = vsyncpa [#allocation8], 1
    %s4708 = scalar_lea.sflag [#allocation8], 1
    %4709 = vsyncpa %s4708, 1
    %4710 = vsyncpa [#allocation5], 1
    %s4711 = scalar_lea.sflag [#allocation5], 1
    %4712 = vsyncpa %s4711, 1
    %4713 = vsyncpa [#allocation6], 1
    %s4714 = scalar_lea.sflag [#allocation6], 1
    %4715 = vsyncpa %s4714, 1
    %4716 = vsyncpa [#allocation11], 1
    %4717 = vsyncpa [#allocation14], 1
    %4718 = vsyncpa [#allocation17], 1

</llo_original>
